<compile_context>
chip_gen: v5e
topology: v5e:2x2
jax: 0.10.0
libtpu: 0.0.40
codegen_flags: <defaults>
</compile_context>

<pallas_src>
import jax
import jax.numpy as jnp
from jax.experimental import pallas as pl
from jax.experimental.pallas import tpu as pltpu

# ---------------- configuration (consistent with the module defaults) --------
NUM_AGENTS = 4
ENTITY_FEAT_DIM = 10          # global_state entity_feature_dim
AGENT_H_DIM = 32              # agent_transformer_embed_dim (!= mixer dim -> projector used)
MIXER_EMBED_DIM = 64          # MIXER_TRANSFORMER_EMBED_DIM
NUM_HEADS = 4                 # MIXER_TRANSFORMER_NUM_HEADS
NUM_BLOCKS = 2                # MIXER_TRANSFORMER_NUM_BLOCKS
FFN_MULT = 4                  # MIXER_TRANSFORMER_FFN_DIM_MULTIPLIER
MLP_HIDDEN = 64               # MIXER_MLP_HIDDEN_DIM
MAX_GLOBAL_ENTITIES = 6
SEQ_LEN = NUM_AGENTS + MAX_GLOBAL_ENTITIES        # 10 real tokens
SEQ_PAD = 16                                      # padded to a multiple of 8
HEAD_DIM = MIXER_EMBED_DIM // NUM_HEADS           # 16
FFN_DIM = MIXER_EMBED_DIM * FFN_MULT              # 256
LN_EPS = 1e-5
FUSED_IN_DIM = AGENT_H_DIM + ENTITY_FEAT_DIM      # 42
HYP1_OUT = NUM_AGENTS * MLP_HIDDEN + MLP_HIDDEN   # 320
HYP2_OUT = MLP_HIDDEN + 1                         # 65
HYP_OUT = HYP1_OUT + HYP2_OUT                     # 385


def _round_up(x, m):
    return (x + m - 1) // m * m


def _layer_norm(x, g, b):
    mean = jnp.mean(x, axis=-1, keepdims=True)
    var = jnp.mean(jnp.square(x - mean), axis=-1, keepdims=True)
    return (x - mean) * jax.lax.rsqrt(var + LN_EPS) * g + b


# ------------------------------- Pallas kernel --------------------------------
def mixer_kernel(q_ref, tok_ref, bias_ref, pool_ref,
                 w_in, b_tok, wqkv, bqkv, wout, bout,
                 wff1, bff1, wff2, bff2,
                 ln1g, ln1b, ln2g, ln2b,
                 whyp, bhyp,
                 out_ref):
    f32, bf16 = jnp.float32, jnp.bfloat16
    bt = q_ref.shape[0]                 # batch tile
    sp = SEQ_PAD
    m = bt * sp                         # flattened token rows in this tile
    d = MIXER_EMBED_DIM
    hd = HEAD_DIM
    scale = 1.0 / (hd ** 0.5)

    # ---- fused embed(global entities) + project(agent hidden) : one bf16 matmul ----
    # TODO(synk): EntityEmbedder class body not provided; assumed a single nn.Linear.
    x = jnp.dot(tok_ref[...], w_in[...], preferred_element_type=f32)          # (M, D) f32
    x = (x.reshape(bt, sp, d) + b_tok[...]).reshape(m, d)                     # per-token bias bcast over bt

    key_bias = bias_ref[...][:, None, :]          # (bt, 1, sp): 0 valid, -1e9 pad

    # ---- TransformerEncoder: post-norm layers, ReLU FFN, dropout = identity ----
    for l in range(NUM_BLOCKS):
        qkv = jnp.dot(x.astype(bf16), wqkv[l], preferred_element_type=f32) + bqkv[l]   # (M, 3D) f32
        q3 = qkv[:, 0 * d:1 * d].reshape(bt, sp, d)
        k3 = qkv[:, 1 * d:2 * d].reshape(bt, sp, d)
        v3 = qkv[:, 2 * d:3 * d].reshape(bt, sp, d)
        wout_l = wout[l]                           # (D, D) bf16

        # Heads as an unrolled loop of single-batch-dim 3-D dots; head outputs are
        # folded into the out-projection by summing head-sliced matmuls (no concat).
        attn = None
        for h in range(NUM_HEADS):
            lo, hi = h * hd, (h + 1) * hd
            s = jnp.einsum('bqd,bkd->bqk', q3[:, :, lo:hi], k3[:, :, lo:hi],
                           preferred_element_type=f32) * scale + key_bias            # (bt,sp,sp)
            s_max = jnp.max(s, axis=-1, keepdims=True)
            e = jnp.exp(s - s_max)
            p = e * pl.reciprocal(jnp.sum(e, axis=-1, keepdims=True), approx=True)
            head = jnp.einsum('bqk,bkd->bqd', p, v3[:, :, lo:hi],
                              preferred_element_type=f32).reshape(m, hd)
            contrib = jnp.dot(head.astype(bf16), wout_l[lo:hi, :],
                              preferred_element_type=f32)                             # (M, D)
            attn = contrib if attn is None else attn + contrib
        x = _layer_norm(x + attn + bout[l], ln1g[l], ln1b[l])

        ffn = jnp.maximum(jnp.dot(x.astype(bf16), wff1[l],
                                  preferred_element_type=f32) + bff1[l], 0.0)
        ffn = jnp.dot(ffn.astype(bf16), wff2[l], preferred_element_type=f32) + bff2[l]
        x = _layer_norm(x + ffn, ln2g[l], ln2b[l])

    # ---- masked mean pooling: weights already normalized (mask / count) in the wrapper ----
    pooled = jnp.sum(x.reshape(bt, sp, d) * pool_ref[...][:, :, None], axis=1)        # (bt, D)

    # ---- fused hypernetwork heads: one matmul -> [W1 | b1 | w2 | b2] ----
    hyp = jnp.dot(pooled.astype(bf16), whyp[...], preferred_element_type=f32) + bhyp[...]   # (bt, 385)
    w1_size = NUM_AGENTS * MLP_HIDDEN
    W1 = jnp.abs(hyp[:, :w1_size])                               # (bt, N*H)
    b1 = hyp[:, w1_size:HYP1_OUT]                                # (bt, H)
    w2 = jnp.abs(hyp[:, HYP1_OUT:HYP1_OUT + MLP_HIDDEN])         # (bt, H)
    b2 = hyp[:, HYP1_OUT + MLP_HIDDEN:HYP1_OUT + MLP_HIDDEN + 1] # (bt, 1)

    # ---- mixing MLP: q_vals @ |W1| + b1 -> ELU -> . |w2| + b2 (batched over the tile) ----
    qv = q_ref[...]                                              # (bt, N)
    h1 = b1
    for n in range(NUM_AGENTS):
        h1 = h1 + qv[:, n:n + 1] * W1[:, n * MLP_HIDDEN:(n + 1) * MLP_HIDDEN]
    h1 = jnp.where(h1 > 0.0, h1, jnp.exp(jnp.minimum(h1, 0.0)) - 1.0)   # ELU(alpha=1)
    out_ref[...] = jnp.sum(h1 * w2, axis=-1, keepdims=True) + b2        # (bt, 1)


# ------------------------------- wrapper --------------------------------------
def _const_index_map(ndim):
    def idx(t):
        return (0,) * ndim
    return idx


def transfqmix_mixer_forward(params, q_vals, entities, agent_h, mask, *, max_batch_tile=128):
    """q_vals (B,N), entities (B,E,F) zero-padded, agent_h (B,N,A), mask (B,S) float 1=valid."""
    (w_emb, b_emb, w_proj, b_proj, wqkv, bqkv, wout, bout,
     wff1, bff1, wff2, bff2, ln1g, ln1b, ln2g, ln2b,
     whyp1, bhyp1, whyp2, bhyp2) = params

    f32, bf16 = jnp.float32, jnp.bfloat16
    B = q_vals.shape[0]
    N, E, F, A = NUM_AGENTS, MAX_GLOBAL_ENTITIES, ENTITY_FEAT_DIM, AGENT_H_DIM
    S, SP, D, AF = SEQ_LEN, SEQ_PAD, MIXER_EMBED_DIM, FUSED_IN_DIM

    # ---- batch tiling (on v7x prefer bt giving an even number of tiles >= 2) ----
    bt = min(max_batch_tile, _round_up(max(B, 1), 8))
    b_pad = _round_up(B, bt)
    n_tiles = b_pad // bt

    # ---- fused token features: agent rows [agent_h | 0], entity rows [0 | entity] ----
    tok = jnp.zeros((B, SP, AF), f32)
    tok = tok.at[:, :N, :A].set(agent_h.astype(f32))
    tok = tok.at[:, N:N + E, A:].set(entities.astype(f32))
    mask_p = jnp.zeros((B, SP), f32).at[:, :S].set(mask.astype(f32))

    def pad_b(x):
        return jnp.pad(x, ((0, b_pad - B),) + ((0, 0),) * (x.ndim - 1))

    tok = pad_b(tok).reshape(b_pad * SP, AF).astype(bf16)        # bf16 MXU operand, half the DMA
    q_p = pad_b(q_vals.astype(f32))
    mask_p = pad_b(mask_p)

    key_bias = (mask_p - 1.0) * 1e9                              # (b_pad, SP): 0 valid, -1e9 pad
    count = jnp.maximum(jnp.sum(mask_p, axis=-1, keepdims=True), 1.0)
    pool_w = mask_p / count                                      # (b_pad, SP) normalized pool weights

    # ---- fused input-projection params (block-diagonal weight, per-token bias) ----
    w_in = jnp.concatenate([w_proj, w_emb], axis=0).astype(bf16)  # (A+F, D)
    b_tok = jnp.zeros((SP, D), f32)
    b_tok = b_tok.at[:N, :].set(jnp.broadcast_to(b_proj, (N, D)))
    b_tok = b_tok.at[N:N + E, :].set(jnp.broadcast_to(b_emb, (E, D)))

    # ---- fused hypernet heads: one (D, 385) weight ----
    whyp = jnp.concatenate([whyp1, whyp2], axis=1).astype(bf16)   # (D, 385)
    bhyp = jnp.concatenate([bhyp1, bhyp2], axis=1)                # (1, 385)

    kparams = (w_in, b_tok, wqkv.astype(bf16), bqkv, wout.astype(bf16), bout,
               wff1.astype(bf16), bff1, wff2.astype(bf16), bff2,
               ln1g, ln1b, ln2g, ln2b, whyp, bhyp)

    in_specs = [
        pl.BlockSpec((bt, N), lambda t: (t, 0)),
        pl.BlockSpec((bt * SP, AF), lambda t: (t, 0)),
        pl.BlockSpec((bt, SP), lambda t: (t, 0)),
        pl.BlockSpec((bt, SP), lambda t: (t, 0)),
    ] + [pl.BlockSpec(p.shape, _const_index_map(p.ndim)) for p in kparams]

    out = pl.pallas_call(
        mixer_kernel,
        out_shape=jax.ShapeDtypeStruct((b_pad, 1), jnp.float32),
        grid_spec=pltpu.PrefetchScalarGridSpec(
            num_scalar_prefetch=0,
            grid=(n_tiles,),
            in_specs=in_specs,
            out_specs=pl.BlockSpec((bt, 1), lambda t: (t, 0)),
        ),
        compiler_params=pltpu.CompilerParams(
            dimension_semantics=("parallel",),
            vmem_limit_bytes=48 * 1024 * 1024),
    )(q_p, tok, key_bias, pool_w, *kparams)
    return out[:B]                                               # (B, 1)


# --------------------------- pure-JAX reference (f32) --------------------------
def forward_reference(params, q_vals, entities, agent_h, mask):
    (w_emb, b_emb, w_proj, b_proj, wqkv, bqkv, wout, bout,
     wff1, bff1, wff2, bff2, ln1g, ln1b, ln2g, ln2b,
     whyp1, bhyp1, whyp2, bhyp2) = params
    B = q_vals.shape[0]
    emb_ent = entities @ w_emb + b_emb
    proj_h = agent_h @ w_proj + b_proj
    x = jnp.concatenate([proj_h, emb_ent], axis=1)                   # (B, S, D)
    key_bias = ((mask - 1.0) * 1e9)[:, None, None, :]                # (B,1,1,S)
    scale = 1.0 / (HEAD_DIM ** 0.5)
    for l in range(NUM_BLOCKS):
        qkv = x @ wqkv[l] + bqkv[l]
        q, k, v = jnp.split(qkv, 3, axis=-1)

        def sh(t):
            return t.reshape(B, SEQ_LEN, NUM_HEADS, HEAD_DIM).transpose(0, 2, 1, 3)
        qh, kh, vh = sh(q), sh(k), sh(v)
        scores = jnp.einsum('bhqd,bhkd->bhqk', qh, kh) * scale + key_bias
        attn = jax.nn.softmax(scores, axis=-1)
        out = jnp.einsum('bhqk,bhkd->bhqd', attn, vh).transpose(0, 2, 1, 3)
        out = out.reshape(B, SEQ_LEN, MIXER_EMBED_DIM)
        x = _layer_norm(x + (out @ wout[l] + bout[l]), ln1g[l], ln1b[l])
        ffn = jax.nn.relu(x @ wff1[l] + bff1[l]) @ wff2[l] + bff2[l]
        x = _layer_norm(x + ffn, ln2g[l], ln2b[l])
    valid = mask[..., None]
    pooled = (x * valid).sum(1) / jnp.maximum(valid.sum(1), 1.0)     # (B, D)
    w1b1 = pooled @ whyp1 + bhyp1
    w2b2 = pooled @ whyp2 + bhyp2
    w1_size = NUM_AGENTS * MLP_HIDDEN
    W1 = jnp.abs(w1b1[:, :w1_size]).reshape(B, NUM_AGENTS, MLP_HIDDEN)
    b1 = w1b1[:, w1_size:][:, None, :]
    W2 = jnp.abs(w2b2[:, :MLP_HIDDEN])[..., None]
    b2 = w2b2[:, MLP_HIDDEN:][:, None, :]
    h1 = jax.nn.elu(jnp.einsum('bn,bnh->bh', q_vals, W1)[:, None, :] + b1)
    q_tot = jnp.einsum('bih,bho->bio', h1, W2) + b2
    return q_tot.squeeze(-1)                                         # (B, 1)


# ----------------------------- parameter init ----------------------------------
def init_params(key):
    ks = iter(jax.random.split(key, 32))

    def w(shape, fan_in):
        return jax.random.normal(next(ks), shape, jnp.float32) / jnp.sqrt(float(fan_in))

    def b(shape):
        return 0.01 * jax.random.normal(next(ks), shape, jnp.float32)

    D, F, A, L, Dff = MIXER_EMBED_DIM, ENTITY_FEAT_DIM, AGENT_H_DIM, NUM_BLOCKS, FFN_DIM
    return (
        w((F, D), F), b((1, D)),                    # EntityEmbedder (assumed Linear)
        w((A, D), A), b((1, D)),                    # agent_h_projector
        w((L, D, 3 * D), D), b((L, 1, 3 * D)),      # attn in_proj
        w((L, D, D), D), b((L, 1, D)),              # attn out_proj
        w((L, D, Dff), D), b((L, 1, Dff)),          # ffn linear1
        w((L, Dff, D), Dff), b((L, 1, D)),          # ffn linear2
        jnp.ones((L, 1, D), jnp.float32), jnp.zeros((L, 1, D), jnp.float32),  # norm1
        jnp.ones((L, 1, D), jnp.float32), jnp.zeros((L, 1, D), jnp.float32),  # norm2
        w((D, HYP1_OUT), D), b((1, HYP1_OUT)),      # hyper_w1_b1_head
        w((D, HYP2_OUT), D), b((1, HYP2_OUT)),      # hyper_w2_b2_head
    )


if __name__ == "__main__":
    key = jax.random.PRNGKey(0)
    kp, kq, ke, kh, kn = jax.random.split(key, 5)
    params = init_params(kp)

    # B=20 with a small batch tile (8) -> 3-step grid, exercises tiling + padding.
    B = 20
    q_vals = jax.random.normal(kq, (B, NUM_AGENTS), jnp.float32)
    # emulate ragged per-batch global entity lists (between 2 and 6 entities each)
    num_entities = 2 + (jax.random.randint(kn, (B,), 0, 5))
    ent_valid = (jnp.arange(MAX_GLOBAL_ENTITIES)[None, :] < num_entities[:, None])
    entities = jax.random.normal(
        ke, (B, MAX_GLOBAL_ENTITIES, ENTITY_FEAT_DIM), jnp.float32)
    entities = entities * ent_valid[..., None].astype(jnp.float32)   # zero-pad
    agent_h = jax.random.normal(kh, (B, NUM_AGENTS, AGENT_H_DIM), jnp.float32)
    mask = jnp.concatenate(
        [jnp.ones((B, NUM_AGENTS), jnp.float32), ent_valid.astype(jnp.float32)],
        axis=1)                                                       # (B, S), 1=valid

    out = transfqmix_mixer_forward(params, q_vals, entities, agent_h, mask,
                                   max_batch_tile=8)
    out = jax.block_until_ready(out)

    ref = forward_reference(params, q_vals, entities, agent_h, mask)
    assert out.shape == (B, 1)
    assert bool(jnp.all(jnp.isfinite(out)))
    # bf16 MXU operands (f32 accumulation) -> compare at a scale-relative tolerance.
    err = float(jnp.max(jnp.abs(out - ref)))
    scale = max(float(jnp.max(jnp.abs(ref))), 1.0)
    assert err <= 8e-2 * scale, (err, scale, out, ref)
    print("KERNEL_OK")
</pallas_src>

<mosaic_0001>
module attributes {stable_mosaic.version = 11 : i64} {
  func.func @mixer_kernel(%arg0: i32, %arg1: memref<8x4xf32, #tpu.memory_space<vmem>>, %arg2: memref<128x42xbf16, #tpu.memory_space<vmem>>, %arg3: memref<8x16xf32, #tpu.memory_space<vmem>>, %arg4: memref<8x16xf32, #tpu.memory_space<vmem>>, %arg5: memref<42x64xbf16, #tpu.memory_space<vmem>>, %arg6: memref<16x64xf32, #tpu.memory_space<vmem>>, %arg7: memref<2x64x192xbf16, #tpu.memory_space<vmem>>, %arg8: memref<2x1x192xf32, #tpu.memory_space<vmem>>, %arg9: memref<2x64x64xbf16, #tpu.memory_space<vmem>>, %arg10: memref<2x1x64xf32, #tpu.memory_space<vmem>>, %arg11: memref<2x64x256xbf16, #tpu.memory_space<vmem>>, %arg12: memref<2x1x256xf32, #tpu.memory_space<vmem>>, %arg13: memref<2x256x64xbf16, #tpu.memory_space<vmem>>, %arg14: memref<2x1x64xf32, #tpu.memory_space<vmem>>, %arg15: memref<2x1x64xf32, #tpu.memory_space<vmem>>, %arg16: memref<2x1x64xf32, #tpu.memory_space<vmem>>, %arg17: memref<2x1x64xf32, #tpu.memory_space<vmem>>, %arg18: memref<2x1x64xf32, #tpu.memory_space<vmem>>, %arg19: memref<64x385xbf16, #tpu.memory_space<vmem>>, %arg20: memref<1x385xf32, #tpu.memory_space<vmem>>, %arg21: memref<8x1xf32, #tpu.memory_space<vmem>>) attributes {dimension_semantics = [#tpu.dimension_semantics<parallel>], iteration_bounds = array<i64: 3>, scalar_prefetch = 0 : i64, scratch_operands = 0 : i64, tpu.core_type = #tpu.core_type<tc>, window_params = [{transform_indices = @transform_0, window_bounds = array<i64: 8, 4>}, {transform_indices = @transform_1, window_bounds = array<i64: 128, 42>}, {transform_indices = @transform_2, window_bounds = array<i64: 8, 16>}, {transform_indices = @transform_3, window_bounds = array<i64: 8, 16>}, {pipeline_mode = #tpu.pipeline_mode<synchronous>, transform_indices = @transform_4, window_bounds = array<i64: 42, 64>}, {pipeline_mode = #tpu.pipeline_mode<synchronous>, transform_indices = @transform_5, window_bounds = array<i64: 16, 64>}, {pipeline_mode = #tpu.pipeline_mode<synchronous>, transform_indices = @transform_6, window_bounds = array<i64: 2, 64, 192>}, {pipeline_mode = #tpu.pipeline_mode<synchronous>, transform_indices = @transform_7, window_bounds = array<i64: 2, 1, 192>}, {pipeline_mode = #tpu.pipeline_mode<synchronous>, transform_indices = @transform_8, window_bounds = array<i64: 2, 64, 64>}, {pipeline_mode = #tpu.pipeline_mode<synchronous>, transform_indices = @transform_9, window_bounds = array<i64: 2, 1, 64>}, {pipeline_mode = #tpu.pipeline_mode<synchronous>, transform_indices = @transform_10, window_bounds = array<i64: 2, 64, 256>}, {pipeline_mode = #tpu.pipeline_mode<synchronous>, transform_indices = @transform_11, window_bounds = array<i64: 2, 1, 256>}, {pipeline_mode = #tpu.pipeline_mode<synchronous>, transform_indices = @transform_12, window_bounds = array<i64: 2, 256, 64>}, {pipeline_mode = #tpu.pipeline_mode<synchronous>, transform_indices = @transform_13, window_bounds = array<i64: 2, 1, 64>}, {pipeline_mode = #tpu.pipeline_mode<synchronous>, transform_indices = @transform_14, window_bounds = array<i64: 2, 1, 64>}, {pipeline_mode = #tpu.pipeline_mode<synchronous>, transform_indices = @transform_15, window_bounds = array<i64: 2, 1, 64>}, {pipeline_mode = #tpu.pipeline_mode<synchronous>, transform_indices = @transform_16, window_bounds = array<i64: 2, 1, 64>}, {pipeline_mode = #tpu.pipeline_mode<synchronous>, transform_indices = @transform_17, window_bounds = array<i64: 2, 1, 64>}, {pipeline_mode = #tpu.pipeline_mode<synchronous>, transform_indices = @transform_18, window_bounds = array<i64: 64, 385>}, {pipeline_mode = #tpu.pipeline_mode<synchronous>, transform_indices = @transform_19, window_bounds = array<i64: 1, 385>}, {transform_indices = @transform_20, window_bounds = array<i64: 8, 1>}]} {
    %c0 = arith.constant 0 : index
    %c0_0 = arith.constant 0 : index
    %0 = vector.load %arg2[%c0, %c0_0] : memref<128x42xbf16, #tpu.memory_space<vmem>>, vector<128x42xbf16>
    %c0_1 = arith.constant 0 : index
    %c0_2 = arith.constant 0 : index
    %1 = vector.load %arg5[%c0_1, %c0_2] : memref<42x64xbf16, #tpu.memory_space<vmem>>, vector<42x64xbf16>
    %cst = arith.constant dense<0.000000e+00> : vector<128x64xf32>
    %2 = tpu.matmul %0, %1, %cst {dimension_numbers = #tpu.dot_dimension_numbers<[1], [0], [0], [1], [0, 0, 1, 1], [], []>} : vector<128x42xbf16>, vector<42x64xbf16>, vector<128x64xf32> -> vector<128x64xf32>
    %3 = vector.shape_cast %2 : vector<128x64xf32> to vector<8x16x64xf32>
    %c0_3 = arith.constant 0 : index
    %c0_4 = arith.constant 0 : index
    %4 = vector.load %arg6[%c0_3, %c0_4] : memref<16x64xf32, #tpu.memory_space<vmem>>, vector<16x64xf32>
    %5 = vector.shape_cast %4 : vector<16x64xf32> to vector<1x16x64xf32>
    %6 = vector.broadcast %5 : vector<1x16x64xf32> to vector<8x16x64xf32>
    %7 = arith.addf %3, %6 : vector<8x16x64xf32>
    %8 = vector.shape_cast %7 : vector<8x16x64xf32> to vector<128x64xf32>
    %c0_5 = arith.constant 0 : index
    %c0_6 = arith.constant 0 : index
    %9 = vector.load %arg3[%c0_5, %c0_6] : memref<8x16xf32, #tpu.memory_space<vmem>>, vector<8x16xf32>
    %10 = vector.shape_cast %9 : vector<8x16xf32> to vector<8x1x16xf32>
    %11 = arith.truncf %8 : vector<128x64xf32> to vector<128x64xbf16>
    %c0_7 = arith.constant 0 : index
    %c0_8 = arith.constant 0 : index
    %c0_9 = arith.constant 0 : index
    %12 = vector.load %arg7[%c0_7, %c0_8, %c0_9] : memref<2x64x192xbf16, #tpu.memory_space<vmem>>, vector<1x64x192xbf16>
    %13 = vector.shape_cast %12 : vector<1x64x192xbf16> to vector<64x192xbf16>
    %cst_10 = arith.constant dense<0.000000e+00> : vector<128x192xf32>
    %14 = tpu.matmul %11, %13, %cst_10 {dimension_numbers = #tpu.dot_dimension_numbers<[1], [0], [0], [1], [0, 0, 1, 1], [], []>} : vector<128x64xbf16>, vector<64x192xbf16>, vector<128x192xf32> -> vector<128x192xf32>
    %c0_11 = arith.constant 0 : index
    %c0_12 = arith.constant 0 : index
    %c0_13 = arith.constant 0 : index
    %15 = vector.load %arg8[%c0_11, %c0_12, %c0_13] : memref<2x1x192xf32, #tpu.memory_space<vmem>>, vector<1x1x192xf32>
    %16 = vector.shape_cast %15 : vector<1x1x192xf32> to vector<1x192xf32>
    %17 = vector.broadcast %16 : vector<1x192xf32> to vector<128x192xf32>
    %18 = arith.addf %14, %17 : vector<128x192xf32>
    %19 = vector.extract_strided_slice %18 {offsets = [0, 0], sizes = [128, 64], strides = [1, 1]} : vector<128x192xf32> to vector<128x64xf32>
    %20 = vector.shape_cast %19 : vector<128x64xf32> to vector<8x16x64xf32>
    %21 = vector.extract_strided_slice %18 {offsets = [0, 64], sizes = [128, 64], strides = [1, 1]} : vector<128x192xf32> to vector<128x64xf32>
    %22 = vector.shape_cast %21 : vector<128x64xf32> to vector<8x16x64xf32>
    %23 = vector.extract_strided_slice %18 {offsets = [0, 128], sizes = [128, 64], strides = [1, 1]} : vector<128x192xf32> to vector<128x64xf32>
    %24 = vector.shape_cast %23 : vector<128x64xf32> to vector<8x16x64xf32>
    %c0_14 = arith.constant 0 : index
    %c0_15 = arith.constant 0 : index
    %c0_16 = arith.constant 0 : index
    %25 = vector.load %arg9[%c0_14, %c0_15, %c0_16] : memref<2x64x64xbf16, #tpu.memory_space<vmem>>, vector<1x64x64xbf16>
    %26 = vector.shape_cast %25 : vector<1x64x64xbf16> to vector<64x64xbf16>
    %27 = vector.extract_strided_slice %20 {offsets = [0, 0, 0], sizes = [8, 16, 16], strides = [1, 1, 1]} : vector<8x16x64xf32> to vector<8x16x16xf32>
    %28 = vector.extract_strided_slice %22 {offsets = [0, 0, 0], sizes = [8, 16, 16], strides = [1, 1, 1]} : vector<8x16x64xf32> to vector<8x16x16xf32>
    "tpu.trace_start"() <{level = 10 : i32, message = "bqd,bkd->bqk"}> : () -> ()
    %cst_17 = arith.constant dense<0.000000e+00> : vector<8x16x16xf32>
    %29 = tpu.matmul %27, %28, %cst_17 {dimension_numbers = #tpu.dot_dimension_numbers<[2], [2], [1], [1], [0, 0, 0, 1, 1, 1], [0], [0]>} : vector<8x16x16xf32>, vector<8x16x16xf32>, vector<8x16x16xf32> -> vector<8x16x16xf32>
    "tpu.trace_stop"() : () -> ()
    %cst_18 = arith.constant 2.500000e-01 : f32
    %30 = vector.broadcast %cst_18 : f32 to vector<8x16x16xf32>
    %31 = arith.mulf %29, %30 : vector<8x16x16xf32>
    %32 = vector.broadcast %10 : vector<8x1x16xf32> to vector<8x16x16xf32>
    %33 = arith.addf %31, %32 : vector<8x16x16xf32>
    %cst_19 = arith.constant dense<0xFF800000> : vector<8x16xf32>
    %34 = vector.multi_reduction <maximumf>, %33, %cst_19 [2] : vector<8x16x16xf32> to vector<8x16xf32>
    %35 = vector.shape_cast %34 : vector<8x16xf32> to vector<8x16x1xf32>
    %36 = vector.broadcast %35 : vector<8x16x1xf32> to vector<8x16x16xf32>
    %37 = arith.subf %33, %36 : vector<8x16x16xf32>
    %38 = math.exp %37 : vector<8x16x16xf32>
    %cst_20 = arith.constant dense<0.000000e+00> : vector<8x16xf32>
    %39 = vector.multi_reduction <add>, %38, %cst_20 [2] : vector<8x16x16xf32> to vector<8x16xf32>
    %40 = vector.shape_cast %39 : vector<8x16xf32> to vector<8x16x1xf32>
    %41 = tpu.reciprocal %40 {approx = true} : vector<8x16x1xf32> -> vector<8x16x1xf32>
    %42 = vector.broadcast %41 : vector<8x16x1xf32> to vector<8x16x16xf32>
    %43 = arith.mulf %38, %42 : vector<8x16x16xf32>
    %44 = vector.extract_strided_slice %24 {offsets = [0, 0, 0], sizes = [8, 16, 16], strides = [1, 1, 1]} : vector<8x16x64xf32> to vector<8x16x16xf32>
    "tpu.trace_start"() <{level = 10 : i32, message = "bqk,bkd->bqd"}> : () -> ()
    %cst_21 = arith.constant dense<0.000000e+00> : vector<8x16x16xf32>
    %45 = tpu.matmul %43, %44, %cst_21 {dimension_numbers = #tpu.dot_dimension_numbers<[2], [1], [1], [2], [0, 0, 0, 1, 1, 2], [0], [0]>} : vector<8x16x16xf32>, vector<8x16x16xf32>, vector<8x16x16xf32> -> vector<8x16x16xf32>
    "tpu.trace_stop"() : () -> ()
    %46 = vector.shape_cast %45 : vector<8x16x16xf32> to vector<128x16xf32>
    %47 = arith.truncf %46 : vector<128x16xf32> to vector<128x16xbf16>
    %48 = vector.extract_strided_slice %26 {offsets = [0, 0], sizes = [16, 64], strides = [1, 1]} : vector<64x64xbf16> to vector<16x64xbf16>
    %cst_22 = arith.constant dense<0.000000e+00> : vector<128x64xf32>
    %49 = tpu.matmul %47, %48, %cst_22 {dimension_numbers = #tpu.dot_dimension_numbers<[1], [0], [0], [1], [0, 0, 1, 1], [], []>} : vector<128x16xbf16>, vector<16x64xbf16>, vector<128x64xf32> -> vector<128x64xf32>
    %50 = vector.extract_strided_slice %20 {offsets = [0, 0, 16], sizes = [8, 16, 16], strides = [1, 1, 1]} : vector<8x16x64xf32> to vector<8x16x16xf32>
    %51 = vector.extract_strided_slice %22 {offsets = [0, 0, 16], sizes = [8, 16, 16], strides = [1, 1, 1]} : vector<8x16x64xf32> to vector<8x16x16xf32>
    "tpu.trace_start"() <{level = 10 : i32, message = "bqd,bkd->bqk"}> : () -> ()
    %cst_23 = arith.constant dense<0.000000e+00> : vector<8x16x16xf32>
    %52 = tpu.matmul %50, %51, %cst_23 {dimension_numbers = #tpu.dot_dimension_numbers<[2], [2], [1], [1], [0, 0, 0, 1, 1, 1], [0], [0]>} : vector<8x16x16xf32>, vector<8x16x16xf32>, vector<8x16x16xf32> -> vector<8x16x16xf32>
    "tpu.trace_stop"() : () -> ()
    %cst_24 = arith.constant 2.500000e-01 : f32
    %53 = vector.broadcast %cst_24 : f32 to vector<8x16x16xf32>
    %54 = arith.mulf %52, %53 : vector<8x16x16xf32>
    %55 = vector.broadcast %10 : vector<8x1x16xf32> to vector<8x16x16xf32>
    %56 = arith.addf %54, %55 : vector<8x16x16xf32>
    %cst_25 = arith.constant dense<0xFF800000> : vector<8x16xf32>
    %57 = vector.multi_reduction <maximumf>, %56, %cst_25 [2] : vector<8x16x16xf32> to vector<8x16xf32>
    %58 = vector.shape_cast %57 : vector<8x16xf32> to vector<8x16x1xf32>
    %59 = vector.broadcast %58 : vector<8x16x1xf32> to vector<8x16x16xf32>
    %60 = arith.subf %56, %59 : vector<8x16x16xf32>
    %61 = math.exp %60 : vector<8x16x16xf32>
    %cst_26 = arith.constant dense<0.000000e+00> : vector<8x16xf32>
    %62 = vector.multi_reduction <add>, %61, %cst_26 [2] : vector<8x16x16xf32> to vector<8x16xf32>
    %63 = vector.shape_cast %62 : vector<8x16xf32> to vector<8x16x1xf32>
    %64 = tpu.reciprocal %63 {approx = true} : vector<8x16x1xf32> -> vector<8x16x1xf32>
    %65 = vector.broadcast %64 : vector<8x16x1xf32> to vector<8x16x16xf32>
    %66 = arith.mulf %61, %65 : vector<8x16x16xf32>
    %67 = vector.extract_strided_slice %24 {offsets = [0, 0, 16], sizes = [8, 16, 16], strides = [1, 1, 1]} : vector<8x16x64xf32> to vector<8x16x16xf32>
    "tpu.trace_start"() <{level = 10 : i32, message = "bqk,bkd->bqd"}> : () -> ()
    %cst_27 = arith.constant dense<0.000000e+00> : vector<8x16x16xf32>
    %68 = tpu.matmul %66, %67, %cst_27 {dimension_numbers = #tpu.dot_dimension_numbers<[2], [1], [1], [2], [0, 0, 0, 1, 1, 2], [0], [0]>} : vector<8x16x16xf32>, vector<8x16x16xf32>, vector<8x16x16xf32> -> vector<8x16x16xf32>
    "tpu.trace_stop"() : () -> ()
    %69 = vector.shape_cast %68 : vector<8x16x16xf32> to vector<128x16xf32>
    %70 = arith.truncf %69 : vector<128x16xf32> to vector<128x16xbf16>
    %71 = vector.extract_strided_slice %26 {offsets = [16, 0], sizes = [16, 64], strides = [1, 1]} : vector<64x64xbf16> to vector<16x64xbf16>
    %cst_28 = arith.constant dense<0.000000e+00> : vector<128x64xf32>
    %72 = tpu.matmul %70, %71, %cst_28 {dimension_numbers = #tpu.dot_dimension_numbers<[1], [0], [0], [1], [0, 0, 1, 1], [], []>} : vector<128x16xbf16>, vector<16x64xbf16>, vector<128x64xf32> -> vector<128x64xf32>
    %73 = arith.addf %49, %72 : vector<128x64xf32>
    %74 = vector.extract_strided_slice %20 {offsets = [0, 0, 32], sizes = [8, 16, 16], strides = [1, 1, 1]} : vector<8x16x64xf32> to vector<8x16x16xf32>
    %75 = vector.extract_strided_slice %22 {offsets = [0, 0, 32], sizes = [8, 16, 16], strides = [1, 1, 1]} : vector<8x16x64xf32> to vector<8x16x16xf32>
    "tpu.trace_start"() <{level = 10 : i32, message = "bqd,bkd->bqk"}> : () -> ()
    %cst_29 = arith.constant dense<0.000000e+00> : vector<8x16x16xf32>
    %76 = tpu.matmul %74, %75, %cst_29 {dimension_numbers = #tpu.dot_dimension_numbers<[2], [2], [1], [1], [0, 0, 0, 1, 1, 1], [0], [0]>} : vector<8x16x16xf32>, vector<8x16x16xf32>, vector<8x16x16xf32> -> vector<8x16x16xf32>
    "tpu.trace_stop"() : () -> ()
    %cst_30 = arith.constant 2.500000e-01 : f32
    %77 = vector.broadcast %cst_30 : f32 to vector<8x16x16xf32>
    %78 = arith.mulf %76, %77 : vector<8x16x16xf32>
    %79 = vector.broadcast %10 : vector<8x1x16xf32> to vector<8x16x16xf32>
    %80 = arith.addf %78, %79 : vector<8x16x16xf32>
    %cst_31 = arith.constant dense<0xFF800000> : vector<8x16xf32>
    %81 = vector.multi_reduction <maximumf>, %80, %cst_31 [2] : vector<8x16x16xf32> to vector<8x16xf32>
    %82 = vector.shape_cast %81 : vector<8x16xf32> to vector<8x16x1xf32>
    %83 = vector.broadcast %82 : vector<8x16x1xf32> to vector<8x16x16xf32>
    %84 = arith.subf %80, %83 : vector<8x16x16xf32>
    %85 = math.exp %84 : vector<8x16x16xf32>
    %cst_32 = arith.constant dense<0.000000e+00> : vector<8x16xf32>
    %86 = vector.multi_reduction <add>, %85, %cst_32 [2] : vector<8x16x16xf32> to vector<8x16xf32>
    %87 = vector.shape_cast %86 : vector<8x16xf32> to vector<8x16x1xf32>
    %88 = tpu.reciprocal %87 {approx = true} : vector<8x16x1xf32> -> vector<8x16x1xf32>
    %89 = vector.broadcast %88 : vector<8x16x1xf32> to vector<8x16x16xf32>
    %90 = arith.mulf %85, %89 : vector<8x16x16xf32>
    %91 = vector.extract_strided_slice %24 {offsets = [0, 0, 32], sizes = [8, 16, 16], strides = [1, 1, 1]} : vector<8x16x64xf32> to vector<8x16x16xf32>
    "tpu.trace_start"() <{level = 10 : i32, message = "bqk,bkd->bqd"}> : () -> ()
    %cst_33 = arith.constant dense<0.000000e+00> : vector<8x16x16xf32>
    %92 = tpu.matmul %90, %91, %cst_33 {dimension_numbers = #tpu.dot_dimension_numbers<[2], [1], [1], [2], [0, 0, 0, 1, 1, 2], [0], [0]>} : vector<8x16x16xf32>, vector<8x16x16xf32>, vector<8x16x16xf32> -> vector<8x16x16xf32>
    "tpu.trace_stop"() : () -> ()
    %93 = vector.shape_cast %92 : vector<8x16x16xf32> to vector<128x16xf32>
    %94 = arith.truncf %93 : vector<128x16xf32> to vector<128x16xbf16>
    %95 = vector.extract_strided_slice %26 {offsets = [32, 0], sizes = [16, 64], strides = [1, 1]} : vector<64x64xbf16> to vector<16x64xbf16>
    %cst_34 = arith.constant dense<0.000000e+00> : vector<128x64xf32>
    %96 = tpu.matmul %94, %95, %cst_34 {dimension_numbers = #tpu.dot_dimension_numbers<[1], [0], [0], [1], [0, 0, 1, 1], [], []>} : vector<128x16xbf16>, vector<16x64xbf16>, vector<128x64xf32> -> vector<128x64xf32>
    %97 = arith.addf %73, %96 : vector<128x64xf32>
    %98 = vector.extract_strided_slice %20 {offsets = [0, 0, 48], sizes = [8, 16, 16], strides = [1, 1, 1]} : vector<8x16x64xf32> to vector<8x16x16xf32>
    %99 = vector.extract_strided_slice %22 {offsets = [0, 0, 48], sizes = [8, 16, 16], strides = [1, 1, 1]} : vector<8x16x64xf32> to vector<8x16x16xf32>
    "tpu.trace_start"() <{level = 10 : i32, message = "bqd,bkd->bqk"}> : () -> ()
    %cst_35 = arith.constant dense<0.000000e+00> : vector<8x16x16xf32>
    %100 = tpu.matmul %98, %99, %cst_35 {dimension_numbers = #tpu.dot_dimension_numbers<[2], [2], [1], [1], [0, 0, 0, 1, 1, 1], [0], [0]>} : vector<8x16x16xf32>, vector<8x16x16xf32>, vector<8x16x16xf32> -> vector<8x16x16xf32>
    "tpu.trace_stop"() : () -> ()
    %cst_36 = arith.constant 2.500000e-01 : f32
    %101 = vector.broadcast %cst_36 : f32 to vector<8x16x16xf32>
    %102 = arith.mulf %100, %101 : vector<8x16x16xf32>
    %103 = vector.broadcast %10 : vector<8x1x16xf32> to vector<8x16x16xf32>
    %104 = arith.addf %102, %103 : vector<8x16x16xf32>
    %cst_37 = arith.constant dense<0xFF800000> : vector<8x16xf32>
    %105 = vector.multi_reduction <maximumf>, %104, %cst_37 [2] : vector<8x16x16xf32> to vector<8x16xf32>
    %106 = vector.shape_cast %105 : vector<8x16xf32> to vector<8x16x1xf32>
    %107 = vector.broadcast %106 : vector<8x16x1xf32> to vector<8x16x16xf32>
    %108 = arith.subf %104, %107 : vector<8x16x16xf32>
    %109 = math.exp %108 : vector<8x16x16xf32>
    %cst_38 = arith.constant dense<0.000000e+00> : vector<8x16xf32>
    %110 = vector.multi_reduction <add>, %109, %cst_38 [2] : vector<8x16x16xf32> to vector<8x16xf32>
    %111 = vector.shape_cast %110 : vector<8x16xf32> to vector<8x16x1xf32>
    %112 = tpu.reciprocal %111 {approx = true} : vector<8x16x1xf32> -> vector<8x16x1xf32>
    %113 = vector.broadcast %112 : vector<8x16x1xf32> to vector<8x16x16xf32>
    %114 = arith.mulf %109, %113 : vector<8x16x16xf32>
    %115 = vector.extract_strided_slice %24 {offsets = [0, 0, 48], sizes = [8, 16, 16], strides = [1, 1, 1]} : vector<8x16x64xf32> to vector<8x16x16xf32>
    "tpu.trace_start"() <{level = 10 : i32, message = "bqk,bkd->bqd"}> : () -> ()
    %cst_39 = arith.constant dense<0.000000e+00> : vector<8x16x16xf32>
    %116 = tpu.matmul %114, %115, %cst_39 {dimension_numbers = #tpu.dot_dimension_numbers<[2], [1], [1], [2], [0, 0, 0, 1, 1, 2], [0], [0]>} : vector<8x16x16xf32>, vector<8x16x16xf32>, vector<8x16x16xf32> -> vector<8x16x16xf32>
    "tpu.trace_stop"() : () -> ()
    %117 = vector.shape_cast %116 : vector<8x16x16xf32> to vector<128x16xf32>
    %118 = arith.truncf %117 : vector<128x16xf32> to vector<128x16xbf16>
    %119 = vector.extract_strided_slice %26 {offsets = [48, 0], sizes = [16, 64], strides = [1, 1]} : vector<64x64xbf16> to vector<16x64xbf16>
    %cst_40 = arith.constant dense<0.000000e+00> : vector<128x64xf32>
    %120 = tpu.matmul %118, %119, %cst_40 {dimension_numbers = #tpu.dot_dimension_numbers<[1], [0], [0], [1], [0, 0, 1, 1], [], []>} : vector<128x16xbf16>, vector<16x64xbf16>, vector<128x64xf32> -> vector<128x64xf32>
    %121 = arith.addf %97, %120 : vector<128x64xf32>
    %122 = arith.addf %8, %121 : vector<128x64xf32>
    %c0_41 = arith.constant 0 : index
    %c0_42 = arith.constant 0 : index
    %c0_43 = arith.constant 0 : index
    %123 = vector.load %arg10[%c0_41, %c0_42, %c0_43] : memref<2x1x64xf32, #tpu.memory_space<vmem>>, vector<1x1x64xf32>
    %124 = vector.shape_cast %123 : vector<1x1x64xf32> to vector<1x64xf32>
    %125 = vector.broadcast %124 : vector<1x64xf32> to vector<128x64xf32>
    %126 = arith.addf %122, %125 : vector<128x64xf32>
    %c0_44 = arith.constant 0 : index
    %c0_45 = arith.constant 0 : index
    %c0_46 = arith.constant 0 : index
    %127 = vector.load %arg15[%c0_44, %c0_45, %c0_46] : memref<2x1x64xf32, #tpu.memory_space<vmem>>, vector<1x1x64xf32>
    %128 = vector.shape_cast %127 : vector<1x1x64xf32> to vector<1x64xf32>
    %c0_47 = arith.constant 0 : index
    %c0_48 = arith.constant 0 : index
    %c0_49 = arith.constant 0 : index
    %129 = vector.load %arg16[%c0_47, %c0_48, %c0_49] : memref<2x1x64xf32, #tpu.memory_space<vmem>>, vector<1x1x64xf32>
    %130 = vector.shape_cast %129 : vector<1x1x64xf32> to vector<1x64xf32>
    %cst_50 = arith.constant dense<0.000000e+00> : vector<128xf32>
    %131 = vector.multi_reduction <add>, %126, %cst_50 [1] : vector<128x64xf32> to vector<128xf32>
    %132 = vector.shape_cast %131 : vector<128xf32> to vector<128x1xf32>
    %cst_51 = arith.constant 6.400000e+01 : f32
    %133 = vector.broadcast %cst_51 : f32 to vector<128x1xf32>
    %134 = arith.divf %132, %133 : vector<128x1xf32>
    %135 = vector.broadcast %134 : vector<128x1xf32> to vector<128x64xf32>
    %136 = arith.subf %126, %135 : vector<128x64xf32>
    %137 = arith.mulf %136, %136 : vector<128x64xf32>
    %cst_52 = arith.constant dense<0.000000e+00> : vector<128xf32>
    %138 = vector.multi_reduction <add>, %137, %cst_52 [1] : vector<128x64xf32> to vector<128xf32>
    %139 = vector.shape_cast %138 : vector<128xf32> to vector<128x1xf32>
    %cst_53 = arith.constant 6.400000e+01 : f32
    %140 = vector.broadcast %cst_53 : f32 to vector<128x1xf32>
    %141 = arith.divf %139, %140 : vector<128x1xf32>
    %142 = vector.broadcast %134 : vector<128x1xf32> to vector<128x64xf32>
    %143 = arith.subf %126, %142 : vector<128x64xf32>
    %cst_54 = arith.constant 9.99999974E-6 : f32
    %144 = vector.broadcast %cst_54 : f32 to vector<128x1xf32>
    %145 = arith.addf %141, %144 : vector<128x1xf32>
    %146 = math.rsqrt %145 : vector<128x1xf32>
    %147 = vector.broadcast %146 : vector<128x1xf32> to vector<128x64xf32>
    %148 = arith.mulf %143, %147 : vector<128x64xf32>
    %149 = vector.broadcast %128 : vector<1x64xf32> to vector<128x64xf32>
    %150 = arith.mulf %148, %149 : vector<128x64xf32>
    %151 = vector.broadcast %130 : vector<1x64xf32> to vector<128x64xf32>
    %152 = arith.addf %150, %151 : vector<128x64xf32>
    %153 = arith.truncf %152 : vector<128x64xf32> to vector<128x64xbf16>
    %c0_55 = arith.constant 0 : index
    %c0_56 = arith.constant 0 : index
    %c0_57 = arith.constant 0 : index
    %154 = vector.load %arg11[%c0_55, %c0_56, %c0_57] : memref<2x64x256xbf16, #tpu.memory_space<vmem>>, vector<1x64x256xbf16>
    %155 = vector.shape_cast %154 : vector<1x64x256xbf16> to vector<64x256xbf16>
    %cst_58 = arith.constant dense<0.000000e+00> : vector<128x256xf32>
    %156 = tpu.matmul %153, %155, %cst_58 {dimension_numbers = #tpu.dot_dimension_numbers<[1], [0], [0], [1], [0, 0, 1, 1], [], []>} : vector<128x64xbf16>, vector<64x256xbf16>, vector<128x256xf32> -> vector<128x256xf32>
    %c0_59 = arith.constant 0 : index
    %c0_60 = arith.constant 0 : index
    %c0_61 = arith.constant 0 : index
    %157 = vector.load %arg12[%c0_59, %c0_60, %c0_61] : memref<2x1x256xf32, #tpu.memory_space<vmem>>, vector<1x1x256xf32>
    %158 = vector.shape_cast %157 : vector<1x1x256xf32> to vector<1x256xf32>
    %159 = vector.broadcast %158 : vector<1x256xf32> to vector<128x256xf32>
    %160 = arith.addf %156, %159 : vector<128x256xf32>
    %cst_62 = arith.constant 0.000000e+00 : f32
    %161 = vector.broadcast %cst_62 : f32 to vector<128x256xf32>
    %162 = arith.maximumf %160, %161 : vector<128x256xf32>
    %163 = arith.truncf %162 : vector<128x256xf32> to vector<128x256xbf16>
    %c0_63 = arith.constant 0 : index
    %c0_64 = arith.constant 0 : index
    %c0_65 = arith.constant 0 : index
    %164 = vector.load %arg13[%c0_63, %c0_64, %c0_65] : memref<2x256x64xbf16, #tpu.memory_space<vmem>>, vector<1x256x64xbf16>
    %165 = vector.shape_cast %164 : vector<1x256x64xbf16> to vector<256x64xbf16>
    %cst_66 = arith.constant dense<0.000000e+00> : vector<128x64xf32>
    %166 = tpu.matmul %163, %165, %cst_66 {dimension_numbers = #tpu.dot_dimension_numbers<[1], [0], [0], [1], [0, 0, 1, 1], [], []>} : vector<128x256xbf16>, vector<256x64xbf16>, vector<128x64xf32> -> vector<128x64xf32>
    %c0_67 = arith.constant 0 : index
    %c0_68 = arith.constant 0 : index
    %c0_69 = arith.constant 0 : index
    %167 = vector.load %arg14[%c0_67, %c0_68, %c0_69] : memref<2x1x64xf32, #tpu.memory_space<vmem>>, vector<1x1x64xf32>
    %168 = vector.shape_cast %167 : vector<1x1x64xf32> to vector<1x64xf32>
    %169 = vector.broadcast %168 : vector<1x64xf32> to vector<128x64xf32>
    %170 = arith.addf %166, %169 : vector<128x64xf32>
    %171 = arith.addf %152, %170 : vector<128x64xf32>
    %c0_70 = arith.constant 0 : index
    %c0_71 = arith.constant 0 : index
    %c0_72 = arith.constant 0 : index
    %172 = vector.load %arg17[%c0_70, %c0_71, %c0_72] : memref<2x1x64xf32, #tpu.memory_space<vmem>>, vector<1x1x64xf32>
    %173 = vector.shape_cast %172 : vector<1x1x64xf32> to vector<1x64xf32>
    %c0_73 = arith.constant 0 : index
    %c0_74 = arith.constant 0 : index
    %c0_75 = arith.constant 0 : index
    %174 = vector.load %arg18[%c0_73, %c0_74, %c0_75] : memref<2x1x64xf32, #tpu.memory_space<vmem>>, vector<1x1x64xf32>
    %175 = vector.shape_cast %174 : vector<1x1x64xf32> to vector<1x64xf32>
    %cst_76 = arith.constant dense<0.000000e+00> : vector<128xf32>
    %176 = vector.multi_reduction <add>, %171, %cst_76 [1] : vector<128x64xf32> to vector<128xf32>
    %177 = vector.shape_cast %176 : vector<128xf32> to vector<128x1xf32>
    %cst_77 = arith.constant 6.400000e+01 : f32
    %178 = vector.broadcast %cst_77 : f32 to vector<128x1xf32>
    %179 = arith.divf %177, %178 : vector<128x1xf32>
    %180 = vector.broadcast %179 : vector<128x1xf32> to vector<128x64xf32>
    %181 = arith.subf %171, %180 : vector<128x64xf32>
    %182 = arith.mulf %181, %181 : vector<128x64xf32>
    %cst_78 = arith.constant dense<0.000000e+00> : vector<128xf32>
    %183 = vector.multi_reduction <add>, %182, %cst_78 [1] : vector<128x64xf32> to vector<128xf32>
    %184 = vector.shape_cast %183 : vector<128xf32> to vector<128x1xf32>
    %cst_79 = arith.constant 6.400000e+01 : f32
    %185 = vector.broadcast %cst_79 : f32 to vector<128x1xf32>
    %186 = arith.divf %184, %185 : vector<128x1xf32>
    %187 = vector.broadcast %179 : vector<128x1xf32> to vector<128x64xf32>
    %188 = arith.subf %171, %187 : vector<128x64xf32>
    %cst_80 = arith.constant 9.99999974E-6 : f32
    %189 = vector.broadcast %cst_80 : f32 to vector<128x1xf32>
    %190 = arith.addf %186, %189 : vector<128x1xf32>
    %191 = math.rsqrt %190 : vector<128x1xf32>
    %192 = vector.broadcast %191 : vector<128x1xf32> to vector<128x64xf32>
    %193 = arith.mulf %188, %192 : vector<128x64xf32>
    %194 = vector.broadcast %173 : vector<1x64xf32> to vector<128x64xf32>
    %195 = arith.mulf %193, %194 : vector<128x64xf32>
    %196 = vector.broadcast %175 : vector<1x64xf32> to vector<128x64xf32>
    %197 = arith.addf %195, %196 : vector<128x64xf32>
    %198 = arith.truncf %197 : vector<128x64xf32> to vector<128x64xbf16>
    %c1 = arith.constant 1 : index
    %c0_81 = arith.constant 0 : index
    %c0_82 = arith.constant 0 : index
    %199 = vector.load %arg7[%c1, %c0_81, %c0_82] : memref<2x64x192xbf16, #tpu.memory_space<vmem>>, vector<1x64x192xbf16>
    %200 = vector.shape_cast %199 : vector<1x64x192xbf16> to vector<64x192xbf16>
    %cst_83 = arith.constant dense<0.000000e+00> : vector<128x192xf32>
    %201 = tpu.matmul %198, %200, %cst_83 {dimension_numbers = #tpu.dot_dimension_numbers<[1], [0], [0], [1], [0, 0, 1, 1], [], []>} : vector<128x64xbf16>, vector<64x192xbf16>, vector<128x192xf32> -> vector<128x192xf32>
    %c1_84 = arith.constant 1 : index
    %c0_85 = arith.constant 0 : index
    %c0_86 = arith.constant 0 : index
    %202 = vector.load %arg8[%c1_84, %c0_85, %c0_86] : memref<2x1x192xf32, #tpu.memory_space<vmem>>, vector<1x1x192xf32>
    %203 = vector.shape_cast %202 : vector<1x1x192xf32> to vector<1x192xf32>
    %204 = vector.broadcast %203 : vector<1x192xf32> to vector<128x192xf32>
    %205 = arith.addf %201, %204 : vector<128x192xf32>
    %206 = vector.extract_strided_slice %205 {offsets = [0, 0], sizes = [128, 64], strides = [1, 1]} : vector<128x192xf32> to vector<128x64xf32>
    %207 = vector.shape_cast %206 : vector<128x64xf32> to vector<8x16x64xf32>
    %208 = vector.extract_strided_slice %205 {offsets = [0, 64], sizes = [128, 64], strides = [1, 1]} : vector<128x192xf32> to vector<128x64xf32>
    %209 = vector.shape_cast %208 : vector<128x64xf32> to vector<8x16x64xf32>
    %210 = vector.extract_strided_slice %205 {offsets = [0, 128], sizes = [128, 64], strides = [1, 1]} : vector<128x192xf32> to vector<128x64xf32>
    %211 = vector.shape_cast %210 : vector<128x64xf32> to vector<8x16x64xf32>
    %c1_87 = arith.constant 1 : index
    %c0_88 = arith.constant 0 : index
    %c0_89 = arith.constant 0 : index
    %212 = vector.load %arg9[%c1_87, %c0_88, %c0_89] : memref<2x64x64xbf16, #tpu.memory_space<vmem>>, vector<1x64x64xbf16>
    %213 = vector.shape_cast %212 : vector<1x64x64xbf16> to vector<64x64xbf16>
    %214 = vector.extract_strided_slice %207 {offsets = [0, 0, 0], sizes = [8, 16, 16], strides = [1, 1, 1]} : vector<8x16x64xf32> to vector<8x16x16xf32>
    %215 = vector.extract_strided_slice %209 {offsets = [0, 0, 0], sizes = [8, 16, 16], strides = [1, 1, 1]} : vector<8x16x64xf32> to vector<8x16x16xf32>
    "tpu.trace_start"() <{level = 10 : i32, message = "bqd,bkd->bqk"}> : () -> ()
    %cst_90 = arith.constant dense<0.000000e+00> : vector<8x16x16xf32>
    %216 = tpu.matmul %214, %215, %cst_90 {dimension_numbers = #tpu.dot_dimension_numbers<[2], [2], [1], [1], [0, 0, 0, 1, 1, 1], [0], [0]>} : vector<8x16x16xf32>, vector<8x16x16xf32>, vector<8x16x16xf32> -> vector<8x16x16xf32>
    "tpu.trace_stop"() : () -> ()
    %cst_91 = arith.constant 2.500000e-01 : f32
    %217 = vector.broadcast %cst_91 : f32 to vector<8x16x16xf32>
    %218 = arith.mulf %216, %217 : vector<8x16x16xf32>
    %219 = vector.broadcast %10 : vector<8x1x16xf32> to vector<8x16x16xf32>
    %220 = arith.addf %218, %219 : vector<8x16x16xf32>
    %cst_92 = arith.constant dense<0xFF800000> : vector<8x16xf32>
    %221 = vector.multi_reduction <maximumf>, %220, %cst_92 [2] : vector<8x16x16xf32> to vector<8x16xf32>
    %222 = vector.shape_cast %221 : vector<8x16xf32> to vector<8x16x1xf32>
    %223 = vector.broadcast %222 : vector<8x16x1xf32> to vector<8x16x16xf32>
    %224 = arith.subf %220, %223 : vector<8x16x16xf32>
    %225 = math.exp %224 : vector<8x16x16xf32>
    %cst_93 = arith.constant dense<0.000000e+00> : vector<8x16xf32>
    %226 = vector.multi_reduction <add>, %225, %cst_93 [2] : vector<8x16x16xf32> to vector<8x16xf32>
    %227 = vector.shape_cast %226 : vector<8x16xf32> to vector<8x16x1xf32>
    %228 = tpu.reciprocal %227 {approx = true} : vector<8x16x1xf32> -> vector<8x16x1xf32>
    %229 = vector.broadcast %228 : vector<8x16x1xf32> to vector<8x16x16xf32>
    %230 = arith.mulf %225, %229 : vector<8x16x16xf32>
    %231 = vector.extract_strided_slice %211 {offsets = [0, 0, 0], sizes = [8, 16, 16], strides = [1, 1, 1]} : vector<8x16x64xf32> to vector<8x16x16xf32>
    "tpu.trace_start"() <{level = 10 : i32, message = "bqk,bkd->bqd"}> : () -> ()
    %cst_94 = arith.constant dense<0.000000e+00> : vector<8x16x16xf32>
    %232 = tpu.matmul %230, %231, %cst_94 {dimension_numbers = #tpu.dot_dimension_numbers<[2], [1], [1], [2], [0, 0, 0, 1, 1, 2], [0], [0]>} : vector<8x16x16xf32>, vector<8x16x16xf32>, vector<8x16x16xf32> -> vector<8x16x16xf32>
    "tpu.trace_stop"() : () -> ()
    %233 = vector.shape_cast %232 : vector<8x16x16xf32> to vector<128x16xf32>
    %234 = arith.truncf %233 : vector<128x16xf32> to vector<128x16xbf16>
    %235 = vector.extract_strided_slice %213 {offsets = [0, 0], sizes = [16, 64], strides = [1, 1]} : vector<64x64xbf16> to vector<16x64xbf16>
    %cst_95 = arith.constant dense<0.000000e+00> : vector<128x64xf32>
    %236 = tpu.matmul %234, %235, %cst_95 {dimension_numbers = #tpu.dot_dimension_numbers<[1], [0], [0], [1], [0, 0, 1, 1], [], []>} : vector<128x16xbf16>, vector<16x64xbf16>, vector<128x64xf32> -> vector<128x64xf32>
    %237 = vector.extract_strided_slice %207 {offsets = [0, 0, 16], sizes = [8, 16, 16], strides = [1, 1, 1]} : vector<8x16x64xf32> to vector<8x16x16xf32>
    %238 = vector.extract_strided_slice %209 {offsets = [0, 0, 16], sizes = [8, 16, 16], strides = [1, 1, 1]} : vector<8x16x64xf32> to vector<8x16x16xf32>
    "tpu.trace_start"() <{level = 10 : i32, message = "bqd,bkd->bqk"}> : () -> ()
    %cst_96 = arith.constant dense<0.000000e+00> : vector<8x16x16xf32>
    %239 = tpu.matmul %237, %238, %cst_96 {dimension_numbers = #tpu.dot_dimension_numbers<[2], [2], [1], [1], [0, 0, 0, 1, 1, 1], [0], [0]>} : vector<8x16x16xf32>, vector<8x16x16xf32>, vector<8x16x16xf32> -> vector<8x16x16xf32>
    "tpu.trace_stop"() : () -> ()
    %cst_97 = arith.constant 2.500000e-01 : f32
    %240 = vector.broadcast %cst_97 : f32 to vector<8x16x16xf32>
    %241 = arith.mulf %239, %240 : vector<8x16x16xf32>
    %242 = vector.broadcast %10 : vector<8x1x16xf32> to vector<8x16x16xf32>
    %243 = arith.addf %241, %242 : vector<8x16x16xf32>
    %cst_98 = arith.constant dense<0xFF800000> : vector<8x16xf32>
    %244 = vector.multi_reduction <maximumf>, %243, %cst_98 [2] : vector<8x16x16xf32> to vector<8x16xf32>
    %245 = vector.shape_cast %244 : vector<8x16xf32> to vector<8x16x1xf32>
    %246 = vector.broadcast %245 : vector<8x16x1xf32> to vector<8x16x16xf32>
    %247 = arith.subf %243, %246 : vector<8x16x16xf32>
    %248 = math.exp %247 : vector<8x16x16xf32>
    %cst_99 = arith.constant dense<0.000000e+00> : vector<8x16xf32>
    %249 = vector.multi_reduction <add>, %248, %cst_99 [2] : vector<8x16x16xf32> to vector<8x16xf32>
    %250 = vector.shape_cast %249 : vector<8x16xf32> to vector<8x16x1xf32>
    %251 = tpu.reciprocal %250 {approx = true} : vector<8x16x1xf32> -> vector<8x16x1xf32>
    %252 = vector.broadcast %251 : vector<8x16x1xf32> to vector<8x16x16xf32>
    %253 = arith.mulf %248, %252 : vector<8x16x16xf32>
    %254 = vector.extract_strided_slice %211 {offsets = [0, 0, 16], sizes = [8, 16, 16], strides = [1, 1, 1]} : vector<8x16x64xf32> to vector<8x16x16xf32>
    "tpu.trace_start"() <{level = 10 : i32, message = "bqk,bkd->bqd"}> : () -> ()
    %cst_100 = arith.constant dense<0.000000e+00> : vector<8x16x16xf32>
    %255 = tpu.matmul %253, %254, %cst_100 {dimension_numbers = #tpu.dot_dimension_numbers<[2], [1], [1], [2], [0, 0, 0, 1, 1, 2], [0], [0]>} : vector<8x16x16xf32>, vector<8x16x16xf32>, vector<8x16x16xf32> -> vector<8x16x16xf32>
    "tpu.trace_stop"() : () -> ()
    %256 = vector.shape_cast %255 : vector<8x16x16xf32> to vector<128x16xf32>
    %257 = arith.truncf %256 : vector<128x16xf32> to vector<128x16xbf16>
    %258 = vector.extract_strided_slice %213 {offsets = [16, 0], sizes = [16, 64], strides = [1, 1]} : vector<64x64xbf16> to vector<16x64xbf16>
    %cst_101 = arith.constant dense<0.000000e+00> : vector<128x64xf32>
    %259 = tpu.matmul %257, %258, %cst_101 {dimension_numbers = #tpu.dot_dimension_numbers<[1], [0], [0], [1], [0, 0, 1, 1], [], []>} : vector<128x16xbf16>, vector<16x64xbf16>, vector<128x64xf32> -> vector<128x64xf32>
    %260 = arith.addf %236, %259 : vector<128x64xf32>
    %261 = vector.extract_strided_slice %207 {offsets = [0, 0, 32], sizes = [8, 16, 16], strides = [1, 1, 1]} : vector<8x16x64xf32> to vector<8x16x16xf32>
    %262 = vector.extract_strided_slice %209 {offsets = [0, 0, 32], sizes = [8, 16, 16], strides = [1, 1, 1]} : vector<8x16x64xf32> to vector<8x16x16xf32>
    "tpu.trace_start"() <{level = 10 : i32, message = "bqd,bkd->bqk"}> : () -> ()
    %cst_102 = arith.constant dense<0.000000e+00> : vector<8x16x16xf32>
    %263 = tpu.matmul %261, %262, %cst_102 {dimension_numbers = #tpu.dot_dimension_numbers<[2], [2], [1], [1], [0, 0, 0, 1, 1, 1], [0], [0]>} : vector<8x16x16xf32>, vector<8x16x16xf32>, vector<8x16x16xf32> -> vector<8x16x16xf32>
    "tpu.trace_stop"() : () -> ()
    %cst_103 = arith.constant 2.500000e-01 : f32
    %264 = vector.broadcast %cst_103 : f32 to vector<8x16x16xf32>
    %265 = arith.mulf %263, %264 : vector<8x16x16xf32>
    %266 = vector.broadcast %10 : vector<8x1x16xf32> to vector<8x16x16xf32>
    %267 = arith.addf %265, %266 : vector<8x16x16xf32>
    %cst_104 = arith.constant dense<0xFF800000> : vector<8x16xf32>
    %268 = vector.multi_reduction <maximumf>, %267, %cst_104 [2] : vector<8x16x16xf32> to vector<8x16xf32>
    %269 = vector.shape_cast %268 : vector<8x16xf32> to vector<8x16x1xf32>
    %270 = vector.broadcast %269 : vector<8x16x1xf32> to vector<8x16x16xf32>
    %271 = arith.subf %267, %270 : vector<8x16x16xf32>
    %272 = math.exp %271 : vector<8x16x16xf32>
    %cst_105 = arith.constant dense<0.000000e+00> : vector<8x16xf32>
    %273 = vector.multi_reduction <add>, %272, %cst_105 [2] : vector<8x16x16xf32> to vector<8x16xf32>
    %274 = vector.shape_cast %273 : vector<8x16xf32> to vector<8x16x1xf32>
    %275 = tpu.reciprocal %274 {approx = true} : vector<8x16x1xf32> -> vector<8x16x1xf32>
    %276 = vector.broadcast %275 : vector<8x16x1xf32> to vector<8x16x16xf32>
    %277 = arith.mulf %272, %276 : vector<8x16x16xf32>
    %278 = vector.extract_strided_slice %211 {offsets = [0, 0, 32], sizes = [8, 16, 16], strides = [1, 1, 1]} : vector<8x16x64xf32> to vector<8x16x16xf32>
    "tpu.trace_start"() <{level = 10 : i32, message = "bqk,bkd->bqd"}> : () -> ()
    %cst_106 = arith.constant dense<0.000000e+00> : vector<8x16x16xf32>
    %279 = tpu.matmul %277, %278, %cst_106 {dimension_numbers = #tpu.dot_dimension_numbers<[2], [1], [1], [2], [0, 0, 0, 1, 1, 2], [0], [0]>} : vector<8x16x16xf32>, vector<8x16x16xf32>, vector<8x16x16xf32> -> vector<8x16x16xf32>
    "tpu.trace_stop"() : () -> ()
    %280 = vector.shape_cast %279 : vector<8x16x16xf32> to vector<128x16xf32>
    %281 = arith.truncf %280 : vector<128x16xf32> to vector<128x16xbf16>
    %282 = vector.extract_strided_slice %213 {offsets = [32, 0], sizes = [16, 64], strides = [1, 1]} : vector<64x64xbf16> to vector<16x64xbf16>
    %cst_107 = arith.constant dense<0.000000e+00> : vector<128x64xf32>
    %283 = tpu.matmul %281, %282, %cst_107 {dimension_numbers = #tpu.dot_dimension_numbers<[1], [0], [0], [1], [0, 0, 1, 1], [], []>} : vector<128x16xbf16>, vector<16x64xbf16>, vector<128x64xf32> -> vector<128x64xf32>
    %284 = arith.addf %260, %283 : vector<128x64xf32>
    %285 = vector.extract_strided_slice %207 {offsets = [0, 0, 48], sizes = [8, 16, 16], strides = [1, 1, 1]} : vector<8x16x64xf32> to vector<8x16x16xf32>
    %286 = vector.extract_strided_slice %209 {offsets = [0, 0, 48], sizes = [8, 16, 16], strides = [1, 1, 1]} : vector<8x16x64xf32> to vector<8x16x16xf32>
    "tpu.trace_start"() <{level = 10 : i32, message = "bqd,bkd->bqk"}> : () -> ()
    %cst_108 = arith.constant dense<0.000000e+00> : vector<8x16x16xf32>
    %287 = tpu.matmul %285, %286, %cst_108 {dimension_numbers = #tpu.dot_dimension_numbers<[2], [2], [1], [1], [0, 0, 0, 1, 1, 1], [0], [0]>} : vector<8x16x16xf32>, vector<8x16x16xf32>, vector<8x16x16xf32> -> vector<8x16x16xf32>
    "tpu.trace_stop"() : () -> ()
    %cst_109 = arith.constant 2.500000e-01 : f32
    %288 = vector.broadcast %cst_109 : f32 to vector<8x16x16xf32>
    %289 = arith.mulf %287, %288 : vector<8x16x16xf32>
    %290 = vector.broadcast %10 : vector<8x1x16xf32> to vector<8x16x16xf32>
    %291 = arith.addf %289, %290 : vector<8x16x16xf32>
    %cst_110 = arith.constant dense<0xFF800000> : vector<8x16xf32>
    %292 = vector.multi_reduction <maximumf>, %291, %cst_110 [2] : vector<8x16x16xf32> to vector<8x16xf32>
    %293 = vector.shape_cast %292 : vector<8x16xf32> to vector<8x16x1xf32>
    %294 = vector.broadcast %293 : vector<8x16x1xf32> to vector<8x16x16xf32>
    %295 = arith.subf %291, %294 : vector<8x16x16xf32>
    %296 = math.exp %295 : vector<8x16x16xf32>
    %cst_111 = arith.constant dense<0.000000e+00> : vector<8x16xf32>
    %297 = vector.multi_reduction <add>, %296, %cst_111 [2] : vector<8x16x16xf32> to vector<8x16xf32>
    %298 = vector.shape_cast %297 : vector<8x16xf32> to vector<8x16x1xf32>
    %299 = tpu.reciprocal %298 {approx = true} : vector<8x16x1xf32> -> vector<8x16x1xf32>
    %300 = vector.broadcast %299 : vector<8x16x1xf32> to vector<8x16x16xf32>
    %301 = arith.mulf %296, %300 : vector<8x16x16xf32>
    %302 = vector.extract_strided_slice %211 {offsets = [0, 0, 48], sizes = [8, 16, 16], strides = [1, 1, 1]} : vector<8x16x64xf32> to vector<8x16x16xf32>
    "tpu.trace_start"() <{level = 10 : i32, message = "bqk,bkd->bqd"}> : () -> ()
    %cst_112 = arith.constant dense<0.000000e+00> : vector<8x16x16xf32>
    %303 = tpu.matmul %301, %302, %cst_112 {dimension_numbers = #tpu.dot_dimension_numbers<[2], [1], [1], [2], [0, 0, 0, 1, 1, 2], [0], [0]>} : vector<8x16x16xf32>, vector<8x16x16xf32>, vector<8x16x16xf32> -> vector<8x16x16xf32>
    "tpu.trace_stop"() : () -> ()
    %304 = vector.shape_cast %303 : vector<8x16x16xf32> to vector<128x16xf32>
    %305 = arith.truncf %304 : vector<128x16xf32> to vector<128x16xbf16>
    %306 = vector.extract_strided_slice %213 {offsets = [48, 0], sizes = [16, 64], strides = [1, 1]} : vector<64x64xbf16> to vector<16x64xbf16>
    %cst_113 = arith.constant dense<0.000000e+00> : vector<128x64xf32>
    %307 = tpu.matmul %305, %306, %cst_113 {dimension_numbers = #tpu.dot_dimension_numbers<[1], [0], [0], [1], [0, 0, 1, 1], [], []>} : vector<128x16xbf16>, vector<16x64xbf16>, vector<128x64xf32> -> vector<128x64xf32>
    %308 = arith.addf %284, %307 : vector<128x64xf32>
    %309 = arith.addf %197, %308 : vector<128x64xf32>
    %c1_114 = arith.constant 1 : index
    %c0_115 = arith.constant 0 : index
    %c0_116 = arith.constant 0 : index
    %310 = vector.load %arg10[%c1_114, %c0_115, %c0_116] : memref<2x1x64xf32, #tpu.memory_space<vmem>>, vector<1x1x64xf32>
    %311 = vector.shape_cast %310 : vector<1x1x64xf32> to vector<1x64xf32>
    %312 = vector.broadcast %311 : vector<1x64xf32> to vector<128x64xf32>
    %313 = arith.addf %309, %312 : vector<128x64xf32>
    %c1_117 = arith.constant 1 : index
    %c0_118 = arith.constant 0 : index
    %c0_119 = arith.constant 0 : index
    %314 = vector.load %arg15[%c1_117, %c0_118, %c0_119] : memref<2x1x64xf32, #tpu.memory_space<vmem>>, vector<1x1x64xf32>
    %315 = vector.shape_cast %314 : vector<1x1x64xf32> to vector<1x64xf32>
    %c1_120 = arith.constant 1 : index
    %c0_121 = arith.constant 0 : index
    %c0_122 = arith.constant 0 : index
    %316 = vector.load %arg16[%c1_120, %c0_121, %c0_122] : memref<2x1x64xf32, #tpu.memory_space<vmem>>, vector<1x1x64xf32>
    %317 = vector.shape_cast %316 : vector<1x1x64xf32> to vector<1x64xf32>
    %cst_123 = arith.constant dense<0.000000e+00> : vector<128xf32>
    %318 = vector.multi_reduction <add>, %313, %cst_123 [1] : vector<128x64xf32> to vector<128xf32>
    %319 = vector.shape_cast %318 : vector<128xf32> to vector<128x1xf32>
    %cst_124 = arith.constant 6.400000e+01 : f32
    %320 = vector.broadcast %cst_124 : f32 to vector<128x1xf32>
    %321 = arith.divf %319, %320 : vector<128x1xf32>
    %322 = vector.broadcast %321 : vector<128x1xf32> to vector<128x64xf32>
    %323 = arith.subf %313, %322 : vector<128x64xf32>
    %324 = arith.mulf %323, %323 : vector<128x64xf32>
    %cst_125 = arith.constant dense<0.000000e+00> : vector<128xf32>
    %325 = vector.multi_reduction <add>, %324, %cst_125 [1] : vector<128x64xf32> to vector<128xf32>
    %326 = vector.shape_cast %325 : vector<128xf32> to vector<128x1xf32>
    %cst_126 = arith.constant 6.400000e+01 : f32
    %327 = vector.broadcast %cst_126 : f32 to vector<128x1xf32>
    %328 = arith.divf %326, %327 : vector<128x1xf32>
    %329 = vector.broadcast %321 : vector<128x1xf32> to vector<128x64xf32>
    %330 = arith.subf %313, %329 : vector<128x64xf32>
    %cst_127 = arith.constant 9.99999974E-6 : f32
    %331 = vector.broadcast %cst_127 : f32 to vector<128x1xf32>
    %332 = arith.addf %328, %331 : vector<128x1xf32>
    %333 = math.rsqrt %332 : vector<128x1xf32>
    %334 = vector.broadcast %333 : vector<128x1xf32> to vector<128x64xf32>
    %335 = arith.mulf %330, %334 : vector<128x64xf32>
    %336 = vector.broadcast %315 : vector<1x64xf32> to vector<128x64xf32>
    %337 = arith.mulf %335, %336 : vector<128x64xf32>
    %338 = vector.broadcast %317 : vector<1x64xf32> to vector<128x64xf32>
    %339 = arith.addf %337, %338 : vector<128x64xf32>
    %340 = arith.truncf %339 : vector<128x64xf32> to vector<128x64xbf16>
    %c1_128 = arith.constant 1 : index
    %c0_129 = arith.constant 0 : index
    %c0_130 = arith.constant 0 : index
    %341 = vector.load %arg11[%c1_128, %c0_129, %c0_130] : memref<2x64x256xbf16, #tpu.memory_space<vmem>>, vector<1x64x256xbf16>
    %342 = vector.shape_cast %341 : vector<1x64x256xbf16> to vector<64x256xbf16>
    %cst_131 = arith.constant dense<0.000000e+00> : vector<128x256xf32>
    %343 = tpu.matmul %340, %342, %cst_131 {dimension_numbers = #tpu.dot_dimension_numbers<[1], [0], [0], [1], [0, 0, 1, 1], [], []>} : vector<128x64xbf16>, vector<64x256xbf16>, vector<128x256xf32> -> vector<128x256xf32>
    %c1_132 = arith.constant 1 : index
    %c0_133 = arith.constant 0 : index
    %c0_134 = arith.constant 0 : index
    %344 = vector.load %arg12[%c1_132, %c0_133, %c0_134] : memref<2x1x256xf32, #tpu.memory_space<vmem>>, vector<1x1x256xf32>
    %345 = vector.shape_cast %344 : vector<1x1x256xf32> to vector<1x256xf32>
    %346 = vector.broadcast %345 : vector<1x256xf32> to vector<128x256xf32>
    %347 = arith.addf %343, %346 : vector<128x256xf32>
    %cst_135 = arith.constant 0.000000e+00 : f32
    %348 = vector.broadcast %cst_135 : f32 to vector<128x256xf32>
    %349 = arith.maximumf %347, %348 : vector<128x256xf32>
    %350 = arith.truncf %349 : vector<128x256xf32> to vector<128x256xbf16>
    %c1_136 = arith.constant 1 : index
    %c0_137 = arith.constant 0 : index
    %c0_138 = arith.constant 0 : index
    %351 = vector.load %arg13[%c1_136, %c0_137, %c0_138] : memref<2x256x64xbf16, #tpu.memory_space<vmem>>, vector<1x256x64xbf16>
    %352 = vector.shape_cast %351 : vector<1x256x64xbf16> to vector<256x64xbf16>
    %cst_139 = arith.constant dense<0.000000e+00> : vector<128x64xf32>
    %353 = tpu.matmul %350, %352, %cst_139 {dimension_numbers = #tpu.dot_dimension_numbers<[1], [0], [0], [1], [0, 0, 1, 1], [], []>} : vector<128x256xbf16>, vector<256x64xbf16>, vector<128x64xf32> -> vector<128x64xf32>
    %c1_140 = arith.constant 1 : index
    %c0_141 = arith.constant 0 : index
    %c0_142 = arith.constant 0 : index
    %354 = vector.load %arg14[%c1_140, %c0_141, %c0_142] : memref<2x1x64xf32, #tpu.memory_space<vmem>>, vector<1x1x64xf32>
    %355 = vector.shape_cast %354 : vector<1x1x64xf32> to vector<1x64xf32>
    %356 = vector.broadcast %355 : vector<1x64xf32> to vector<128x64xf32>
    %357 = arith.addf %353, %356 : vector<128x64xf32>
    %358 = arith.addf %339, %357 : vector<128x64xf32>
    %c1_143 = arith.constant 1 : index
    %c0_144 = arith.constant 0 : index
    %c0_145 = arith.constant 0 : index
    %359 = vector.load %arg17[%c1_143, %c0_144, %c0_145] : memref<2x1x64xf32, #tpu.memory_space<vmem>>, vector<1x1x64xf32>
    %360 = vector.shape_cast %359 : vector<1x1x64xf32> to vector<1x64xf32>
    %c1_146 = arith.constant 1 : index
    %c0_147 = arith.constant 0 : index
    %c0_148 = arith.constant 0 : index
    %361 = vector.load %arg18[%c1_146, %c0_147, %c0_148] : memref<2x1x64xf32, #tpu.memory_space<vmem>>, vector<1x1x64xf32>
    %362 = vector.shape_cast %361 : vector<1x1x64xf32> to vector<1x64xf32>
    %cst_149 = arith.constant dense<0.000000e+00> : vector<128xf32>
    %363 = vector.multi_reduction <add>, %358, %cst_149 [1] : vector<128x64xf32> to vector<128xf32>
    %364 = vector.shape_cast %363 : vector<128xf32> to vector<128x1xf32>
    %cst_150 = arith.constant 6.400000e+01 : f32
    %365 = vector.broadcast %cst_150 : f32 to vector<128x1xf32>
    %366 = arith.divf %364, %365 : vector<128x1xf32>
    %367 = vector.broadcast %366 : vector<128x1xf32> to vector<128x64xf32>
    %368 = arith.subf %358, %367 : vector<128x64xf32>
    %369 = arith.mulf %368, %368 : vector<128x64xf32>
    %cst_151 = arith.constant dense<0.000000e+00> : vector<128xf32>
    %370 = vector.multi_reduction <add>, %369, %cst_151 [1] : vector<128x64xf32> to vector<128xf32>
    %371 = vector.shape_cast %370 : vector<128xf32> to vector<128x1xf32>
    %cst_152 = arith.constant 6.400000e+01 : f32
    %372 = vector.broadcast %cst_152 : f32 to vector<128x1xf32>
    %373 = arith.divf %371, %372 : vector<128x1xf32>
    %374 = vector.broadcast %366 : vector<128x1xf32> to vector<128x64xf32>
    %375 = arith.subf %358, %374 : vector<128x64xf32>
    %cst_153 = arith.constant 9.99999974E-6 : f32
    %376 = vector.broadcast %cst_153 : f32 to vector<128x1xf32>
    %377 = arith.addf %373, %376 : vector<128x1xf32>
    %378 = math.rsqrt %377 : vector<128x1xf32>
    %379 = vector.broadcast %378 : vector<128x1xf32> to vector<128x64xf32>
    %380 = arith.mulf %375, %379 : vector<128x64xf32>
    %381 = vector.broadcast %360 : vector<1x64xf32> to vector<128x64xf32>
    %382 = arith.mulf %380, %381 : vector<128x64xf32>
    %383 = vector.broadcast %362 : vector<1x64xf32> to vector<128x64xf32>
    %384 = arith.addf %382, %383 : vector<128x64xf32>
    %385 = vector.shape_cast %384 : vector<128x64xf32> to vector<8x16x64xf32>
    %c0_154 = arith.constant 0 : index
    %c0_155 = arith.constant 0 : index
    %386 = vector.load %arg4[%c0_154, %c0_155] : memref<8x16xf32, #tpu.memory_space<vmem>>, vector<8x16xf32>
    %387 = vector.shape_cast %386 : vector<8x16xf32> to vector<8x16x1xf32>
    %388 = vector.broadcast %387 : vector<8x16x1xf32> to vector<8x16x64xf32>
    %389 = arith.mulf %385, %388 : vector<8x16x64xf32>
    %cst_156 = arith.constant dense<0.000000e+00> : vector<8x64xf32>
    %390 = vector.multi_reduction <add>, %389, %cst_156 [1] : vector<8x16x64xf32> to vector<8x64xf32>
    %391 = arith.truncf %390 : vector<8x64xf32> to vector<8x64xbf16>
    %c0_157 = arith.constant 0 : index
    %c0_158 = arith.constant 0 : index
    %392 = vector.load %arg19[%c0_157, %c0_158] : memref<64x385xbf16, #tpu.memory_space<vmem>>, vector<64x385xbf16>
    %cst_159 = arith.constant dense<0.000000e+00> : vector<8x385xf32>
    %393 = tpu.matmul %391, %392, %cst_159 {dimension_numbers = #tpu.dot_dimension_numbers<[1], [0], [0], [1], [0, 0, 1, 1], [], []>} : vector<8x64xbf16>, vector<64x385xbf16>, vector<8x385xf32> -> vector<8x385xf32>
    %c0_160 = arith.constant 0 : index
    %c0_161 = arith.constant 0 : index
    %394 = vector.load %arg20[%c0_160, %c0_161] : memref<1x385xf32, #tpu.memory_space<vmem>>, vector<1x385xf32>
    %395 = vector.broadcast %394 : vector<1x385xf32> to vector<8x385xf32>
    %396 = arith.addf %393, %395 : vector<8x385xf32>
    %397 = vector.extract_strided_slice %396 {offsets = [0, 0], sizes = [8, 256], strides = [1, 1]} : vector<8x385xf32> to vector<8x256xf32>
    %398 = math.absf %397 : vector<8x256xf32>
    %399 = vector.extract_strided_slice %396 {offsets = [0, 256], sizes = [8, 64], strides = [1, 1]} : vector<8x385xf32> to vector<8x64xf32>
    %400 = vector.extract_strided_slice %396 {offsets = [0, 320], sizes = [8, 64], strides = [1, 1]} : vector<8x385xf32> to vector<8x64xf32>
    %401 = math.absf %400 : vector<8x64xf32>
    %402 = vector.extract_strided_slice %396 {offsets = [0, 384], sizes = [8, 1], strides = [1, 1]} : vector<8x385xf32> to vector<8x1xf32>
    %c0_162 = arith.constant 0 : index
    %c0_163 = arith.constant 0 : index
    %403 = vector.load %arg1[%c0_162, %c0_163] : memref<8x4xf32, #tpu.memory_space<vmem>>, vector<8x4xf32>
    %404 = vector.extract_strided_slice %403 {offsets = [0, 0], sizes = [8, 1], strides = [1, 1]} : vector<8x4xf32> to vector<8x1xf32>
    %405 = vector.extract_strided_slice %398 {offsets = [0, 0], sizes = [8, 64], strides = [1, 1]} : vector<8x256xf32> to vector<8x64xf32>
    %406 = vector.broadcast %404 : vector<8x1xf32> to vector<8x64xf32>
    %407 = arith.mulf %406, %405 : vector<8x64xf32>
    %408 = arith.addf %399, %407 : vector<8x64xf32>
    %409 = vector.extract_strided_slice %403 {offsets = [0, 1], sizes = [8, 1], strides = [1, 1]} : vector<8x4xf32> to vector<8x1xf32>
    %410 = vector.extract_strided_slice %398 {offsets = [0, 64], sizes = [8, 64], strides = [1, 1]} : vector<8x256xf32> to vector<8x64xf32>
    %411 = vector.broadcast %409 : vector<8x1xf32> to vector<8x64xf32>
    %412 = arith.mulf %411, %410 : vector<8x64xf32>
    %413 = arith.addf %408, %412 : vector<8x64xf32>
    %414 = vector.extract_strided_slice %403 {offsets = [0, 2], sizes = [8, 1], strides = [1, 1]} : vector<8x4xf32> to vector<8x1xf32>
    %415 = vector.extract_strided_slice %398 {offsets = [0, 128], sizes = [8, 64], strides = [1, 1]} : vector<8x256xf32> to vector<8x64xf32>
    %416 = vector.broadcast %414 : vector<8x1xf32> to vector<8x64xf32>
    %417 = arith.mulf %416, %415 : vector<8x64xf32>
    %418 = arith.addf %413, %417 : vector<8x64xf32>
    %419 = vector.extract_strided_slice %403 {offsets = [0, 3], sizes = [8, 1], strides = [1, 1]} : vector<8x4xf32> to vector<8x1xf32>
    %420 = vector.extract_strided_slice %398 {offsets = [0, 192], sizes = [8, 64], strides = [1, 1]} : vector<8x256xf32> to vector<8x64xf32>
    %421 = vector.broadcast %419 : vector<8x1xf32> to vector<8x64xf32>
    %422 = arith.mulf %421, %420 : vector<8x64xf32>
    %423 = arith.addf %418, %422 : vector<8x64xf32>
    %cst_164 = arith.constant 0.000000e+00 : f32
    %424 = vector.broadcast %cst_164 : f32 to vector<8x64xf32>
    %425 = arith.cmpf ogt, %423, %424 : vector<8x64xf32>
    %cst_165 = arith.constant 0.000000e+00 : f32
    %426 = vector.broadcast %cst_165 : f32 to vector<8x64xf32>
    %427 = arith.minimumf %423, %426 : vector<8x64xf32>
    %428 = math.exp %427 : vector<8x64xf32>
    %cst_166 = arith.constant 1.000000e+00 : f32
    %429 = vector.broadcast %cst_166 : f32 to vector<8x64xf32>
    %430 = arith.subf %428, %429 : vector<8x64xf32>
    %431 = arith.select %425, %423, %430 : vector<8x64xi1>, vector<8x64xf32>
    %432 = arith.mulf %431, %401 : vector<8x64xf32>
    %cst_167 = arith.constant dense<0.000000e+00> : vector<8xf32>
    %433 = vector.multi_reduction <add>, %432, %cst_167 [1] : vector<8x64xf32> to vector<8xf32>
    %434 = vector.shape_cast %433 : vector<8xf32> to vector<8x1xf32>
    %435 = arith.addf %434, %402 : vector<8x1xf32>
    %c0_168 = arith.constant 0 : index
    %c0_169 = arith.constant 0 : index
    %436 = vector.load %arg21[%c0_168, %c0_169] : memref<8x1xf32, #tpu.memory_space<vmem>>, vector<8x1xf32>
    tpu.vector_store %arg21[%c0_168, %c0_169], %435 {strides = array<i32>} : memref<8x1xf32, #tpu.memory_space<vmem>>, vector<8x1xf32>,
    return
  }
  func.func @transform_0(%arg0: i32) -> (i32, i32) {
    %c0_i32 = arith.constant 0 : i32
    %c0_i32_0 = arith.constant 0 : i32
    return %arg0, %c0_i32 : i32, i32
  }
  func.func @transform_1(%arg0: i32) -> (i32, i32) {
    %c0_i32 = arith.constant 0 : i32
    %c0_i32_0 = arith.constant 0 : i32
    return %arg0, %c0_i32 : i32, i32
  }
  func.func @transform_2(%arg0: i32) -> (i32, i32) {
    %c0_i32 = arith.constant 0 : i32
    %c0_i32_0 = arith.constant 0 : i32
    return %arg0, %c0_i32 : i32, i32
  }
  func.func @transform_3(%arg0: i32) -> (i32, i32) {
    %c0_i32 = arith.constant 0 : i32
    %c0_i32_0 = arith.constant 0 : i32
    return %arg0, %c0_i32 : i32, i32
  }
  func.func @transform_4(%arg0: i32) -> (i32, i32) {
    %c0_i32 = arith.constant 0 : i32
    %c0_i32_0 = arith.constant 0 : i32
    %c0_i32_1 = arith.constant 0 : i32
    return %c0_i32, %c0_i32_0 : i32, i32
  }
  func.func @transform_5(%arg0: i32) -> (i32, i32) {
    %c0_i32 = arith.constant 0 : i32
    %c0_i32_0 = arith.constant 0 : i32
    %c0_i32_1 = arith.constant 0 : i32
    return %c0_i32, %c0_i32_0 : i32, i32
  }
  func.func @transform_6(%arg0: i32) -> (i32, i32, i32) {
    %c0_i32 = arith.constant 0 : i32
    %c0_i32_0 = arith.constant 0 : i32
    %c0_i32_1 = arith.constant 0 : i32
    %c0_i32_2 = arith.constant 0 : i32
    return %c0_i32, %c0_i32_0, %c0_i32_1 : i32, i32, i32
  }
  func.func @transform_7(%arg0: i32) -> (i32, i32, i32) {
    %c0_i32 = arith.constant 0 : i32
    %c0_i32_0 = arith.constant 0 : i32
    %c0_i32_1 = arith.constant 0 : i32
    %c0_i32_2 = arith.constant 0 : i32
    return %c0_i32, %c0_i32_0, %c0_i32_1 : i32, i32, i32
  }
  func.func @transform_8(%arg0: i32) -> (i32, i32, i32) {
    %c0_i32 = arith.constant 0 : i32
    %c0_i32_0 = arith.constant 0 : i32
    %c0_i32_1 = arith.constant 0 : i32
    %c0_i32_2 = arith.constant 0 : i32
    return %c0_i32, %c0_i32_0, %c0_i32_1 : i32, i32, i32
  }
  func.func @transform_9(%arg0: i32) -> (i32, i32, i32) {
    %c0_i32 = arith.constant 0 : i32
    %c0_i32_0 = arith.constant 0 : i32
    %c0_i32_1 = arith.constant 0 : i32
    %c0_i32_2 = arith.constant 0 : i32
    return %c0_i32, %c0_i32_0, %c0_i32_1 : i32, i32, i32
  }
  func.func @transform_10(%arg0: i32) -> (i32, i32, i32) {
    %c0_i32 = arith.constant 0 : i32
    %c0_i32_0 = arith.constant 0 : i32
    %c0_i32_1 = arith.constant 0 : i32
    %c0_i32_2 = arith.constant 0 : i32
    return %c0_i32, %c0_i32_0, %c0_i32_1 : i32, i32, i32
  }
  func.func @transform_11(%arg0: i32) -> (i32, i32, i32) {
    %c0_i32 = arith.constant 0 : i32
    %c0_i32_0 = arith.constant 0 : i32
    %c0_i32_1 = arith.constant 0 : i32
    %c0_i32_2 = arith.constant 0 : i32
    return %c0_i32, %c0_i32_0, %c0_i32_1 : i32, i32, i32
  }
  func.func @transform_12(%arg0: i32) -> (i32, i32, i32) {
    %c0_i32 = arith.constant 0 : i32
    %c0_i32_0 = arith.constant 0 : i32
    %c0_i32_1 = arith.constant 0 : i32
    %c0_i32_2 = arith.constant 0 : i32
    return %c0_i32, %c0_i32_0, %c0_i32_1 : i32, i32, i32
  }
  func.func @transform_13(%arg0: i32) -> (i32, i32, i32) {
    %c0_i32 = arith.constant 0 : i32
    %c0_i32_0 = arith.constant 0 : i32
    %c0_i32_1 = arith.constant 0 : i32
    %c0_i32_2 = arith.constant 0 : i32
    return %c0_i32, %c0_i32_0, %c0_i32_1 : i32, i32, i32
  }
  func.func @transform_14(%arg0: i32) -> (i32, i32, i32) {
    %c0_i32 = arith.constant 0 : i32
    %c0_i32_0 = arith.constant 0 : i32
    %c0_i32_1 = arith.constant 0 : i32
    %c0_i32_2 = arith.constant 0 : i32
    return %c0_i32, %c0_i32_0, %c0_i32_1 : i32, i32, i32
  }
  func.func @transform_15(%arg0: i32) -> (i32, i32, i32) {
    %c0_i32 = arith.constant 0 : i32
    %c0_i32_0 = arith.constant 0 : i32
    %c0_i32_1 = arith.constant 0 : i32
    %c0_i32_2 = arith.constant 0 : i32
    return %c0_i32, %c0_i32_0, %c0_i32_1 : i32, i32, i32
  }
  func.func @transform_16(%arg0: i32) -> (i32, i32, i32) {
    %c0_i32 = arith.constant 0 : i32
    %c0_i32_0 = arith.constant 0 : i32
    %c0_i32_1 = arith.constant 0 : i32
    %c0_i32_2 = arith.constant 0 : i32
    return %c0_i32, %c0_i32_0, %c0_i32_1 : i32, i32, i32
  }
  func.func @transform_17(%arg0: i32) -> (i32, i32, i32) {
    %c0_i32 = arith.constant 0 : i32
    %c0_i32_0 = arith.constant 0 : i32
    %c0_i32_1 = arith.constant 0 : i32
    %c0_i32_2 = arith.constant 0 : i32
    return %c0_i32, %c0_i32_0, %c0_i32_1 : i32, i32, i32
  }
  func.func @transform_18(%arg0: i32) -> (i32, i32) {
    %c0_i32 = arith.constant 0 : i32
    %c0_i32_0 = arith.constant 0 : i32
    %c0_i32_1 = arith.constant 0 : i32
    return %c0_i32, %c0_i32_0 : i32, i32
  }
  func.func @transform_19(%arg0: i32) -> (i32, i32) {
    %c0_i32 = arith.constant 0 : i32
    %c0_i32_0 = arith.constant 0 : i32
    %c0_i32_1 = arith.constant 0 : i32
    return %c0_i32, %c0_i32_0 : i32, i32
  }
  func.func @transform_20(%arg0: i32) -> (i32, i32) {
    %c0_i32 = arith.constant 0 : i32
    %c0_i32_0 = arith.constant 0 : i32
    return %arg0, %c0_i32 : i32, i32
  }
}

</mosaic_0001>

<llo_original>
// kernel: tpu_custom_call.1
$region0: #{tpu_custom_call.1}
  #allocation0 [shape = 'u32[]', space=smem, size = 0x4, offset = 0x4, fixed_abs, tag = 'smem constant byte address 0x4 - core index']
  #allocation1 [shape = 'u32[72,128]{1,0:T(1,128)}', space=vmem, size = 0x9000, scoped, tag = 'internal scratch']
  %s0 = inlined_call_operand.vmem [shape: f32[24,4], index: 0, kind: input, shape index: {}]
  %s1 = inlined_call_operand.vmem [shape: bf16[384,42], index: 1, kind: input, shape index: {}]
  %s2 = inlined_call_operand.vmem [shape: f32[24,16], index: 2, kind: input, shape index: {}]
  %s3 = inlined_call_operand.vmem [shape: f32[24,16], index: 3, kind: input, shape index: {}]
  %s4 = inlined_call_operand.vmem [shape: bf16[42,64], index: 4, kind: input, shape index: {}]
  %s5 = inlined_call_operand.vmem [shape: f32[16,64], index: 5, kind: input, shape index: {}]
  %s6 = inlined_call_operand.vmem [shape: bf16[2,64,192], index: 6, kind: input, shape index: {}]
  %s7 = inlined_call_operand.vmem [shape: f32[2,1,192], index: 7, kind: input, shape index: {}]
  %s8 = inlined_call_operand.vmem [shape: bf16[2,64,64], index: 8, kind: input, shape index: {}]
  %s9 = inlined_call_operand.vmem [shape: f32[2,1,64], index: 9, kind: input, shape index: {}]
  %s10 = inlined_call_operand.vmem [shape: bf16[2,64,256], index: 10, kind: input, shape index: {}]
  %s11 = inlined_call_operand.vmem [shape: f32[2,1,256], index: 11, kind: input, shape index: {}]
  %s12 = inlined_call_operand.vmem [shape: bf16[2,256,64], index: 12, kind: input, shape index: {}]
  %s13 = inlined_call_operand.vmem [shape: f32[2,1,64], index: 13, kind: input, shape index: {}]
  %s14 = inlined_call_operand.vmem [shape: f32[2,1,64], index: 14, kind: input, shape index: {}]
  %s15 = inlined_call_operand.vmem [shape: f32[2,1,64], index: 15, kind: input, shape index: {}]
  %s16 = inlined_call_operand.vmem [shape: f32[2,1,64], index: 16, kind: input, shape index: {}]
  %s17 = inlined_call_operand.vmem [shape: f32[2,1,64], index: 17, kind: input, shape index: {}]
  %s18 = inlined_call_operand.vmem [shape: bf16[64,385], index: 18, kind: input, shape index: {}]
  %s19 = inlined_call_operand.vmem [shape: f32[1,385], index: 19, kind: input, shape index: {}]
  %s20 = inlined_call_operand.vmem [shape: f32[24,1], index: 20, kind: output, shape index: {}]
  %s21 = sld [smem:[#allocation0]]
  $region113: #{tpu_custom_call.1} parent=0
    _
  %s23 = ssub.s32 1, %s21
  %s24 = scalar_select 0, %s23, %s21
  loop: start=0, step=1, limit=5
  $region2: #{tpu_custom_call.1} parent=0 // loop_pre_header
    _
  $region3: #{tpu_custom_call.1} parent=0 // loop_header
    %s26 = sphi 0, %s30
    %p27 = scmp.ge.s32.totalorder %s26, 5
    %s36 = sphi 0, %s38
    %s39 = sphi 0, %s36
    %s40 = sphi 0, %s39
    %s56 = sphi 0, %s40
    %s62 = sphi 0, %s64
    %s65 = sphi 0, %s62
    %s66 = sphi 0, %s65
    %s82 = sphi 0, %s66
    %s88 = sphi 0, %s90
    %s91 = sphi 0, %s88
    %s92 = sphi 0, %s91
    %s108 = sphi 0, %s92
    %s114 = sphi 0, %s116
    %s117 = sphi 0, %s114
    %s118 = sphi 0, %s117
    %s134 = sphi 0, %s118
    %s138 = sphi 0, %s138
    %s140 = sphi 0, %s138
    %s141 = sphi 0, %s140
    %s155 = sphi 0, %s141
    %s159 = sphi 0, %s159
    %s161 = sphi 0, %s159
    %s162 = sphi 0, %s161
    %s176 = sphi 0, %s162
    %s180 = sphi 0, %s180
    %s182 = sphi 0, %s180
    %s183 = sphi 0, %s182
    %s197 = sphi 0, %s183
    %s201 = sphi 0, %s201
    %s203 = sphi 0, %s201
    %s204 = sphi 0, %s203
    %s218 = sphi 0, %s204
    %s222 = sphi 0, %s222
    %s224 = sphi 0, %s222
    %s225 = sphi 0, %s224
    %s239 = sphi 0, %s225
    %s243 = sphi 0, %s243
    %s245 = sphi 0, %s243
    %s246 = sphi 0, %s245
    %s260 = sphi 0, %s246
    %s264 = sphi 0, %s264
    %s266 = sphi 0, %s264
    %s267 = sphi 0, %s266
    %s281 = sphi 0, %s267
    %s285 = sphi 0, %s285
    %s287 = sphi 0, %s285
    %s288 = sphi 0, %s287
    %s302 = sphi 0, %s288
    %s306 = sphi 0, %s306
    %s308 = sphi 0, %s306
    %s309 = sphi 0, %s308
    %s323 = sphi 0, %s309
    %s327 = sphi 0, %s327
    %s329 = sphi 0, %s327
    %s330 = sphi 0, %s329
    %s344 = sphi 0, %s330
    %s348 = sphi 0, %s348
    %s350 = sphi 0, %s348
    %s351 = sphi 0, %s350
    %s365 = sphi 0, %s351
    %s369 = sphi 0, %s369
    %s371 = sphi 0, %s369
    %s372 = sphi 0, %s371
    %s386 = sphi 0, %s372
    %s390 = sphi 0, %s390
    %s392 = sphi 0, %s390
    %s393 = sphi 0, %s392
    %s407 = sphi 0, %s393
    %s411 = sphi 0, %s411
    %s413 = sphi 0, %s411
    %s414 = sphi 0, %s413
    %s428 = sphi 0, %s414
    %s432 = sphi 0, %s432
    %s434 = sphi 0, %s432
    %s435 = sphi 0, %s434
    %s449 = sphi 0, %s435
    %s453 = sphi 0, %s453
    %s455 = sphi 0, %s453
    %s456 = sphi 0, %s455
    %s470 = sphi 0, %s456
    %s476 = sphi 0, %s478
    %s479 = sphi 0, %s476
    %s480 = sphi 0, %s479
    %s496 = sphi 0, %s480
  $region4: #{tpu_custom_call.1} parent=0 // loop_header_branch
    %29 = sbr.rel (%p27) target = $region8
  $region5: #{tpu_custom_call.1} parent=0 // loop_body
    %s31 = ssub.s32 %s26, 1
    %s32 = ssub.s32 %s26, 2
    %s33 = sadd.s32 %s26, 1
    %s34 = ssub.s32 %s26, %s33
    %p35 = scmp.eq.s32.totalorder %s34, 0
    %s37 = sadd.s32 %s36, 1
    %s38 = scalar_select %p35, %s36, %s37
    %p41 = pneg %p35
    %p42 = scmp.eq.s32.totalorder %s26, 2
    %p43 = por %p41, %p42
    %p44 = scmp.ne.s32.totalorder %s36, %s39
    %p45 = scmp.eq.s32.totalorder %s26, 0
    %p46 = por %p44, %p45
    %p47 = scmp.ne.s32.totalorder %s36, %s39
    %p48 = scmp.eq.s32.totalorder %s31, 2
    %p49 = por %p47, %p48
    %p50 = scmp.ne.s32.totalorder %s39, %s40
    %p51 = scmp.eq.s32.totalorder %s31, 0
    %p52 = por %p50, %p51
    %p53 = scmp.ne.s32.totalorder %s39, %s40
    %p54 = scmp.eq.s32.totalorder %s32, 2
    %p55 = por %p53, %p54
    %p57 = scmp.ne.s32.totalorder %s40, %s56
    %p58 = scmp.eq.s32.totalorder %s32, 0
    %p59 = por %p57, %p58
    %s60 = ssub.s32 %s26, %s33
    %p61 = scmp.eq.s32.totalorder %s60, 0
    %s63 = sadd.s32 %s62, 1
    %s64 = scalar_select %p61, %s62, %s63
    %p67 = pneg %p61
    %p68 = scmp.eq.s32.totalorder %s26, 2
    %p69 = por %p67, %p68
    %p70 = scmp.ne.s32.totalorder %s62, %s65
    %p71 = scmp.eq.s32.totalorder %s26, 0
    %p72 = por %p70, %p71
    %p73 = scmp.ne.s32.totalorder %s62, %s65
    %p74 = scmp.eq.s32.totalorder %s31, 2
    %p75 = por %p73, %p74
    %p76 = scmp.ne.s32.totalorder %s65, %s66
    %p77 = scmp.eq.s32.totalorder %s31, 0
    %p78 = por %p76, %p77
    %p79 = scmp.ne.s32.totalorder %s65, %s66
    %p80 = scmp.eq.s32.totalorder %s32, 2
    %p81 = por %p79, %p80
    %p83 = scmp.ne.s32.totalorder %s66, %s82
    %p84 = scmp.eq.s32.totalorder %s32, 0
    %p85 = por %p83, %p84
    %s86 = ssub.s32 %s26, %s33
    %p87 = scmp.eq.s32.totalorder %s86, 0
    %s89 = sadd.s32 %s88, 1
    %s90 = scalar_select %p87, %s88, %s89
    %p93 = pneg %p87
    %p94 = scmp.eq.s32.totalorder %s26, 2
    %p95 = por %p93, %p94
    %p96 = scmp.ne.s32.totalorder %s88, %s91
    %p97 = scmp.eq.s32.totalorder %s26, 0
    %p98 = por %p96, %p97
    %p99 = scmp.ne.s32.totalorder %s88, %s91
    %p100 = scmp.eq.s32.totalorder %s31, 2
    %p101 = por %p99, %p100
    %p102 = scmp.ne.s32.totalorder %s91, %s92
    %p103 = scmp.eq.s32.totalorder %s31, 0
    %p104 = por %p102, %p103
    %p105 = scmp.ne.s32.totalorder %s91, %s92
    %p106 = scmp.eq.s32.totalorder %s32, 2
    %p107 = por %p105, %p106
    %p109 = scmp.ne.s32.totalorder %s92, %s108
    %p110 = scmp.eq.s32.totalorder %s32, 0
    %p111 = por %p109, %p110
    %s112 = ssub.s32 %s26, %s33
    %p113 = scmp.eq.s32.totalorder %s112, 0
    %s115 = sadd.s32 %s114, 1
    %s116 = scalar_select %p113, %s114, %s115
    %p119 = pneg %p113
    %p120 = scmp.eq.s32.totalorder %s26, 2
    %p121 = por %p119, %p120
    %p122 = scmp.ne.s32.totalorder %s114, %s117
    %p123 = scmp.eq.s32.totalorder %s26, 0
    %p124 = por %p122, %p123
    %p125 = scmp.ne.s32.totalorder %s114, %s117
    %p126 = scmp.eq.s32.totalorder %s31, 2
    %p127 = por %p125, %p126
    %p128 = scmp.ne.s32.totalorder %s117, %s118
    %p129 = scmp.eq.s32.totalorder %s31, 0
    %p130 = por %p128, %p129
    %p131 = scmp.ne.s32.totalorder %s117, %s118
    %p132 = scmp.eq.s32.totalorder %s32, 2
    %p133 = por %p131, %p132
    %p135 = scmp.ne.s32.totalorder %s118, %s134
    %p136 = scmp.eq.s32.totalorder %s32, 0
    %p137 = por %p135, %p136
    %s139 = sadd.s32 %s138, 1
    %p142 = scmp.eq.s32.totalorder %s26, 2
    %p143 = scmp.ne.s32.totalorder %s138, %s140
    %p144 = scmp.eq.s32.totalorder %s26, 0
    %p145 = por %p143, %p144
    %p146 = scmp.ne.s32.totalorder %s138, %s140
    %p147 = scmp.eq.s32.totalorder %s31, 2
    %p148 = por %p146, %p147
    %p149 = scmp.ne.s32.totalorder %s140, %s141
    %p150 = scmp.eq.s32.totalorder %s31, 0
    %p151 = por %p149, %p150
    %p152 = scmp.ne.s32.totalorder %s140, %s141
    %p153 = scmp.eq.s32.totalorder %s32, 2
    %p154 = por %p152, %p153
    %p156 = scmp.ne.s32.totalorder %s141, %s155
    %p157 = scmp.eq.s32.totalorder %s32, 0
    %p158 = por %p156, %p157
    %s160 = sadd.s32 %s159, 1
    %p163 = scmp.eq.s32.totalorder %s26, 2
    %p164 = scmp.ne.s32.totalorder %s159, %s161
    %p165 = scmp.eq.s32.totalorder %s26, 0
    %p166 = por %p164, %p165
    %p167 = scmp.ne.s32.totalorder %s159, %s161
    %p168 = scmp.eq.s32.totalorder %s31, 2
    %p169 = por %p167, %p168
    %p170 = scmp.ne.s32.totalorder %s161, %s162
    %p171 = scmp.eq.s32.totalorder %s31, 0
    %p172 = por %p170, %p171
    %p173 = scmp.ne.s32.totalorder %s161, %s162
    %p174 = scmp.eq.s32.totalorder %s32, 2
    %p175 = por %p173, %p174
    %p177 = scmp.ne.s32.totalorder %s162, %s176
    %p178 = scmp.eq.s32.totalorder %s32, 0
    %p179 = por %p177, %p178
    %s181 = sadd.s32 %s180, 1
    %p184 = scmp.eq.s32.totalorder %s26, 2
    %p185 = scmp.ne.s32.totalorder %s180, %s182
    %p186 = scmp.eq.s32.totalorder %s26, 0
    %p187 = por %p185, %p186
    %p188 = scmp.ne.s32.totalorder %s180, %s182
    %p189 = scmp.eq.s32.totalorder %s31, 2
    %p190 = por %p188, %p189
    %p191 = scmp.ne.s32.totalorder %s182, %s183
    %p192 = scmp.eq.s32.totalorder %s31, 0
    %p193 = por %p191, %p192
    %p194 = scmp.ne.s32.totalorder %s182, %s183
    %p195 = scmp.eq.s32.totalorder %s32, 2
    %p196 = por %p194, %p195
    %p198 = scmp.ne.s32.totalorder %s183, %s197
    %p199 = scmp.eq.s32.totalorder %s32, 0
    %p200 = por %p198, %p199
    %s202 = sadd.s32 %s201, 1
    %p205 = scmp.eq.s32.totalorder %s26, 2
    %p206 = scmp.ne.s32.totalorder %s201, %s203
    %p207 = scmp.eq.s32.totalorder %s26, 0
    %p208 = por %p206, %p207
    %p209 = scmp.ne.s32.totalorder %s201, %s203
    %p210 = scmp.eq.s32.totalorder %s31, 2
    %p211 = por %p209, %p210
    %p212 = scmp.ne.s32.totalorder %s203, %s204
    %p213 = scmp.eq.s32.totalorder %s31, 0
    %p214 = por %p212, %p213
    %p215 = scmp.ne.s32.totalorder %s203, %s204
    %p216 = scmp.eq.s32.totalorder %s32, 2
    %p217 = por %p215, %p216
    %p219 = scmp.ne.s32.totalorder %s204, %s218
    %p220 = scmp.eq.s32.totalorder %s32, 0
    %p221 = por %p219, %p220
    %s223 = sadd.s32 %s222, 1
    %p226 = scmp.eq.s32.totalorder %s26, 2
    %p227 = scmp.ne.s32.totalorder %s222, %s224
    %p228 = scmp.eq.s32.totalorder %s26, 0
    %p229 = por %p227, %p228
    %p230 = scmp.ne.s32.totalorder %s222, %s224
    %p231 = scmp.eq.s32.totalorder %s31, 2
    %p232 = por %p230, %p231
    %p233 = scmp.ne.s32.totalorder %s224, %s225
    %p234 = scmp.eq.s32.totalorder %s31, 0
    %p235 = por %p233, %p234
    %p236 = scmp.ne.s32.totalorder %s224, %s225
    %p237 = scmp.eq.s32.totalorder %s32, 2
    %p238 = por %p236, %p237
    %p240 = scmp.ne.s32.totalorder %s225, %s239
    %p241 = scmp.eq.s32.totalorder %s32, 0
    %p242 = por %p240, %p241
    %s244 = sadd.s32 %s243, 1
    %p247 = scmp.eq.s32.totalorder %s26, 2
    %p248 = scmp.ne.s32.totalorder %s243, %s245
    %p249 = scmp.eq.s32.totalorder %s26, 0
    %p250 = por %p248, %p249
    %p251 = scmp.ne.s32.totalorder %s243, %s245
    %p252 = scmp.eq.s32.totalorder %s31, 2
    %p253 = por %p251, %p252
    %p254 = scmp.ne.s32.totalorder %s245, %s246
    %p255 = scmp.eq.s32.totalorder %s31, 0
    %p256 = por %p254, %p255
    %p257 = scmp.ne.s32.totalorder %s245, %s246
    %p258 = scmp.eq.s32.totalorder %s32, 2
    %p259 = por %p257, %p258
    %p261 = scmp.ne.s32.totalorder %s246, %s260
    %p262 = scmp.eq.s32.totalorder %s32, 0
    %p263 = por %p261, %p262
    %s265 = sadd.s32 %s264, 1
    %p268 = scmp.eq.s32.totalorder %s26, 2
    %p269 = scmp.ne.s32.totalorder %s264, %s266
    %p270 = scmp.eq.s32.totalorder %s26, 0
    %p271 = por %p269, %p270
    %p272 = scmp.ne.s32.totalorder %s264, %s266
    %p273 = scmp.eq.s32.totalorder %s31, 2
    %p274 = por %p272, %p273
    %p275 = scmp.ne.s32.totalorder %s266, %s267
    %p276 = scmp.eq.s32.totalorder %s31, 0
    %p277 = por %p275, %p276
    %p278 = scmp.ne.s32.totalorder %s266, %s267
    %p279 = scmp.eq.s32.totalorder %s32, 2
    %p280 = por %p278, %p279
    %p282 = scmp.ne.s32.totalorder %s267, %s281
    %p283 = scmp.eq.s32.totalorder %s32, 0
    %p284 = por %p282, %p283
    %s286 = sadd.s32 %s285, 1
    %p289 = scmp.eq.s32.totalorder %s26, 2
    %p290 = scmp.ne.s32.totalorder %s285, %s287
    %p291 = scmp.eq.s32.totalorder %s26, 0
    %p292 = por %p290, %p291
    %p293 = scmp.ne.s32.totalorder %s285, %s287
    %p294 = scmp.eq.s32.totalorder %s31, 2
    %p295 = por %p293, %p294
    %p296 = scmp.ne.s32.totalorder %s287, %s288
    %p297 = scmp.eq.s32.totalorder %s31, 0
    %p298 = por %p296, %p297
    %p299 = scmp.ne.s32.totalorder %s287, %s288
    %p300 = scmp.eq.s32.totalorder %s32, 2
    %p301 = por %p299, %p300
    %p303 = scmp.ne.s32.totalorder %s288, %s302
    %p304 = scmp.eq.s32.totalorder %s32, 0
    %p305 = por %p303, %p304
    %s307 = sadd.s32 %s306, 1
    %p310 = scmp.eq.s32.totalorder %s26, 2
    %p311 = scmp.ne.s32.totalorder %s306, %s308
    %p312 = scmp.eq.s32.totalorder %s26, 0
    %p313 = por %p311, %p312
    %p314 = scmp.ne.s32.totalorder %s306, %s308
    %p315 = scmp.eq.s32.totalorder %s31, 2
    %p316 = por %p314, %p315
    %p317 = scmp.ne.s32.totalorder %s308, %s309
    %p318 = scmp.eq.s32.totalorder %s31, 0
    %p319 = por %p317, %p318
    %p320 = scmp.ne.s32.totalorder %s308, %s309
    %p321 = scmp.eq.s32.totalorder %s32, 2
    %p322 = por %p320, %p321
    %p324 = scmp.ne.s32.totalorder %s309, %s323
    %p325 = scmp.eq.s32.totalorder %s32, 0
    %p326 = por %p324, %p325
    %s328 = sadd.s32 %s327, 1
    %p331 = scmp.eq.s32.totalorder %s26, 2
    %p332 = scmp.ne.s32.totalorder %s327, %s329
    %p333 = scmp.eq.s32.totalorder %s26, 0
    %p334 = por %p332, %p333
    %p335 = scmp.ne.s32.totalorder %s327, %s329
    %p336 = scmp.eq.s32.totalorder %s31, 2
    %p337 = por %p335, %p336
    %p338 = scmp.ne.s32.totalorder %s329, %s330
    %p339 = scmp.eq.s32.totalorder %s31, 0
    %p340 = por %p338, %p339
    %p341 = scmp.ne.s32.totalorder %s329, %s330
    %p342 = scmp.eq.s32.totalorder %s32, 2
    %p343 = por %p341, %p342
    %p345 = scmp.ne.s32.totalorder %s330, %s344
    %p346 = scmp.eq.s32.totalorder %s32, 0
    %p347 = por %p345, %p346
    %s349 = sadd.s32 %s348, 1
    %p352 = scmp.eq.s32.totalorder %s26, 2
    %p353 = scmp.ne.s32.totalorder %s348, %s350
    %p354 = scmp.eq.s32.totalorder %s26, 0
    %p355 = por %p353, %p354
    %p356 = scmp.ne.s32.totalorder %s348, %s350
    %p357 = scmp.eq.s32.totalorder %s31, 2
    %p358 = por %p356, %p357
    %p359 = scmp.ne.s32.totalorder %s350, %s351
    %p360 = scmp.eq.s32.totalorder %s31, 0
    %p361 = por %p359, %p360
    %p362 = scmp.ne.s32.totalorder %s350, %s351
    %p363 = scmp.eq.s32.totalorder %s32, 2
    %p364 = por %p362, %p363
    %p366 = scmp.ne.s32.totalorder %s351, %s365
    %p367 = scmp.eq.s32.totalorder %s32, 0
    %p368 = por %p366, %p367
    %s370 = sadd.s32 %s369, 1
    %p373 = scmp.eq.s32.totalorder %s26, 2
    %p374 = scmp.ne.s32.totalorder %s369, %s371
    %p375 = scmp.eq.s32.totalorder %s26, 0
    %p376 = por %p374, %p375
    %p377 = scmp.ne.s32.totalorder %s369, %s371
    %p378 = scmp.eq.s32.totalorder %s31, 2
    %p379 = por %p377, %p378
    %p380 = scmp.ne.s32.totalorder %s371, %s372
    %p381 = scmp.eq.s32.totalorder %s31, 0
    %p382 = por %p380, %p381
    %p383 = scmp.ne.s32.totalorder %s371, %s372
    %p384 = scmp.eq.s32.totalorder %s32, 2
    %p385 = por %p383, %p384
    %p387 = scmp.ne.s32.totalorder %s372, %s386
    %p388 = scmp.eq.s32.totalorder %s32, 0
    %p389 = por %p387, %p388
    %s391 = sadd.s32 %s390, 1
    %p394 = scmp.eq.s32.totalorder %s26, 2
    %p395 = scmp.ne.s32.totalorder %s390, %s392
    %p396 = scmp.eq.s32.totalorder %s26, 0
    %p397 = por %p395, %p396
    %p398 = scmp.ne.s32.totalorder %s390, %s392
    %p399 = scmp.eq.s32.totalorder %s31, 2
    %p400 = por %p398, %p399
    %p401 = scmp.ne.s32.totalorder %s392, %s393
    %p402 = scmp.eq.s32.totalorder %s31, 0
    %p403 = por %p401, %p402
    %p404 = scmp.ne.s32.totalorder %s392, %s393
    %p405 = scmp.eq.s32.totalorder %s32, 2
    %p406 = por %p404, %p405
    %p408 = scmp.ne.s32.totalorder %s393, %s407
    %p409 = scmp.eq.s32.totalorder %s32, 0
    %p410 = por %p408, %p409
    %s412 = sadd.s32 %s411, 1
    %p415 = scmp.eq.s32.totalorder %s26, 2
    %p416 = scmp.ne.s32.totalorder %s411, %s413
    %p417 = scmp.eq.s32.totalorder %s26, 0
    %p418 = por %p416, %p417
    %p419 = scmp.ne.s32.totalorder %s411, %s413
    %p420 = scmp.eq.s32.totalorder %s31, 2
    %p421 = por %p419, %p420
    %p422 = scmp.ne.s32.totalorder %s413, %s414
    %p423 = scmp.eq.s32.totalorder %s31, 0
    %p424 = por %p422, %p423
    %p425 = scmp.ne.s32.totalorder %s413, %s414
    %p426 = scmp.eq.s32.totalorder %s32, 2
    %p427 = por %p425, %p426
    %p429 = scmp.ne.s32.totalorder %s414, %s428
    %p430 = scmp.eq.s32.totalorder %s32, 0
    %p431 = por %p429, %p430
    %s433 = sadd.s32 %s432, 1
    %p436 = scmp.eq.s32.totalorder %s26, 2
    %p437 = scmp.ne.s32.totalorder %s432, %s434
    %p438 = scmp.eq.s32.totalorder %s26, 0
    %p439 = por %p437, %p438
    %p440 = scmp.ne.s32.totalorder %s432, %s434
    %p441 = scmp.eq.s32.totalorder %s31, 2
    %p442 = por %p440, %p441
    %p443 = scmp.ne.s32.totalorder %s434, %s435
    %p444 = scmp.eq.s32.totalorder %s31, 0
    %p445 = por %p443, %p444
    %p446 = scmp.ne.s32.totalorder %s434, %s435
    %p447 = scmp.eq.s32.totalorder %s32, 2
    %p448 = por %p446, %p447
    %p450 = scmp.ne.s32.totalorder %s435, %s449
    %p451 = scmp.eq.s32.totalorder %s32, 0
    %p452 = por %p450, %p451
    %s454 = sadd.s32 %s453, 1
    %p457 = scmp.eq.s32.totalorder %s26, 2
    %p458 = scmp.ne.s32.totalorder %s453, %s455
    %p459 = scmp.eq.s32.totalorder %s26, 0
    %p460 = por %p458, %p459
    %p461 = scmp.ne.s32.totalorder %s453, %s455
    %p462 = scmp.eq.s32.totalorder %s31, 2
    %p463 = por %p461, %p462
    %p464 = scmp.ne.s32.totalorder %s455, %s456
    %p465 = scmp.eq.s32.totalorder %s31, 0
    %p466 = por %p464, %p465
    %p467 = scmp.ne.s32.totalorder %s455, %s456
    %p468 = scmp.eq.s32.totalorder %s32, 2
    %p469 = por %p467, %p468
    %p471 = scmp.ne.s32.totalorder %s456, %s470
    %p472 = scmp.eq.s32.totalorder %s32, 0
    %p473 = por %p471, %p472
    %s474 = ssub.s32 %s26, %s33
    %p475 = scmp.eq.s32.totalorder %s474, 0
    %s477 = sadd.s32 %s476, 1
    %s478 = scalar_select %p475, %s476, %s477
    %p481 = pneg %p475
    %p482 = scmp.eq.s32.totalorder %s26, 2
    %p483 = por %p481, %p482
    %p484 = scmp.ne.s32.totalorder %s476, %s479
    %p485 = scmp.eq.s32.totalorder %s26, 0
    %p486 = por %p484, %p485
    %p487 = scmp.ne.s32.totalorder %s476, %s479
    %p488 = scmp.eq.s32.totalorder %s31, 2
    %p489 = por %p487, %p488
    %p490 = scmp.ne.s32.totalorder %s479, %s480
    %p491 = scmp.eq.s32.totalorder %s31, 0
    %p492 = por %p490, %p491
    %p493 = scmp.ne.s32.totalorder %s479, %s480
    %p494 = scmp.eq.s32.totalorder %s32, 2
    %p495 = por %p493, %p494
    %p497 = scmp.ne.s32.totalorder %s480, %s496
    %p498 = scmp.eq.s32.totalorder %s32, 0
    %p499 = por %p497, %p498
    %p500 = scmp.le.s32.totalorder 1, %s26
    %p501 = scmp.lt.s32.totalorder %s26, 4
    %p502 = pnand %p500, %p501
    %p503 = pneg %p502
    // Predicated region
    $region9: #{tpu_custom_call.1} parent=5 // pred_check
      _
    $region10: #{tpu_custom_call.1} parent=5 // pred_check_branch
      %505 = sbr.rel (%p502) target = $region12
    $region11: #{tpu_custom_call.1} parent=5 // pred_region
      %s506 = ssub.s32 %s26, 1
      // Predicated region
      $region13: #{tpu_custom_call.1} parent=11 // pred_check
        %p507 = pneg %p151
      $region14: #{tpu_custom_call.1} parent=11 // pred_check_branch
        %509 = sbr.rel (%p507) target = $region16
      $region15: #{tpu_custom_call.1} parent=11 // pred_region
        _
      $region16: #{tpu_custom_call.1} parent=11 // pred_fallthru
        _
      // Predicated region
      $region17: #{tpu_custom_call.1} parent=11 // pred_check
        %p510 = pneg %p172
      $region18: #{tpu_custom_call.1} parent=11 // pred_check_branch
        %512 = sbr.rel (%p510) target = $region20
      $region19: #{tpu_custom_call.1} parent=11 // pred_region
        _
      $region20: #{tpu_custom_call.1} parent=11 // pred_fallthru
        _
      // Predicated region
      $region21: #{tpu_custom_call.1} parent=11 // pred_check
        %p513 = pneg %p193
      $region22: #{tpu_custom_call.1} parent=11 // pred_check_branch
        %515 = sbr.rel (%p513) target = $region24
      $region23: #{tpu_custom_call.1} parent=11 // pred_region
        _
      $region24: #{tpu_custom_call.1} parent=11 // pred_fallthru
        _
      // Predicated region
      $region25: #{tpu_custom_call.1} parent=11 // pred_check
        %p516 = pneg %p214
      $region26: #{tpu_custom_call.1} parent=11 // pred_check_branch
        %518 = sbr.rel (%p516) target = $region28
      $region27: #{tpu_custom_call.1} parent=11 // pred_region
        _
      $region28: #{tpu_custom_call.1} parent=11 // pred_fallthru
        _
      // Predicated region
      $region29: #{tpu_custom_call.1} parent=11 // pred_check
        %p519 = pneg %p235
      $region30: #{tpu_custom_call.1} parent=11 // pred_check_branch
        %521 = sbr.rel (%p519) target = $region32
      $region31: #{tpu_custom_call.1} parent=11 // pred_region
        _
      $region32: #{tpu_custom_call.1} parent=11 // pred_fallthru
        _
      // Predicated region
      $region33: #{tpu_custom_call.1} parent=11 // pred_check
        %p522 = pneg %p256
      $region34: #{tpu_custom_call.1} parent=11 // pred_check_branch
        %524 = sbr.rel (%p522) target = $region36
      $region35: #{tpu_custom_call.1} parent=11 // pred_region
        _
      $region36: #{tpu_custom_call.1} parent=11 // pred_fallthru
        _
      // Predicated region
      $region37: #{tpu_custom_call.1} parent=11 // pred_check
        %p525 = pneg %p277
      $region38: #{tpu_custom_call.1} parent=11 // pred_check_branch
        %527 = sbr.rel (%p525) target = $region40
      $region39: #{tpu_custom_call.1} parent=11 // pred_region
        _
      $region40: #{tpu_custom_call.1} parent=11 // pred_fallthru
        _
      // Predicated region
      $region41: #{tpu_custom_call.1} parent=11 // pred_check
        %p528 = pneg %p298
      $region42: #{tpu_custom_call.1} parent=11 // pred_check_branch
        %530 = sbr.rel (%p528) target = $region44
      $region43: #{tpu_custom_call.1} parent=11 // pred_region
        _
      $region44: #{tpu_custom_call.1} parent=11 // pred_fallthru
        _
      // Predicated region
      $region45: #{tpu_custom_call.1} parent=11 // pred_check
        %p531 = pneg %p319
      $region46: #{tpu_custom_call.1} parent=11 // pred_check_branch
        %533 = sbr.rel (%p531) target = $region48
      $region47: #{tpu_custom_call.1} parent=11 // pred_region
        _
      $region48: #{tpu_custom_call.1} parent=11 // pred_fallthru
        _
      // Predicated region
      $region49: #{tpu_custom_call.1} parent=11 // pred_check
        %p534 = pneg %p340
      $region50: #{tpu_custom_call.1} parent=11 // pred_check_branch
        %536 = sbr.rel (%p534) target = $region52
      $region51: #{tpu_custom_call.1} parent=11 // pred_region
        _
      $region52: #{tpu_custom_call.1} parent=11 // pred_fallthru
        _
      // Predicated region
      $region53: #{tpu_custom_call.1} parent=11 // pred_check
        %p537 = pneg %p361
      $region54: #{tpu_custom_call.1} parent=11 // pred_check_branch
        %539 = sbr.rel (%p537) target = $region56
      $region55: #{tpu_custom_call.1} parent=11 // pred_region
        _
      $region56: #{tpu_custom_call.1} parent=11 // pred_fallthru
        _
      // Predicated region
      $region57: #{tpu_custom_call.1} parent=11 // pred_check
        %p540 = pneg %p382
      $region58: #{tpu_custom_call.1} parent=11 // pred_check_branch
        %542 = sbr.rel (%p540) target = $region60
      $region59: #{tpu_custom_call.1} parent=11 // pred_region
        _
      $region60: #{tpu_custom_call.1} parent=11 // pred_fallthru
        _
      // Predicated region
      $region61: #{tpu_custom_call.1} parent=11 // pred_check
        %p543 = pneg %p403
      $region62: #{tpu_custom_call.1} parent=11 // pred_check_branch
        %545 = sbr.rel (%p543) target = $region64
      $region63: #{tpu_custom_call.1} parent=11 // pred_region
        _
      $region64: #{tpu_custom_call.1} parent=11 // pred_fallthru
        _
      // Predicated region
      $region65: #{tpu_custom_call.1} parent=11 // pred_check
        %p546 = pneg %p424
      $region66: #{tpu_custom_call.1} parent=11 // pred_check_branch
        %548 = sbr.rel (%p546) target = $region68
      $region67: #{tpu_custom_call.1} parent=11 // pred_region
        _
      $region68: #{tpu_custom_call.1} parent=11 // pred_fallthru
        _
      // Predicated region
      $region69: #{tpu_custom_call.1} parent=11 // pred_check
        %p549 = pneg %p445
      $region70: #{tpu_custom_call.1} parent=11 // pred_check_branch
        %551 = sbr.rel (%p549) target = $region72
      $region71: #{tpu_custom_call.1} parent=11 // pred_region
        _
      $region72: #{tpu_custom_call.1} parent=11 // pred_fallthru
        _
      // Predicated region
      $region73: #{tpu_custom_call.1} parent=11 // pred_check
        %p552 = pneg %p466
      $region74: #{tpu_custom_call.1} parent=11 // pred_check_branch
        %554 = sbr.rel (%p552) target = $region76
      $region75: #{tpu_custom_call.1} parent=11 // pred_region
        _
      $region76: #{tpu_custom_call.1} parent=11 // pred_fallthru
        _
    $region12: #{tpu_custom_call.1} parent=5 // pred_fallthru
      _
    %p555 = scmp.lt.s32.totalorder %s26, 3
    // Predicated region
    $region77: #{tpu_custom_call.1} parent=5 // pred_check
      %p556 = pneg %p555
    $region78: #{tpu_custom_call.1} parent=5 // pred_check_branch
      %558 = sbr.rel (%p556) target = $region80
    $region79: #{tpu_custom_call.1} parent=5 // pred_region
      // Predicated region
      $region81: #{tpu_custom_call.1} parent=79 // pred_check
        %p559 = pneg %p46
      $region82: #{tpu_custom_call.1} parent=79 // pred_check_branch
        %561 = sbr.rel (%p559) target = $region84
      $region83: #{tpu_custom_call.1} parent=79 // pred_region
        %p562 = scmp.lt.s32.totalorder %s26, 2
        %s563 = scalar_select %p562, %s26, 2
        %s564 = smul.addr %s563, 8
        %s565 = scalar_lea.vmem %s0, %s564
      $region84: #{tpu_custom_call.1} parent=79 // pred_fallthru
        _
      // Predicated region
      $region85: #{tpu_custom_call.1} parent=79 // pred_check
        %p566 = pneg %p72
      $region86: #{tpu_custom_call.1} parent=79 // pred_check_branch
        %568 = sbr.rel (%p566) target = $region88
      $region87: #{tpu_custom_call.1} parent=79 // pred_region
        %s569 = smul.u32 16, %s26
        %p570 = scmp.lt.s32.totalorder %s569, 47
        %s571 = scalar_select %p570, %s569, 47
        %s572 = smul.addr %s571, 4
        %s573 = scalar_lea.vmem %s1, %s572
        %s574 = smul.u32 16, %s26
      $region88: #{tpu_custom_call.1} parent=79 // pred_fallthru
        _
      // Predicated region
      $region89: #{tpu_custom_call.1} parent=79 // pred_check
        %p575 = pneg %p98
      $region90: #{tpu_custom_call.1} parent=79 // pred_check_branch
        %577 = sbr.rel (%p575) target = $region92
      $region91: #{tpu_custom_call.1} parent=79 // pred_region
        %p578 = scmp.lt.s32.totalorder %s26, 2
        %s579 = scalar_select %p578, %s26, 2
        %s580 = smul.addr %s579, 8
        %s581 = scalar_lea.vmem %s2, %s580
      $region92: #{tpu_custom_call.1} parent=79 // pred_fallthru
        _
      // Predicated region
      $region93: #{tpu_custom_call.1} parent=79 // pred_check
        %p582 = pneg %p124
      $region94: #{tpu_custom_call.1} parent=79 // pred_check_branch
        %584 = sbr.rel (%p582) target = $region96
      $region95: #{tpu_custom_call.1} parent=79 // pred_region
        %p585 = scmp.lt.s32.totalorder %s26, 2
        %s586 = scalar_select %p585, %s26, 2
        %s587 = smul.addr %s586, 8
        %s588 = scalar_lea.vmem %s3, %s587
      $region96: #{tpu_custom_call.1} parent=79 // pred_fallthru
        _
    $region80: #{tpu_custom_call.1} parent=5 // pred_fallthru
      _
    %p589 = scmp.le.s32.totalorder 1, %s26
    %p590 = scmp.lt.s32.totalorder %s26, 4
    %p591 = pnand %p589, %p590
    %p592 = pneg %p591
    // Predicated region
    $region97: #{tpu_custom_call.1} parent=5 // pred_check
      _
    $region98: #{tpu_custom_call.1} parent=5 // pred_check_branch
      %594 = sbr.rel (%p591) target = $region100
    $region99: #{tpu_custom_call.1} parent=5 // pred_region
      %s595 = ssub.s32 %s26, 1
      %p596 = scmp.lt.s32.totalorder %s31, 2
      %s597 = scalar_select %p596, %s31, 2
      %s598 = smul.addr %s597, 8
      %s599 = scalar_lea.vmem %s0, %s598
      %p600 = pneg %p52
      %p601 = pneg %p49
      %s602 = smul.u32 16, %s31
      %p603 = scmp.lt.s32.totalorder %s602, 47
      %s604 = scalar_select %p603, %s602, 47
      %s605 = smul.addr %s604, 4
      %s606 = scalar_lea.vmem %s1, %s605
      %p607 = pneg %p78
      %p608 = pneg %p75
      %p609 = scmp.lt.s32.totalorder %s31, 2
      %s610 = scalar_select %p609, %s31, 2
      %s611 = smul.addr %s610, 8
      %s612 = scalar_lea.vmem %s2, %s611
      %p613 = pneg %p104
      %p614 = pneg %p101
      %p615 = scmp.lt.s32.totalorder %s31, 2
      %s616 = scalar_select %p615, %s31, 2
      %s617 = smul.addr %s616, 8
      %s618 = scalar_lea.vmem %s3, %s617
      %p619 = pneg %p130
      %p620 = pneg %p127
      %p621 = pneg %p151
      %p622 = pneg %p148
      %p623 = pneg %p172
      %p624 = pneg %p169
      %p625 = pneg %p193
      %p626 = pneg %p190
      %p627 = pneg %p214
      %p628 = pneg %p211
      %p629 = pneg %p235
      %p630 = pneg %p232
      %p631 = pneg %p256
      %p632 = pneg %p253
      %p633 = pneg %p277
      %p634 = pneg %p274
      %p635 = pneg %p298
      %p636 = pneg %p295
      %p637 = pneg %p319
      %p638 = pneg %p316
      %p639 = pneg %p340
      %p640 = pneg %p337
      %p641 = pneg %p361
      %p642 = pneg %p358
      %p643 = pneg %p382
      %p644 = pneg %p379
      %p645 = pneg %p403
      %p646 = pneg %p400
      %p647 = pneg %p424
      %p648 = pneg %p421
      %p649 = pneg %p445
      %p650 = pneg %p442
      %p651 = pneg %p466
      %p652 = pneg %p463
      %p653 = pneg %p492
      %p654 = pneg %p489
      %p655 = scmp.lt.s32.totalorder %s31, 2
      %s656 = scalar_select %p655, %s31, 2
      %s657 = smul.addr %s656, 8
      %s658 = scalar_lea.vmem %s20, %s657
      %p659 = scmp.lt.s32.totalorder %s31, 2
      %s660 = scalar_select %p659, %s31, 2
      %s661 = smul.addr %s660, 8
      %s662 = scalar_lea.vmem %s0, %s661
      %s663 = smul.u32 16, %s31
      %p664 = scmp.lt.s32.totalorder %s663, 47
      %s665 = scalar_select %p664, %s663, 47
      %s666 = smul.addr %s665, 4
      %s667 = scalar_lea.vmem %s1, %s666
      %s668 = smul.u32 16, %s31
      %p669 = scmp.lt.s32.totalorder %s31, 2
      %s670 = scalar_select %p669, %s31, 2
      %s671 = smul.addr %s670, 8
      %s672 = scalar_lea.vmem %s2, %s671
      %p673 = scmp.lt.s32.totalorder %s31, 2
      %s674 = scalar_select %p673, %s31, 2
      %s675 = smul.addr %s674, 8
      %s676 = scalar_lea.vmem %s3, %s675
      %p677 = scmp.lt.s32.totalorder %s31, 2
      %s678 = scalar_select %p677, %s31, 2
      %s679 = smul.addr %s678, 8
      %s680 = scalar_lea.vmem %s20, %s679
      %v682 = vld [vmem:[%s667] sm:$0xf]
      %v683 = vld [vmem:[%s667 + $0x4] sm:$0xf]
      %v684 = vld [vmem:[%s667 + $0x8] sm:$0xf]
      %v685 = vld [vmem:[%s667 + $0xc] sm:$0xf]
      %v686 = vld [vmem:[%s667 + $0x10] sm:$0xf]
      %v687 = vld [vmem:[%s667 + $0x14] sm:$0xf]
      %v688 = vld [vmem:[%s667 + $0x18] sm:$0xf]
      %v689 = vld [vmem:[%s667 + $0x1c] sm:$0xf]
      %v690 = vld [vmem:[%s667 + $0x20] sm:$0xf]
      %v691 = vld [vmem:[%s667 + $0x24] sm:$0xf]
      %v692 = vld [vmem:[%s667 + $0x28] sm:$0xf]
      %v693 = vld [vmem:[%s667 + $0x2c] sm:$0xf]
      %v694 = vld [vmem:[%s667 + $0x30] sm:$0xf]
      %v695 = vld [vmem:[%s667 + $0x34] sm:$0xf]
      %v696 = vld [vmem:[%s667 + $0x38] sm:$0xf]
      %v697 = vld [vmem:[%s667 + $0x3c] sm:$0xf]
      %v698 = vld [vmem:[%s4] sm:$0xf]
      %v699 = vld [vmem:[%s4 + $0x4] sm:$0xf]
      %v700 = vld [vmem:[%s4 + $0x8] sm:$0xf]
      %v701 = vld [vmem:[%s4 + $0xc] sm:$0xf]
      %v702 = vld [vmem:[%s4 + $0x10] sm:$0xf]
      %v703 = vld [vmem:[%s4 + $0x14] sm:$0x1]
      %v720 = vunpack.c.l.b16 %v682
      %v721 = vunpack.c.l.b16 %v683
      %v722 = vunpack.c.l.b16 %v684
      %v723 = vunpack.c.l.b16 %v685
      %v724 = vunpack.c.l.b16 %v686
      %v725 = vunpack.c.l.b16 %v687
      %v726 = vunpack.c.l.b16 %v688
      %v727 = vunpack.c.l.b16 %v689
      %v728 = vunpack.c.l.b16 %v690
      %v729 = vunpack.c.l.b16 %v691
      %v730 = vunpack.c.l.b16 %v692
      %v731 = vunpack.c.l.b16 %v693
      %v732 = vunpack.c.l.b16 %v694
      %v733 = vunpack.c.l.b16 %v695
      %v734 = vunpack.c.l.b16 %v696
      %v735 = vunpack.c.l.b16 %v697
      %v736 = vpack.c.b16 %v721, %v720
      %v737 = vpack.c.b16 %v723, %v722
      %v738 = vpack.c.b16 %v725, %v724
      %v739 = vpack.c.b16 %v727, %v726
      %v740 = vpack.c.b16 %v729, %v728
      %v741 = vpack.c.b16 %v731, %v730
      %v742 = vpack.c.b16 %v733, %v732
      %v743 = vpack.c.b16 %v735, %v734
      %v750 = vunpack.c.l.b16 %v698
      %v751 = vunpack.c.l.b16 %v699
      %v752 = vunpack.c.l.b16 %v700
      %v753 = vunpack.c.l.b16 %v701
      %v754 = vunpack.c.l.b16 %v702
      %v755 = vunpack.c.l.b16 %v703
      %v756 = vpack.c.b16 %v751, %v750
      %v757 = vpack.c.b16 %v753, %v752
      %v758 = vpack.c.b16 %v755, %v754
      %vm761 = vcmask 343040
      %v763 = vsel %vm761, %v736, 0
      %v766 = vsel %vm761, %v737, 0
      %v769 = vsel %vm761, %v738, 0
      %v772 = vsel %vm761, %v739, 0
      %v775 = vsel %vm761, %v740, 0
      %v778 = vsel %vm761, %v741, 0
      %v781 = vsel %vm761, %v742, 0
      %v784 = vsel %vm761, %v743, 0
      %vm786 = vcmask 1044480
      %v788 = vsel %vm786, %v758, 0
      %790 = vmatpush.bf16.msra.mxu0 0
      %791 = vmatpush.bf16.msra.mxu0 0
      %792 = vmatpush.bf16.msra.mxu0 0
      %793 = vmatpush.bf16.msra.mxu0 0
      %794 = vmatpush.bf16.msra.mxu0 0
      %795 = vmatpush.bf16.msra.mxu0 %v788
      %796 = vmatpush.bf16.msra.mxu0 %v757
      %797 = vmatpush.bf16.msra.mxu0 %v756
      %798 = vmatmul.bf16.gmra.mxu0 %v763
      %v799 = vpop.f32.mrf.mxu0
      %v800 = vadd.f32 0.0, %v799
      %v801 = vpop.f32.mrf.mxu0
      %v802 = vadd.f32 0.0, %v801
      %803 = vmatmul.bf16.gmra.mxu0 %v766
      %v804 = vpop.f32.mrf.mxu0
      %v805 = vadd.f32 0.0, %v804
      %v806 = vpop.f32.mrf.mxu0
      %v807 = vadd.f32 0.0, %v806
      %808 = vmatmul.bf16.gmra.mxu0 %v769
      %v809 = vpop.f32.mrf.mxu0
      %v810 = vadd.f32 0.0, %v809
      %v811 = vpop.f32.mrf.mxu0
      %v812 = vadd.f32 0.0, %v811
      %813 = vmatmul.bf16.gmra.mxu0 %v772
      %v814 = vpop.f32.mrf.mxu0
      %v815 = vadd.f32 0.0, %v814
      %v816 = vpop.f32.mrf.mxu0
      %v817 = vadd.f32 0.0, %v816
      %818 = vmatmul.bf16.gmra.mxu0 %v775
      %v819 = vpop.f32.mrf.mxu0
      %v820 = vadd.f32 0.0, %v819
      %v821 = vpop.f32.mrf.mxu0
      %v822 = vadd.f32 0.0, %v821
      %823 = vmatmul.bf16.gmra.mxu0 %v778
      %v824 = vpop.f32.mrf.mxu0
      %v825 = vadd.f32 0.0, %v824
      %v826 = vpop.f32.mrf.mxu0
      %v827 = vadd.f32 0.0, %v826
      %828 = vmatmul.bf16.gmra.mxu0 %v781
      %v829 = vpop.f32.mrf.mxu0
      %v830 = vadd.f32 0.0, %v829
      %v831 = vpop.f32.mrf.mxu0
      %v832 = vadd.f32 0.0, %v831
      %833 = vmatmul.bf16.gmra.mxu0 %v784
      %v834 = vpop.f32.mrf.mxu0
      %v835 = vadd.f32 0.0, %v834
      %v836 = vpop.f32.mrf.mxu0
      %v837 = vadd.f32 0.0, %v836
      %838 = vdwg.mxu0
      %v839 = vld [vmem:[%s5] sm:$0xff]
      %v840 = vld [vmem:[%s5 + $0x8] sm:$0xff]
      %v841 = vadd.f32 %v800, %v839
      %v842 = vadd.f32 %v802, %v840
      %v843 = vadd.f32 %v805, %v839
      %v844 = vadd.f32 %v807, %v840
      %v845 = vadd.f32 %v810, %v839
      %v846 = vadd.f32 %v812, %v840
      %v847 = vadd.f32 %v815, %v839
      %v848 = vadd.f32 %v817, %v840
      %v849 = vadd.f32 %v820, %v839
      %v850 = vadd.f32 %v822, %v840
      %v851 = vadd.f32 %v825, %v839
      %v852 = vadd.f32 %v827, %v840
      %v853 = vadd.f32 %v830, %v839
      %v854 = vadd.f32 %v832, %v840
      %v855 = vadd.f32 %v835, %v839
      %v856 = vadd.f32 %v837, %v840
      %v857 = vld [vmem:[%s672] sm:$0xff]
      %v859 = vrot.slane %v857, 1
      %v860 = vrot.slane %v857, 2
      %v861 = vrot.slane %v857, 3
      %v862 = vrot.slane %v857, 4
      %v863 = vrot.slane %v857, 5
      %v864 = vrot.slane %v857, 6
      %v865 = vrot.slane %v857, 7
      %v866 = vpack.c.bf16 %v842, %v841
      %v867 = vpack.c.bf16 %v844, %v843
      %v868 = vpack.c.bf16 %v846, %v845
      %v869 = vpack.c.bf16 %v848, %v847
      %v870 = vpack.c.bf16 %v850, %v849
      %v871 = vpack.c.bf16 %v852, %v851
      %v872 = vpack.c.bf16 %v854, %v853
      %v873 = vpack.c.bf16 %v856, %v855
      %v874 = vld [vmem:[%s6] sm:$0xff]
      %v875 = vld [vmem:[%s6 + $0x8] sm:$0xff]
      %v876 = vld [vmem:[%s6 + $0x10] sm:$0xff]
      %v877 = vld [vmem:[%s6 + $0x18] sm:$0xff]
      %v878 = vld [vmem:[%s6 + $0x20] sm:$0xff]
      %v879 = vld [vmem:[%s6 + $0x28] sm:$0xff]
      %v880 = vld [vmem:[%s6 + $0x30] sm:$0xff]
      %v881 = vld [vmem:[%s6 + $0x38] sm:$0xff]
      %v882 = vld [vmem:[%s7] sm:$0x3]
      %v884 = vperm.slane %v882, 0
      %v885 = vperm.slane %v882, 1
      %v896 = vunpack.c.l.b16 %v874
      %v897 = vunpack.c.h.b16 %v874
      %v898 = vunpack.c.l.b16 %v875
      %v899 = vunpack.c.h.b16 %v875
      %v900 = vunpack.c.l.b16 %v876
      %v901 = vunpack.c.h.b16 %v876
      %v902 = vunpack.c.l.b16 %v877
      %v903 = vunpack.c.h.b16 %v877
      %v904 = vunpack.c.l.b16 %v878
      %v905 = vunpack.c.h.b16 %v878
      %v906 = vunpack.c.l.b16 %v879
      %v907 = vunpack.c.h.b16 %v879
      %v908 = vunpack.c.l.b16 %v880
      %v909 = vunpack.c.h.b16 %v880
      %v910 = vunpack.c.l.b16 %v881
      %v911 = vunpack.c.h.b16 %v881
      %v912 = vpack.c.b16 %v898, %v896
      %v913 = vpack.c.b16 %v899, %v897
      %v914 = vpack.c.b16 %v902, %v900
      %v915 = vpack.c.b16 %v903, %v901
      %v916 = vpack.c.b16 %v906, %v904
      %v917 = vpack.c.b16 %v907, %v905
      %v918 = vpack.c.b16 %v910, %v908
      %v919 = vpack.c.b16 %v911, %v909
      %vm928 = vcmask 523264
      %v930 = vsel %vm928, %v866, 0
      %v933 = vsel %vm928, %v867, 0
      %v936 = vsel %vm928, %v868, 0
      %v939 = vsel %vm928, %v869, 0
      %v942 = vsel %vm928, %v870, 0
      %v945 = vsel %vm928, %v871, 0
      %v948 = vsel %vm928, %v872, 0
      %v951 = vsel %vm928, %v873, 0
      %953 = vmatpush.bf16.msra.mxu0 0
      %954 = vmatpush.bf16.msra.mxu0 0
      %955 = vmatpush.bf16.msra.mxu0 0
      %956 = vmatpush.bf16.msra.mxu0 0
      %957 = vmatpush.bf16.msra.mxu0 %v918
      %958 = vmatpush.bf16.msra.mxu0 %v916
      %959 = vmatpush.bf16.msra.mxu0 %v914
      %960 = vmatpush.bf16.msra.mxu0 %v912
      %961 = vmatmul.bf16.gmra.mxu0 %v930
      %v962 = vpop.f32.mrf.mxu0
      %v963 = vadd.f32 %v884, %v962
      %v964 = vpop.f32.mrf.mxu0
      %v965 = vadd.f32 %v884, %v964
      %966 = vmatmul.bf16.gmra.mxu0 %v933
      %v967 = vpop.f32.mrf.mxu0
      %v968 = vadd.f32 %v884, %v967
      %v969 = vpop.f32.mrf.mxu0
      %v970 = vadd.f32 %v884, %v969
      %971 = vmatmul.bf16.gmra.mxu0 %v936
      %v972 = vpop.f32.mrf.mxu0
      %v973 = vadd.f32 %v884, %v972
      %v974 = vpop.f32.mrf.mxu0
      %v975 = vadd.f32 %v884, %v974
      %976 = vmatmul.bf16.gmra.mxu0 %v939
      %v977 = vpop.f32.mrf.mxu0
      %v978 = vadd.f32 %v884, %v977
      %v979 = vpop.f32.mrf.mxu0
      %v980 = vadd.f32 %v884, %v979
      %981 = vmatmul.bf16.gmra.mxu0 %v942
      %v982 = vpop.f32.mrf.mxu0
      %v983 = vadd.f32 %v884, %v982
      %v984 = vpop.f32.mrf.mxu0
      %v985 = vadd.f32 %v884, %v984
      %986 = vmatmul.bf16.gmra.mxu0 %v945
      %v987 = vpop.f32.mrf.mxu0
      %v988 = vadd.f32 %v884, %v987
      %v989 = vpop.f32.mrf.mxu0
      %v990 = vadd.f32 %v884, %v989
      %991 = vmatmul.bf16.gmra.mxu0 %v948
      %v992 = vpop.f32.mrf.mxu0
      %v993 = vadd.f32 %v884, %v992
      %v994 = vpop.f32.mrf.mxu0
      %v995 = vadd.f32 %v884, %v994
      %996 = vmatmul.bf16.gmra.mxu0 %v951
      %v997 = vpop.f32.mrf.mxu0
      %v998 = vadd.f32 %v884, %v997
      %v999 = vpop.f32.mrf.mxu0
      %v1000 = vadd.f32 %v884, %v999
      %1001 = vdwg.mxu0
      %1002 = vmatpush.bf16.msra.mxu0 0
      %1003 = vmatpush.bf16.msra.mxu0 0
      %1004 = vmatpush.bf16.msra.mxu0 0
      %1005 = vmatpush.bf16.msra.mxu0 0
      %1006 = vmatpush.bf16.msra.mxu0 %v919
      %1007 = vmatpush.bf16.msra.mxu0 %v917
      %1008 = vmatpush.bf16.msra.mxu0 %v915
      %1009 = vmatpush.bf16.msra.mxu0 %v913
      %1010 = vmatmul.bf16.gmra.mxu0 %v930
      %v1011 = vpop.f32.mrf.mxu0
      %v1012 = vadd.f32 %v885, %v1011
      %v1013 = vpop.f32.mrf.mxu0
      %v1014 = vadd.f32 %v885, %v1013
      %1015 = vmatmul.bf16.gmra.mxu0 %v933
      %v1016 = vpop.f32.mrf.mxu0
      %v1017 = vadd.f32 %v885, %v1016
      %v1018 = vpop.f32.mrf.mxu0
      %v1019 = vadd.f32 %v885, %v1018
      %1020 = vmatmul.bf16.gmra.mxu0 %v936
      %v1021 = vpop.f32.mrf.mxu0
      %v1022 = vadd.f32 %v885, %v1021
      %v1023 = vpop.f32.mrf.mxu0
      %v1024 = vadd.f32 %v885, %v1023
      %1025 = vmatmul.bf16.gmra.mxu0 %v939
      %v1026 = vpop.f32.mrf.mxu0
      %v1027 = vadd.f32 %v885, %v1026
      %v1028 = vpop.f32.mrf.mxu0
      %v1029 = vadd.f32 %v885, %v1028
      %1030 = vmatmul.bf16.gmra.mxu0 %v942
      %v1031 = vpop.f32.mrf.mxu0
      %v1032 = vadd.f32 %v885, %v1031
      %v1033 = vpop.f32.mrf.mxu0
      %v1034 = vadd.f32 %v885, %v1033
      %1035 = vmatmul.bf16.gmra.mxu0 %v945
      %v1036 = vpop.f32.mrf.mxu0
      %v1037 = vadd.f32 %v885, %v1036
      %v1038 = vpop.f32.mrf.mxu0
      %v1039 = vadd.f32 %v885, %v1038
      %1040 = vmatmul.bf16.gmra.mxu0 %v948
      %v1041 = vpop.f32.mrf.mxu0
      %v1042 = vadd.f32 %v885, %v1041
      %v1043 = vpop.f32.mrf.mxu0
      %v1044 = vadd.f32 %v885, %v1043
      %1045 = vmatmul.bf16.gmra.mxu0 %v951
      %v1046 = vpop.f32.mrf.mxu0
      %v1047 = vadd.f32 %v885, %v1046
      %v1048 = vpop.f32.mrf.mxu0
      %v1049 = vadd.f32 %v885, %v1048
      %1050 = vdwg.mxu0
      %v1051 = vld [vmem:[%s8] sm:$0xf]
      %v1052 = vld [vmem:[%s8 + $0x4] sm:$0xf]
      %v1053 = vld [vmem:[%s8 + $0x8] sm:$0xf]
      %v1054 = vld [vmem:[%s8 + $0xc] sm:$0xf]
      %v1055 = vld [vmem:[%s8 + $0x10] sm:$0xf]
      %v1056 = vld [vmem:[%s8 + $0x14] sm:$0xf]
      %v1057 = vld [vmem:[%s8 + $0x18] sm:$0xf]
      %v1058 = vld [vmem:[%s8 + $0x1c] sm:$0xf]
      %1061 = vrot.lane.b32.xlu0 %v963, 64
      %v1062 = vpop.permute.xlu0 %1061
      %1063 = vrot.lane.b32.xlu0 %v965, 64
      %v1064 = vpop.permute.xlu0 %1063
      %vm1065 = vcmask 130048
      %v1066 = vsel %vm1065, %v963, 0
      %v1068 = vsel %vm1065, %v965, 0
      %v1070 = vsel %vm1065, %v1062, 0
      %v1072 = vsel %vm1065, %v1064, 0
      %1074 = vmatpush.xpose.msra.mxu0 0.0
      %1075 = vmatpush.xpose.msra.mxu0 0.0
      %1076 = vmatpush.xpose.msra.mxu0 0.0
      %1077 = vmatpush.xpose.msra.mxu0 0.0
      %1078 = vmatpush.xpose.msra.mxu0 0.0
      %1079 = vmatpush.xpose.msra.mxu0 0.0
      %1080 = vmatpush.xpose.msra.mxu0 0.0
      %1081 = vmatpush.xpose.msra.mxu0 0.0
      %1082 = vmatpush.xpose.msra.mxu0 0.0
      %1083 = vmatpush.xpose.msra.mxu0 0.0
      %1084 = vmatpush.xpose.msra.mxu0 0.0
      %1085 = vmatpush.xpose.msra.mxu0 0.0
      %1086 = vmatpush.xpose.msra.mxu0 0.0
      %1087 = vmatpush.xpose.msra.mxu0 0.0
      %1088 = vmatpush.xpose.msra.mxu0 %v1072
      %1089 = vmatpush.xpose.msra.mxu0 %v1070
      %1090 = vmatmul.f32.gmra.mxu0 %v1066
      %v1091 = vpop.f32.mrf.mxu0
      %v1092 = vadd.f32 0.0, %v1091
      %1093 = vmatmul.f32.gmra.mxu0 %v1068
      %v1094 = vpop.f32.mrf.mxu0
      %v1095 = vadd.f32 0.0, %v1094
      %1096 = vdwg.mxu0
      %1099 = vrot.lane.b32.xlu0 %v968, 64
      %v1100 = vpop.permute.xlu0 %1099
      %1101 = vrot.lane.b32.xlu0 %v970, 64
      %v1102 = vpop.permute.xlu0 %1101
      %v1103 = vsel %vm1065, %v968, 0
      %v1105 = vsel %vm1065, %v970, 0
      %v1107 = vsel %vm1065, %v1100, 0
      %v1109 = vsel %vm1065, %v1102, 0
      %1111 = vmatpush.xpose.msra.mxu0 0.0
      %1112 = vmatpush.xpose.msra.mxu0 0.0
      %1113 = vmatpush.xpose.msra.mxu0 0.0
      %1114 = vmatpush.xpose.msra.mxu0 0.0
      %1115 = vmatpush.xpose.msra.mxu0 0.0
      %1116 = vmatpush.xpose.msra.mxu0 0.0
      %1117 = vmatpush.xpose.msra.mxu0 0.0
      %1118 = vmatpush.xpose.msra.mxu0 0.0
      %1119 = vmatpush.xpose.msra.mxu0 0.0
      %1120 = vmatpush.xpose.msra.mxu0 0.0
      %1121 = vmatpush.xpose.msra.mxu0 0.0
      %1122 = vmatpush.xpose.msra.mxu0 0.0
      %1123 = vmatpush.xpose.msra.mxu0 0.0
      %1124 = vmatpush.xpose.msra.mxu0 0.0
      %1125 = vmatpush.xpose.msra.mxu0 %v1109
      %1126 = vmatpush.xpose.msra.mxu0 %v1107
      %1127 = vmatmul.f32.gmra.mxu0 %v1103
      %v1128 = vpop.f32.mrf.mxu0
      %v1129 = vadd.f32 0.0, %v1128
      %1130 = vmatmul.f32.gmra.mxu0 %v1105
      %v1131 = vpop.f32.mrf.mxu0
      %v1132 = vadd.f32 0.0, %v1131
      %1133 = vdwg.mxu0
      %1136 = vrot.lane.b32.xlu0 %v973, 64
      %v1137 = vpop.permute.xlu0 %1136
      %1138 = vrot.lane.b32.xlu0 %v975, 64
      %v1139 = vpop.permute.xlu0 %1138
      %v1140 = vsel %vm1065, %v973, 0
      %v1142 = vsel %vm1065, %v975, 0
      %v1144 = vsel %vm1065, %v1137, 0
      %v1146 = vsel %vm1065, %v1139, 0
      %1148 = vmatpush.xpose.msra.mxu0 0.0
      %1149 = vmatpush.xpose.msra.mxu0 0.0
      %1150 = vmatpush.xpose.msra.mxu0 0.0
      %1151 = vmatpush.xpose.msra.mxu0 0.0
      %1152 = vmatpush.xpose.msra.mxu0 0.0
      %1153 = vmatpush.xpose.msra.mxu0 0.0
      %1154 = vmatpush.xpose.msra.mxu0 0.0
      %1155 = vmatpush.xpose.msra.mxu0 0.0
      %1156 = vmatpush.xpose.msra.mxu0 0.0
      %1157 = vmatpush.xpose.msra.mxu0 0.0
      %1158 = vmatpush.xpose.msra.mxu0 0.0
      %1159 = vmatpush.xpose.msra.mxu0 0.0
      %1160 = vmatpush.xpose.msra.mxu0 0.0
      %1161 = vmatpush.xpose.msra.mxu0 0.0
      %1162 = vmatpush.xpose.msra.mxu0 %v1146
      %1163 = vmatpush.xpose.msra.mxu0 %v1144
      %1164 = vmatmul.f32.gmra.mxu0 %v1140
      %v1165 = vpop.f32.mrf.mxu0
      %v1166 = vadd.f32 0.0, %v1165
      %1167 = vmatmul.f32.gmra.mxu0 %v1142
      %v1168 = vpop.f32.mrf.mxu0
      %v1169 = vadd.f32 0.0, %v1168
      %1170 = vdwg.mxu0
      %1173 = vrot.lane.b32.xlu0 %v978, 64
      %v1174 = vpop.permute.xlu0 %1173
      %1175 = vrot.lane.b32.xlu0 %v980, 64
      %v1176 = vpop.permute.xlu0 %1175
      %v1177 = vsel %vm1065, %v978, 0
      %v1179 = vsel %vm1065, %v980, 0
      %v1181 = vsel %vm1065, %v1174, 0
      %v1183 = vsel %vm1065, %v1176, 0
      %1185 = vmatpush.xpose.msra.mxu0 0.0
      %1186 = vmatpush.xpose.msra.mxu0 0.0
      %1187 = vmatpush.xpose.msra.mxu0 0.0
      %1188 = vmatpush.xpose.msra.mxu0 0.0
      %1189 = vmatpush.xpose.msra.mxu0 0.0
      %1190 = vmatpush.xpose.msra.mxu0 0.0
      %1191 = vmatpush.xpose.msra.mxu0 0.0
      %1192 = vmatpush.xpose.msra.mxu0 0.0
      %1193 = vmatpush.xpose.msra.mxu0 0.0
      %1194 = vmatpush.xpose.msra.mxu0 0.0
      %1195 = vmatpush.xpose.msra.mxu0 0.0
      %1196 = vmatpush.xpose.msra.mxu0 0.0
      %1197 = vmatpush.xpose.msra.mxu0 0.0
      %1198 = vmatpush.xpose.msra.mxu0 0.0
      %1199 = vmatpush.xpose.msra.mxu0 %v1183
      %1200 = vmatpush.xpose.msra.mxu0 %v1181
      %1201 = vmatmul.f32.gmra.mxu0 %v1177
      %v1202 = vpop.f32.mrf.mxu0
      %v1203 = vadd.f32 0.0, %v1202
      %1204 = vmatmul.f32.gmra.mxu0 %v1179
      %v1205 = vpop.f32.mrf.mxu0
      %v1206 = vadd.f32 0.0, %v1205
      %1207 = vdwg.mxu0
      %1210 = vrot.lane.b32.xlu0 %v983, 64
      %v1211 = vpop.permute.xlu0 %1210
      %1212 = vrot.lane.b32.xlu0 %v985, 64
      %v1213 = vpop.permute.xlu0 %1212
      %v1214 = vsel %vm1065, %v983, 0
      %v1216 = vsel %vm1065, %v985, 0
      %v1218 = vsel %vm1065, %v1211, 0
      %v1220 = vsel %vm1065, %v1213, 0
      %1222 = vmatpush.xpose.msra.mxu0 0.0
      %1223 = vmatpush.xpose.msra.mxu0 0.0
      %1224 = vmatpush.xpose.msra.mxu0 0.0
      %1225 = vmatpush.xpose.msra.mxu0 0.0
      %1226 = vmatpush.xpose.msra.mxu0 0.0
      %1227 = vmatpush.xpose.msra.mxu0 0.0
      %1228 = vmatpush.xpose.msra.mxu0 0.0
      %1229 = vmatpush.xpose.msra.mxu0 0.0
      %1230 = vmatpush.xpose.msra.mxu0 0.0
      %1231 = vmatpush.xpose.msra.mxu0 0.0
      %1232 = vmatpush.xpose.msra.mxu0 0.0
      %1233 = vmatpush.xpose.msra.mxu0 0.0
      %1234 = vmatpush.xpose.msra.mxu0 0.0
      %1235 = vmatpush.xpose.msra.mxu0 0.0
      %1236 = vmatpush.xpose.msra.mxu0 %v1220
      %1237 = vmatpush.xpose.msra.mxu0 %v1218
      %1238 = vmatmul.f32.gmra.mxu0 %v1214
      %v1239 = vpop.f32.mrf.mxu0
      %v1240 = vadd.f32 0.0, %v1239
      %1241 = vmatmul.f32.gmra.mxu0 %v1216
      %v1242 = vpop.f32.mrf.mxu0
      %v1243 = vadd.f32 0.0, %v1242
      %1244 = vdwg.mxu0
      %1247 = vrot.lane.b32.xlu0 %v988, 64
      %v1248 = vpop.permute.xlu0 %1247
      %1249 = vrot.lane.b32.xlu0 %v990, 64
      %v1250 = vpop.permute.xlu0 %1249
      %v1251 = vsel %vm1065, %v988, 0
      %v1253 = vsel %vm1065, %v990, 0
      %v1255 = vsel %vm1065, %v1248, 0
      %v1257 = vsel %vm1065, %v1250, 0
      %1259 = vmatpush.xpose.msra.mxu0 0.0
      %1260 = vmatpush.xpose.msra.mxu0 0.0
      %1261 = vmatpush.xpose.msra.mxu0 0.0
      %1262 = vmatpush.xpose.msra.mxu0 0.0
      %1263 = vmatpush.xpose.msra.mxu0 0.0
      %1264 = vmatpush.xpose.msra.mxu0 0.0
      %1265 = vmatpush.xpose.msra.mxu0 0.0
      %1266 = vmatpush.xpose.msra.mxu0 0.0
      %1267 = vmatpush.xpose.msra.mxu0 0.0
      %1268 = vmatpush.xpose.msra.mxu0 0.0
      %1269 = vmatpush.xpose.msra.mxu0 0.0
      %1270 = vmatpush.xpose.msra.mxu0 0.0
      %1271 = vmatpush.xpose.msra.mxu0 0.0
      %1272 = vmatpush.xpose.msra.mxu0 0.0
      %1273 = vmatpush.xpose.msra.mxu0 %v1257
      %1274 = vmatpush.xpose.msra.mxu0 %v1255
      %1275 = vmatmul.f32.gmra.mxu0 %v1251
      %v1276 = vpop.f32.mrf.mxu0
      %v1277 = vadd.f32 0.0, %v1276
      %1278 = vmatmul.f32.gmra.mxu0 %v1253
      %v1279 = vpop.f32.mrf.mxu0
      %v1280 = vadd.f32 0.0, %v1279
      %1281 = vdwg.mxu0
      %1284 = vrot.lane.b32.xlu0 %v993, 64
      %v1285 = vpop.permute.xlu0 %1284
      %1286 = vrot.lane.b32.xlu0 %v995, 64
      %v1287 = vpop.permute.xlu0 %1286
      %v1288 = vsel %vm1065, %v993, 0
      %v1290 = vsel %vm1065, %v995, 0
      %v1292 = vsel %vm1065, %v1285, 0
      %v1294 = vsel %vm1065, %v1287, 0
      %1296 = vmatpush.xpose.msra.mxu0 0.0
      %1297 = vmatpush.xpose.msra.mxu0 0.0
      %1298 = vmatpush.xpose.msra.mxu0 0.0
      %1299 = vmatpush.xpose.msra.mxu0 0.0
      %1300 = vmatpush.xpose.msra.mxu0 0.0
      %1301 = vmatpush.xpose.msra.mxu0 0.0
      %1302 = vmatpush.xpose.msra.mxu0 0.0
      %1303 = vmatpush.xpose.msra.mxu0 0.0
      %1304 = vmatpush.xpose.msra.mxu0 0.0
      %1305 = vmatpush.xpose.msra.mxu0 0.0
      %1306 = vmatpush.xpose.msra.mxu0 0.0
      %1307 = vmatpush.xpose.msra.mxu0 0.0
      %1308 = vmatpush.xpose.msra.mxu0 0.0
      %1309 = vmatpush.xpose.msra.mxu0 0.0
      %1310 = vmatpush.xpose.msra.mxu0 %v1294
      %1311 = vmatpush.xpose.msra.mxu0 %v1292
      %1312 = vmatmul.f32.gmra.mxu0 %v1288
      %v1313 = vpop.f32.mrf.mxu0
      %v1314 = vadd.f32 0.0, %v1313
      %1315 = vmatmul.f32.gmra.mxu0 %v1290
      %v1316 = vpop.f32.mrf.mxu0
      %v1317 = vadd.f32 0.0, %v1316
      %1318 = vdwg.mxu0
      %1321 = vrot.lane.b32.xlu0 %v998, 64
      %v1322 = vpop.permute.xlu0 %1321
      %1323 = vrot.lane.b32.xlu0 %v1000, 64
      %v1324 = vpop.permute.xlu0 %1323
      %v1325 = vsel %vm1065, %v998, 0
      %v1327 = vsel %vm1065, %v1000, 0
      %v1329 = vsel %vm1065, %v1322, 0
      %v1331 = vsel %vm1065, %v1324, 0
      %1333 = vmatpush.xpose.msra.mxu0 0.0
      %1334 = vmatpush.xpose.msra.mxu0 0.0
      %1335 = vmatpush.xpose.msra.mxu0 0.0
      %1336 = vmatpush.xpose.msra.mxu0 0.0
      %1337 = vmatpush.xpose.msra.mxu0 0.0
      %1338 = vmatpush.xpose.msra.mxu0 0.0
      %1339 = vmatpush.xpose.msra.mxu0 0.0
      %1340 = vmatpush.xpose.msra.mxu0 0.0
      %1341 = vmatpush.xpose.msra.mxu0 0.0
      %1342 = vmatpush.xpose.msra.mxu0 0.0
      %1343 = vmatpush.xpose.msra.mxu0 0.0
      %1344 = vmatpush.xpose.msra.mxu0 0.0
      %1345 = vmatpush.xpose.msra.mxu0 0.0
      %1346 = vmatpush.xpose.msra.mxu0 0.0
      %1347 = vmatpush.xpose.msra.mxu0 %v1331
      %1348 = vmatpush.xpose.msra.mxu0 %v1329
      %1349 = vmatmul.f32.gmra.mxu0 %v1325
      %v1350 = vpop.f32.mrf.mxu0
      %v1351 = vadd.f32 0.0, %v1350
      %1352 = vmatmul.f32.gmra.mxu0 %v1327
      %v1353 = vpop.f32.mrf.mxu0
      %v1354 = vadd.f32 0.0, %v1353
      %1355 = vdwg.mxu0
      %v1356 = vmul.f32 %v1092, 0.25
      %v1357 = vmul.f32 %v1095, 0.25
      %v1358 = vmul.f32 %v1129, 0.25
      %v1359 = vmul.f32 %v1132, 0.25
      %v1360 = vmul.f32 %v1166, 0.25
      %v1361 = vmul.f32 %v1169, 0.25
      %v1362 = vmul.f32 %v1203, 0.25
      %v1363 = vmul.f32 %v1206, 0.25
      %v1364 = vmul.f32 %v1240, 0.25
      %v1365 = vmul.f32 %v1243, 0.25
      %v1366 = vmul.f32 %v1277, 0.25
      %v1367 = vmul.f32 %v1280, 0.25
      %v1368 = vmul.f32 %v1314, 0.25
      %v1369 = vmul.f32 %v1317, 0.25
      %v1370 = vmul.f32 %v1351, 0.25
      %v1371 = vmul.f32 %v1354, 0.25
      %v1372 = vperm.slane %v857, 0
      %v1373 = vperm.slane %v859, 0
      %v1374 = vperm.slane %v860, 0
      %v1375 = vperm.slane %v861, 0
      %v1376 = vperm.slane %v862, 0
      %v1377 = vperm.slane %v863, 0
      %v1378 = vperm.slane %v864, 0
      %v1379 = vperm.slane %v865, 0
      %v1388 = vadd.f32 %v1356, %v1372
      %v1389 = vadd.f32 %v1357, %v1372
      %v1390 = vadd.f32 %v1358, %v1373
      %v1391 = vadd.f32 %v1359, %v1373
      %v1392 = vadd.f32 %v1360, %v1374
      %v1393 = vadd.f32 %v1361, %v1374
      %v1394 = vadd.f32 %v1362, %v1375
      %v1395 = vadd.f32 %v1363, %v1375
      %v1396 = vadd.f32 %v1364, %v1376
      %v1397 = vadd.f32 %v1365, %v1376
      %v1398 = vadd.f32 %v1366, %v1377
      %v1399 = vadd.f32 %v1367, %v1377
      %v1400 = vadd.f32 %v1368, %v1378
      %v1401 = vadd.f32 %v1369, %v1378
      %v1402 = vadd.f32 %v1370, %v1379
      %v1403 = vadd.f32 %v1371, %v1379
      %v1404 = vsel %vm1065, %v1388, -inf
      %1405 = vmax.xlane.f32.xlu0 %v1404
      %v1406 = vpop.xlane.xlu0 %1405
      %v1407 = vsel %vm1065, %v1389, -inf
      %1408 = vmax.xlane.f32.xlu0 %v1407
      %v1409 = vpop.xlane.xlu0 %1408
      %v1410 = vsel %vm1065, %v1390, -inf
      %1411 = vmax.xlane.f32.xlu0 %v1410
      %v1412 = vpop.xlane.xlu0 %1411
      %v1413 = vsel %vm1065, %v1391, -inf
      %1414 = vmax.xlane.f32.xlu0 %v1413
      %v1415 = vpop.xlane.xlu0 %1414
      %v1416 = vsel %vm1065, %v1392, -inf
      %1417 = vmax.xlane.f32.xlu0 %v1416
      %v1418 = vpop.xlane.xlu0 %1417
      %v1419 = vsel %vm1065, %v1393, -inf
      %1420 = vmax.xlane.f32.xlu0 %v1419
      %v1421 = vpop.xlane.xlu0 %1420
      %v1422 = vsel %vm1065, %v1394, -inf
      %1423 = vmax.xlane.f32.xlu0 %v1422
      %v1424 = vpop.xlane.xlu0 %1423
      %v1425 = vsel %vm1065, %v1395, -inf
      %1426 = vmax.xlane.f32.xlu0 %v1425
      %v1427 = vpop.xlane.xlu0 %1426
      %v1428 = vsel %vm1065, %v1396, -inf
      %1429 = vmax.xlane.f32.xlu0 %v1428
      %v1430 = vpop.xlane.xlu0 %1429
      %v1431 = vsel %vm1065, %v1397, -inf
      %1432 = vmax.xlane.f32.xlu0 %v1431
      %v1433 = vpop.xlane.xlu0 %1432
      %v1434 = vsel %vm1065, %v1398, -inf
      %1435 = vmax.xlane.f32.xlu0 %v1434
      %v1436 = vpop.xlane.xlu0 %1435
      %v1437 = vsel %vm1065, %v1399, -inf
      %1438 = vmax.xlane.f32.xlu0 %v1437
      %v1439 = vpop.xlane.xlu0 %1438
      %v1440 = vsel %vm1065, %v1400, -inf
      %1441 = vmax.xlane.f32.xlu0 %v1440
      %v1442 = vpop.xlane.xlu0 %1441
      %v1443 = vsel %vm1065, %v1401, -inf
      %1444 = vmax.xlane.f32.xlu0 %v1443
      %v1445 = vpop.xlane.xlu0 %1444
      %v1446 = vsel %vm1065, %v1402, -inf
      %1447 = vmax.xlane.f32.xlu0 %v1446
      %v1448 = vpop.xlane.xlu0 %1447
      %v1449 = vsel %vm1065, %v1403, -inf
      %1450 = vmax.xlane.f32.xlu0 %v1449
      %v1451 = vpop.xlane.xlu0 %1450
      %v1452 = vsub.f32 %v1388, %v1406
      %v1453 = vsub.f32 %v1389, %v1409
      %v1454 = vsub.f32 %v1390, %v1412
      %v1455 = vsub.f32 %v1391, %v1415
      %v1456 = vsub.f32 %v1392, %v1418
      %v1457 = vsub.f32 %v1393, %v1421
      %v1458 = vsub.f32 %v1394, %v1424
      %v1459 = vsub.f32 %v1395, %v1427
      %v1460 = vsub.f32 %v1396, %v1430
      %v1461 = vsub.f32 %v1397, %v1433
      %v1462 = vsub.f32 %v1398, %v1436
      %v1463 = vsub.f32 %v1399, %v1439
      %v1464 = vsub.f32 %v1400, %v1442
      %v1465 = vsub.f32 %v1401, %v1445
      %v1466 = vsub.f32 %v1402, %v1448
      %v1467 = vsub.f32 %v1403, %v1451
      %v1468 = vmul.f32 %v1452, 1.442695
      %v1469 = vpow.pop %v1468
      %v1470 = vmul.f32 %v1453, 1.442695
      %v1471 = vpow.pop %v1470
      %v1472 = vmul.f32 %v1454, 1.442695
      %v1473 = vpow.pop %v1472
      %v1474 = vmul.f32 %v1455, 1.442695
      %v1475 = vpow.pop %v1474
      %v1476 = vmul.f32 %v1456, 1.442695
      %v1477 = vpow.pop %v1476
      %v1478 = vmul.f32 %v1457, 1.442695
      %v1479 = vpow.pop %v1478
      %v1480 = vmul.f32 %v1458, 1.442695
      %v1481 = vpow.pop %v1480
      %v1482 = vmul.f32 %v1459, 1.442695
      %v1483 = vpow.pop %v1482
      %v1484 = vmul.f32 %v1460, 1.442695
      %v1485 = vpow.pop %v1484
      %v1486 = vmul.f32 %v1461, 1.442695
      %v1487 = vpow.pop %v1486
      %v1488 = vmul.f32 %v1462, 1.442695
      %v1489 = vpow.pop %v1488
      %v1490 = vmul.f32 %v1463, 1.442695
      %v1491 = vpow.pop %v1490
      %v1492 = vmul.f32 %v1464, 1.442695
      %v1493 = vpow.pop %v1492
      %v1494 = vmul.f32 %v1465, 1.442695
      %v1495 = vpow.pop %v1494
      %v1496 = vmul.f32 %v1466, 1.442695
      %v1497 = vpow.pop %v1496
      %v1498 = vmul.f32 %v1467, 1.442695
      %v1499 = vpow.pop %v1498
      %v1500 = vsel %vm1065, %v1469, 0.0
      %1501 = vadd.xlane.f32.xlu0 %v1500
      %v1502 = vpop.xlane.xlu0 %1501
      %v1503 = vsel %vm1065, %v1471, 0.0
      %1504 = vadd.xlane.f32.xlu0 %v1503
      %v1505 = vpop.xlane.xlu0 %1504
      %v1506 = vsel %vm1065, %v1473, 0.0
      %1507 = vadd.xlane.f32.xlu0 %v1506
      %v1508 = vpop.xlane.xlu0 %1507
      %v1509 = vsel %vm1065, %v1475, 0.0
      %1510 = vadd.xlane.f32.xlu0 %v1509
      %v1511 = vpop.xlane.xlu0 %1510
      %v1512 = vsel %vm1065, %v1477, 0.0
      %1513 = vadd.xlane.f32.xlu0 %v1512
      %v1514 = vpop.xlane.xlu0 %1513
      %v1515 = vsel %vm1065, %v1479, 0.0
      %1516 = vadd.xlane.f32.xlu0 %v1515
      %v1517 = vpop.xlane.xlu0 %1516
      %v1518 = vsel %vm1065, %v1481, 0.0
      %1519 = vadd.xlane.f32.xlu0 %v1518
      %v1520 = vpop.xlane.xlu0 %1519
      %v1521 = vsel %vm1065, %v1483, 0.0
      %1522 = vadd.xlane.f32.xlu0 %v1521
      %v1523 = vpop.xlane.xlu0 %1522
      %v1524 = vsel %vm1065, %v1485, 0.0
      %1525 = vadd.xlane.f32.xlu0 %v1524
      %v1526 = vpop.xlane.xlu0 %1525
      %v1527 = vsel %vm1065, %v1487, 0.0
      %1528 = vadd.xlane.f32.xlu0 %v1527
      %v1529 = vpop.xlane.xlu0 %1528
      %v1530 = vsel %vm1065, %v1489, 0.0
      %1531 = vadd.xlane.f32.xlu0 %v1530
      %v1532 = vpop.xlane.xlu0 %1531
      %v1533 = vsel %vm1065, %v1491, 0.0
      %1534 = vadd.xlane.f32.xlu0 %v1533
      %v1535 = vpop.xlane.xlu0 %1534
      %v1536 = vsel %vm1065, %v1493, 0.0
      %1537 = vadd.xlane.f32.xlu0 %v1536
      %v1538 = vpop.xlane.xlu0 %1537
      %v1539 = vsel %vm1065, %v1495, 0.0
      %1540 = vadd.xlane.f32.xlu0 %v1539
      %v1541 = vpop.xlane.xlu0 %1540
      %v1542 = vsel %vm1065, %v1497, 0.0
      %1543 = vadd.xlane.f32.xlu0 %v1542
      %v1544 = vpop.xlane.xlu0 %1543
      %v1545 = vsel %vm1065, %v1499, 0.0
      %1546 = vadd.xlane.f32.xlu0 %v1545
      %v1547 = vpop.xlane.xlu0 %1546
      %v1548 = vrcp.pop %v1502
      %v1549 = vrcp.pop %v1505
      %v1550 = vrcp.pop %v1508
      %v1551 = vrcp.pop %v1511
      %v1552 = vrcp.pop %v1514
      %v1553 = vrcp.pop %v1517
      %v1554 = vrcp.pop %v1520
      %v1555 = vrcp.pop %v1523
      %v1556 = vrcp.pop %v1526
      %v1557 = vrcp.pop %v1529
      %v1558 = vrcp.pop %v1532
      %v1559 = vrcp.pop %v1535
      %v1560 = vrcp.pop %v1538
      %v1561 = vrcp.pop %v1541
      %v1562 = vrcp.pop %v1544
      %v1563 = vrcp.pop %v1547
      %v1564 = vmul.f32 %v1469, %v1548
      %v1565 = vmul.f32 %v1471, %v1549
      %v1566 = vmul.f32 %v1473, %v1550
      %v1567 = vmul.f32 %v1475, %v1551
      %v1568 = vmul.f32 %v1477, %v1552
      %v1569 = vmul.f32 %v1479, %v1553
      %v1570 = vmul.f32 %v1481, %v1554
      %v1571 = vmul.f32 %v1483, %v1555
      %v1572 = vmul.f32 %v1485, %v1556
      %v1573 = vmul.f32 %v1487, %v1557
      %v1574 = vmul.f32 %v1489, %v1558
      %v1575 = vmul.f32 %v1491, %v1559
      %v1576 = vmul.f32 %v1493, %v1560
      %v1577 = vmul.f32 %v1495, %v1561
      %v1578 = vmul.f32 %v1497, %v1562
      %v1579 = vmul.f32 %v1499, %v1563
      %v1581 = vsel %vm1065, %v1564, 0
      %v1584 = vsel %vm1065, %v1565, 0
      %1586 = vmatpush.msra.mxu0 0.0
      %1587 = vmatpush.msra.mxu0 0.0
      %1588 = vmatpush.msra.mxu0 0.0
      %1589 = vmatpush.msra.mxu0 0.0
      %1590 = vmatpush.msra.mxu0 0.0
      %1591 = vmatpush.msra.mxu0 0.0
      %1592 = vmatpush.msra.mxu0 0.0
      %1593 = vmatpush.msra.mxu0 0.0
      %1594 = vmatpush.msra.mxu0 0.0
      %1595 = vmatpush.msra.mxu0 0.0
      %1596 = vmatpush.msra.mxu0 0.0
      %1597 = vmatpush.msra.mxu0 0.0
      %1598 = vmatpush.msra.mxu0 0.0
      %1599 = vmatpush.msra.mxu0 0.0
      %1600 = vmatpush.msra.mxu0 %v1014
      %1601 = vmatpush.msra.mxu0 %v1012
      %1602 = vmatmul.f32.gmra.mxu0 %v1581
      %v1603 = vpop.f32.mrf.mxu0
      %v1604 = vadd.f32 0.0, %v1603
      %1605 = vmatmul.f32.gmra.mxu0 %v1584
      %v1606 = vpop.f32.mrf.mxu0
      %v1607 = vadd.f32 0.0, %v1606
      %1608 = vdwg.mxu0
      %v1610 = vsel %vm1065, %v1566, 0
      %v1613 = vsel %vm1065, %v1567, 0
      %1615 = vmatpush.msra.mxu0 0.0
      %1616 = vmatpush.msra.mxu0 0.0
      %1617 = vmatpush.msra.mxu0 0.0
      %1618 = vmatpush.msra.mxu0 0.0
      %1619 = vmatpush.msra.mxu0 0.0
      %1620 = vmatpush.msra.mxu0 0.0
      %1621 = vmatpush.msra.mxu0 0.0
      %1622 = vmatpush.msra.mxu0 0.0
      %1623 = vmatpush.msra.mxu0 0.0
      %1624 = vmatpush.msra.mxu0 0.0
      %1625 = vmatpush.msra.mxu0 0.0
      %1626 = vmatpush.msra.mxu0 0.0
      %1627 = vmatpush.msra.mxu0 0.0
      %1628 = vmatpush.msra.mxu0 0.0
      %1629 = vmatpush.msra.mxu0 %v1019
      %1630 = vmatpush.msra.mxu0 %v1017
      %1631 = vmatmul.f32.gmra.mxu0 %v1610
      %v1632 = vpop.f32.mrf.mxu0
      %v1633 = vadd.f32 0.0, %v1632
      %1634 = vmatmul.f32.gmra.mxu0 %v1613
      %v1635 = vpop.f32.mrf.mxu0
      %v1636 = vadd.f32 0.0, %v1635
      %1637 = vdwg.mxu0
      %v1639 = vsel %vm1065, %v1568, 0
      %v1642 = vsel %vm1065, %v1569, 0
      %1644 = vmatpush.msra.mxu0 0.0
      %1645 = vmatpush.msra.mxu0 0.0
      %1646 = vmatpush.msra.mxu0 0.0
      %1647 = vmatpush.msra.mxu0 0.0
      %1648 = vmatpush.msra.mxu0 0.0
      %1649 = vmatpush.msra.mxu0 0.0
      %1650 = vmatpush.msra.mxu0 0.0
      %1651 = vmatpush.msra.mxu0 0.0
      %1652 = vmatpush.msra.mxu0 0.0
      %1653 = vmatpush.msra.mxu0 0.0
      %1654 = vmatpush.msra.mxu0 0.0
      %1655 = vmatpush.msra.mxu0 0.0
      %1656 = vmatpush.msra.mxu0 0.0
      %1657 = vmatpush.msra.mxu0 0.0
      %1658 = vmatpush.msra.mxu0 %v1024
      %1659 = vmatpush.msra.mxu0 %v1022
      %1660 = vmatmul.f32.gmra.mxu0 %v1639
      %v1661 = vpop.f32.mrf.mxu0
      %v1662 = vadd.f32 0.0, %v1661
      %1663 = vmatmul.f32.gmra.mxu0 %v1642
      %v1664 = vpop.f32.mrf.mxu0
      %v1665 = vadd.f32 0.0, %v1664
      %1666 = vdwg.mxu0
      %v1668 = vsel %vm1065, %v1570, 0
      %v1671 = vsel %vm1065, %v1571, 0
      %1673 = vmatpush.msra.mxu0 0.0
      %1674 = vmatpush.msra.mxu0 0.0
      %1675 = vmatpush.msra.mxu0 0.0
      %1676 = vmatpush.msra.mxu0 0.0
      %1677 = vmatpush.msra.mxu0 0.0
      %1678 = vmatpush.msra.mxu0 0.0
      %1679 = vmatpush.msra.mxu0 0.0
      %1680 = vmatpush.msra.mxu0 0.0
      %1681 = vmatpush.msra.mxu0 0.0
      %1682 = vmatpush.msra.mxu0 0.0
      %1683 = vmatpush.msra.mxu0 0.0
      %1684 = vmatpush.msra.mxu0 0.0
      %1685 = vmatpush.msra.mxu0 0.0
      %1686 = vmatpush.msra.mxu0 0.0
      %1687 = vmatpush.msra.mxu0 %v1029
      %1688 = vmatpush.msra.mxu0 %v1027
      %1689 = vmatmul.f32.gmra.mxu0 %v1668
      %v1690 = vpop.f32.mrf.mxu0
      %v1691 = vadd.f32 0.0, %v1690
      %1692 = vmatmul.f32.gmra.mxu0 %v1671
      %v1693 = vpop.f32.mrf.mxu0
      %v1694 = vadd.f32 0.0, %v1693
      %1695 = vdwg.mxu0
      %v1697 = vsel %vm1065, %v1572, 0
      %v1700 = vsel %vm1065, %v1573, 0
      %1702 = vmatpush.msra.mxu0 0.0
      %1703 = vmatpush.msra.mxu0 0.0
      %1704 = vmatpush.msra.mxu0 0.0
      %1705 = vmatpush.msra.mxu0 0.0
      %1706 = vmatpush.msra.mxu0 0.0
      %1707 = vmatpush.msra.mxu0 0.0
      %1708 = vmatpush.msra.mxu0 0.0
      %1709 = vmatpush.msra.mxu0 0.0
      %1710 = vmatpush.msra.mxu0 0.0
      %1711 = vmatpush.msra.mxu0 0.0
      %1712 = vmatpush.msra.mxu0 0.0
      %1713 = vmatpush.msra.mxu0 0.0
      %1714 = vmatpush.msra.mxu0 0.0
      %1715 = vmatpush.msra.mxu0 0.0
      %1716 = vmatpush.msra.mxu0 %v1034
      %1717 = vmatpush.msra.mxu0 %v1032
      %1718 = vmatmul.f32.gmra.mxu0 %v1697
      %v1719 = vpop.f32.mrf.mxu0
      %v1720 = vadd.f32 0.0, %v1719
      %1721 = vmatmul.f32.gmra.mxu0 %v1700
      %v1722 = vpop.f32.mrf.mxu0
      %v1723 = vadd.f32 0.0, %v1722
      %1724 = vdwg.mxu0
      %v1726 = vsel %vm1065, %v1574, 0
      %v1729 = vsel %vm1065, %v1575, 0
      %1731 = vmatpush.msra.mxu0 0.0
      %1732 = vmatpush.msra.mxu0 0.0
      %1733 = vmatpush.msra.mxu0 0.0
      %1734 = vmatpush.msra.mxu0 0.0
      %1735 = vmatpush.msra.mxu0 0.0
      %1736 = vmatpush.msra.mxu0 0.0
      %1737 = vmatpush.msra.mxu0 0.0
      %1738 = vmatpush.msra.mxu0 0.0
      %1739 = vmatpush.msra.mxu0 0.0
      %1740 = vmatpush.msra.mxu0 0.0
      %1741 = vmatpush.msra.mxu0 0.0
      %1742 = vmatpush.msra.mxu0 0.0
      %1743 = vmatpush.msra.mxu0 0.0
      %1744 = vmatpush.msra.mxu0 0.0
      %1745 = vmatpush.msra.mxu0 %v1039
      %1746 = vmatpush.msra.mxu0 %v1037
      %1747 = vmatmul.f32.gmra.mxu0 %v1726
      %v1748 = vpop.f32.mrf.mxu0
      %v1749 = vadd.f32 0.0, %v1748
      %1750 = vmatmul.f32.gmra.mxu0 %v1729
      %v1751 = vpop.f32.mrf.mxu0
      %v1752 = vadd.f32 0.0, %v1751
      %1753 = vdwg.mxu0
      %v1755 = vsel %vm1065, %v1576, 0
      %v1758 = vsel %vm1065, %v1577, 0
      %1760 = vmatpush.msra.mxu0 0.0
      %1761 = vmatpush.msra.mxu0 0.0
      %1762 = vmatpush.msra.mxu0 0.0
      %1763 = vmatpush.msra.mxu0 0.0
      %1764 = vmatpush.msra.mxu0 0.0
      %1765 = vmatpush.msra.mxu0 0.0
      %1766 = vmatpush.msra.mxu0 0.0
      %1767 = vmatpush.msra.mxu0 0.0
      %1768 = vmatpush.msra.mxu0 0.0
      %1769 = vmatpush.msra.mxu0 0.0
      %1770 = vmatpush.msra.mxu0 0.0
      %1771 = vmatpush.msra.mxu0 0.0
      %1772 = vmatpush.msra.mxu0 0.0
      %1773 = vmatpush.msra.mxu0 0.0
      %1774 = vmatpush.msra.mxu0 %v1044
      %1775 = vmatpush.msra.mxu0 %v1042
      %1776 = vmatmul.f32.gmra.mxu0 %v1755
      %v1777 = vpop.f32.mrf.mxu0
      %v1778 = vadd.f32 0.0, %v1777
      %1779 = vmatmul.f32.gmra.mxu0 %v1758
      %v1780 = vpop.f32.mrf.mxu0
      %v1781 = vadd.f32 0.0, %v1780
      %1782 = vdwg.mxu0
      %v1784 = vsel %vm1065, %v1578, 0
      %v1787 = vsel %vm1065, %v1579, 0
      %1789 = vmatpush.msra.mxu0 0.0
      %1790 = vmatpush.msra.mxu0 0.0
      %1791 = vmatpush.msra.mxu0 0.0
      %1792 = vmatpush.msra.mxu0 0.0
      %1793 = vmatpush.msra.mxu0 0.0
      %1794 = vmatpush.msra.mxu0 0.0
      %1795 = vmatpush.msra.mxu0 0.0
      %1796 = vmatpush.msra.mxu0 0.0
      %1797 = vmatpush.msra.mxu0 0.0
      %1798 = vmatpush.msra.mxu0 0.0
      %1799 = vmatpush.msra.mxu0 0.0
      %1800 = vmatpush.msra.mxu0 0.0
      %1801 = vmatpush.msra.mxu0 0.0
      %1802 = vmatpush.msra.mxu0 0.0
      %1803 = vmatpush.msra.mxu0 %v1049
      %1804 = vmatpush.msra.mxu0 %v1047
      %1805 = vmatmul.f32.gmra.mxu0 %v1784
      %v1806 = vpop.f32.mrf.mxu0
      %v1807 = vadd.f32 0.0, %v1806
      %1808 = vmatmul.f32.gmra.mxu0 %v1787
      %v1809 = vpop.f32.mrf.mxu0
      %v1810 = vadd.f32 0.0, %v1809
      %1811 = vdwg.mxu0
      %v1812 = vpack.c.bf16 %v1607, %v1604
      %v1813 = vpack.c.bf16 %v1636, %v1633
      %v1814 = vpack.c.bf16 %v1665, %v1662
      %v1815 = vpack.c.bf16 %v1694, %v1691
      %v1816 = vpack.c.bf16 %v1723, %v1720
      %v1817 = vpack.c.bf16 %v1752, %v1749
      %v1818 = vpack.c.bf16 %v1781, %v1778
      %v1819 = vpack.c.bf16 %v1810, %v1807
      %1820 = vrot.lane.b32.xlu0 %v963, 112
      %v1821 = vpop.permute.xlu0 %1820
      %1822 = vrot.lane.b32.xlu0 %v965, 112
      %v1823 = vpop.permute.xlu0 %1822
      %1824 = vrot.lane.b32.xlu0 %v963, 48
      %v1825 = vpop.permute.xlu0 %1824
      %1826 = vrot.lane.b32.xlu0 %v965, 48
      %v1827 = vpop.permute.xlu0 %1826
      %v1828 = vsel %vm1065, %v1821, 0
      %v1830 = vsel %vm1065, %v1823, 0
      %v1832 = vsel %vm1065, %v1825, 0
      %v1834 = vsel %vm1065, %v1827, 0
      %1836 = vmatpush.xpose.msra.mxu0 0.0
      %1837 = vmatpush.xpose.msra.mxu0 0.0
      %1838 = vmatpush.xpose.msra.mxu0 0.0
      %1839 = vmatpush.xpose.msra.mxu0 0.0
      %1840 = vmatpush.xpose.msra.mxu0 0.0
      %1841 = vmatpush.xpose.msra.mxu0 0.0
      %1842 = vmatpush.xpose.msra.mxu0 0.0
      %1843 = vmatpush.xpose.msra.mxu0 0.0
      %1844 = vmatpush.xpose.msra.mxu0 0.0
      %1845 = vmatpush.xpose.msra.mxu0 0.0
      %1846 = vmatpush.xpose.msra.mxu0 0.0
      %1847 = vmatpush.xpose.msra.mxu0 0.0
      %1848 = vmatpush.xpose.msra.mxu0 0.0
      %1849 = vmatpush.xpose.msra.mxu0 0.0
      %1850 = vmatpush.xpose.msra.mxu0 %v1834
      %1851 = vmatpush.xpose.msra.mxu0 %v1832
      %1852 = vmatmul.f32.gmra.mxu0 %v1828
      %v1853 = vpop.f32.mrf.mxu0
      %v1854 = vadd.f32 0.0, %v1853
      %1855 = vmatmul.f32.gmra.mxu0 %v1830
      %v1856 = vpop.f32.mrf.mxu0
      %v1857 = vadd.f32 0.0, %v1856
      %1858 = vdwg.mxu0
      %1859 = vrot.lane.b32.xlu0 %v968, 112
      %v1860 = vpop.permute.xlu0 %1859
      %1861 = vrot.lane.b32.xlu0 %v970, 112
      %v1862 = vpop.permute.xlu0 %1861
      %1863 = vrot.lane.b32.xlu0 %v968, 48
      %v1864 = vpop.permute.xlu0 %1863
      %1865 = vrot.lane.b32.xlu0 %v970, 48
      %v1866 = vpop.permute.xlu0 %1865
      %v1867 = vsel %vm1065, %v1860, 0
      %v1869 = vsel %vm1065, %v1862, 0
      %v1871 = vsel %vm1065, %v1864, 0
      %v1873 = vsel %vm1065, %v1866, 0
      %1875 = vmatpush.xpose.msra.mxu0 0.0
      %1876 = vmatpush.xpose.msra.mxu0 0.0
      %1877 = vmatpush.xpose.msra.mxu0 0.0
      %1878 = vmatpush.xpose.msra.mxu0 0.0
      %1879 = vmatpush.xpose.msra.mxu0 0.0
      %1880 = vmatpush.xpose.msra.mxu0 0.0
      %1881 = vmatpush.xpose.msra.mxu0 0.0
      %1882 = vmatpush.xpose.msra.mxu0 0.0
      %1883 = vmatpush.xpose.msra.mxu0 0.0
      %1884 = vmatpush.xpose.msra.mxu0 0.0
      %1885 = vmatpush.xpose.msra.mxu0 0.0
      %1886 = vmatpush.xpose.msra.mxu0 0.0
      %1887 = vmatpush.xpose.msra.mxu0 0.0
      %1888 = vmatpush.xpose.msra.mxu0 0.0
      %1889 = vmatpush.xpose.msra.mxu0 %v1873
      %1890 = vmatpush.xpose.msra.mxu0 %v1871
      %1891 = vmatmul.f32.gmra.mxu0 %v1867
      %v1892 = vpop.f32.mrf.mxu0
      %v1893 = vadd.f32 0.0, %v1892
      %1894 = vmatmul.f32.gmra.mxu0 %v1869
      %v1895 = vpop.f32.mrf.mxu0
      %v1896 = vadd.f32 0.0, %v1895
      %1897 = vdwg.mxu0
      %1898 = vrot.lane.b32.xlu0 %v973, 112
      %v1899 = vpop.permute.xlu0 %1898
      %1900 = vrot.lane.b32.xlu0 %v975, 112
      %v1901 = vpop.permute.xlu0 %1900
      %1902 = vrot.lane.b32.xlu0 %v973, 48
      %v1903 = vpop.permute.xlu0 %1902
      %1904 = vrot.lane.b32.xlu0 %v975, 48
      %v1905 = vpop.permute.xlu0 %1904
      %v1906 = vsel %vm1065, %v1899, 0
      %v1908 = vsel %vm1065, %v1901, 0
      %v1910 = vsel %vm1065, %v1903, 0
      %v1912 = vsel %vm1065, %v1905, 0
      %1914 = vmatpush.xpose.msra.mxu0 0.0
      %1915 = vmatpush.xpose.msra.mxu0 0.0
      %1916 = vmatpush.xpose.msra.mxu0 0.0
      %1917 = vmatpush.xpose.msra.mxu0 0.0
      %1918 = vmatpush.xpose.msra.mxu0 0.0
      %1919 = vmatpush.xpose.msra.mxu0 0.0
      %1920 = vmatpush.xpose.msra.mxu0 0.0
      %1921 = vmatpush.xpose.msra.mxu0 0.0
      %1922 = vmatpush.xpose.msra.mxu0 0.0
      %1923 = vmatpush.xpose.msra.mxu0 0.0
      %1924 = vmatpush.xpose.msra.mxu0 0.0
      %1925 = vmatpush.xpose.msra.mxu0 0.0
      %1926 = vmatpush.xpose.msra.mxu0 0.0
      %1927 = vmatpush.xpose.msra.mxu0 0.0
      %1928 = vmatpush.xpose.msra.mxu0 %v1912
      %1929 = vmatpush.xpose.msra.mxu0 %v1910
      %1930 = vmatmul.f32.gmra.mxu0 %v1906
      %v1931 = vpop.f32.mrf.mxu0
      %v1932 = vadd.f32 0.0, %v1931
      %1933 = vmatmul.f32.gmra.mxu0 %v1908
      %v1934 = vpop.f32.mrf.mxu0
      %v1935 = vadd.f32 0.0, %v1934
      %1936 = vdwg.mxu0
      %1937 = vrot.lane.b32.xlu0 %v978, 112
      %v1938 = vpop.permute.xlu0 %1937
      %1939 = vrot.lane.b32.xlu0 %v980, 112
      %v1940 = vpop.permute.xlu0 %1939
      %1941 = vrot.lane.b32.xlu0 %v978, 48
      %v1942 = vpop.permute.xlu0 %1941
      %1943 = vrot.lane.b32.xlu0 %v980, 48
      %v1944 = vpop.permute.xlu0 %1943
      %v1945 = vsel %vm1065, %v1938, 0
      %v1947 = vsel %vm1065, %v1940, 0
      %v1949 = vsel %vm1065, %v1942, 0
      %v1951 = vsel %vm1065, %v1944, 0
      %1953 = vmatpush.xpose.msra.mxu0 0.0
      %1954 = vmatpush.xpose.msra.mxu0 0.0
      %1955 = vmatpush.xpose.msra.mxu0 0.0
      %1956 = vmatpush.xpose.msra.mxu0 0.0
      %1957 = vmatpush.xpose.msra.mxu0 0.0
      %1958 = vmatpush.xpose.msra.mxu0 0.0
      %1959 = vmatpush.xpose.msra.mxu0 0.0
      %1960 = vmatpush.xpose.msra.mxu0 0.0
      %1961 = vmatpush.xpose.msra.mxu0 0.0
      %1962 = vmatpush.xpose.msra.mxu0 0.0
      %1963 = vmatpush.xpose.msra.mxu0 0.0
      %1964 = vmatpush.xpose.msra.mxu0 0.0
      %1965 = vmatpush.xpose.msra.mxu0 0.0
      %1966 = vmatpush.xpose.msra.mxu0 0.0
      %1967 = vmatpush.xpose.msra.mxu0 %v1951
      %1968 = vmatpush.xpose.msra.mxu0 %v1949
      %1969 = vmatmul.f32.gmra.mxu0 %v1945
      %v1970 = vpop.f32.mrf.mxu0
      %v1971 = vadd.f32 0.0, %v1970
      %1972 = vmatmul.f32.gmra.mxu0 %v1947
      %v1973 = vpop.f32.mrf.mxu0
      %v1974 = vadd.f32 0.0, %v1973
      %1975 = vdwg.mxu0
      %1976 = vrot.lane.b32.xlu0 %v983, 112
      %v1977 = vpop.permute.xlu0 %1976
      %1978 = vrot.lane.b32.xlu0 %v985, 112
      %v1979 = vpop.permute.xlu0 %1978
      %1980 = vrot.lane.b32.xlu0 %v983, 48
      %v1981 = vpop.permute.xlu0 %1980
      %1982 = vrot.lane.b32.xlu0 %v985, 48
      %v1983 = vpop.permute.xlu0 %1982
      %v1984 = vsel %vm1065, %v1977, 0
      %v1986 = vsel %vm1065, %v1979, 0
      %v1988 = vsel %vm1065, %v1981, 0
      %v1990 = vsel %vm1065, %v1983, 0
      %1992 = vmatpush.xpose.msra.mxu0 0.0
      %1993 = vmatpush.xpose.msra.mxu0 0.0
      %1994 = vmatpush.xpose.msra.mxu0 0.0
      %1995 = vmatpush.xpose.msra.mxu0 0.0
      %1996 = vmatpush.xpose.msra.mxu0 0.0
      %1997 = vmatpush.xpose.msra.mxu0 0.0
      %1998 = vmatpush.xpose.msra.mxu0 0.0
      %1999 = vmatpush.xpose.msra.mxu0 0.0
      %2000 = vmatpush.xpose.msra.mxu0 0.0
      %2001 = vmatpush.xpose.msra.mxu0 0.0
      %2002 = vmatpush.xpose.msra.mxu0 0.0
      %2003 = vmatpush.xpose.msra.mxu0 0.0
      %2004 = vmatpush.xpose.msra.mxu0 0.0
      %2005 = vmatpush.xpose.msra.mxu0 0.0
      %2006 = vmatpush.xpose.msra.mxu0 %v1990
      %2007 = vmatpush.xpose.msra.mxu0 %v1988
      %2008 = vmatmul.f32.gmra.mxu0 %v1984
      %v2009 = vpop.f32.mrf.mxu0
      %v2010 = vadd.f32 0.0, %v2009
      %2011 = vmatmul.f32.gmra.mxu0 %v1986
      %v2012 = vpop.f32.mrf.mxu0
      %v2013 = vadd.f32 0.0, %v2012
      %2014 = vdwg.mxu0
      %2015 = vrot.lane.b32.xlu0 %v988, 112
      %v2016 = vpop.permute.xlu0 %2015
      %2017 = vrot.lane.b32.xlu0 %v990, 112
      %v2018 = vpop.permute.xlu0 %2017
      %2019 = vrot.lane.b32.xlu0 %v988, 48
      %v2020 = vpop.permute.xlu0 %2019
      %2021 = vrot.lane.b32.xlu0 %v990, 48
      %v2022 = vpop.permute.xlu0 %2021
      %v2023 = vsel %vm1065, %v2016, 0
      %v2025 = vsel %vm1065, %v2018, 0
      %v2027 = vsel %vm1065, %v2020, 0
      %v2029 = vsel %vm1065, %v2022, 0
      %2031 = vmatpush.xpose.msra.mxu0 0.0
      %2032 = vmatpush.xpose.msra.mxu0 0.0
      %2033 = vmatpush.xpose.msra.mxu0 0.0
      %2034 = vmatpush.xpose.msra.mxu0 0.0
      %2035 = vmatpush.xpose.msra.mxu0 0.0
      %2036 = vmatpush.xpose.msra.mxu0 0.0
      %2037 = vmatpush.xpose.msra.mxu0 0.0
      %2038 = vmatpush.xpose.msra.mxu0 0.0
      %2039 = vmatpush.xpose.msra.mxu0 0.0
      %2040 = vmatpush.xpose.msra.mxu0 0.0
      %2041 = vmatpush.xpose.msra.mxu0 0.0
      %2042 = vmatpush.xpose.msra.mxu0 0.0
      %2043 = vmatpush.xpose.msra.mxu0 0.0
      %2044 = vmatpush.xpose.msra.mxu0 0.0
      %2045 = vmatpush.xpose.msra.mxu0 %v2029
      %2046 = vmatpush.xpose.msra.mxu0 %v2027
      %2047 = vmatmul.f32.gmra.mxu0 %v2023
      %v2048 = vpop.f32.mrf.mxu0
      %v2049 = vadd.f32 0.0, %v2048
      %2050 = vmatmul.f32.gmra.mxu0 %v2025
      %v2051 = vpop.f32.mrf.mxu0
      %v2052 = vadd.f32 0.0, %v2051
      %2053 = vdwg.mxu0
      %2054 = vrot.lane.b32.xlu0 %v993, 112
      %v2055 = vpop.permute.xlu0 %2054
      %2056 = vrot.lane.b32.xlu0 %v995, 112
      %v2057 = vpop.permute.xlu0 %2056
      %2058 = vrot.lane.b32.xlu0 %v993, 48
      %v2059 = vpop.permute.xlu0 %2058
      %2060 = vrot.lane.b32.xlu0 %v995, 48
      %v2061 = vpop.permute.xlu0 %2060
      %v2062 = vsel %vm1065, %v2055, 0
      %v2064 = vsel %vm1065, %v2057, 0
      %v2066 = vsel %vm1065, %v2059, 0
      %v2068 = vsel %vm1065, %v2061, 0
      %2070 = vmatpush.xpose.msra.mxu0 0.0
      %2071 = vmatpush.xpose.msra.mxu0 0.0
      %2072 = vmatpush.xpose.msra.mxu0 0.0
      %2073 = vmatpush.xpose.msra.mxu0 0.0
      %2074 = vmatpush.xpose.msra.mxu0 0.0
      %2075 = vmatpush.xpose.msra.mxu0 0.0
      %2076 = vmatpush.xpose.msra.mxu0 0.0
      %2077 = vmatpush.xpose.msra.mxu0 0.0
      %2078 = vmatpush.xpose.msra.mxu0 0.0
      %2079 = vmatpush.xpose.msra.mxu0 0.0
      %2080 = vmatpush.xpose.msra.mxu0 0.0
      %2081 = vmatpush.xpose.msra.mxu0 0.0
      %2082 = vmatpush.xpose.msra.mxu0 0.0
      %2083 = vmatpush.xpose.msra.mxu0 0.0
      %2084 = vmatpush.xpose.msra.mxu0 %v2068
      %2085 = vmatpush.xpose.msra.mxu0 %v2066
      %2086 = vmatmul.f32.gmra.mxu0 %v2062
      %v2087 = vpop.f32.mrf.mxu0
      %v2088 = vadd.f32 0.0, %v2087
      %2089 = vmatmul.f32.gmra.mxu0 %v2064
      %v2090 = vpop.f32.mrf.mxu0
      %v2091 = vadd.f32 0.0, %v2090
      %2092 = vdwg.mxu0
      %2093 = vrot.lane.b32.xlu0 %v998, 112
      %v2094 = vpop.permute.xlu0 %2093
      %2095 = vrot.lane.b32.xlu0 %v1000, 112
      %v2096 = vpop.permute.xlu0 %2095
      %2097 = vrot.lane.b32.xlu0 %v998, 48
      %v2098 = vpop.permute.xlu0 %2097
      %2099 = vrot.lane.b32.xlu0 %v1000, 48
      %v2100 = vpop.permute.xlu0 %2099
      %v2101 = vsel %vm1065, %v2094, 0
      %v2103 = vsel %vm1065, %v2096, 0
      %v2105 = vsel %vm1065, %v2098, 0
      %v2107 = vsel %vm1065, %v2100, 0
      %2109 = vmatpush.xpose.msra.mxu0 0.0
      %2110 = vmatpush.xpose.msra.mxu0 0.0
      %2111 = vmatpush.xpose.msra.mxu0 0.0
      %2112 = vmatpush.xpose.msra.mxu0 0.0
      %2113 = vmatpush.xpose.msra.mxu0 0.0
      %2114 = vmatpush.xpose.msra.mxu0 0.0
      %2115 = vmatpush.xpose.msra.mxu0 0.0
      %2116 = vmatpush.xpose.msra.mxu0 0.0
      %2117 = vmatpush.xpose.msra.mxu0 0.0
      %2118 = vmatpush.xpose.msra.mxu0 0.0
      %2119 = vmatpush.xpose.msra.mxu0 0.0
      %2120 = vmatpush.xpose.msra.mxu0 0.0
      %2121 = vmatpush.xpose.msra.mxu0 0.0
      %2122 = vmatpush.xpose.msra.mxu0 0.0
      %2123 = vmatpush.xpose.msra.mxu0 %v2107
      %2124 = vmatpush.xpose.msra.mxu0 %v2105
      %2125 = vmatmul.f32.gmra.mxu0 %v2101
      %v2126 = vpop.f32.mrf.mxu0
      %v2127 = vadd.f32 0.0, %v2126
      %2128 = vmatmul.f32.gmra.mxu0 %v2103
      %v2129 = vpop.f32.mrf.mxu0
      %v2130 = vadd.f32 0.0, %v2129
      %2131 = vdwg.mxu0
      %v2132 = vmul.f32 %v1854, 0.25
      %v2133 = vmul.f32 %v1857, 0.25
      %v2134 = vmul.f32 %v1893, 0.25
      %v2135 = vmul.f32 %v1896, 0.25
      %v2136 = vmul.f32 %v1932, 0.25
      %v2137 = vmul.f32 %v1935, 0.25
      %v2138 = vmul.f32 %v1971, 0.25
      %v2139 = vmul.f32 %v1974, 0.25
      %v2140 = vmul.f32 %v2010, 0.25
      %v2141 = vmul.f32 %v2013, 0.25
      %v2142 = vmul.f32 %v2049, 0.25
      %v2143 = vmul.f32 %v2052, 0.25
      %v2144 = vmul.f32 %v2088, 0.25
      %v2145 = vmul.f32 %v2091, 0.25
      %v2146 = vmul.f32 %v2127, 0.25
      %v2147 = vmul.f32 %v2130, 0.25
      %v2148 = vadd.f32 %v2132, %v1372
      %v2149 = vadd.f32 %v2133, %v1372
      %v2150 = vadd.f32 %v2134, %v1373
      %v2151 = vadd.f32 %v2135, %v1373
      %v2152 = vadd.f32 %v2136, %v1374
      %v2153 = vadd.f32 %v2137, %v1374
      %v2154 = vadd.f32 %v2138, %v1375
      %v2155 = vadd.f32 %v2139, %v1375
      %v2156 = vadd.f32 %v2140, %v1376
      %v2157 = vadd.f32 %v2141, %v1376
      %v2158 = vadd.f32 %v2142, %v1377
      %v2159 = vadd.f32 %v2143, %v1377
      %v2160 = vadd.f32 %v2144, %v1378
      %v2161 = vadd.f32 %v2145, %v1378
      %v2162 = vadd.f32 %v2146, %v1379
      %v2163 = vadd.f32 %v2147, %v1379
      %v2164 = vsel %vm1065, %v2148, -inf
      %2165 = vmax.xlane.f32.xlu0 %v2164
      %v2166 = vpop.xlane.xlu0 %2165
      %v2167 = vsel %vm1065, %v2149, -inf
      %2168 = vmax.xlane.f32.xlu0 %v2167
      %v2169 = vpop.xlane.xlu0 %2168
      %v2170 = vsel %vm1065, %v2150, -inf
      %2171 = vmax.xlane.f32.xlu0 %v2170
      %v2172 = vpop.xlane.xlu0 %2171
      %v2173 = vsel %vm1065, %v2151, -inf
      %2174 = vmax.xlane.f32.xlu0 %v2173
      %v2175 = vpop.xlane.xlu0 %2174
      %v2176 = vsel %vm1065, %v2152, -inf
      %2177 = vmax.xlane.f32.xlu0 %v2176
      %v2178 = vpop.xlane.xlu0 %2177
      %v2179 = vsel %vm1065, %v2153, -inf
      %2180 = vmax.xlane.f32.xlu0 %v2179
      %v2181 = vpop.xlane.xlu0 %2180
      %v2182 = vsel %vm1065, %v2154, -inf
      %2183 = vmax.xlane.f32.xlu0 %v2182
      %v2184 = vpop.xlane.xlu0 %2183
      %v2185 = vsel %vm1065, %v2155, -inf
      %2186 = vmax.xlane.f32.xlu0 %v2185
      %v2187 = vpop.xlane.xlu0 %2186
      %v2188 = vsel %vm1065, %v2156, -inf
      %2189 = vmax.xlane.f32.xlu0 %v2188
      %v2190 = vpop.xlane.xlu0 %2189
      %v2191 = vsel %vm1065, %v2157, -inf
      %2192 = vmax.xlane.f32.xlu0 %v2191
      %v2193 = vpop.xlane.xlu0 %2192
      %v2194 = vsel %vm1065, %v2158, -inf
      %2195 = vmax.xlane.f32.xlu0 %v2194
      %v2196 = vpop.xlane.xlu0 %2195
      %v2197 = vsel %vm1065, %v2159, -inf
      %2198 = vmax.xlane.f32.xlu0 %v2197
      %v2199 = vpop.xlane.xlu0 %2198
      %v2200 = vsel %vm1065, %v2160, -inf
      %2201 = vmax.xlane.f32.xlu0 %v2200
      %v2202 = vpop.xlane.xlu0 %2201
      %v2203 = vsel %vm1065, %v2161, -inf
      %2204 = vmax.xlane.f32.xlu0 %v2203
      %v2205 = vpop.xlane.xlu0 %2204
      %v2206 = vsel %vm1065, %v2162, -inf
      %2207 = vmax.xlane.f32.xlu0 %v2206
      %v2208 = vpop.xlane.xlu0 %2207
      %v2209 = vsel %vm1065, %v2163, -inf
      %2210 = vmax.xlane.f32.xlu0 %v2209
      %v2211 = vpop.xlane.xlu0 %2210
      %v2212 = vsub.f32 %v2148, %v2166
      %v2213 = vsub.f32 %v2149, %v2169
      %v2214 = vsub.f32 %v2150, %v2172
      %v2215 = vsub.f32 %v2151, %v2175
      %v2216 = vsub.f32 %v2152, %v2178
      %v2217 = vsub.f32 %v2153, %v2181
      %v2218 = vsub.f32 %v2154, %v2184
      %v2219 = vsub.f32 %v2155, %v2187
      %v2220 = vsub.f32 %v2156, %v2190
      %v2221 = vsub.f32 %v2157, %v2193
      %v2222 = vsub.f32 %v2158, %v2196
      %v2223 = vsub.f32 %v2159, %v2199
      %v2224 = vsub.f32 %v2160, %v2202
      %v2225 = vsub.f32 %v2161, %v2205
      %v2226 = vsub.f32 %v2162, %v2208
      %v2227 = vsub.f32 %v2163, %v2211
      %v2228 = vmul.f32 %v2212, 1.442695
      %v2229 = vpow.pop %v2228
      %v2230 = vmul.f32 %v2213, 1.442695
      %v2231 = vpow.pop %v2230
      %v2232 = vmul.f32 %v2214, 1.442695
      %v2233 = vpow.pop %v2232
      %v2234 = vmul.f32 %v2215, 1.442695
      %v2235 = vpow.pop %v2234
      %v2236 = vmul.f32 %v2216, 1.442695
      %v2237 = vpow.pop %v2236
      %v2238 = vmul.f32 %v2217, 1.442695
      %v2239 = vpow.pop %v2238
      %v2240 = vmul.f32 %v2218, 1.442695
      %v2241 = vpow.pop %v2240
      %v2242 = vmul.f32 %v2219, 1.442695
      %v2243 = vpow.pop %v2242
      %v2244 = vmul.f32 %v2220, 1.442695
      %v2245 = vpow.pop %v2244
      %v2246 = vmul.f32 %v2221, 1.442695
      %v2247 = vpow.pop %v2246
      %v2248 = vmul.f32 %v2222, 1.442695
      %v2249 = vpow.pop %v2248
      %v2250 = vmul.f32 %v2223, 1.442695
      %v2251 = vpow.pop %v2250
      %v2252 = vmul.f32 %v2224, 1.442695
      %v2253 = vpow.pop %v2252
      %v2254 = vmul.f32 %v2225, 1.442695
      %v2255 = vpow.pop %v2254
      %v2256 = vmul.f32 %v2226, 1.442695
      %v2257 = vpow.pop %v2256
      %v2258 = vmul.f32 %v2227, 1.442695
      %v2259 = vpow.pop %v2258
      %v2260 = vsel %vm1065, %v2229, 0.0
      %2261 = vadd.xlane.f32.xlu0 %v2260
      %v2262 = vpop.xlane.xlu0 %2261
      %v2263 = vsel %vm1065, %v2231, 0.0
      %2264 = vadd.xlane.f32.xlu0 %v2263
      %v2265 = vpop.xlane.xlu0 %2264
      %v2266 = vsel %vm1065, %v2233, 0.0
      %2267 = vadd.xlane.f32.xlu0 %v2266
      %v2268 = vpop.xlane.xlu0 %2267
      %v2269 = vsel %vm1065, %v2235, 0.0
      %2270 = vadd.xlane.f32.xlu0 %v2269
      %v2271 = vpop.xlane.xlu0 %2270
      %v2272 = vsel %vm1065, %v2237, 0.0
      %2273 = vadd.xlane.f32.xlu0 %v2272
      %v2274 = vpop.xlane.xlu0 %2273
      %v2275 = vsel %vm1065, %v2239, 0.0
      %2276 = vadd.xlane.f32.xlu0 %v2275
      %v2277 = vpop.xlane.xlu0 %2276
      %v2278 = vsel %vm1065, %v2241, 0.0
      %2279 = vadd.xlane.f32.xlu0 %v2278
      %v2280 = vpop.xlane.xlu0 %2279
      %v2281 = vsel %vm1065, %v2243, 0.0
      %2282 = vadd.xlane.f32.xlu0 %v2281
      %v2283 = vpop.xlane.xlu0 %2282
      %v2284 = vsel %vm1065, %v2245, 0.0
      %2285 = vadd.xlane.f32.xlu0 %v2284
      %v2286 = vpop.xlane.xlu0 %2285
      %v2287 = vsel %vm1065, %v2247, 0.0
      %2288 = vadd.xlane.f32.xlu0 %v2287
      %v2289 = vpop.xlane.xlu0 %2288
      %v2290 = vsel %vm1065, %v2249, 0.0
      %2291 = vadd.xlane.f32.xlu0 %v2290
      %v2292 = vpop.xlane.xlu0 %2291
      %v2293 = vsel %vm1065, %v2251, 0.0
      %2294 = vadd.xlane.f32.xlu0 %v2293
      %v2295 = vpop.xlane.xlu0 %2294
      %v2296 = vsel %vm1065, %v2253, 0.0
      %2297 = vadd.xlane.f32.xlu0 %v2296
      %v2298 = vpop.xlane.xlu0 %2297
      %v2299 = vsel %vm1065, %v2255, 0.0
      %2300 = vadd.xlane.f32.xlu0 %v2299
      %v2301 = vpop.xlane.xlu0 %2300
      %v2302 = vsel %vm1065, %v2257, 0.0
      %2303 = vadd.xlane.f32.xlu0 %v2302
      %v2304 = vpop.xlane.xlu0 %2303
      %v2305 = vsel %vm1065, %v2259, 0.0
      %2306 = vadd.xlane.f32.xlu0 %v2305
      %v2307 = vpop.xlane.xlu0 %2306
      %v2308 = vrcp.pop %v2262
      %v2309 = vrcp.pop %v2265
      %v2310 = vrcp.pop %v2268
      %v2311 = vrcp.pop %v2271
      %v2312 = vrcp.pop %v2274
      %v2313 = vrcp.pop %v2277
      %v2314 = vrcp.pop %v2280
      %v2315 = vrcp.pop %v2283
      %v2316 = vrcp.pop %v2286
      %v2317 = vrcp.pop %v2289
      %v2318 = vrcp.pop %v2292
      %v2319 = vrcp.pop %v2295
      %v2320 = vrcp.pop %v2298
      %v2321 = vrcp.pop %v2301
      %v2322 = vrcp.pop %v2304
      %v2323 = vrcp.pop %v2307
      %v2324 = vmul.f32 %v2229, %v2308
      %v2325 = vmul.f32 %v2231, %v2309
      %v2326 = vmul.f32 %v2233, %v2310
      %v2327 = vmul.f32 %v2235, %v2311
      %v2328 = vmul.f32 %v2237, %v2312
      %v2329 = vmul.f32 %v2239, %v2313
      %v2330 = vmul.f32 %v2241, %v2314
      %v2331 = vmul.f32 %v2243, %v2315
      %v2332 = vmul.f32 %v2245, %v2316
      %v2333 = vmul.f32 %v2247, %v2317
      %v2334 = vmul.f32 %v2249, %v2318
      %v2335 = vmul.f32 %v2251, %v2319
      %v2336 = vmul.f32 %v2253, %v2320
      %v2337 = vmul.f32 %v2255, %v2321
      %v2338 = vmul.f32 %v2257, %v2322
      %v2339 = vmul.f32 %v2259, %v2323
      %2342 = vrot.lane.b32.xlu0 %v1012, 112
      %v2343 = vpop.permute.xlu0 %2342
      %2344 = vrot.lane.b32.xlu0 %v1014, 112
      %v2345 = vpop.permute.xlu0 %2344
      %v2349 = vsel %vm1065, %v2324, 0
      %v2352 = vsel %vm1065, %v2325, 0
      %2354 = vmatpush.msra.mxu0 0.0
      %2355 = vmatpush.msra.mxu0 0.0
      %2356 = vmatpush.msra.mxu0 0.0
      %2357 = vmatpush.msra.mxu0 0.0
      %2358 = vmatpush.msra.mxu0 0.0
      %2359 = vmatpush.msra.mxu0 0.0
      %2360 = vmatpush.msra.mxu0 0.0
      %2361 = vmatpush.msra.mxu0 0.0
      %2362 = vmatpush.msra.mxu0 0.0
      %2363 = vmatpush.msra.mxu0 0.0
      %2364 = vmatpush.msra.mxu0 0.0
      %2365 = vmatpush.msra.mxu0 0.0
      %2366 = vmatpush.msra.mxu0 0.0
      %2367 = vmatpush.msra.mxu0 0.0
      %2368 = vmatpush.msra.mxu0 %v2345
      %2369 = vmatpush.msra.mxu0 %v2343
      %2370 = vmatmul.f32.gmra.mxu0 %v2349
      %v2371 = vpop.f32.mrf.mxu0
      %v2372 = vadd.f32 0.0, %v2371
      %2373 = vmatmul.f32.gmra.mxu0 %v2352
      %v2374 = vpop.f32.mrf.mxu0
      %v2375 = vadd.f32 0.0, %v2374
      %2376 = vdwg.mxu0
      %2379 = vrot.lane.b32.xlu0 %v1017, 112
      %v2380 = vpop.permute.xlu0 %2379
      %2381 = vrot.lane.b32.xlu0 %v1019, 112
      %v2382 = vpop.permute.xlu0 %2381
      %v2386 = vsel %vm1065, %v2326, 0
      %v2389 = vsel %vm1065, %v2327, 0
      %2391 = vmatpush.msra.mxu0 0.0
      %2392 = vmatpush.msra.mxu0 0.0
      %2393 = vmatpush.msra.mxu0 0.0
      %2394 = vmatpush.msra.mxu0 0.0
      %2395 = vmatpush.msra.mxu0 0.0
      %2396 = vmatpush.msra.mxu0 0.0
      %2397 = vmatpush.msra.mxu0 0.0
      %2398 = vmatpush.msra.mxu0 0.0
      %2399 = vmatpush.msra.mxu0 0.0
      %2400 = vmatpush.msra.mxu0 0.0
      %2401 = vmatpush.msra.mxu0 0.0
      %2402 = vmatpush.msra.mxu0 0.0
      %2403 = vmatpush.msra.mxu0 0.0
      %2404 = vmatpush.msra.mxu0 0.0
      %2405 = vmatpush.msra.mxu0 %v2382
      %2406 = vmatpush.msra.mxu0 %v2380
      %2407 = vmatmul.f32.gmra.mxu0 %v2386
      %v2408 = vpop.f32.mrf.mxu0
      %v2409 = vadd.f32 0.0, %v2408
      %2410 = vmatmul.f32.gmra.mxu0 %v2389
      %v2411 = vpop.f32.mrf.mxu0
      %v2412 = vadd.f32 0.0, %v2411
      %2413 = vdwg.mxu0
      %2416 = vrot.lane.b32.xlu0 %v1022, 112
      %v2417 = vpop.permute.xlu0 %2416
      %2418 = vrot.lane.b32.xlu0 %v1024, 112
      %v2419 = vpop.permute.xlu0 %2418
      %v2423 = vsel %vm1065, %v2328, 0
      %v2426 = vsel %vm1065, %v2329, 0
      %2428 = vmatpush.msra.mxu0 0.0
      %2429 = vmatpush.msra.mxu0 0.0
      %2430 = vmatpush.msra.mxu0 0.0
      %2431 = vmatpush.msra.mxu0 0.0
      %2432 = vmatpush.msra.mxu0 0.0
      %2433 = vmatpush.msra.mxu0 0.0
      %2434 = vmatpush.msra.mxu0 0.0
      %2435 = vmatpush.msra.mxu0 0.0
      %2436 = vmatpush.msra.mxu0 0.0
      %2437 = vmatpush.msra.mxu0 0.0
      %2438 = vmatpush.msra.mxu0 0.0
      %2439 = vmatpush.msra.mxu0 0.0
      %2440 = vmatpush.msra.mxu0 0.0
      %2441 = vmatpush.msra.mxu0 0.0
      %2442 = vmatpush.msra.mxu0 %v2419
      %2443 = vmatpush.msra.mxu0 %v2417
      %2444 = vmatmul.f32.gmra.mxu0 %v2423
      %v2445 = vpop.f32.mrf.mxu0
      %v2446 = vadd.f32 0.0, %v2445
      %2447 = vmatmul.f32.gmra.mxu0 %v2426
      %v2448 = vpop.f32.mrf.mxu0
      %v2449 = vadd.f32 0.0, %v2448
      %2450 = vdwg.mxu0
      %2453 = vrot.lane.b32.xlu0 %v1027, 112
      %v2454 = vpop.permute.xlu0 %2453
      %2455 = vrot.lane.b32.xlu0 %v1029, 112
      %v2456 = vpop.permute.xlu0 %2455
      %v2460 = vsel %vm1065, %v2330, 0
      %v2463 = vsel %vm1065, %v2331, 0
      %2465 = vmatpush.msra.mxu0 0.0
      %2466 = vmatpush.msra.mxu0 0.0
      %2467 = vmatpush.msra.mxu0 0.0
      %2468 = vmatpush.msra.mxu0 0.0
      %2469 = vmatpush.msra.mxu0 0.0
      %2470 = vmatpush.msra.mxu0 0.0
      %2471 = vmatpush.msra.mxu0 0.0
      %2472 = vmatpush.msra.mxu0 0.0
      %2473 = vmatpush.msra.mxu0 0.0
      %2474 = vmatpush.msra.mxu0 0.0
      %2475 = vmatpush.msra.mxu0 0.0
      %2476 = vmatpush.msra.mxu0 0.0
      %2477 = vmatpush.msra.mxu0 0.0
      %2478 = vmatpush.msra.mxu0 0.0
      %2479 = vmatpush.msra.mxu0 %v2456
      %2480 = vmatpush.msra.mxu0 %v2454
      %2481 = vmatmul.f32.gmra.mxu0 %v2460
      %v2482 = vpop.f32.mrf.mxu0
      %v2483 = vadd.f32 0.0, %v2482
      %2484 = vmatmul.f32.gmra.mxu0 %v2463
      %v2485 = vpop.f32.mrf.mxu0
      %v2486 = vadd.f32 0.0, %v2485
      %2487 = vdwg.mxu0
      %2490 = vrot.lane.b32.xlu0 %v1032, 112
      %v2491 = vpop.permute.xlu0 %2490
      %2492 = vrot.lane.b32.xlu0 %v1034, 112
      %v2493 = vpop.permute.xlu0 %2492
      %v2497 = vsel %vm1065, %v2332, 0
      %v2500 = vsel %vm1065, %v2333, 0
      %2502 = vmatpush.msra.mxu0 0.0
      %2503 = vmatpush.msra.mxu0 0.0
      %2504 = vmatpush.msra.mxu0 0.0
      %2505 = vmatpush.msra.mxu0 0.0
      %2506 = vmatpush.msra.mxu0 0.0
      %2507 = vmatpush.msra.mxu0 0.0
      %2508 = vmatpush.msra.mxu0 0.0
      %2509 = vmatpush.msra.mxu0 0.0
      %2510 = vmatpush.msra.mxu0 0.0
      %2511 = vmatpush.msra.mxu0 0.0
      %2512 = vmatpush.msra.mxu0 0.0
      %2513 = vmatpush.msra.mxu0 0.0
      %2514 = vmatpush.msra.mxu0 0.0
      %2515 = vmatpush.msra.mxu0 0.0
      %2516 = vmatpush.msra.mxu0 %v2493
      %2517 = vmatpush.msra.mxu0 %v2491
      %2518 = vmatmul.f32.gmra.mxu0 %v2497
      %v2519 = vpop.f32.mrf.mxu0
      %v2520 = vadd.f32 0.0, %v2519
      %2521 = vmatmul.f32.gmra.mxu0 %v2500
      %v2522 = vpop.f32.mrf.mxu0
      %v2523 = vadd.f32 0.0, %v2522
      %2524 = vdwg.mxu0
      %2527 = vrot.lane.b32.xlu0 %v1037, 112
      %v2528 = vpop.permute.xlu0 %2527
      %2529 = vrot.lane.b32.xlu0 %v1039, 112
      %v2530 = vpop.permute.xlu0 %2529
      %v2534 = vsel %vm1065, %v2334, 0
      %v2537 = vsel %vm1065, %v2335, 0
      %2539 = vmatpush.msra.mxu0 0.0
      %2540 = vmatpush.msra.mxu0 0.0
      %2541 = vmatpush.msra.mxu0 0.0
      %2542 = vmatpush.msra.mxu0 0.0
      %2543 = vmatpush.msra.mxu0 0.0
      %2544 = vmatpush.msra.mxu0 0.0
      %2545 = vmatpush.msra.mxu0 0.0
      %2546 = vmatpush.msra.mxu0 0.0
      %2547 = vmatpush.msra.mxu0 0.0
      %2548 = vmatpush.msra.mxu0 0.0
      %2549 = vmatpush.msra.mxu0 0.0
      %2550 = vmatpush.msra.mxu0 0.0
      %2551 = vmatpush.msra.mxu0 0.0
      %2552 = vmatpush.msra.mxu0 0.0
      %2553 = vmatpush.msra.mxu0 %v2530
      %2554 = vmatpush.msra.mxu0 %v2528
      %2555 = vmatmul.f32.gmra.mxu0 %v2534
      %v2556 = vpop.f32.mrf.mxu0
      %v2557 = vadd.f32 0.0, %v2556
      %2558 = vmatmul.f32.gmra.mxu0 %v2537
      %v2559 = vpop.f32.mrf.mxu0
      %v2560 = vadd.f32 0.0, %v2559
      %2561 = vdwg.mxu0
      %2564 = vrot.lane.b32.xlu0 %v1042, 112
      %v2565 = vpop.permute.xlu0 %2564
      %2566 = vrot.lane.b32.xlu0 %v1044, 112
      %v2567 = vpop.permute.xlu0 %2566
      %v2571 = vsel %vm1065, %v2336, 0
      %v2574 = vsel %vm1065, %v2337, 0
      %2576 = vmatpush.msra.mxu0 0.0
      %2577 = vmatpush.msra.mxu0 0.0
      %2578 = vmatpush.msra.mxu0 0.0
      %2579 = vmatpush.msra.mxu0 0.0
      %2580 = vmatpush.msra.mxu0 0.0
      %2581 = vmatpush.msra.mxu0 0.0
      %2582 = vmatpush.msra.mxu0 0.0
      %2583 = vmatpush.msra.mxu0 0.0
      %2584 = vmatpush.msra.mxu0 0.0
      %2585 = vmatpush.msra.mxu0 0.0
      %2586 = vmatpush.msra.mxu0 0.0
      %2587 = vmatpush.msra.mxu0 0.0
      %2588 = vmatpush.msra.mxu0 0.0
      %2589 = vmatpush.msra.mxu0 0.0
      %2590 = vmatpush.msra.mxu0 %v2567
      %2591 = vmatpush.msra.mxu0 %v2565
      %2592 = vmatmul.f32.gmra.mxu0 %v2571
      %v2593 = vpop.f32.mrf.mxu0
      %v2594 = vadd.f32 0.0, %v2593
      %2595 = vmatmul.f32.gmra.mxu0 %v2574
      %v2596 = vpop.f32.mrf.mxu0
      %v2597 = vadd.f32 0.0, %v2596
      %2598 = vdwg.mxu0
      %2601 = vrot.lane.b32.xlu0 %v1047, 112
      %v2602 = vpop.permute.xlu0 %2601
      %2603 = vrot.lane.b32.xlu0 %v1049, 112
      %v2604 = vpop.permute.xlu0 %2603
      %v2608 = vsel %vm1065, %v2338, 0
      %v2611 = vsel %vm1065, %v2339, 0
      %2613 = vmatpush.msra.mxu0 0.0
      %2614 = vmatpush.msra.mxu0 0.0
      %2615 = vmatpush.msra.mxu0 0.0
      %2616 = vmatpush.msra.mxu0 0.0
      %2617 = vmatpush.msra.mxu0 0.0
      %2618 = vmatpush.msra.mxu0 0.0
      %2619 = vmatpush.msra.mxu0 0.0
      %2620 = vmatpush.msra.mxu0 0.0
      %2621 = vmatpush.msra.mxu0 0.0
      %2622 = vmatpush.msra.mxu0 0.0
      %2623 = vmatpush.msra.mxu0 0.0
      %2624 = vmatpush.msra.mxu0 0.0
      %2625 = vmatpush.msra.mxu0 0.0
      %2626 = vmatpush.msra.mxu0 0.0
      %2627 = vmatpush.msra.mxu0 %v2604
      %2628 = vmatpush.msra.mxu0 %v2602
      %2629 = vmatmul.f32.gmra.mxu0 %v2608
      %v2630 = vpop.f32.mrf.mxu0
      %v2631 = vadd.f32 0.0, %v2630
      %2632 = vmatmul.f32.gmra.mxu0 %v2611
      %v2633 = vpop.f32.mrf.mxu0
      %v2634 = vadd.f32 0.0, %v2633
      %2635 = vdwg.mxu0
      %v2636 = vpack.c.bf16 %v2375, %v2372
      %v2637 = vpack.c.bf16 %v2412, %v2409
      %v2638 = vpack.c.bf16 %v2449, %v2446
      %v2639 = vpack.c.bf16 %v2486, %v2483
      %v2640 = vpack.c.bf16 %v2523, %v2520
      %v2641 = vpack.c.bf16 %v2560, %v2557
      %v2642 = vpack.c.bf16 %v2597, %v2594
      %v2643 = vpack.c.bf16 %v2634, %v2631
      %v2646 = vunpack.c.l.b16 %v1053
      %v2647 = vunpack.c.l.b16 %v1054
      %v2648 = vpack.c.b16 %v2647, %v2646
      %v2651 = vsel %vm1065, %v2636, 0
      %v2654 = vsel %vm1065, %v2637, 0
      %v2657 = vsel %vm1065, %v2638, 0
      %v2660 = vsel %vm1065, %v2639, 0
      %v2663 = vsel %vm1065, %v2640, 0
      %v2666 = vsel %vm1065, %v2641, 0
      %v2669 = vsel %vm1065, %v2642, 0
      %v2672 = vsel %vm1065, %v2643, 0
      %2674 = vmatpush.bf16.msra.mxu0 0
      %2675 = vmatpush.bf16.msra.mxu0 0
      %2676 = vmatpush.bf16.msra.mxu0 0
      %2677 = vmatpush.bf16.msra.mxu0 0
      %2678 = vmatpush.bf16.msra.mxu0 0
      %2679 = vmatpush.bf16.msra.mxu0 0
      %2680 = vmatpush.bf16.msra.mxu0 0
      %2681 = vmatpush.bf16.msra.mxu0 %v2648
      %2682 = vmatmul.bf16.gmra.mxu0 %v2651
      %v2683 = vpop.f32.mrf.mxu0
      %v2684 = vadd.f32 0.0, %v2683
      %v2685 = vpop.f32.mrf.mxu0
      %v2686 = vadd.f32 0.0, %v2685
      %2687 = vmatmul.bf16.gmra.mxu0 %v2654
      %v2688 = vpop.f32.mrf.mxu0
      %v2689 = vadd.f32 0.0, %v2688
      %v2690 = vpop.f32.mrf.mxu0
      %v2691 = vadd.f32 0.0, %v2690
      %2692 = vmatmul.bf16.gmra.mxu0 %v2657
      %v2693 = vpop.f32.mrf.mxu0
      %v2694 = vadd.f32 0.0, %v2693
      %v2695 = vpop.f32.mrf.mxu0
      %v2696 = vadd.f32 0.0, %v2695
      %2697 = vmatmul.bf16.gmra.mxu0 %v2660
      %v2698 = vpop.f32.mrf.mxu0
      %v2699 = vadd.f32 0.0, %v2698
      %v2700 = vpop.f32.mrf.mxu0
      %v2701 = vadd.f32 0.0, %v2700
      %2702 = vmatmul.bf16.gmra.mxu0 %v2663
      %v2703 = vpop.f32.mrf.mxu0
      %v2704 = vadd.f32 0.0, %v2703
      %v2705 = vpop.f32.mrf.mxu0
      %v2706 = vadd.f32 0.0, %v2705
      %2707 = vmatmul.bf16.gmra.mxu0 %v2666
      %v2708 = vpop.f32.mrf.mxu0
      %v2709 = vadd.f32 0.0, %v2708
      %v2710 = vpop.f32.mrf.mxu0
      %v2711 = vadd.f32 0.0, %v2710
      %2712 = vmatmul.bf16.gmra.mxu0 %v2669
      %v2713 = vpop.f32.mrf.mxu0
      %v2714 = vadd.f32 0.0, %v2713
      %v2715 = vpop.f32.mrf.mxu0
      %v2716 = vadd.f32 0.0, %v2715
      %2717 = vmatmul.bf16.gmra.mxu0 %v2672
      %v2718 = vpop.f32.mrf.mxu0
      %v2719 = vadd.f32 0.0, %v2718
      %v2720 = vpop.f32.mrf.mxu0
      %v2721 = vadd.f32 0.0, %v2720
      %2722 = vdwg.mxu0
      %v2725 = vunpack.c.l.b16 %v1051
      %v2726 = vunpack.c.l.b16 %v1052
      %v2727 = vpack.c.b16 %v2726, %v2725
      %v2730 = vsel %vm1065, %v1812, 0
      %v2733 = vsel %vm1065, %v1813, 0
      %v2736 = vsel %vm1065, %v1814, 0
      %v2739 = vsel %vm1065, %v1815, 0
      %v2742 = vsel %vm1065, %v1816, 0
      %v2745 = vsel %vm1065, %v1817, 0
      %v2748 = vsel %vm1065, %v1818, 0
      %v2751 = vsel %vm1065, %v1819, 0
      %2753 = vmatpush.bf16.msra.mxu0 0
      %2754 = vmatpush.bf16.msra.mxu0 0
      %2755 = vmatpush.bf16.msra.mxu0 0
      %2756 = vmatpush.bf16.msra.mxu0 0
      %2757 = vmatpush.bf16.msra.mxu0 0
      %2758 = vmatpush.bf16.msra.mxu0 0
      %2759 = vmatpush.bf16.msra.mxu0 0
      %2760 = vmatpush.bf16.msra.mxu0 %v2727
      %2761 = vmatmul.bf16.gmra.mxu0 %v2730
      %v2762 = vpop.f32.mrf.mxu0
      %v2763 = vadd.f32 %v2684, %v2762
      %v2764 = vpop.f32.mrf.mxu0
      %v2765 = vadd.f32 %v2686, %v2764
      %2766 = vmatmul.bf16.gmra.mxu0 %v2733
      %v2767 = vpop.f32.mrf.mxu0
      %v2768 = vadd.f32 %v2689, %v2767
      %v2769 = vpop.f32.mrf.mxu0
      %v2770 = vadd.f32 %v2691, %v2769
      %2771 = vmatmul.bf16.gmra.mxu0 %v2736
      %v2772 = vpop.f32.mrf.mxu0
      %v2773 = vadd.f32 %v2694, %v2772
      %v2774 = vpop.f32.mrf.mxu0
      %v2775 = vadd.f32 %v2696, %v2774
      %2776 = vmatmul.bf16.gmra.mxu0 %v2739
      %v2777 = vpop.f32.mrf.mxu0
      %v2778 = vadd.f32 %v2699, %v2777
      %v2779 = vpop.f32.mrf.mxu0
      %v2780 = vadd.f32 %v2701, %v2779
      %2781 = vmatmul.bf16.gmra.mxu0 %v2742
      %v2782 = vpop.f32.mrf.mxu0
      %v2783 = vadd.f32 %v2704, %v2782
      %v2784 = vpop.f32.mrf.mxu0
      %v2785 = vadd.f32 %v2706, %v2784
      %2786 = vmatmul.bf16.gmra.mxu0 %v2745
      %v2787 = vpop.f32.mrf.mxu0
      %v2788 = vadd.f32 %v2709, %v2787
      %v2789 = vpop.f32.mrf.mxu0
      %v2790 = vadd.f32 %v2711, %v2789
      %2791 = vmatmul.bf16.gmra.mxu0 %v2748
      %v2792 = vpop.f32.mrf.mxu0
      %v2793 = vadd.f32 %v2714, %v2792
      %v2794 = vpop.f32.mrf.mxu0
      %v2795 = vadd.f32 %v2716, %v2794
      %2796 = vmatmul.bf16.gmra.mxu0 %v2751
      %v2797 = vpop.f32.mrf.mxu0
      %v2798 = vadd.f32 %v2719, %v2797
      %v2799 = vpop.f32.mrf.mxu0
      %v2800 = vadd.f32 %v2721, %v2799
      %2801 = vdwg.mxu0
      %2802 = vrot.lane.b32.xlu0 %v963, 96
      %v2803 = vpop.permute.xlu0 %2802
      %2804 = vrot.lane.b32.xlu0 %v965, 96
      %v2805 = vpop.permute.xlu0 %2804
      %2806 = vrot.lane.b32.xlu0 %v963, 32
      %v2807 = vpop.permute.xlu0 %2806
      %2808 = vrot.lane.b32.xlu0 %v965, 32
      %v2809 = vpop.permute.xlu0 %2808
      %v2810 = vsel %vm1065, %v2803, 0
      %v2812 = vsel %vm1065, %v2805, 0
      %v2814 = vsel %vm1065, %v2807, 0
      %v2816 = vsel %vm1065, %v2809, 0
      %2818 = vmatpush.xpose.msra.mxu0 0.0
      %2819 = vmatpush.xpose.msra.mxu0 0.0
      %2820 = vmatpush.xpose.msra.mxu0 0.0
      %2821 = vmatpush.xpose.msra.mxu0 0.0
      %2822 = vmatpush.xpose.msra.mxu0 0.0
      %2823 = vmatpush.xpose.msra.mxu0 0.0
      %2824 = vmatpush.xpose.msra.mxu0 0.0
      %2825 = vmatpush.xpose.msra.mxu0 0.0
      %2826 = vmatpush.xpose.msra.mxu0 0.0
      %2827 = vmatpush.xpose.msra.mxu0 0.0
      %2828 = vmatpush.xpose.msra.mxu0 0.0
      %2829 = vmatpush.xpose.msra.mxu0 0.0
      %2830 = vmatpush.xpose.msra.mxu0 0.0
      %2831 = vmatpush.xpose.msra.mxu0 0.0
      %2832 = vmatpush.xpose.msra.mxu0 %v2816
      %2833 = vmatpush.xpose.msra.mxu0 %v2814
      %2834 = vmatmul.f32.gmra.mxu0 %v2810
      %v2835 = vpop.f32.mrf.mxu0
      %v2836 = vadd.f32 0.0, %v2835
      %2837 = vmatmul.f32.gmra.mxu0 %v2812
      %v2838 = vpop.f32.mrf.mxu0
      %v2839 = vadd.f32 0.0, %v2838
      %2840 = vdwg.mxu0
      %2841 = vrot.lane.b32.xlu0 %v968, 96
      %v2842 = vpop.permute.xlu0 %2841
      %2843 = vrot.lane.b32.xlu0 %v970, 96
      %v2844 = vpop.permute.xlu0 %2843
      %2845 = vrot.lane.b32.xlu0 %v968, 32
      %v2846 = vpop.permute.xlu0 %2845
      %2847 = vrot.lane.b32.xlu0 %v970, 32
      %v2848 = vpop.permute.xlu0 %2847
      %v2849 = vsel %vm1065, %v2842, 0
      %v2851 = vsel %vm1065, %v2844, 0
      %v2853 = vsel %vm1065, %v2846, 0
      %v2855 = vsel %vm1065, %v2848, 0
      %2857 = vmatpush.xpose.msra.mxu0 0.0
      %2858 = vmatpush.xpose.msra.mxu0 0.0
      %2859 = vmatpush.xpose.msra.mxu0 0.0
      %2860 = vmatpush.xpose.msra.mxu0 0.0
      %2861 = vmatpush.xpose.msra.mxu0 0.0
      %2862 = vmatpush.xpose.msra.mxu0 0.0
      %2863 = vmatpush.xpose.msra.mxu0 0.0
      %2864 = vmatpush.xpose.msra.mxu0 0.0
      %2865 = vmatpush.xpose.msra.mxu0 0.0
      %2866 = vmatpush.xpose.msra.mxu0 0.0
      %2867 = vmatpush.xpose.msra.mxu0 0.0
      %2868 = vmatpush.xpose.msra.mxu0 0.0
      %2869 = vmatpush.xpose.msra.mxu0 0.0
      %2870 = vmatpush.xpose.msra.mxu0 0.0
      %2871 = vmatpush.xpose.msra.mxu0 %v2855
      %2872 = vmatpush.xpose.msra.mxu0 %v2853
      %2873 = vmatmul.f32.gmra.mxu0 %v2849
      %v2874 = vpop.f32.mrf.mxu0
      %v2875 = vadd.f32 0.0, %v2874
      %2876 = vmatmul.f32.gmra.mxu0 %v2851
      %v2877 = vpop.f32.mrf.mxu0
      %v2878 = vadd.f32 0.0, %v2877
      %2879 = vdwg.mxu0
      %2880 = vrot.lane.b32.xlu0 %v973, 96
      %v2881 = vpop.permute.xlu0 %2880
      %2882 = vrot.lane.b32.xlu0 %v975, 96
      %v2883 = vpop.permute.xlu0 %2882
      %2884 = vrot.lane.b32.xlu0 %v973, 32
      %v2885 = vpop.permute.xlu0 %2884
      %2886 = vrot.lane.b32.xlu0 %v975, 32
      %v2887 = vpop.permute.xlu0 %2886
      %v2888 = vsel %vm1065, %v2881, 0
      %v2890 = vsel %vm1065, %v2883, 0
      %v2892 = vsel %vm1065, %v2885, 0
      %v2894 = vsel %vm1065, %v2887, 0
      %2896 = vmatpush.xpose.msra.mxu0 0.0
      %2897 = vmatpush.xpose.msra.mxu0 0.0
      %2898 = vmatpush.xpose.msra.mxu0 0.0
      %2899 = vmatpush.xpose.msra.mxu0 0.0
      %2900 = vmatpush.xpose.msra.mxu0 0.0
      %2901 = vmatpush.xpose.msra.mxu0 0.0
      %2902 = vmatpush.xpose.msra.mxu0 0.0
      %2903 = vmatpush.xpose.msra.mxu0 0.0
      %2904 = vmatpush.xpose.msra.mxu0 0.0
      %2905 = vmatpush.xpose.msra.mxu0 0.0
      %2906 = vmatpush.xpose.msra.mxu0 0.0
      %2907 = vmatpush.xpose.msra.mxu0 0.0
      %2908 = vmatpush.xpose.msra.mxu0 0.0
      %2909 = vmatpush.xpose.msra.mxu0 0.0
      %2910 = vmatpush.xpose.msra.mxu0 %v2894
      %2911 = vmatpush.xpose.msra.mxu0 %v2892
      %2912 = vmatmul.f32.gmra.mxu0 %v2888
      %v2913 = vpop.f32.mrf.mxu0
      %v2914 = vadd.f32 0.0, %v2913
      %2915 = vmatmul.f32.gmra.mxu0 %v2890
      %v2916 = vpop.f32.mrf.mxu0
      %v2917 = vadd.f32 0.0, %v2916
      %2918 = vdwg.mxu0
      %2919 = vrot.lane.b32.xlu0 %v978, 96
      %v2920 = vpop.permute.xlu0 %2919
      %2921 = vrot.lane.b32.xlu0 %v980, 96
      %v2922 = vpop.permute.xlu0 %2921
      %2923 = vrot.lane.b32.xlu0 %v978, 32
      %v2924 = vpop.permute.xlu0 %2923
      %2925 = vrot.lane.b32.xlu0 %v980, 32
      %v2926 = vpop.permute.xlu0 %2925
      %v2927 = vsel %vm1065, %v2920, 0
      %v2929 = vsel %vm1065, %v2922, 0
      %v2931 = vsel %vm1065, %v2924, 0
      %v2933 = vsel %vm1065, %v2926, 0
      %2935 = vmatpush.xpose.msra.mxu0 0.0
      %2936 = vmatpush.xpose.msra.mxu0 0.0
      %2937 = vmatpush.xpose.msra.mxu0 0.0
      %2938 = vmatpush.xpose.msra.mxu0 0.0
      %2939 = vmatpush.xpose.msra.mxu0 0.0
      %2940 = vmatpush.xpose.msra.mxu0 0.0
      %2941 = vmatpush.xpose.msra.mxu0 0.0
      %2942 = vmatpush.xpose.msra.mxu0 0.0
      %2943 = vmatpush.xpose.msra.mxu0 0.0
      %2944 = vmatpush.xpose.msra.mxu0 0.0
      %2945 = vmatpush.xpose.msra.mxu0 0.0
      %2946 = vmatpush.xpose.msra.mxu0 0.0
      %2947 = vmatpush.xpose.msra.mxu0 0.0
      %2948 = vmatpush.xpose.msra.mxu0 0.0
      %2949 = vmatpush.xpose.msra.mxu0 %v2933
      %2950 = vmatpush.xpose.msra.mxu0 %v2931
      %2951 = vmatmul.f32.gmra.mxu0 %v2927
      %v2952 = vpop.f32.mrf.mxu0
      %v2953 = vadd.f32 0.0, %v2952
      %2954 = vmatmul.f32.gmra.mxu0 %v2929
      %v2955 = vpop.f32.mrf.mxu0
      %v2956 = vadd.f32 0.0, %v2955
      %2957 = vdwg.mxu0
      %2958 = vrot.lane.b32.xlu0 %v983, 96
      %v2959 = vpop.permute.xlu0 %2958
      %2960 = vrot.lane.b32.xlu0 %v985, 96
      %v2961 = vpop.permute.xlu0 %2960
      %2962 = vrot.lane.b32.xlu0 %v983, 32
      %v2963 = vpop.permute.xlu0 %2962
      %2964 = vrot.lane.b32.xlu0 %v985, 32
      %v2965 = vpop.permute.xlu0 %2964
      %v2966 = vsel %vm1065, %v2959, 0
      %v2968 = vsel %vm1065, %v2961, 0
      %v2970 = vsel %vm1065, %v2963, 0
      %v2972 = vsel %vm1065, %v2965, 0
      %2974 = vmatpush.xpose.msra.mxu0 0.0
      %2975 = vmatpush.xpose.msra.mxu0 0.0
      %2976 = vmatpush.xpose.msra.mxu0 0.0
      %2977 = vmatpush.xpose.msra.mxu0 0.0
      %2978 = vmatpush.xpose.msra.mxu0 0.0
      %2979 = vmatpush.xpose.msra.mxu0 0.0
      %2980 = vmatpush.xpose.msra.mxu0 0.0
      %2981 = vmatpush.xpose.msra.mxu0 0.0
      %2982 = vmatpush.xpose.msra.mxu0 0.0
      %2983 = vmatpush.xpose.msra.mxu0 0.0
      %2984 = vmatpush.xpose.msra.mxu0 0.0
      %2985 = vmatpush.xpose.msra.mxu0 0.0
      %2986 = vmatpush.xpose.msra.mxu0 0.0
      %2987 = vmatpush.xpose.msra.mxu0 0.0
      %2988 = vmatpush.xpose.msra.mxu0 %v2972
      %2989 = vmatpush.xpose.msra.mxu0 %v2970
      %2990 = vmatmul.f32.gmra.mxu0 %v2966
      %v2991 = vpop.f32.mrf.mxu0
      %v2992 = vadd.f32 0.0, %v2991
      %2993 = vmatmul.f32.gmra.mxu0 %v2968
      %v2994 = vpop.f32.mrf.mxu0
      %v2995 = vadd.f32 0.0, %v2994
      %2996 = vdwg.mxu0
      %2997 = vrot.lane.b32.xlu0 %v988, 96
      %v2998 = vpop.permute.xlu0 %2997
      %2999 = vrot.lane.b32.xlu0 %v990, 96
      %v3000 = vpop.permute.xlu0 %2999
      %3001 = vrot.lane.b32.xlu0 %v988, 32
      %v3002 = vpop.permute.xlu0 %3001
      %3003 = vrot.lane.b32.xlu0 %v990, 32
      %v3004 = vpop.permute.xlu0 %3003
      %v3005 = vsel %vm1065, %v2998, 0
      %v3007 = vsel %vm1065, %v3000, 0
      %v3009 = vsel %vm1065, %v3002, 0
      %v3011 = vsel %vm1065, %v3004, 0
      %3013 = vmatpush.xpose.msra.mxu0 0.0
      %3014 = vmatpush.xpose.msra.mxu0 0.0
      %3015 = vmatpush.xpose.msra.mxu0 0.0
      %3016 = vmatpush.xpose.msra.mxu0 0.0
      %3017 = vmatpush.xpose.msra.mxu0 0.0
      %3018 = vmatpush.xpose.msra.mxu0 0.0
      %3019 = vmatpush.xpose.msra.mxu0 0.0
      %3020 = vmatpush.xpose.msra.mxu0 0.0
      %3021 = vmatpush.xpose.msra.mxu0 0.0
      %3022 = vmatpush.xpose.msra.mxu0 0.0
      %3023 = vmatpush.xpose.msra.mxu0 0.0
      %3024 = vmatpush.xpose.msra.mxu0 0.0
      %3025 = vmatpush.xpose.msra.mxu0 0.0
      %3026 = vmatpush.xpose.msra.mxu0 0.0
      %3027 = vmatpush.xpose.msra.mxu0 %v3011
      %3028 = vmatpush.xpose.msra.mxu0 %v3009
      %3029 = vmatmul.f32.gmra.mxu0 %v3005
      %v3030 = vpop.f32.mrf.mxu0
      %v3031 = vadd.f32 0.0, %v3030
      %3032 = vmatmul.f32.gmra.mxu0 %v3007
      %v3033 = vpop.f32.mrf.mxu0
      %v3034 = vadd.f32 0.0, %v3033
      %3035 = vdwg.mxu0
      %3036 = vrot.lane.b32.xlu0 %v993, 96
      %v3037 = vpop.permute.xlu0 %3036
      %3038 = vrot.lane.b32.xlu0 %v995, 96
      %v3039 = vpop.permute.xlu0 %3038
      %3040 = vrot.lane.b32.xlu0 %v993, 32
      %v3041 = vpop.permute.xlu0 %3040
      %3042 = vrot.lane.b32.xlu0 %v995, 32
      %v3043 = vpop.permute.xlu0 %3042
      %v3044 = vsel %vm1065, %v3037, 0
      %v3046 = vsel %vm1065, %v3039, 0
      %v3048 = vsel %vm1065, %v3041, 0
      %v3050 = vsel %vm1065, %v3043, 0
      %3052 = vmatpush.xpose.msra.mxu0 0.0
      %3053 = vmatpush.xpose.msra.mxu0 0.0
      %3054 = vmatpush.xpose.msra.mxu0 0.0
      %3055 = vmatpush.xpose.msra.mxu0 0.0
      %3056 = vmatpush.xpose.msra.mxu0 0.0
      %3057 = vmatpush.xpose.msra.mxu0 0.0
      %3058 = vmatpush.xpose.msra.mxu0 0.0
      %3059 = vmatpush.xpose.msra.mxu0 0.0
      %3060 = vmatpush.xpose.msra.mxu0 0.0
      %3061 = vmatpush.xpose.msra.mxu0 0.0
      %3062 = vmatpush.xpose.msra.mxu0 0.0
      %3063 = vmatpush.xpose.msra.mxu0 0.0
      %3064 = vmatpush.xpose.msra.mxu0 0.0
      %3065 = vmatpush.xpose.msra.mxu0 0.0
      %3066 = vmatpush.xpose.msra.mxu0 %v3050
      %3067 = vmatpush.xpose.msra.mxu0 %v3048
      %3068 = vmatmul.f32.gmra.mxu0 %v3044
      %v3069 = vpop.f32.mrf.mxu0
      %v3070 = vadd.f32 0.0, %v3069
      %3071 = vmatmul.f32.gmra.mxu0 %v3046
      %v3072 = vpop.f32.mrf.mxu0
      %v3073 = vadd.f32 0.0, %v3072
      %3074 = vdwg.mxu0
      %3075 = vrot.lane.b32.xlu0 %v998, 96
      %v3076 = vpop.permute.xlu0 %3075
      %3077 = vrot.lane.b32.xlu0 %v1000, 96
      %v3078 = vpop.permute.xlu0 %3077
      %3079 = vrot.lane.b32.xlu0 %v998, 32
      %v3080 = vpop.permute.xlu0 %3079
      %3081 = vrot.lane.b32.xlu0 %v1000, 32
      %v3082 = vpop.permute.xlu0 %3081
      %v3083 = vsel %vm1065, %v3076, 0
      %v3085 = vsel %vm1065, %v3078, 0
      %v3087 = vsel %vm1065, %v3080, 0
      %v3089 = vsel %vm1065, %v3082, 0
      %3091 = vmatpush.xpose.msra.mxu0 0.0
      %3092 = vmatpush.xpose.msra.mxu0 0.0
      %3093 = vmatpush.xpose.msra.mxu0 0.0
      %3094 = vmatpush.xpose.msra.mxu0 0.0
      %3095 = vmatpush.xpose.msra.mxu0 0.0
      %3096 = vmatpush.xpose.msra.mxu0 0.0
      %3097 = vmatpush.xpose.msra.mxu0 0.0
      %3098 = vmatpush.xpose.msra.mxu0 0.0
      %3099 = vmatpush.xpose.msra.mxu0 0.0
      %3100 = vmatpush.xpose.msra.mxu0 0.0
      %3101 = vmatpush.xpose.msra.mxu0 0.0
      %3102 = vmatpush.xpose.msra.mxu0 0.0
      %3103 = vmatpush.xpose.msra.mxu0 0.0
      %3104 = vmatpush.xpose.msra.mxu0 0.0
      %3105 = vmatpush.xpose.msra.mxu0 %v3089
      %3106 = vmatpush.xpose.msra.mxu0 %v3087
      %3107 = vmatmul.f32.gmra.mxu0 %v3083
      %v3108 = vpop.f32.mrf.mxu0
      %v3109 = vadd.f32 0.0, %v3108
      %3110 = vmatmul.f32.gmra.mxu0 %v3085
      %v3111 = vpop.f32.mrf.mxu0
      %v3112 = vadd.f32 0.0, %v3111
      %3113 = vdwg.mxu0
      %v3114 = vmul.f32 %v2836, 0.25
      %v3115 = vmul.f32 %v2839, 0.25
      %v3116 = vmul.f32 %v2875, 0.25
      %v3117 = vmul.f32 %v2878, 0.25
      %v3118 = vmul.f32 %v2914, 0.25
      %v3119 = vmul.f32 %v2917, 0.25
      %v3120 = vmul.f32 %v2953, 0.25
      %v3121 = vmul.f32 %v2956, 0.25
      %v3122 = vmul.f32 %v2992, 0.25
      %v3123 = vmul.f32 %v2995, 0.25
      %v3124 = vmul.f32 %v3031, 0.25
      %v3125 = vmul.f32 %v3034, 0.25
      %v3126 = vmul.f32 %v3070, 0.25
      %v3127 = vmul.f32 %v3073, 0.25
      %v3128 = vmul.f32 %v3109, 0.25
      %v3129 = vmul.f32 %v3112, 0.25
      %v3130 = vadd.f32 %v3114, %v1372
      %v3131 = vadd.f32 %v3115, %v1372
      %v3132 = vadd.f32 %v3116, %v1373
      %v3133 = vadd.f32 %v3117, %v1373
      %v3134 = vadd.f32 %v3118, %v1374
      %v3135 = vadd.f32 %v3119, %v1374
      %v3136 = vadd.f32 %v3120, %v1375
      %v3137 = vadd.f32 %v3121, %v1375
      %v3138 = vadd.f32 %v3122, %v1376
      %v3139 = vadd.f32 %v3123, %v1376
      %v3140 = vadd.f32 %v3124, %v1377
      %v3141 = vadd.f32 %v3125, %v1377
      %v3142 = vadd.f32 %v3126, %v1378
      %v3143 = vadd.f32 %v3127, %v1378
      %v3144 = vadd.f32 %v3128, %v1379
      %v3145 = vadd.f32 %v3129, %v1379
      %v3146 = vsel %vm1065, %v3130, -inf
      %3147 = vmax.xlane.f32.xlu0 %v3146
      %v3148 = vpop.xlane.xlu0 %3147
      %v3149 = vsel %vm1065, %v3131, -inf
      %3150 = vmax.xlane.f32.xlu0 %v3149
      %v3151 = vpop.xlane.xlu0 %3150
      %v3152 = vsel %vm1065, %v3132, -inf
      %3153 = vmax.xlane.f32.xlu0 %v3152
      %v3154 = vpop.xlane.xlu0 %3153
      %v3155 = vsel %vm1065, %v3133, -inf
      %3156 = vmax.xlane.f32.xlu0 %v3155
      %v3157 = vpop.xlane.xlu0 %3156
      %v3158 = vsel %vm1065, %v3134, -inf
      %3159 = vmax.xlane.f32.xlu0 %v3158
      %v3160 = vpop.xlane.xlu0 %3159
      %v3161 = vsel %vm1065, %v3135, -inf
      %3162 = vmax.xlane.f32.xlu0 %v3161
      %v3163 = vpop.xlane.xlu0 %3162
      %v3164 = vsel %vm1065, %v3136, -inf
      %3165 = vmax.xlane.f32.xlu0 %v3164
      %v3166 = vpop.xlane.xlu0 %3165
      %v3167 = vsel %vm1065, %v3137, -inf
      %3168 = vmax.xlane.f32.xlu0 %v3167
      %v3169 = vpop.xlane.xlu0 %3168
      %v3170 = vsel %vm1065, %v3138, -inf
      %3171 = vmax.xlane.f32.xlu0 %v3170
      %v3172 = vpop.xlane.xlu0 %3171
      %v3173 = vsel %vm1065, %v3139, -inf
      %3174 = vmax.xlane.f32.xlu0 %v3173
      %v3175 = vpop.xlane.xlu0 %3174
      %v3176 = vsel %vm1065, %v3140, -inf
      %3177 = vmax.xlane.f32.xlu0 %v3176
      %v3178 = vpop.xlane.xlu0 %3177
      %v3179 = vsel %vm1065, %v3141, -inf
      %3180 = vmax.xlane.f32.xlu0 %v3179
      %v3181 = vpop.xlane.xlu0 %3180
      %v3182 = vsel %vm1065, %v3142, -inf
      %3183 = vmax.xlane.f32.xlu0 %v3182
      %v3184 = vpop.xlane.xlu0 %3183
      %v3185 = vsel %vm1065, %v3143, -inf
      %3186 = vmax.xlane.f32.xlu0 %v3185
      %v3187 = vpop.xlane.xlu0 %3186
      %v3188 = vsel %vm1065, %v3144, -inf
      %3189 = vmax.xlane.f32.xlu0 %v3188
      %v3190 = vpop.xlane.xlu0 %3189
      %v3191 = vsel %vm1065, %v3145, -inf
      %3192 = vmax.xlane.f32.xlu0 %v3191
      %v3193 = vpop.xlane.xlu0 %3192
      %v3194 = vsub.f32 %v3130, %v3148
      %v3195 = vsub.f32 %v3131, %v3151
      %v3196 = vsub.f32 %v3132, %v3154
      %v3197 = vsub.f32 %v3133, %v3157
      %v3198 = vsub.f32 %v3134, %v3160
      %v3199 = vsub.f32 %v3135, %v3163
      %v3200 = vsub.f32 %v3136, %v3166
      %v3201 = vsub.f32 %v3137, %v3169
      %v3202 = vsub.f32 %v3138, %v3172
      %v3203 = vsub.f32 %v3139, %v3175
      %v3204 = vsub.f32 %v3140, %v3178
      %v3205 = vsub.f32 %v3141, %v3181
      %v3206 = vsub.f32 %v3142, %v3184
      %v3207 = vsub.f32 %v3143, %v3187
      %v3208 = vsub.f32 %v3144, %v3190
      %v3209 = vsub.f32 %v3145, %v3193
      %v3210 = vmul.f32 %v3194, 1.442695
      %v3211 = vpow.pop %v3210
      %v3212 = vmul.f32 %v3195, 1.442695
      %v3213 = vpow.pop %v3212
      %v3214 = vmul.f32 %v3196, 1.442695
      %v3215 = vpow.pop %v3214
      %v3216 = vmul.f32 %v3197, 1.442695
      %v3217 = vpow.pop %v3216
      %v3218 = vmul.f32 %v3198, 1.442695
      %v3219 = vpow.pop %v3218
      %v3220 = vmul.f32 %v3199, 1.442695
      %v3221 = vpow.pop %v3220
      %v3222 = vmul.f32 %v3200, 1.442695
      %v3223 = vpow.pop %v3222
      %v3224 = vmul.f32 %v3201, 1.442695
      %v3225 = vpow.pop %v3224
      %v3226 = vmul.f32 %v3202, 1.442695
      %v3227 = vpow.pop %v3226
      %v3228 = vmul.f32 %v3203, 1.442695
      %v3229 = vpow.pop %v3228
      %v3230 = vmul.f32 %v3204, 1.442695
      %v3231 = vpow.pop %v3230
      %v3232 = vmul.f32 %v3205, 1.442695
      %v3233 = vpow.pop %v3232
      %v3234 = vmul.f32 %v3206, 1.442695
      %v3235 = vpow.pop %v3234
      %v3236 = vmul.f32 %v3207, 1.442695
      %v3237 = vpow.pop %v3236
      %v3238 = vmul.f32 %v3208, 1.442695
      %v3239 = vpow.pop %v3238
      %v3240 = vmul.f32 %v3209, 1.442695
      %v3241 = vpow.pop %v3240
      %v3242 = vsel %vm1065, %v3211, 0.0
      %3243 = vadd.xlane.f32.xlu0 %v3242
      %v3244 = vpop.xlane.xlu0 %3243
      %v3245 = vsel %vm1065, %v3213, 0.0
      %3246 = vadd.xlane.f32.xlu0 %v3245
      %v3247 = vpop.xlane.xlu0 %3246
      %v3248 = vsel %vm1065, %v3215, 0.0
      %3249 = vadd.xlane.f32.xlu0 %v3248
      %v3250 = vpop.xlane.xlu0 %3249
      %v3251 = vsel %vm1065, %v3217, 0.0
      %3252 = vadd.xlane.f32.xlu0 %v3251
      %v3253 = vpop.xlane.xlu0 %3252
      %v3254 = vsel %vm1065, %v3219, 0.0
      %3255 = vadd.xlane.f32.xlu0 %v3254
      %v3256 = vpop.xlane.xlu0 %3255
      %v3257 = vsel %vm1065, %v3221, 0.0
      %3258 = vadd.xlane.f32.xlu0 %v3257
      %v3259 = vpop.xlane.xlu0 %3258
      %v3260 = vsel %vm1065, %v3223, 0.0
      %3261 = vadd.xlane.f32.xlu0 %v3260
      %v3262 = vpop.xlane.xlu0 %3261
      %v3263 = vsel %vm1065, %v3225, 0.0
      %3264 = vadd.xlane.f32.xlu0 %v3263
      %v3265 = vpop.xlane.xlu0 %3264
      %v3266 = vsel %vm1065, %v3227, 0.0
      %3267 = vadd.xlane.f32.xlu0 %v3266
      %v3268 = vpop.xlane.xlu0 %3267
      %v3269 = vsel %vm1065, %v3229, 0.0
      %3270 = vadd.xlane.f32.xlu0 %v3269
      %v3271 = vpop.xlane.xlu0 %3270
      %v3272 = vsel %vm1065, %v3231, 0.0
      %3273 = vadd.xlane.f32.xlu0 %v3272
      %v3274 = vpop.xlane.xlu0 %3273
      %v3275 = vsel %vm1065, %v3233, 0.0
      %3276 = vadd.xlane.f32.xlu0 %v3275
      %v3277 = vpop.xlane.xlu0 %3276
      %v3278 = vsel %vm1065, %v3235, 0.0
      %3279 = vadd.xlane.f32.xlu0 %v3278
      %v3280 = vpop.xlane.xlu0 %3279
      %v3281 = vsel %vm1065, %v3237, 0.0
      %3282 = vadd.xlane.f32.xlu0 %v3281
      %v3283 = vpop.xlane.xlu0 %3282
      %v3284 = vsel %vm1065, %v3239, 0.0
      %3285 = vadd.xlane.f32.xlu0 %v3284
      %v3286 = vpop.xlane.xlu0 %3285
      %v3287 = vsel %vm1065, %v3241, 0.0
      %3288 = vadd.xlane.f32.xlu0 %v3287
      %v3289 = vpop.xlane.xlu0 %3288
      %v3290 = vrcp.pop %v3244
      %v3291 = vrcp.pop %v3247
      %v3292 = vrcp.pop %v3250
      %v3293 = vrcp.pop %v3253
      %v3294 = vrcp.pop %v3256
      %v3295 = vrcp.pop %v3259
      %v3296 = vrcp.pop %v3262
      %v3297 = vrcp.pop %v3265
      %v3298 = vrcp.pop %v3268
      %v3299 = vrcp.pop %v3271
      %v3300 = vrcp.pop %v3274
      %v3301 = vrcp.pop %v3277
      %v3302 = vrcp.pop %v3280
      %v3303 = vrcp.pop %v3283
      %v3304 = vrcp.pop %v3286
      %v3305 = vrcp.pop %v3289
      %v3306 = vmul.f32 %v3211, %v3290
      %v3307 = vmul.f32 %v3213, %v3291
      %v3308 = vmul.f32 %v3215, %v3292
      %v3309 = vmul.f32 %v3217, %v3293
      %v3310 = vmul.f32 %v3219, %v3294
      %v3311 = vmul.f32 %v3221, %v3295
      %v3312 = vmul.f32 %v3223, %v3296
      %v3313 = vmul.f32 %v3225, %v3297
      %v3314 = vmul.f32 %v3227, %v3298
      %v3315 = vmul.f32 %v3229, %v3299
      %v3316 = vmul.f32 %v3231, %v3300
      %v3317 = vmul.f32 %v3233, %v3301
      %v3318 = vmul.f32 %v3235, %v3302
      %v3319 = vmul.f32 %v3237, %v3303
      %v3320 = vmul.f32 %v3239, %v3304
      %v3321 = vmul.f32 %v3241, %v3305
      %3322 = vrot.lane.b32.xlu0 %v1012, 96
      %v3323 = vpop.permute.xlu0 %3322
      %3324 = vrot.lane.b32.xlu0 %v1014, 96
      %v3325 = vpop.permute.xlu0 %3324
      %v3329 = vsel %vm1065, %v3306, 0
      %v3332 = vsel %vm1065, %v3307, 0
      %3334 = vmatpush.msra.mxu0 0.0
      %3335 = vmatpush.msra.mxu0 0.0
      %3336 = vmatpush.msra.mxu0 0.0
      %3337 = vmatpush.msra.mxu0 0.0
      %3338 = vmatpush.msra.mxu0 0.0
      %3339 = vmatpush.msra.mxu0 0.0
      %3340 = vmatpush.msra.mxu0 0.0
      %3341 = vmatpush.msra.mxu0 0.0
      %3342 = vmatpush.msra.mxu0 0.0
      %3343 = vmatpush.msra.mxu0 0.0
      %3344 = vmatpush.msra.mxu0 0.0
      %3345 = vmatpush.msra.mxu0 0.0
      %3346 = vmatpush.msra.mxu0 0.0
      %3347 = vmatpush.msra.mxu0 0.0
      %3348 = vmatpush.msra.mxu0 %v3325
      %3349 = vmatpush.msra.mxu0 %v3323
      %3350 = vmatmul.f32.gmra.mxu0 %v3329
      %v3351 = vpop.f32.mrf.mxu0
      %v3352 = vadd.f32 0.0, %v3351
      %3353 = vmatmul.f32.gmra.mxu0 %v3332
      %v3354 = vpop.f32.mrf.mxu0
      %v3355 = vadd.f32 0.0, %v3354
      %3356 = vdwg.mxu0
      %3357 = vrot.lane.b32.xlu0 %v1017, 96
      %v3358 = vpop.permute.xlu0 %3357
      %3359 = vrot.lane.b32.xlu0 %v1019, 96
      %v3360 = vpop.permute.xlu0 %3359
      %v3364 = vsel %vm1065, %v3308, 0
      %v3367 = vsel %vm1065, %v3309, 0
      %3369 = vmatpush.msra.mxu0 0.0
      %3370 = vmatpush.msra.mxu0 0.0
      %3371 = vmatpush.msra.mxu0 0.0
      %3372 = vmatpush.msra.mxu0 0.0
      %3373 = vmatpush.msra.mxu0 0.0
      %3374 = vmatpush.msra.mxu0 0.0
      %3375 = vmatpush.msra.mxu0 0.0
      %3376 = vmatpush.msra.mxu0 0.0
      %3377 = vmatpush.msra.mxu0 0.0
      %3378 = vmatpush.msra.mxu0 0.0
      %3379 = vmatpush.msra.mxu0 0.0
      %3380 = vmatpush.msra.mxu0 0.0
      %3381 = vmatpush.msra.mxu0 0.0
      %3382 = vmatpush.msra.mxu0 0.0
      %3383 = vmatpush.msra.mxu0 %v3360
      %3384 = vmatpush.msra.mxu0 %v3358
      %3385 = vmatmul.f32.gmra.mxu0 %v3364
      %v3386 = vpop.f32.mrf.mxu0
      %v3387 = vadd.f32 0.0, %v3386
      %3388 = vmatmul.f32.gmra.mxu0 %v3367
      %v3389 = vpop.f32.mrf.mxu0
      %v3390 = vadd.f32 0.0, %v3389
      %3391 = vdwg.mxu0
      %3392 = vrot.lane.b32.xlu0 %v1022, 96
      %v3393 = vpop.permute.xlu0 %3392
      %3394 = vrot.lane.b32.xlu0 %v1024, 96
      %v3395 = vpop.permute.xlu0 %3394
      %v3399 = vsel %vm1065, %v3310, 0
      %v3402 = vsel %vm1065, %v3311, 0
      %3404 = vmatpush.msra.mxu0 0.0
      %3405 = vmatpush.msra.mxu0 0.0
      %3406 = vmatpush.msra.mxu0 0.0
      %3407 = vmatpush.msra.mxu0 0.0
      %3408 = vmatpush.msra.mxu0 0.0
      %3409 = vmatpush.msra.mxu0 0.0
      %3410 = vmatpush.msra.mxu0 0.0
      %3411 = vmatpush.msra.mxu0 0.0
      %3412 = vmatpush.msra.mxu0 0.0
      %3413 = vmatpush.msra.mxu0 0.0
      %3414 = vmatpush.msra.mxu0 0.0
      %3415 = vmatpush.msra.mxu0 0.0
      %3416 = vmatpush.msra.mxu0 0.0
      %3417 = vmatpush.msra.mxu0 0.0
      %3418 = vmatpush.msra.mxu0 %v3395
      %3419 = vmatpush.msra.mxu0 %v3393
      %3420 = vmatmul.f32.gmra.mxu0 %v3399
      %v3421 = vpop.f32.mrf.mxu0
      %v3422 = vadd.f32 0.0, %v3421
      %3423 = vmatmul.f32.gmra.mxu0 %v3402
      %v3424 = vpop.f32.mrf.mxu0
      %v3425 = vadd.f32 0.0, %v3424
      %3426 = vdwg.mxu0
      %3427 = vrot.lane.b32.xlu0 %v1027, 96
      %v3428 = vpop.permute.xlu0 %3427
      %3429 = vrot.lane.b32.xlu0 %v1029, 96
      %v3430 = vpop.permute.xlu0 %3429
      %v3434 = vsel %vm1065, %v3312, 0
      %v3437 = vsel %vm1065, %v3313, 0
      %3439 = vmatpush.msra.mxu0 0.0
      %3440 = vmatpush.msra.mxu0 0.0
      %3441 = vmatpush.msra.mxu0 0.0
      %3442 = vmatpush.msra.mxu0 0.0
      %3443 = vmatpush.msra.mxu0 0.0
      %3444 = vmatpush.msra.mxu0 0.0
      %3445 = vmatpush.msra.mxu0 0.0
      %3446 = vmatpush.msra.mxu0 0.0
      %3447 = vmatpush.msra.mxu0 0.0
      %3448 = vmatpush.msra.mxu0 0.0
      %3449 = vmatpush.msra.mxu0 0.0
      %3450 = vmatpush.msra.mxu0 0.0
      %3451 = vmatpush.msra.mxu0 0.0
      %3452 = vmatpush.msra.mxu0 0.0
      %3453 = vmatpush.msra.mxu0 %v3430
      %3454 = vmatpush.msra.mxu0 %v3428
      %3455 = vmatmul.f32.gmra.mxu0 %v3434
      %v3456 = vpop.f32.mrf.mxu0
      %v3457 = vadd.f32 0.0, %v3456
      %3458 = vmatmul.f32.gmra.mxu0 %v3437
      %v3459 = vpop.f32.mrf.mxu0
      %v3460 = vadd.f32 0.0, %v3459
      %3461 = vdwg.mxu0
      %3462 = vrot.lane.b32.xlu0 %v1032, 96
      %v3463 = vpop.permute.xlu0 %3462
      %3464 = vrot.lane.b32.xlu0 %v1034, 96
      %v3465 = vpop.permute.xlu0 %3464
      %v3469 = vsel %vm1065, %v3314, 0
      %v3472 = vsel %vm1065, %v3315, 0
      %3474 = vmatpush.msra.mxu0 0.0
      %3475 = vmatpush.msra.mxu0 0.0
      %3476 = vmatpush.msra.mxu0 0.0
      %3477 = vmatpush.msra.mxu0 0.0
      %3478 = vmatpush.msra.mxu0 0.0
      %3479 = vmatpush.msra.mxu0 0.0
      %3480 = vmatpush.msra.mxu0 0.0
      %3481 = vmatpush.msra.mxu0 0.0
      %3482 = vmatpush.msra.mxu0 0.0
      %3483 = vmatpush.msra.mxu0 0.0
      %3484 = vmatpush.msra.mxu0 0.0
      %3485 = vmatpush.msra.mxu0 0.0
      %3486 = vmatpush.msra.mxu0 0.0
      %3487 = vmatpush.msra.mxu0 0.0
      %3488 = vmatpush.msra.mxu0 %v3465
      %3489 = vmatpush.msra.mxu0 %v3463
      %3490 = vmatmul.f32.gmra.mxu0 %v3469
      %v3491 = vpop.f32.mrf.mxu0
      %v3492 = vadd.f32 0.0, %v3491
      %3493 = vmatmul.f32.gmra.mxu0 %v3472
      %v3494 = vpop.f32.mrf.mxu0
      %v3495 = vadd.f32 0.0, %v3494
      %3496 = vdwg.mxu0
      %3497 = vrot.lane.b32.xlu0 %v1037, 96
      %v3498 = vpop.permute.xlu0 %3497
      %3499 = vrot.lane.b32.xlu0 %v1039, 96
      %v3500 = vpop.permute.xlu0 %3499
      %v3504 = vsel %vm1065, %v3316, 0
      %v3507 = vsel %vm1065, %v3317, 0
      %3509 = vmatpush.msra.mxu0 0.0
      %3510 = vmatpush.msra.mxu0 0.0
      %3511 = vmatpush.msra.mxu0 0.0
      %3512 = vmatpush.msra.mxu0 0.0
      %3513 = vmatpush.msra.mxu0 0.0
      %3514 = vmatpush.msra.mxu0 0.0
      %3515 = vmatpush.msra.mxu0 0.0
      %3516 = vmatpush.msra.mxu0 0.0
      %3517 = vmatpush.msra.mxu0 0.0
      %3518 = vmatpush.msra.mxu0 0.0
      %3519 = vmatpush.msra.mxu0 0.0
      %3520 = vmatpush.msra.mxu0 0.0
      %3521 = vmatpush.msra.mxu0 0.0
      %3522 = vmatpush.msra.mxu0 0.0
      %3523 = vmatpush.msra.mxu0 %v3500
      %3524 = vmatpush.msra.mxu0 %v3498
      %3525 = vmatmul.f32.gmra.mxu0 %v3504
      %v3526 = vpop.f32.mrf.mxu0
      %v3527 = vadd.f32 0.0, %v3526
      %3528 = vmatmul.f32.gmra.mxu0 %v3507
      %v3529 = vpop.f32.mrf.mxu0
      %v3530 = vadd.f32 0.0, %v3529
      %3531 = vdwg.mxu0
      %3532 = vrot.lane.b32.xlu0 %v1042, 96
      %v3533 = vpop.permute.xlu0 %3532
      %3534 = vrot.lane.b32.xlu0 %v1044, 96
      %v3535 = vpop.permute.xlu0 %3534
      %v3539 = vsel %vm1065, %v3318, 0
      %v3542 = vsel %vm1065, %v3319, 0
      %3544 = vmatpush.msra.mxu0 0.0
      %3545 = vmatpush.msra.mxu0 0.0
      %3546 = vmatpush.msra.mxu0 0.0
      %3547 = vmatpush.msra.mxu0 0.0
      %3548 = vmatpush.msra.mxu0 0.0
      %3549 = vmatpush.msra.mxu0 0.0
      %3550 = vmatpush.msra.mxu0 0.0
      %3551 = vmatpush.msra.mxu0 0.0
      %3552 = vmatpush.msra.mxu0 0.0
      %3553 = vmatpush.msra.mxu0 0.0
      %3554 = vmatpush.msra.mxu0 0.0
      %3555 = vmatpush.msra.mxu0 0.0
      %3556 = vmatpush.msra.mxu0 0.0
      %3557 = vmatpush.msra.mxu0 0.0
      %3558 = vmatpush.msra.mxu0 %v3535
      %3559 = vmatpush.msra.mxu0 %v3533
      %3560 = vmatmul.f32.gmra.mxu0 %v3539
      %v3561 = vpop.f32.mrf.mxu0
      %v3562 = vadd.f32 0.0, %v3561
      %3563 = vmatmul.f32.gmra.mxu0 %v3542
      %v3564 = vpop.f32.mrf.mxu0
      %v3565 = vadd.f32 0.0, %v3564
      %3566 = vdwg.mxu0
      %3567 = vrot.lane.b32.xlu0 %v1047, 96
      %v3568 = vpop.permute.xlu0 %3567
      %3569 = vrot.lane.b32.xlu0 %v1049, 96
      %v3570 = vpop.permute.xlu0 %3569
      %v3574 = vsel %vm1065, %v3320, 0
      %v3577 = vsel %vm1065, %v3321, 0
      %3579 = vmatpush.msra.mxu0 0.0
      %3580 = vmatpush.msra.mxu0 0.0
      %3581 = vmatpush.msra.mxu0 0.0
      %3582 = vmatpush.msra.mxu0 0.0
      %3583 = vmatpush.msra.mxu0 0.0
      %3584 = vmatpush.msra.mxu0 0.0
      %3585 = vmatpush.msra.mxu0 0.0
      %3586 = vmatpush.msra.mxu0 0.0
      %3587 = vmatpush.msra.mxu0 0.0
      %3588 = vmatpush.msra.mxu0 0.0
      %3589 = vmatpush.msra.mxu0 0.0
      %3590 = vmatpush.msra.mxu0 0.0
      %3591 = vmatpush.msra.mxu0 0.0
      %3592 = vmatpush.msra.mxu0 0.0
      %3593 = vmatpush.msra.mxu0 %v3570
      %3594 = vmatpush.msra.mxu0 %v3568
      %3595 = vmatmul.f32.gmra.mxu0 %v3574
      %v3596 = vpop.f32.mrf.mxu0
      %v3597 = vadd.f32 0.0, %v3596
      %3598 = vmatmul.f32.gmra.mxu0 %v3577
      %v3599 = vpop.f32.mrf.mxu0
      %v3600 = vadd.f32 0.0, %v3599
      %3601 = vdwg.mxu0
      %v3602 = vpack.c.bf16 %v3355, %v3352
      %v3603 = vpack.c.bf16 %v3390, %v3387
      %v3604 = vpack.c.bf16 %v3425, %v3422
      %v3605 = vpack.c.bf16 %v3460, %v3457
      %v3606 = vpack.c.bf16 %v3495, %v3492
      %v3607 = vpack.c.bf16 %v3530, %v3527
      %v3608 = vpack.c.bf16 %v3565, %v3562
      %v3609 = vpack.c.bf16 %v3600, %v3597
      %v3612 = vunpack.c.l.b16 %v1055
      %v3613 = vunpack.c.l.b16 %v1056
      %v3614 = vpack.c.b16 %v3613, %v3612
      %v3617 = vsel %vm1065, %v3602, 0
      %v3620 = vsel %vm1065, %v3603, 0
      %v3623 = vsel %vm1065, %v3604, 0
      %v3626 = vsel %vm1065, %v3605, 0
      %v3629 = vsel %vm1065, %v3606, 0
      %v3632 = vsel %vm1065, %v3607, 0
      %v3635 = vsel %vm1065, %v3608, 0
      %v3638 = vsel %vm1065, %v3609, 0
      %3640 = vmatpush.bf16.msra.mxu0 0
      %3641 = vmatpush.bf16.msra.mxu0 0
      %3642 = vmatpush.bf16.msra.mxu0 0
      %3643 = vmatpush.bf16.msra.mxu0 0
      %3644 = vmatpush.bf16.msra.mxu0 0
      %3645 = vmatpush.bf16.msra.mxu0 0
      %3646 = vmatpush.bf16.msra.mxu0 0
      %3647 = vmatpush.bf16.msra.mxu0 %v3614
      %3648 = vmatmul.bf16.gmra.mxu0 %v3617
      %v3649 = vpop.f32.mrf.mxu0
      %v3650 = vadd.f32 0.0, %v3649
      %v3651 = vpop.f32.mrf.mxu0
      %v3652 = vadd.f32 0.0, %v3651
      %3653 = vmatmul.bf16.gmra.mxu0 %v3620
      %v3654 = vpop.f32.mrf.mxu0
      %v3655 = vadd.f32 0.0, %v3654
      %v3656 = vpop.f32.mrf.mxu0
      %v3657 = vadd.f32 0.0, %v3656
      %3658 = vmatmul.bf16.gmra.mxu0 %v3623
      %v3659 = vpop.f32.mrf.mxu0
      %v3660 = vadd.f32 0.0, %v3659
      %v3661 = vpop.f32.mrf.mxu0
      %v3662 = vadd.f32 0.0, %v3661
      %3663 = vmatmul.bf16.gmra.mxu0 %v3626
      %v3664 = vpop.f32.mrf.mxu0
      %v3665 = vadd.f32 0.0, %v3664
      %v3666 = vpop.f32.mrf.mxu0
      %v3667 = vadd.f32 0.0, %v3666
      %3668 = vmatmul.bf16.gmra.mxu0 %v3629
      %v3669 = vpop.f32.mrf.mxu0
      %v3670 = vadd.f32 0.0, %v3669
      %v3671 = vpop.f32.mrf.mxu0
      %v3672 = vadd.f32 0.0, %v3671
      %3673 = vmatmul.bf16.gmra.mxu0 %v3632
      %v3674 = vpop.f32.mrf.mxu0
      %v3675 = vadd.f32 0.0, %v3674
      %v3676 = vpop.f32.mrf.mxu0
      %v3677 = vadd.f32 0.0, %v3676
      %3678 = vmatmul.bf16.gmra.mxu0 %v3635
      %v3679 = vpop.f32.mrf.mxu0
      %v3680 = vadd.f32 0.0, %v3679
      %v3681 = vpop.f32.mrf.mxu0
      %v3682 = vadd.f32 0.0, %v3681
      %3683 = vmatmul.bf16.gmra.mxu0 %v3638
      %v3684 = vpop.f32.mrf.mxu0
      %v3685 = vadd.f32 0.0, %v3684
      %v3686 = vpop.f32.mrf.mxu0
      %v3687 = vadd.f32 0.0, %v3686
      %3688 = vdwg.mxu0
      %v3689 = vadd.f32 %v2763, %v3650
      %v3690 = vadd.f32 %v2765, %v3652
      %v3691 = vadd.f32 %v2768, %v3655
      %v3692 = vadd.f32 %v2770, %v3657
      %v3693 = vadd.f32 %v2773, %v3660
      %v3694 = vadd.f32 %v2775, %v3662
      %v3695 = vadd.f32 %v2778, %v3665
      %v3696 = vadd.f32 %v2780, %v3667
      %v3697 = vadd.f32 %v2783, %v3670
      %v3698 = vadd.f32 %v2785, %v3672
      %v3699 = vadd.f32 %v2788, %v3675
      %v3700 = vadd.f32 %v2790, %v3677
      %v3701 = vadd.f32 %v2793, %v3680
      %v3702 = vadd.f32 %v2795, %v3682
      %v3703 = vadd.f32 %v2798, %v3685
      %v3704 = vadd.f32 %v2800, %v3687
      %3705 = vrot.lane.b32.xlu0 %v963, 80
      %v3706 = vpop.permute.xlu0 %3705
      %3707 = vrot.lane.b32.xlu0 %v965, 80
      %v3708 = vpop.permute.xlu0 %3707
      %3709 = vrot.lane.b32.xlu0 %v963, 16
      %v3710 = vpop.permute.xlu0 %3709
      %3711 = vrot.lane.b32.xlu0 %v965, 16
      %v3712 = vpop.permute.xlu0 %3711
      %v3713 = vsel %vm1065, %v3706, 0
      %v3715 = vsel %vm1065, %v3708, 0
      %v3717 = vsel %vm1065, %v3710, 0
      %v3719 = vsel %vm1065, %v3712, 0
      %3721 = vmatpush.xpose.msra.mxu0 0.0
      %3722 = vmatpush.xpose.msra.mxu0 0.0
      %3723 = vmatpush.xpose.msra.mxu0 0.0
      %3724 = vmatpush.xpose.msra.mxu0 0.0
      %3725 = vmatpush.xpose.msra.mxu0 0.0
      %3726 = vmatpush.xpose.msra.mxu0 0.0
      %3727 = vmatpush.xpose.msra.mxu0 0.0
      %3728 = vmatpush.xpose.msra.mxu0 0.0
      %3729 = vmatpush.xpose.msra.mxu0 0.0
      %3730 = vmatpush.xpose.msra.mxu0 0.0
      %3731 = vmatpush.xpose.msra.mxu0 0.0
      %3732 = vmatpush.xpose.msra.mxu0 0.0
      %3733 = vmatpush.xpose.msra.mxu0 0.0
      %3734 = vmatpush.xpose.msra.mxu0 0.0
      %3735 = vmatpush.xpose.msra.mxu0 %v3719
      %3736 = vmatpush.xpose.msra.mxu0 %v3717
      %3737 = vmatmul.f32.gmra.mxu0 %v3713
      %v3738 = vpop.f32.mrf.mxu0
      %v3739 = vadd.f32 0.0, %v3738
      %3740 = vmatmul.f32.gmra.mxu0 %v3715
      %v3741 = vpop.f32.mrf.mxu0
      %v3742 = vadd.f32 0.0, %v3741
      %3743 = vdwg.mxu0
      %3744 = vrot.lane.b32.xlu0 %v968, 80
      %v3745 = vpop.permute.xlu0 %3744
      %3746 = vrot.lane.b32.xlu0 %v970, 80
      %v3747 = vpop.permute.xlu0 %3746
      %3748 = vrot.lane.b32.xlu0 %v968, 16
      %v3749 = vpop.permute.xlu0 %3748
      %3750 = vrot.lane.b32.xlu0 %v970, 16
      %v3751 = vpop.permute.xlu0 %3750
      %v3752 = vsel %vm1065, %v3745, 0
      %v3754 = vsel %vm1065, %v3747, 0
      %v3756 = vsel %vm1065, %v3749, 0
      %v3758 = vsel %vm1065, %v3751, 0
      %3760 = vmatpush.xpose.msra.mxu0 0.0
      %3761 = vmatpush.xpose.msra.mxu0 0.0
      %3762 = vmatpush.xpose.msra.mxu0 0.0
      %3763 = vmatpush.xpose.msra.mxu0 0.0
      %3764 = vmatpush.xpose.msra.mxu0 0.0
      %3765 = vmatpush.xpose.msra.mxu0 0.0
      %3766 = vmatpush.xpose.msra.mxu0 0.0
      %3767 = vmatpush.xpose.msra.mxu0 0.0
      %3768 = vmatpush.xpose.msra.mxu0 0.0
      %3769 = vmatpush.xpose.msra.mxu0 0.0
      %3770 = vmatpush.xpose.msra.mxu0 0.0
      %3771 = vmatpush.xpose.msra.mxu0 0.0
      %3772 = vmatpush.xpose.msra.mxu0 0.0
      %3773 = vmatpush.xpose.msra.mxu0 0.0
      %3774 = vmatpush.xpose.msra.mxu0 %v3758
      %3775 = vmatpush.xpose.msra.mxu0 %v3756
      %3776 = vmatmul.f32.gmra.mxu0 %v3752
      %v3777 = vpop.f32.mrf.mxu0
      %v3778 = vadd.f32 0.0, %v3777
      %3779 = vmatmul.f32.gmra.mxu0 %v3754
      %v3780 = vpop.f32.mrf.mxu0
      %v3781 = vadd.f32 0.0, %v3780
      %3782 = vdwg.mxu0
      %3783 = vrot.lane.b32.xlu0 %v973, 80
      %v3784 = vpop.permute.xlu0 %3783
      %3785 = vrot.lane.b32.xlu0 %v975, 80
      %v3786 = vpop.permute.xlu0 %3785
      %3787 = vrot.lane.b32.xlu0 %v973, 16
      %v3788 = vpop.permute.xlu0 %3787
      %3789 = vrot.lane.b32.xlu0 %v975, 16
      %v3790 = vpop.permute.xlu0 %3789
      %v3791 = vsel %vm1065, %v3784, 0
      %v3793 = vsel %vm1065, %v3786, 0
      %v3795 = vsel %vm1065, %v3788, 0
      %v3797 = vsel %vm1065, %v3790, 0
      %3799 = vmatpush.xpose.msra.mxu0 0.0
      %3800 = vmatpush.xpose.msra.mxu0 0.0
      %3801 = vmatpush.xpose.msra.mxu0 0.0
      %3802 = vmatpush.xpose.msra.mxu0 0.0
      %3803 = vmatpush.xpose.msra.mxu0 0.0
      %3804 = vmatpush.xpose.msra.mxu0 0.0
      %3805 = vmatpush.xpose.msra.mxu0 0.0
      %3806 = vmatpush.xpose.msra.mxu0 0.0
      %3807 = vmatpush.xpose.msra.mxu0 0.0
      %3808 = vmatpush.xpose.msra.mxu0 0.0
      %3809 = vmatpush.xpose.msra.mxu0 0.0
      %3810 = vmatpush.xpose.msra.mxu0 0.0
      %3811 = vmatpush.xpose.msra.mxu0 0.0
      %3812 = vmatpush.xpose.msra.mxu0 0.0
      %3813 = vmatpush.xpose.msra.mxu0 %v3797
      %3814 = vmatpush.xpose.msra.mxu0 %v3795
      %3815 = vmatmul.f32.gmra.mxu0 %v3791
      %v3816 = vpop.f32.mrf.mxu0
      %v3817 = vadd.f32 0.0, %v3816
      %3818 = vmatmul.f32.gmra.mxu0 %v3793
      %v3819 = vpop.f32.mrf.mxu0
      %v3820 = vadd.f32 0.0, %v3819
      %3821 = vdwg.mxu0
      %3822 = vrot.lane.b32.xlu0 %v978, 80
      %v3823 = vpop.permute.xlu0 %3822
      %3824 = vrot.lane.b32.xlu0 %v980, 80
      %v3825 = vpop.permute.xlu0 %3824
      %3826 = vrot.lane.b32.xlu0 %v978, 16
      %v3827 = vpop.permute.xlu0 %3826
      %3828 = vrot.lane.b32.xlu0 %v980, 16
      %v3829 = vpop.permute.xlu0 %3828
      %v3830 = vsel %vm1065, %v3823, 0
      %v3832 = vsel %vm1065, %v3825, 0
      %v3834 = vsel %vm1065, %v3827, 0
      %v3836 = vsel %vm1065, %v3829, 0
      %3838 = vmatpush.xpose.msra.mxu0 0.0
      %3839 = vmatpush.xpose.msra.mxu0 0.0
      %3840 = vmatpush.xpose.msra.mxu0 0.0
      %3841 = vmatpush.xpose.msra.mxu0 0.0
      %3842 = vmatpush.xpose.msra.mxu0 0.0
      %3843 = vmatpush.xpose.msra.mxu0 0.0
      %3844 = vmatpush.xpose.msra.mxu0 0.0
      %3845 = vmatpush.xpose.msra.mxu0 0.0
      %3846 = vmatpush.xpose.msra.mxu0 0.0
      %3847 = vmatpush.xpose.msra.mxu0 0.0
      %3848 = vmatpush.xpose.msra.mxu0 0.0
      %3849 = vmatpush.xpose.msra.mxu0 0.0
      %3850 = vmatpush.xpose.msra.mxu0 0.0
      %3851 = vmatpush.xpose.msra.mxu0 0.0
      %3852 = vmatpush.xpose.msra.mxu0 %v3836
      %3853 = vmatpush.xpose.msra.mxu0 %v3834
      %3854 = vmatmul.f32.gmra.mxu0 %v3830
      %v3855 = vpop.f32.mrf.mxu0
      %v3856 = vadd.f32 0.0, %v3855
      %3857 = vmatmul.f32.gmra.mxu0 %v3832
      %v3858 = vpop.f32.mrf.mxu0
      %v3859 = vadd.f32 0.0, %v3858
      %3860 = vdwg.mxu0
      %3861 = vrot.lane.b32.xlu0 %v983, 80
      %v3862 = vpop.permute.xlu0 %3861
      %3863 = vrot.lane.b32.xlu0 %v985, 80
      %v3864 = vpop.permute.xlu0 %3863
      %3865 = vrot.lane.b32.xlu0 %v983, 16
      %v3866 = vpop.permute.xlu0 %3865
      %3867 = vrot.lane.b32.xlu0 %v985, 16
      %v3868 = vpop.permute.xlu0 %3867
      %v3869 = vsel %vm1065, %v3862, 0
      %v3871 = vsel %vm1065, %v3864, 0
      %v3873 = vsel %vm1065, %v3866, 0
      %v3875 = vsel %vm1065, %v3868, 0
      %3877 = vmatpush.xpose.msra.mxu0 0.0
      %3878 = vmatpush.xpose.msra.mxu0 0.0
      %3879 = vmatpush.xpose.msra.mxu0 0.0
      %3880 = vmatpush.xpose.msra.mxu0 0.0
      %3881 = vmatpush.xpose.msra.mxu0 0.0
      %3882 = vmatpush.xpose.msra.mxu0 0.0
      %3883 = vmatpush.xpose.msra.mxu0 0.0
      %3884 = vmatpush.xpose.msra.mxu0 0.0
      %3885 = vmatpush.xpose.msra.mxu0 0.0
      %3886 = vmatpush.xpose.msra.mxu0 0.0
      %3887 = vmatpush.xpose.msra.mxu0 0.0
      %3888 = vmatpush.xpose.msra.mxu0 0.0
      %3889 = vmatpush.xpose.msra.mxu0 0.0
      %3890 = vmatpush.xpose.msra.mxu0 0.0
      %3891 = vmatpush.xpose.msra.mxu0 %v3875
      %3892 = vmatpush.xpose.msra.mxu0 %v3873
      %3893 = vmatmul.f32.gmra.mxu0 %v3869
      %v3894 = vpop.f32.mrf.mxu0
      %v3895 = vadd.f32 0.0, %v3894
      %3896 = vmatmul.f32.gmra.mxu0 %v3871
      %v3897 = vpop.f32.mrf.mxu0
      %v3898 = vadd.f32 0.0, %v3897
      %3899 = vdwg.mxu0
      %3900 = vrot.lane.b32.xlu0 %v988, 80
      %v3901 = vpop.permute.xlu0 %3900
      %3902 = vrot.lane.b32.xlu0 %v990, 80
      %v3903 = vpop.permute.xlu0 %3902
      %3904 = vrot.lane.b32.xlu0 %v988, 16
      %v3905 = vpop.permute.xlu0 %3904
      %3906 = vrot.lane.b32.xlu0 %v990, 16
      %v3907 = vpop.permute.xlu0 %3906
      %v3908 = vsel %vm1065, %v3901, 0
      %v3910 = vsel %vm1065, %v3903, 0
      %v3912 = vsel %vm1065, %v3905, 0
      %v3914 = vsel %vm1065, %v3907, 0
      %3916 = vmatpush.xpose.msra.mxu0 0.0
      %3917 = vmatpush.xpose.msra.mxu0 0.0
      %3918 = vmatpush.xpose.msra.mxu0 0.0
      %3919 = vmatpush.xpose.msra.mxu0 0.0
      %3920 = vmatpush.xpose.msra.mxu0 0.0
      %3921 = vmatpush.xpose.msra.mxu0 0.0
      %3922 = vmatpush.xpose.msra.mxu0 0.0
      %3923 = vmatpush.xpose.msra.mxu0 0.0
      %3924 = vmatpush.xpose.msra.mxu0 0.0
      %3925 = vmatpush.xpose.msra.mxu0 0.0
      %3926 = vmatpush.xpose.msra.mxu0 0.0
      %3927 = vmatpush.xpose.msra.mxu0 0.0
      %3928 = vmatpush.xpose.msra.mxu0 0.0
      %3929 = vmatpush.xpose.msra.mxu0 0.0
      %3930 = vmatpush.xpose.msra.mxu0 %v3914
      %3931 = vmatpush.xpose.msra.mxu0 %v3912
      %3932 = vmatmul.f32.gmra.mxu0 %v3908
      %v3933 = vpop.f32.mrf.mxu0
      %v3934 = vadd.f32 0.0, %v3933
      %3935 = vmatmul.f32.gmra.mxu0 %v3910
      %v3936 = vpop.f32.mrf.mxu0
      %v3937 = vadd.f32 0.0, %v3936
      %3938 = vdwg.mxu0
      %3939 = vrot.lane.b32.xlu0 %v993, 80
      %v3940 = vpop.permute.xlu0 %3939
      %3941 = vrot.lane.b32.xlu0 %v995, 80
      %v3942 = vpop.permute.xlu0 %3941
      %3943 = vrot.lane.b32.xlu0 %v993, 16
      %v3944 = vpop.permute.xlu0 %3943
      %3945 = vrot.lane.b32.xlu0 %v995, 16
      %v3946 = vpop.permute.xlu0 %3945
      %v3947 = vsel %vm1065, %v3940, 0
      %v3949 = vsel %vm1065, %v3942, 0
      %v3951 = vsel %vm1065, %v3944, 0
      %v3953 = vsel %vm1065, %v3946, 0
      %3955 = vmatpush.xpose.msra.mxu0 0.0
      %3956 = vmatpush.xpose.msra.mxu0 0.0
      %3957 = vmatpush.xpose.msra.mxu0 0.0
      %3958 = vmatpush.xpose.msra.mxu0 0.0
      %3959 = vmatpush.xpose.msra.mxu0 0.0
      %3960 = vmatpush.xpose.msra.mxu0 0.0
      %3961 = vmatpush.xpose.msra.mxu0 0.0
      %3962 = vmatpush.xpose.msra.mxu0 0.0
      %3963 = vmatpush.xpose.msra.mxu0 0.0
      %3964 = vmatpush.xpose.msra.mxu0 0.0
      %3965 = vmatpush.xpose.msra.mxu0 0.0
      %3966 = vmatpush.xpose.msra.mxu0 0.0
      %3967 = vmatpush.xpose.msra.mxu0 0.0
      %3968 = vmatpush.xpose.msra.mxu0 0.0
      %3969 = vmatpush.xpose.msra.mxu0 %v3953
      %3970 = vmatpush.xpose.msra.mxu0 %v3951
      %3971 = vmatmul.f32.gmra.mxu0 %v3947
      %v3972 = vpop.f32.mrf.mxu0
      %v3973 = vadd.f32 0.0, %v3972
      %3974 = vmatmul.f32.gmra.mxu0 %v3949
      %v3975 = vpop.f32.mrf.mxu0
      %v3976 = vadd.f32 0.0, %v3975
      %3977 = vdwg.mxu0
      %3978 = vrot.lane.b32.xlu0 %v998, 80
      %v3979 = vpop.permute.xlu0 %3978
      %3980 = vrot.lane.b32.xlu0 %v1000, 80
      %v3981 = vpop.permute.xlu0 %3980
      %3982 = vrot.lane.b32.xlu0 %v998, 16
      %v3983 = vpop.permute.xlu0 %3982
      %3984 = vrot.lane.b32.xlu0 %v1000, 16
      %v3985 = vpop.permute.xlu0 %3984
      %v3986 = vsel %vm1065, %v3979, 0
      %v3988 = vsel %vm1065, %v3981, 0
      %v3990 = vsel %vm1065, %v3983, 0
      %v3992 = vsel %vm1065, %v3985, 0
      %3994 = vmatpush.xpose.msra.mxu0 0.0
      %3995 = vmatpush.xpose.msra.mxu0 0.0
      %3996 = vmatpush.xpose.msra.mxu0 0.0
      %3997 = vmatpush.xpose.msra.mxu0 0.0
      %3998 = vmatpush.xpose.msra.mxu0 0.0
      %3999 = vmatpush.xpose.msra.mxu0 0.0
      %4000 = vmatpush.xpose.msra.mxu0 0.0
      %4001 = vmatpush.xpose.msra.mxu0 0.0
      %4002 = vmatpush.xpose.msra.mxu0 0.0
      %4003 = vmatpush.xpose.msra.mxu0 0.0
      %4004 = vmatpush.xpose.msra.mxu0 0.0
      %4005 = vmatpush.xpose.msra.mxu0 0.0
      %4006 = vmatpush.xpose.msra.mxu0 0.0
      %4007 = vmatpush.xpose.msra.mxu0 0.0
      %4008 = vmatpush.xpose.msra.mxu0 %v3992
      %4009 = vmatpush.xpose.msra.mxu0 %v3990
      %4010 = vmatmul.f32.gmra.mxu0 %v3986
      %v4011 = vpop.f32.mrf.mxu0
      %v4012 = vadd.f32 0.0, %v4011
      %4013 = vmatmul.f32.gmra.mxu0 %v3988
      %v4014 = vpop.f32.mrf.mxu0
      %v4015 = vadd.f32 0.0, %v4014
      %4016 = vdwg.mxu0
      %v4017 = vmul.f32 %v3739, 0.25
      %v4018 = vmul.f32 %v3742, 0.25
      %v4019 = vmul.f32 %v3778, 0.25
      %v4020 = vmul.f32 %v3781, 0.25
      %v4021 = vmul.f32 %v3817, 0.25
      %v4022 = vmul.f32 %v3820, 0.25
      %v4023 = vmul.f32 %v3856, 0.25
      %v4024 = vmul.f32 %v3859, 0.25
      %v4025 = vmul.f32 %v3895, 0.25
      %v4026 = vmul.f32 %v3898, 0.25
      %v4027 = vmul.f32 %v3934, 0.25
      %v4028 = vmul.f32 %v3937, 0.25
      %v4029 = vmul.f32 %v3973, 0.25
      %v4030 = vmul.f32 %v3976, 0.25
      %v4031 = vmul.f32 %v4012, 0.25
      %v4032 = vmul.f32 %v4015, 0.25
      %v4033 = vadd.f32 %v4017, %v1372
      %v4034 = vadd.f32 %v4018, %v1372
      %v4035 = vadd.f32 %v4019, %v1373
      %v4036 = vadd.f32 %v4020, %v1373
      %v4037 = vadd.f32 %v4021, %v1374
      %v4038 = vadd.f32 %v4022, %v1374
      %v4039 = vadd.f32 %v4023, %v1375
      %v4040 = vadd.f32 %v4024, %v1375
      %v4041 = vadd.f32 %v4025, %v1376
      %v4042 = vadd.f32 %v4026, %v1376
      %v4043 = vadd.f32 %v4027, %v1377
      %v4044 = vadd.f32 %v4028, %v1377
      %v4045 = vadd.f32 %v4029, %v1378
      %v4046 = vadd.f32 %v4030, %v1378
      %v4047 = vadd.f32 %v4031, %v1379
      %v4048 = vadd.f32 %v4032, %v1379
      %v4049 = vsel %vm1065, %v4033, -inf
      %4050 = vmax.xlane.f32.xlu0 %v4049
      %v4051 = vpop.xlane.xlu0 %4050
      %v4052 = vsel %vm1065, %v4034, -inf
      %4053 = vmax.xlane.f32.xlu0 %v4052
      %v4054 = vpop.xlane.xlu0 %4053
      %v4055 = vsel %vm1065, %v4035, -inf
      %4056 = vmax.xlane.f32.xlu0 %v4055
      %v4057 = vpop.xlane.xlu0 %4056
      %v4058 = vsel %vm1065, %v4036, -inf
      %4059 = vmax.xlane.f32.xlu0 %v4058
      %v4060 = vpop.xlane.xlu0 %4059
      %v4061 = vsel %vm1065, %v4037, -inf
      %4062 = vmax.xlane.f32.xlu0 %v4061
      %v4063 = vpop.xlane.xlu0 %4062
      %v4064 = vsel %vm1065, %v4038, -inf
      %4065 = vmax.xlane.f32.xlu0 %v4064
      %v4066 = vpop.xlane.xlu0 %4065
      %v4067 = vsel %vm1065, %v4039, -inf
      %4068 = vmax.xlane.f32.xlu0 %v4067
      %v4069 = vpop.xlane.xlu0 %4068
      %v4070 = vsel %vm1065, %v4040, -inf
      %4071 = vmax.xlane.f32.xlu0 %v4070
      %v4072 = vpop.xlane.xlu0 %4071
      %v4073 = vsel %vm1065, %v4041, -inf
      %4074 = vmax.xlane.f32.xlu0 %v4073
      %v4075 = vpop.xlane.xlu0 %4074
      %v4076 = vsel %vm1065, %v4042, -inf
      %4077 = vmax.xlane.f32.xlu0 %v4076
      %v4078 = vpop.xlane.xlu0 %4077
      %v4079 = vsel %vm1065, %v4043, -inf
      %4080 = vmax.xlane.f32.xlu0 %v4079
      %v4081 = vpop.xlane.xlu0 %4080
      %v4082 = vsel %vm1065, %v4044, -inf
      %4083 = vmax.xlane.f32.xlu0 %v4082
      %v4084 = vpop.xlane.xlu0 %4083
      %v4085 = vsel %vm1065, %v4045, -inf
      %4086 = vmax.xlane.f32.xlu0 %v4085
      %v4087 = vpop.xlane.xlu0 %4086
      %v4088 = vsel %vm1065, %v4046, -inf
      %4089 = vmax.xlane.f32.xlu0 %v4088
      %v4090 = vpop.xlane.xlu0 %4089
      %v4091 = vsel %vm1065, %v4047, -inf
      %4092 = vmax.xlane.f32.xlu0 %v4091
      %v4093 = vpop.xlane.xlu0 %4092
      %v4094 = vsel %vm1065, %v4048, -inf
      %4095 = vmax.xlane.f32.xlu0 %v4094
      %v4096 = vpop.xlane.xlu0 %4095
      %v4097 = vsub.f32 %v4033, %v4051
      %v4098 = vsub.f32 %v4034, %v4054
      %v4099 = vsub.f32 %v4035, %v4057
      %v4100 = vsub.f32 %v4036, %v4060
      %v4101 = vsub.f32 %v4037, %v4063
      %v4102 = vsub.f32 %v4038, %v4066
      %v4103 = vsub.f32 %v4039, %v4069
      %v4104 = vsub.f32 %v4040, %v4072
      %v4105 = vsub.f32 %v4041, %v4075
      %v4106 = vsub.f32 %v4042, %v4078
      %v4107 = vsub.f32 %v4043, %v4081
      %v4108 = vsub.f32 %v4044, %v4084
      %v4109 = vsub.f32 %v4045, %v4087
      %v4110 = vsub.f32 %v4046, %v4090
      %v4111 = vsub.f32 %v4047, %v4093
      %v4112 = vsub.f32 %v4048, %v4096
      %v4113 = vmul.f32 %v4097, 1.442695
      %v4114 = vpow.pop %v4113
      %v4115 = vmul.f32 %v4098, 1.442695
      %v4116 = vpow.pop %v4115
      %v4117 = vmul.f32 %v4099, 1.442695
      %v4118 = vpow.pop %v4117
      %v4119 = vmul.f32 %v4100, 1.442695
      %v4120 = vpow.pop %v4119
      %v4121 = vmul.f32 %v4101, 1.442695
      %v4122 = vpow.pop %v4121
      %v4123 = vmul.f32 %v4102, 1.442695
      %v4124 = vpow.pop %v4123
      %v4125 = vmul.f32 %v4103, 1.442695
      %v4126 = vpow.pop %v4125
      %v4127 = vmul.f32 %v4104, 1.442695
      %v4128 = vpow.pop %v4127
      %v4129 = vmul.f32 %v4105, 1.442695
      %v4130 = vpow.pop %v4129
      %v4131 = vmul.f32 %v4106, 1.442695
      %v4132 = vpow.pop %v4131
      %v4133 = vmul.f32 %v4107, 1.442695
      %v4134 = vpow.pop %v4133
      %v4135 = vmul.f32 %v4108, 1.442695
      %v4136 = vpow.pop %v4135
      %v4137 = vmul.f32 %v4109, 1.442695
      %v4138 = vpow.pop %v4137
      %v4139 = vmul.f32 %v4110, 1.442695
      %v4140 = vpow.pop %v4139
      %v4141 = vmul.f32 %v4111, 1.442695
      %v4142 = vpow.pop %v4141
      %v4143 = vmul.f32 %v4112, 1.442695
      %v4144 = vpow.pop %v4143
      %v4145 = vsel %vm1065, %v4114, 0.0
      %4146 = vadd.xlane.f32.xlu0 %v4145
      %v4147 = vpop.xlane.xlu0 %4146
      %v4148 = vsel %vm1065, %v4116, 0.0
      %4149 = vadd.xlane.f32.xlu0 %v4148
      %v4150 = vpop.xlane.xlu0 %4149
      %v4151 = vsel %vm1065, %v4118, 0.0
      %4152 = vadd.xlane.f32.xlu0 %v4151
      %v4153 = vpop.xlane.xlu0 %4152
      %v4154 = vsel %vm1065, %v4120, 0.0
      %4155 = vadd.xlane.f32.xlu0 %v4154
      %v4156 = vpop.xlane.xlu0 %4155
      %v4157 = vsel %vm1065, %v4122, 0.0
      %4158 = vadd.xlane.f32.xlu0 %v4157
      %v4159 = vpop.xlane.xlu0 %4158
      %v4160 = vsel %vm1065, %v4124, 0.0
      %4161 = vadd.xlane.f32.xlu0 %v4160
      %v4162 = vpop.xlane.xlu0 %4161
      %v4163 = vsel %vm1065, %v4126, 0.0
      %4164 = vadd.xlane.f32.xlu0 %v4163
      %v4165 = vpop.xlane.xlu0 %4164
      %v4166 = vsel %vm1065, %v4128, 0.0
      %4167 = vadd.xlane.f32.xlu0 %v4166
      %v4168 = vpop.xlane.xlu0 %4167
      %v4169 = vsel %vm1065, %v4130, 0.0
      %4170 = vadd.xlane.f32.xlu0 %v4169
      %v4171 = vpop.xlane.xlu0 %4170
      %v4172 = vsel %vm1065, %v4132, 0.0
      %4173 = vadd.xlane.f32.xlu0 %v4172
      %v4174 = vpop.xlane.xlu0 %4173
      %v4175 = vsel %vm1065, %v4134, 0.0
      %4176 = vadd.xlane.f32.xlu0 %v4175
      %v4177 = vpop.xlane.xlu0 %4176
      %v4178 = vsel %vm1065, %v4136, 0.0
      %4179 = vadd.xlane.f32.xlu0 %v4178
      %v4180 = vpop.xlane.xlu0 %4179
      %v4181 = vsel %vm1065, %v4138, 0.0
      %4182 = vadd.xlane.f32.xlu0 %v4181
      %v4183 = vpop.xlane.xlu0 %4182
      %v4184 = vsel %vm1065, %v4140, 0.0
      %4185 = vadd.xlane.f32.xlu0 %v4184
      %v4186 = vpop.xlane.xlu0 %4185
      %v4187 = vsel %vm1065, %v4142, 0.0
      %4188 = vadd.xlane.f32.xlu0 %v4187
      %v4189 = vpop.xlane.xlu0 %4188
      %v4190 = vsel %vm1065, %v4144, 0.0
      %4191 = vadd.xlane.f32.xlu0 %v4190
      %v4192 = vpop.xlane.xlu0 %4191
      %v4193 = vrcp.pop %v4147
      %v4194 = vrcp.pop %v4150
      %v4195 = vrcp.pop %v4153
      %v4196 = vrcp.pop %v4156
      %v4197 = vrcp.pop %v4159
      %v4198 = vrcp.pop %v4162
      %v4199 = vrcp.pop %v4165
      %v4200 = vrcp.pop %v4168
      %v4201 = vrcp.pop %v4171
      %v4202 = vrcp.pop %v4174
      %v4203 = vrcp.pop %v4177
      %v4204 = vrcp.pop %v4180
      %v4205 = vrcp.pop %v4183
      %v4206 = vrcp.pop %v4186
      %v4207 = vrcp.pop %v4189
      %v4208 = vrcp.pop %v4192
      %v4209 = vmul.f32 %v4114, %v4193
      %v4210 = vmul.f32 %v4116, %v4194
      %v4211 = vmul.f32 %v4118, %v4195
      %v4212 = vmul.f32 %v4120, %v4196
      %v4213 = vmul.f32 %v4122, %v4197
      %v4214 = vmul.f32 %v4124, %v4198
      %v4215 = vmul.f32 %v4126, %v4199
      %v4216 = vmul.f32 %v4128, %v4200
      %v4217 = vmul.f32 %v4130, %v4201
      %v4218 = vmul.f32 %v4132, %v4202
      %v4219 = vmul.f32 %v4134, %v4203
      %v4220 = vmul.f32 %v4136, %v4204
      %v4221 = vmul.f32 %v4138, %v4205
      %v4222 = vmul.f32 %v4140, %v4206
      %v4223 = vmul.f32 %v4142, %v4207
      %v4224 = vmul.f32 %v4144, %v4208
      %4225 = vrot.lane.b32.xlu0 %v1012, 80
      %v4226 = vpop.permute.xlu0 %4225
      %4227 = vrot.lane.b32.xlu0 %v1014, 80
      %v4228 = vpop.permute.xlu0 %4227
      %v4232 = vsel %vm1065, %v4209, 0
      %v4235 = vsel %vm1065, %v4210, 0
      %4237 = vmatpush.msra.mxu0 0.0
      %4238 = vmatpush.msra.mxu0 0.0
      %4239 = vmatpush.msra.mxu0 0.0
      %4240 = vmatpush.msra.mxu0 0.0
      %4241 = vmatpush.msra.mxu0 0.0
      %4242 = vmatpush.msra.mxu0 0.0
      %4243 = vmatpush.msra.mxu0 0.0
      %4244 = vmatpush.msra.mxu0 0.0
      %4245 = vmatpush.msra.mxu0 0.0
      %4246 = vmatpush.msra.mxu0 0.0
      %4247 = vmatpush.msra.mxu0 0.0
      %4248 = vmatpush.msra.mxu0 0.0
      %4249 = vmatpush.msra.mxu0 0.0
      %4250 = vmatpush.msra.mxu0 0.0
      %4251 = vmatpush.msra.mxu0 %v4228
      %4252 = vmatpush.msra.mxu0 %v4226
      %4253 = vmatmul.f32.gmra.mxu0 %v4232
      %v4254 = vpop.f32.mrf.mxu0
      %v4255 = vadd.f32 0.0, %v4254
      %4256 = vmatmul.f32.gmra.mxu0 %v4235
      %v4257 = vpop.f32.mrf.mxu0
      %v4258 = vadd.f32 0.0, %v4257
      %4259 = vdwg.mxu0
      %4260 = vrot.lane.b32.xlu0 %v1017, 80
      %v4261 = vpop.permute.xlu0 %4260
      %4262 = vrot.lane.b32.xlu0 %v1019, 80
      %v4263 = vpop.permute.xlu0 %4262
      %v4267 = vsel %vm1065, %v4211, 0
      %v4270 = vsel %vm1065, %v4212, 0
      %4272 = vmatpush.msra.mxu0 0.0
      %4273 = vmatpush.msra.mxu0 0.0
      %4274 = vmatpush.msra.mxu0 0.0
      %4275 = vmatpush.msra.mxu0 0.0
      %4276 = vmatpush.msra.mxu0 0.0
      %4277 = vmatpush.msra.mxu0 0.0
      %4278 = vmatpush.msra.mxu0 0.0
      %4279 = vmatpush.msra.mxu0 0.0
      %4280 = vmatpush.msra.mxu0 0.0
      %4281 = vmatpush.msra.mxu0 0.0
      %4282 = vmatpush.msra.mxu0 0.0
      %4283 = vmatpush.msra.mxu0 0.0
      %4284 = vmatpush.msra.mxu0 0.0
      %4285 = vmatpush.msra.mxu0 0.0
      %4286 = vmatpush.msra.mxu0 %v4263
      %4287 = vmatpush.msra.mxu0 %v4261
      %4288 = vmatmul.f32.gmra.mxu0 %v4267
      %v4289 = vpop.f32.mrf.mxu0
      %v4290 = vadd.f32 0.0, %v4289
      %4291 = vmatmul.f32.gmra.mxu0 %v4270
      %v4292 = vpop.f32.mrf.mxu0
      %v4293 = vadd.f32 0.0, %v4292
      %4294 = vdwg.mxu0
      %4295 = vrot.lane.b32.xlu0 %v1022, 80
      %v4296 = vpop.permute.xlu0 %4295
      %4297 = vrot.lane.b32.xlu0 %v1024, 80
      %v4298 = vpop.permute.xlu0 %4297
      %v4302 = vsel %vm1065, %v4213, 0
      %v4305 = vsel %vm1065, %v4214, 0
      %4307 = vmatpush.msra.mxu0 0.0
      %4308 = vmatpush.msra.mxu0 0.0
      %4309 = vmatpush.msra.mxu0 0.0
      %4310 = vmatpush.msra.mxu0 0.0
      %4311 = vmatpush.msra.mxu0 0.0
      %4312 = vmatpush.msra.mxu0 0.0
      %4313 = vmatpush.msra.mxu0 0.0
      %4314 = vmatpush.msra.mxu0 0.0
      %4315 = vmatpush.msra.mxu0 0.0
      %4316 = vmatpush.msra.mxu0 0.0
      %4317 = vmatpush.msra.mxu0 0.0
      %4318 = vmatpush.msra.mxu0 0.0
      %4319 = vmatpush.msra.mxu0 0.0
      %4320 = vmatpush.msra.mxu0 0.0
      %4321 = vmatpush.msra.mxu0 %v4298
      %4322 = vmatpush.msra.mxu0 %v4296
      %4323 = vmatmul.f32.gmra.mxu0 %v4302
      %v4324 = vpop.f32.mrf.mxu0
      %v4325 = vadd.f32 0.0, %v4324
      %4326 = vmatmul.f32.gmra.mxu0 %v4305
      %v4327 = vpop.f32.mrf.mxu0
      %v4328 = vadd.f32 0.0, %v4327
      %4329 = vdwg.mxu0
      %4330 = vrot.lane.b32.xlu0 %v1027, 80
      %v4331 = vpop.permute.xlu0 %4330
      %4332 = vrot.lane.b32.xlu0 %v1029, 80
      %v4333 = vpop.permute.xlu0 %4332
      %v4337 = vsel %vm1065, %v4215, 0
      %v4340 = vsel %vm1065, %v4216, 0
      %4342 = vmatpush.msra.mxu0 0.0
      %4343 = vmatpush.msra.mxu0 0.0
      %4344 = vmatpush.msra.mxu0 0.0
      %4345 = vmatpush.msra.mxu0 0.0
      %4346 = vmatpush.msra.mxu0 0.0
      %4347 = vmatpush.msra.mxu0 0.0
      %4348 = vmatpush.msra.mxu0 0.0
      %4349 = vmatpush.msra.mxu0 0.0
      %4350 = vmatpush.msra.mxu0 0.0
      %4351 = vmatpush.msra.mxu0 0.0
      %4352 = vmatpush.msra.mxu0 0.0
      %4353 = vmatpush.msra.mxu0 0.0
      %4354 = vmatpush.msra.mxu0 0.0
      %4355 = vmatpush.msra.mxu0 0.0
      %4356 = vmatpush.msra.mxu0 %v4333
      %4357 = vmatpush.msra.mxu0 %v4331
      %4358 = vmatmul.f32.gmra.mxu0 %v4337
      %v4359 = vpop.f32.mrf.mxu0
      %v4360 = vadd.f32 0.0, %v4359
      %4361 = vmatmul.f32.gmra.mxu0 %v4340
      %v4362 = vpop.f32.mrf.mxu0
      %v4363 = vadd.f32 0.0, %v4362
      %4364 = vdwg.mxu0
      %4365 = vrot.lane.b32.xlu0 %v1032, 80
      %v4366 = vpop.permute.xlu0 %4365
      %4367 = vrot.lane.b32.xlu0 %v1034, 80
      %v4368 = vpop.permute.xlu0 %4367
      %v4372 = vsel %vm1065, %v4217, 0
      %v4375 = vsel %vm1065, %v4218, 0
      %4377 = vmatpush.msra.mxu0 0.0
      %4378 = vmatpush.msra.mxu0 0.0
      %4379 = vmatpush.msra.mxu0 0.0
      %4380 = vmatpush.msra.mxu0 0.0
      %4381 = vmatpush.msra.mxu0 0.0
      %4382 = vmatpush.msra.mxu0 0.0
      %4383 = vmatpush.msra.mxu0 0.0
      %4384 = vmatpush.msra.mxu0 0.0
      %4385 = vmatpush.msra.mxu0 0.0
      %4386 = vmatpush.msra.mxu0 0.0
      %4387 = vmatpush.msra.mxu0 0.0
      %4388 = vmatpush.msra.mxu0 0.0
      %4389 = vmatpush.msra.mxu0 0.0
      %4390 = vmatpush.msra.mxu0 0.0
      %4391 = vmatpush.msra.mxu0 %v4368
      %4392 = vmatpush.msra.mxu0 %v4366
      %4393 = vmatmul.f32.gmra.mxu0 %v4372
      %v4394 = vpop.f32.mrf.mxu0
      %v4395 = vadd.f32 0.0, %v4394
      %4396 = vmatmul.f32.gmra.mxu0 %v4375
      %v4397 = vpop.f32.mrf.mxu0
      %v4398 = vadd.f32 0.0, %v4397
      %4399 = vdwg.mxu0
      %4400 = vrot.lane.b32.xlu0 %v1037, 80
      %v4401 = vpop.permute.xlu0 %4400
      %4402 = vrot.lane.b32.xlu0 %v1039, 80
      %v4403 = vpop.permute.xlu0 %4402
      %v4407 = vsel %vm1065, %v4219, 0
      %v4410 = vsel %vm1065, %v4220, 0
      %4412 = vmatpush.msra.mxu0 0.0
      %4413 = vmatpush.msra.mxu0 0.0
      %4414 = vmatpush.msra.mxu0 0.0
      %4415 = vmatpush.msra.mxu0 0.0
      %4416 = vmatpush.msra.mxu0 0.0
      %4417 = vmatpush.msra.mxu0 0.0
      %4418 = vmatpush.msra.mxu0 0.0
      %4419 = vmatpush.msra.mxu0 0.0
      %4420 = vmatpush.msra.mxu0 0.0
      %4421 = vmatpush.msra.mxu0 0.0
      %4422 = vmatpush.msra.mxu0 0.0
      %4423 = vmatpush.msra.mxu0 0.0
      %4424 = vmatpush.msra.mxu0 0.0
      %4425 = vmatpush.msra.mxu0 0.0
      %4426 = vmatpush.msra.mxu0 %v4403
      %4427 = vmatpush.msra.mxu0 %v4401
      %4428 = vmatmul.f32.gmra.mxu0 %v4407
      %v4429 = vpop.f32.mrf.mxu0
      %v4430 = vadd.f32 0.0, %v4429
      %4431 = vmatmul.f32.gmra.mxu0 %v4410
      %v4432 = vpop.f32.mrf.mxu0
      %v4433 = vadd.f32 0.0, %v4432
      %4434 = vdwg.mxu0
      %4435 = vrot.lane.b32.xlu0 %v1042, 80
      %v4436 = vpop.permute.xlu0 %4435
      %4437 = vrot.lane.b32.xlu0 %v1044, 80
      %v4438 = vpop.permute.xlu0 %4437
      %v4442 = vsel %vm1065, %v4221, 0
      %v4445 = vsel %vm1065, %v4222, 0
      %4447 = vmatpush.msra.mxu0 0.0
      %4448 = vmatpush.msra.mxu0 0.0
      %4449 = vmatpush.msra.mxu0 0.0
      %4450 = vmatpush.msra.mxu0 0.0
      %4451 = vmatpush.msra.mxu0 0.0
      %4452 = vmatpush.msra.mxu0 0.0
      %4453 = vmatpush.msra.mxu0 0.0
      %4454 = vmatpush.msra.mxu0 0.0
      %4455 = vmatpush.msra.mxu0 0.0
      %4456 = vmatpush.msra.mxu0 0.0
      %4457 = vmatpush.msra.mxu0 0.0
      %4458 = vmatpush.msra.mxu0 0.0
      %4459 = vmatpush.msra.mxu0 0.0
      %4460 = vmatpush.msra.mxu0 0.0
      %4461 = vmatpush.msra.mxu0 %v4438
      %4462 = vmatpush.msra.mxu0 %v4436
      %4463 = vmatmul.f32.gmra.mxu0 %v4442
      %v4464 = vpop.f32.mrf.mxu0
      %v4465 = vadd.f32 0.0, %v4464
      %4466 = vmatmul.f32.gmra.mxu0 %v4445
      %v4467 = vpop.f32.mrf.mxu0
      %v4468 = vadd.f32 0.0, %v4467
      %4469 = vdwg.mxu0
      %4470 = vrot.lane.b32.xlu0 %v1047, 80
      %v4471 = vpop.permute.xlu0 %4470
      %4472 = vrot.lane.b32.xlu0 %v1049, 80
      %v4473 = vpop.permute.xlu0 %4472
      %v4477 = vsel %vm1065, %v4223, 0
      %v4480 = vsel %vm1065, %v4224, 0
      %4482 = vmatpush.msra.mxu0 0.0
      %4483 = vmatpush.msra.mxu0 0.0
      %4484 = vmatpush.msra.mxu0 0.0
      %4485 = vmatpush.msra.mxu0 0.0
      %4486 = vmatpush.msra.mxu0 0.0
      %4487 = vmatpush.msra.mxu0 0.0
      %4488 = vmatpush.msra.mxu0 0.0
      %4489 = vmatpush.msra.mxu0 0.0
      %4490 = vmatpush.msra.mxu0 0.0
      %4491 = vmatpush.msra.mxu0 0.0
      %4492 = vmatpush.msra.mxu0 0.0
      %4493 = vmatpush.msra.mxu0 0.0
      %4494 = vmatpush.msra.mxu0 0.0
      %4495 = vmatpush.msra.mxu0 0.0
      %4496 = vmatpush.msra.mxu0 %v4473
      %4497 = vmatpush.msra.mxu0 %v4471
      %4498 = vmatmul.f32.gmra.mxu0 %v4477
      %v4499 = vpop.f32.mrf.mxu0
      %v4500 = vadd.f32 0.0, %v4499
      %4501 = vmatmul.f32.gmra.mxu0 %v4480
      %v4502 = vpop.f32.mrf.mxu0
      %v4503 = vadd.f32 0.0, %v4502
      %4504 = vdwg.mxu0
      %v4505 = vpack.c.bf16 %v4258, %v4255
      %v4506 = vpack.c.bf16 %v4293, %v4290
      %v4507 = vpack.c.bf16 %v4328, %v4325
      %v4508 = vpack.c.bf16 %v4363, %v4360
      %v4509 = vpack.c.bf16 %v4398, %v4395
      %v4510 = vpack.c.bf16 %v4433, %v4430
      %v4511 = vpack.c.bf16 %v4468, %v4465
      %v4512 = vpack.c.bf16 %v4503, %v4500
      %v4515 = vunpack.c.l.b16 %v1057
      %v4516 = vunpack.c.l.b16 %v1058
      %v4517 = vpack.c.b16 %v4516, %v4515
      %v4520 = vsel %vm1065, %v4505, 0
      %v4523 = vsel %vm1065, %v4506, 0
      %v4526 = vsel %vm1065, %v4507, 0
      %v4529 = vsel %vm1065, %v4508, 0
      %v4532 = vsel %vm1065, %v4509, 0
      %v4535 = vsel %vm1065, %v4510, 0
      %v4538 = vsel %vm1065, %v4511, 0
      %v4541 = vsel %vm1065, %v4512, 0
      %4543 = vmatpush.bf16.msra.mxu0 0
      %4544 = vmatpush.bf16.msra.mxu0 0
      %4545 = vmatpush.bf16.msra.mxu0 0
      %4546 = vmatpush.bf16.msra.mxu0 0
      %4547 = vmatpush.bf16.msra.mxu0 0
      %4548 = vmatpush.bf16.msra.mxu0 0
      %4549 = vmatpush.bf16.msra.mxu0 0
      %4550 = vmatpush.bf16.msra.mxu0 %v4517
      %4551 = vmatmul.bf16.gmra.mxu0 %v4520
      %v4552 = vpop.f32.mrf.mxu0
      %v4553 = vadd.f32 0.0, %v4552
      %v4554 = vpop.f32.mrf.mxu0
      %v4555 = vadd.f32 0.0, %v4554
      %4556 = vmatmul.bf16.gmra.mxu0 %v4523
      %v4557 = vpop.f32.mrf.mxu0
      %v4558 = vadd.f32 0.0, %v4557
      %v4559 = vpop.f32.mrf.mxu0
      %v4560 = vadd.f32 0.0, %v4559
      %4561 = vmatmul.bf16.gmra.mxu0 %v4526
      %v4562 = vpop.f32.mrf.mxu0
      %v4563 = vadd.f32 0.0, %v4562
      %v4564 = vpop.f32.mrf.mxu0
      %v4565 = vadd.f32 0.0, %v4564
      %4566 = vmatmul.bf16.gmra.mxu0 %v4529
      %v4567 = vpop.f32.mrf.mxu0
      %v4568 = vadd.f32 0.0, %v4567
      %v4569 = vpop.f32.mrf.mxu0
      %v4570 = vadd.f32 0.0, %v4569
      %4571 = vmatmul.bf16.gmra.mxu0 %v4532
      %v4572 = vpop.f32.mrf.mxu0
      %v4573 = vadd.f32 0.0, %v4572
      %v4574 = vpop.f32.mrf.mxu0
      %v4575 = vadd.f32 0.0, %v4574
      %4576 = vmatmul.bf16.gmra.mxu0 %v4535
      %v4577 = vpop.f32.mrf.mxu0
      %v4578 = vadd.f32 0.0, %v4577
      %v4579 = vpop.f32.mrf.mxu0
      %v4580 = vadd.f32 0.0, %v4579
      %4581 = vmatmul.bf16.gmra.mxu0 %v4538
      %v4582 = vpop.f32.mrf.mxu0
      %v4583 = vadd.f32 0.0, %v4582
      %v4584 = vpop.f32.mrf.mxu0
      %v4585 = vadd.f32 0.0, %v4584
      %4586 = vmatmul.bf16.gmra.mxu0 %v4541
      %v4587 = vpop.f32.mrf.mxu0
      %v4588 = vadd.f32 0.0, %v4587
      %v4589 = vpop.f32.mrf.mxu0
      %v4590 = vadd.f32 0.0, %v4589
      %4591 = vdwg.mxu0
      %v4592 = vadd.f32 %v3689, %v4553
      %v4593 = vadd.f32 %v3690, %v4555
      %v4594 = vadd.f32 %v3691, %v4558
      %v4595 = vadd.f32 %v3692, %v4560
      %v4596 = vadd.f32 %v3693, %v4563
      %v4597 = vadd.f32 %v3694, %v4565
      %v4598 = vadd.f32 %v3695, %v4568
      %v4599 = vadd.f32 %v3696, %v4570
      %v4600 = vadd.f32 %v3697, %v4573
      %v4601 = vadd.f32 %v3698, %v4575
      %v4602 = vadd.f32 %v3699, %v4578
      %v4603 = vadd.f32 %v3700, %v4580
      %v4604 = vadd.f32 %v3701, %v4583
      %v4605 = vadd.f32 %v3702, %v4585
      %v4606 = vadd.f32 %v3703, %v4588
      %v4607 = vadd.f32 %v3704, %v4590
      %v4608 = vadd.f32 %v841, %v4592
      %v4609 = vadd.f32 %v842, %v4593
      %v4610 = vadd.f32 %v843, %v4594
      %v4611 = vadd.f32 %v844, %v4595
      %v4612 = vadd.f32 %v845, %v4596
      %v4613 = vadd.f32 %v846, %v4597
      %v4614 = vadd.f32 %v847, %v4598
      %v4615 = vadd.f32 %v848, %v4599
      %v4616 = vadd.f32 %v849, %v4600
      %v4617 = vadd.f32 %v850, %v4601
      %v4618 = vadd.f32 %v851, %v4602
      %v4619 = vadd.f32 %v852, %v4603
      %v4620 = vadd.f32 %v853, %v4604
      %v4621 = vadd.f32 %v854, %v4605
      %v4622 = vadd.f32 %v855, %v4606
      %v4623 = vadd.f32 %v856, %v4607
      %v4624 = vld [vmem:[%s9] sm:$0x1]
      %v4626 = vperm.slane %v4624, 0
      %v4628 = vadd.f32 %v4608, %v4626
      %v4629 = vadd.f32 %v4609, %v4626
      %v4630 = vadd.f32 %v4610, %v4626
      %v4631 = vadd.f32 %v4611, %v4626
      %v4632 = vadd.f32 %v4612, %v4626
      %v4633 = vadd.f32 %v4613, %v4626
      %v4634 = vadd.f32 %v4614, %v4626
      %v4635 = vadd.f32 %v4615, %v4626
      %v4636 = vadd.f32 %v4616, %v4626
      %v4637 = vadd.f32 %v4617, %v4626
      %v4638 = vadd.f32 %v4618, %v4626
      %v4639 = vadd.f32 %v4619, %v4626
      %v4640 = vadd.f32 %v4620, %v4626
      %v4641 = vadd.f32 %v4621, %v4626
      %v4642 = vadd.f32 %v4622, %v4626
      %v4643 = vadd.f32 %v4623, %v4626
      %v4644 = vld [vmem:[%s14] sm:$0x1]
      %v4645 = vld [vmem:[%s15] sm:$0x1]
      %v4646 = vsel %vm928, %v4628, 0.0
      %4647 = vadd.xlane.f32.xlu0 %v4646
      %v4648 = vpop.xlane.xlu0 %4647
      %v4649 = vsel %vm928, %v4629, 0.0
      %4650 = vadd.xlane.f32.xlu0 %v4649
      %v4651 = vpop.xlane.xlu0 %4650
      %v4652 = vsel %vm928, %v4630, 0.0
      %4653 = vadd.xlane.f32.xlu0 %v4652
      %v4654 = vpop.xlane.xlu0 %4653
      %v4655 = vsel %vm928, %v4631, 0.0
      %4656 = vadd.xlane.f32.xlu0 %v4655
      %v4657 = vpop.xlane.xlu0 %4656
      %v4658 = vsel %vm928, %v4632, 0.0
      %4659 = vadd.xlane.f32.xlu0 %v4658
      %v4660 = vpop.xlane.xlu0 %4659
      %v4661 = vsel %vm928, %v4633, 0.0
      %4662 = vadd.xlane.f32.xlu0 %v4661
      %v4663 = vpop.xlane.xlu0 %4662
      %v4664 = vsel %vm928, %v4634, 0.0
      %4665 = vadd.xlane.f32.xlu0 %v4664
      %v4666 = vpop.xlane.xlu0 %4665
      %v4667 = vsel %vm928, %v4635, 0.0
      %4668 = vadd.xlane.f32.xlu0 %v4667
      %v4669 = vpop.xlane.xlu0 %4668
      %v4670 = vsel %vm928, %v4636, 0.0
      %4671 = vadd.xlane.f32.xlu0 %v4670
      %v4672 = vpop.xlane.xlu0 %4671
      %v4673 = vsel %vm928, %v4637, 0.0
      %4674 = vadd.xlane.f32.xlu0 %v4673
      %v4675 = vpop.xlane.xlu0 %4674
      %v4676 = vsel %vm928, %v4638, 0.0
      %4677 = vadd.xlane.f32.xlu0 %v4676
      %v4678 = vpop.xlane.xlu0 %4677
      %v4679 = vsel %vm928, %v4639, 0.0
      %4680 = vadd.xlane.f32.xlu0 %v4679
      %v4681 = vpop.xlane.xlu0 %4680
      %v4682 = vsel %vm928, %v4640, 0.0
      %4683 = vadd.xlane.f32.xlu0 %v4682
      %v4684 = vpop.xlane.xlu0 %4683
      %v4685 = vsel %vm928, %v4641, 0.0
      %4686 = vadd.xlane.f32.xlu0 %v4685
      %v4687 = vpop.xlane.xlu0 %4686
      %v4688 = vsel %vm928, %v4642, 0.0
      %4689 = vadd.xlane.f32.xlu0 %v4688
      %v4690 = vpop.xlane.xlu0 %4689
      %v4691 = vsel %vm928, %v4643, 0.0
      %4692 = vadd.xlane.f32.xlu0 %v4691
      %v4693 = vpop.xlane.xlu0 %4692
      %v4694 = vrcp.pop 64.0
      %v4695 = vmul.f32 64.0, %v4694
      %v4696 = vsub.f32 1.0, %v4695
      %v4697 = vmul.f32 %v4694, %v4696
      %v4698 = vadd.f32 %v4694, %v4697
      %vm4699 = vweird.f32 %v4694
      %v4700 = vsel %vm4699, %v4694, %v4698
      %v4701 = vmul.f32 %v4648, %v4700
      %v4702 = vmul.f32 %v4651, %v4700
      %v4703 = vmul.f32 %v4654, %v4700
      %v4704 = vmul.f32 %v4657, %v4700
      %v4705 = vmul.f32 %v4660, %v4700
      %v4706 = vmul.f32 %v4663, %v4700
      %v4707 = vmul.f32 %v4666, %v4700
      %v4708 = vmul.f32 %v4669, %v4700
      %v4709 = vmul.f32 %v4672, %v4700
      %v4710 = vmul.f32 %v4675, %v4700
      %v4711 = vmul.f32 %v4678, %v4700
      %v4712 = vmul.f32 %v4681, %v4700
      %v4713 = vmul.f32 %v4684, %v4700
      %v4714 = vmul.f32 %v4687, %v4700
      %v4715 = vmul.f32 %v4690, %v4700
      %v4716 = vmul.f32 %v4693, %v4700
      %v4717 = vsub.f32 %v4628, %v4701
      %v4718 = vsub.f32 %v4629, %v4702
      %v4719 = vsub.f32 %v4630, %v4703
      %v4720 = vsub.f32 %v4631, %v4704
      %v4721 = vsub.f32 %v4632, %v4705
      %v4722 = vsub.f32 %v4633, %v4706
      %v4723 = vsub.f32 %v4634, %v4707
      %v4724 = vsub.f32 %v4635, %v4708
      %v4725 = vsub.f32 %v4636, %v4709
      %v4726 = vsub.f32 %v4637, %v4710
      %v4727 = vsub.f32 %v4638, %v4711
      %v4728 = vsub.f32 %v4639, %v4712
      %v4729 = vsub.f32 %v4640, %v4713
      %v4730 = vsub.f32 %v4641, %v4714
      %v4731 = vsub.f32 %v4642, %v4715
      %v4732 = vsub.f32 %v4643, %v4716
      %v4733 = vmul.f32 %v4717, %v4717
      %v4734 = vmul.f32 %v4718, %v4718
      %v4735 = vmul.f32 %v4719, %v4719
      %v4736 = vmul.f32 %v4720, %v4720
      %v4737 = vmul.f32 %v4721, %v4721
      %v4738 = vmul.f32 %v4722, %v4722
      %v4739 = vmul.f32 %v4723, %v4723
      %v4740 = vmul.f32 %v4724, %v4724
      %v4741 = vmul.f32 %v4725, %v4725
      %v4742 = vmul.f32 %v4726, %v4726
      %v4743 = vmul.f32 %v4727, %v4727
      %v4744 = vmul.f32 %v4728, %v4728
      %v4745 = vmul.f32 %v4729, %v4729
      %v4746 = vmul.f32 %v4730, %v4730
      %v4747 = vmul.f32 %v4731, %v4731
      %v4748 = vmul.f32 %v4732, %v4732
      %v4749 = vsel %vm928, %v4733, 0.0
      %4750 = vadd.xlane.f32.xlu0 %v4749
      %v4751 = vpop.xlane.xlu0 %4750
      %v4752 = vsel %vm928, %v4734, 0.0
      %4753 = vadd.xlane.f32.xlu0 %v4752
      %v4754 = vpop.xlane.xlu0 %4753
      %v4755 = vsel %vm928, %v4735, 0.0
      %4756 = vadd.xlane.f32.xlu0 %v4755
      %v4757 = vpop.xlane.xlu0 %4756
      %v4758 = vsel %vm928, %v4736, 0.0
      %4759 = vadd.xlane.f32.xlu0 %v4758
      %v4760 = vpop.xlane.xlu0 %4759
      %v4761 = vsel %vm928, %v4737, 0.0
      %4762 = vadd.xlane.f32.xlu0 %v4761
      %v4763 = vpop.xlane.xlu0 %4762
      %v4764 = vsel %vm928, %v4738, 0.0
      %4765 = vadd.xlane.f32.xlu0 %v4764
      %v4766 = vpop.xlane.xlu0 %4765
      %v4767 = vsel %vm928, %v4739, 0.0
      %4768 = vadd.xlane.f32.xlu0 %v4767
      %v4769 = vpop.xlane.xlu0 %4768
      %v4770 = vsel %vm928, %v4740, 0.0
      %4771 = vadd.xlane.f32.xlu0 %v4770
      %v4772 = vpop.xlane.xlu0 %4771
      %v4773 = vsel %vm928, %v4741, 0.0
      %4774 = vadd.xlane.f32.xlu0 %v4773
      %v4775 = vpop.xlane.xlu0 %4774
      %v4776 = vsel %vm928, %v4742, 0.0
      %4777 = vadd.xlane.f32.xlu0 %v4776
      %v4778 = vpop.xlane.xlu0 %4777
      %v4779 = vsel %vm928, %v4743, 0.0
      %4780 = vadd.xlane.f32.xlu0 %v4779
      %v4781 = vpop.xlane.xlu0 %4780
      %v4782 = vsel %vm928, %v4744, 0.0
      %4783 = vadd.xlane.f32.xlu0 %v4782
      %v4784 = vpop.xlane.xlu0 %4783
      %v4785 = vsel %vm928, %v4745, 0.0
      %4786 = vadd.xlane.f32.xlu0 %v4785
      %v4787 = vpop.xlane.xlu0 %4786
      %v4788 = vsel %vm928, %v4746, 0.0
      %4789 = vadd.xlane.f32.xlu0 %v4788
      %v4790 = vpop.xlane.xlu0 %4789
      %v4791 = vsel %vm928, %v4747, 0.0
      %4792 = vadd.xlane.f32.xlu0 %v4791
      %v4793 = vpop.xlane.xlu0 %4792
      %v4794 = vsel %vm928, %v4748, 0.0
      %4795 = vadd.xlane.f32.xlu0 %v4794
      %v4796 = vpop.xlane.xlu0 %4795
      %v4797 = vmul.f32 %v4751, %v4700
      %v4798 = vmul.f32 %v4754, %v4700
      %v4799 = vmul.f32 %v4757, %v4700
      %v4800 = vmul.f32 %v4760, %v4700
      %v4801 = vmul.f32 %v4763, %v4700
      %v4802 = vmul.f32 %v4766, %v4700
      %v4803 = vmul.f32 %v4769, %v4700
      %v4804 = vmul.f32 %v4772, %v4700
      %v4805 = vmul.f32 %v4775, %v4700
      %v4806 = vmul.f32 %v4778, %v4700
      %v4807 = vmul.f32 %v4781, %v4700
      %v4808 = vmul.f32 %v4784, %v4700
      %v4809 = vmul.f32 %v4787, %v4700
      %v4810 = vmul.f32 %v4790, %v4700
      %v4811 = vmul.f32 %v4793, %v4700
      %v4812 = vmul.f32 %v4796, %v4700
      %v4813 = vadd.f32 %v4797, 1e-05
      %v4814 = vadd.f32 %v4798, 1e-05
      %v4815 = vadd.f32 %v4799, 1e-05
      %v4816 = vadd.f32 %v4800, 1e-05
      %v4817 = vadd.f32 %v4801, 1e-05
      %v4818 = vadd.f32 %v4802, 1e-05
      %v4819 = vadd.f32 %v4803, 1e-05
      %v4820 = vadd.f32 %v4804, 1e-05
      %v4821 = vadd.f32 %v4805, 1e-05
      %v4822 = vadd.f32 %v4806, 1e-05
      %v4823 = vadd.f32 %v4807, 1e-05
      %v4824 = vadd.f32 %v4808, 1e-05
      %v4825 = vadd.f32 %v4809, 1e-05
      %v4826 = vadd.f32 %v4810, 1e-05
      %v4827 = vadd.f32 %v4811, 1e-05
      %v4828 = vadd.f32 %v4812, 1e-05
      %v4829 = vrsqrt.pop %v4813
      %v4830 = vmul.f32 %v4829, %v4813
      %v4831 = vmul.f32 %v4830, %v4829
      %v4832 = vmul.f32 0.5, %v4831
      %v4833 = vsub.f32 1.5, %v4832
      %v4834 = vmul.f32 %v4829, %v4833
      %vm4835 = vweird.f32 %v4813
      %vm4836 = vweird.f32 %v4829
      %vm4837 = vmor %vm4835, %vm4836
      %v4838 = vsel %vm4837, %v4829, %v4834
      %v4839 = vrsqrt.pop %v4814
      %v4840 = vmul.f32 %v4839, %v4814
      %v4841 = vmul.f32 %v4840, %v4839
      %v4842 = vmul.f32 0.5, %v4841
      %v4843 = vsub.f32 1.5, %v4842
      %v4844 = vmul.f32 %v4839, %v4843
      %vm4845 = vweird.f32 %v4814
      %vm4846 = vweird.f32 %v4839
      %vm4847 = vmor %vm4845, %vm4846
      %v4848 = vsel %vm4847, %v4839, %v4844
      %v4849 = vrsqrt.pop %v4815
      %v4850 = vmul.f32 %v4849, %v4815
      %v4851 = vmul.f32 %v4850, %v4849
      %v4852 = vmul.f32 0.5, %v4851
      %v4853 = vsub.f32 1.5, %v4852
      %v4854 = vmul.f32 %v4849, %v4853
      %vm4855 = vweird.f32 %v4815
      %vm4856 = vweird.f32 %v4849
      %vm4857 = vmor %vm4855, %vm4856
      %v4858 = vsel %vm4857, %v4849, %v4854
      %v4859 = vrsqrt.pop %v4816
      %v4860 = vmul.f32 %v4859, %v4816
      %v4861 = vmul.f32 %v4860, %v4859
      %v4862 = vmul.f32 0.5, %v4861
      %v4863 = vsub.f32 1.5, %v4862
      %v4864 = vmul.f32 %v4859, %v4863
      %vm4865 = vweird.f32 %v4816
      %vm4866 = vweird.f32 %v4859
      %vm4867 = vmor %vm4865, %vm4866
      %v4868 = vsel %vm4867, %v4859, %v4864
      %v4869 = vrsqrt.pop %v4817
      %v4870 = vmul.f32 %v4869, %v4817
      %v4871 = vmul.f32 %v4870, %v4869
      %v4872 = vmul.f32 0.5, %v4871
      %v4873 = vsub.f32 1.5, %v4872
      %v4874 = vmul.f32 %v4869, %v4873
      %vm4875 = vweird.f32 %v4817
      %vm4876 = vweird.f32 %v4869
      %vm4877 = vmor %vm4875, %vm4876
      %v4878 = vsel %vm4877, %v4869, %v4874
      %v4879 = vrsqrt.pop %v4818
      %v4880 = vmul.f32 %v4879, %v4818
      %v4881 = vmul.f32 %v4880, %v4879
      %v4882 = vmul.f32 0.5, %v4881
      %v4883 = vsub.f32 1.5, %v4882
      %v4884 = vmul.f32 %v4879, %v4883
      %vm4885 = vweird.f32 %v4818
      %vm4886 = vweird.f32 %v4879
      %vm4887 = vmor %vm4885, %vm4886
      %v4888 = vsel %vm4887, %v4879, %v4884
      %v4889 = vrsqrt.pop %v4819
      %v4890 = vmul.f32 %v4889, %v4819
      %v4891 = vmul.f32 %v4890, %v4889
      %v4892 = vmul.f32 0.5, %v4891
      %v4893 = vsub.f32 1.5, %v4892
      %v4894 = vmul.f32 %v4889, %v4893
      %vm4895 = vweird.f32 %v4819
      %vm4896 = vweird.f32 %v4889
      %vm4897 = vmor %vm4895, %vm4896
      %v4898 = vsel %vm4897, %v4889, %v4894
      %v4899 = vrsqrt.pop %v4820
      %v4900 = vmul.f32 %v4899, %v4820
      %v4901 = vmul.f32 %v4900, %v4899
      %v4902 = vmul.f32 0.5, %v4901
      %v4903 = vsub.f32 1.5, %v4902
      %v4904 = vmul.f32 %v4899, %v4903
      %vm4905 = vweird.f32 %v4820
      %vm4906 = vweird.f32 %v4899
      %vm4907 = vmor %vm4905, %vm4906
      %v4908 = vsel %vm4907, %v4899, %v4904
      %v4909 = vrsqrt.pop %v4821
      %v4910 = vmul.f32 %v4909, %v4821
      %v4911 = vmul.f32 %v4910, %v4909
      %v4912 = vmul.f32 0.5, %v4911
      %v4913 = vsub.f32 1.5, %v4912
      %v4914 = vmul.f32 %v4909, %v4913
      %vm4915 = vweird.f32 %v4821
      %vm4916 = vweird.f32 %v4909
      %vm4917 = vmor %vm4915, %vm4916
      %v4918 = vsel %vm4917, %v4909, %v4914
      %v4919 = vrsqrt.pop %v4822
      %v4920 = vmul.f32 %v4919, %v4822
      %v4921 = vmul.f32 %v4920, %v4919
      %v4922 = vmul.f32 0.5, %v4921
      %v4923 = vsub.f32 1.5, %v4922
      %v4924 = vmul.f32 %v4919, %v4923
      %vm4925 = vweird.f32 %v4822
      %vm4926 = vweird.f32 %v4919
      %vm4927 = vmor %vm4925, %vm4926
      %v4928 = vsel %vm4927, %v4919, %v4924
      %v4929 = vrsqrt.pop %v4823
      %v4930 = vmul.f32 %v4929, %v4823
      %v4931 = vmul.f32 %v4930, %v4929
      %v4932 = vmul.f32 0.5, %v4931
      %v4933 = vsub.f32 1.5, %v4932
      %v4934 = vmul.f32 %v4929, %v4933
      %vm4935 = vweird.f32 %v4823
      %vm4936 = vweird.f32 %v4929
      %vm4937 = vmor %vm4935, %vm4936
      %v4938 = vsel %vm4937, %v4929, %v4934
      %v4939 = vrsqrt.pop %v4824
      %v4940 = vmul.f32 %v4939, %v4824
      %v4941 = vmul.f32 %v4940, %v4939
      %v4942 = vmul.f32 0.5, %v4941
      %v4943 = vsub.f32 1.5, %v4942
      %v4944 = vmul.f32 %v4939, %v4943
      %vm4945 = vweird.f32 %v4824
      %vm4946 = vweird.f32 %v4939
      %vm4947 = vmor %vm4945, %vm4946
      %v4948 = vsel %vm4947, %v4939, %v4944
      %v4949 = vrsqrt.pop %v4825
      %v4950 = vmul.f32 %v4949, %v4825
      %v4951 = vmul.f32 %v4950, %v4949
      %v4952 = vmul.f32 0.5, %v4951
      %v4953 = vsub.f32 1.5, %v4952
      %v4954 = vmul.f32 %v4949, %v4953
      %vm4955 = vweird.f32 %v4825
      %vm4956 = vweird.f32 %v4949
      %vm4957 = vmor %vm4955, %vm4956
      %v4958 = vsel %vm4957, %v4949, %v4954
      %v4959 = vrsqrt.pop %v4826
      %v4960 = vmul.f32 %v4959, %v4826
      %v4961 = vmul.f32 %v4960, %v4959
      %v4962 = vmul.f32 0.5, %v4961
      %v4963 = vsub.f32 1.5, %v4962
      %v4964 = vmul.f32 %v4959, %v4963
      %vm4965 = vweird.f32 %v4826
      %vm4966 = vweird.f32 %v4959
      %vm4967 = vmor %vm4965, %vm4966
      %v4968 = vsel %vm4967, %v4959, %v4964
      %v4969 = vrsqrt.pop %v4827
      %v4970 = vmul.f32 %v4969, %v4827
      %v4971 = vmul.f32 %v4970, %v4969
      %v4972 = vmul.f32 0.5, %v4971
      %v4973 = vsub.f32 1.5, %v4972
      %v4974 = vmul.f32 %v4969, %v4973
      %vm4975 = vweird.f32 %v4827
      %vm4976 = vweird.f32 %v4969
      %vm4977 = vmor %vm4975, %vm4976
      %v4978 = vsel %vm4977, %v4969, %v4974
      %v4979 = vrsqrt.pop %v4828
      %v4980 = vmul.f32 %v4979, %v4828
      %v4981 = vmul.f32 %v4980, %v4979
      %v4982 = vmul.f32 0.5, %v4981
      %v4983 = vsub.f32 1.5, %v4982
      %v4984 = vmul.f32 %v4979, %v4983
      %vm4985 = vweird.f32 %v4828
      %vm4986 = vweird.f32 %v4979
      %vm4987 = vmor %vm4985, %vm4986
      %v4988 = vsel %vm4987, %v4979, %v4984
      %v4989 = vmul.f32 %v4717, %v4838
      %v4990 = vmul.f32 %v4718, %v4848
      %v4991 = vmul.f32 %v4719, %v4858
      %v4992 = vmul.f32 %v4720, %v4868
      %v4993 = vmul.f32 %v4721, %v4878
      %v4994 = vmul.f32 %v4722, %v4888
      %v4995 = vmul.f32 %v4723, %v4898
      %v4996 = vmul.f32 %v4724, %v4908
      %v4997 = vmul.f32 %v4725, %v4918
      %v4998 = vmul.f32 %v4726, %v4928
      %v4999 = vmul.f32 %v4727, %v4938
      %v5000 = vmul.f32 %v4728, %v4948
      %v5001 = vmul.f32 %v4729, %v4958
      %v5002 = vmul.f32 %v4730, %v4968
      %v5003 = vmul.f32 %v4731, %v4978
      %v5004 = vmul.f32 %v4732, %v4988
      %v5006 = vperm.slane %v4644, 0
      %v5008 = vmul.f32 %v4989, %v5006
      %v5009 = vmul.f32 %v4990, %v5006
      %v5010 = vmul.f32 %v4991, %v5006
      %v5011 = vmul.f32 %v4992, %v5006
      %v5012 = vmul.f32 %v4993, %v5006
      %v5013 = vmul.f32 %v4994, %v5006
      %v5014 = vmul.f32 %v4995, %v5006
      %v5015 = vmul.f32 %v4996, %v5006
      %v5016 = vmul.f32 %v4997, %v5006
      %v5017 = vmul.f32 %v4998, %v5006
      %v5018 = vmul.f32 %v4999, %v5006
      %v5019 = vmul.f32 %v5000, %v5006
      %v5020 = vmul.f32 %v5001, %v5006
      %v5021 = vmul.f32 %v5002, %v5006
      %v5022 = vmul.f32 %v5003, %v5006
      %v5023 = vmul.f32 %v5004, %v5006
      %v5025 = vperm.slane %v4645, 0
      %v5027 = vadd.f32 %v5008, %v5025
      %v5028 = vadd.f32 %v5009, %v5025
      %v5029 = vadd.f32 %v5010, %v5025
      %v5030 = vadd.f32 %v5011, %v5025
      %v5031 = vadd.f32 %v5012, %v5025
      %v5032 = vadd.f32 %v5013, %v5025
      %v5033 = vadd.f32 %v5014, %v5025
      %v5034 = vadd.f32 %v5015, %v5025
      %v5035 = vadd.f32 %v5016, %v5025
      %v5036 = vadd.f32 %v5017, %v5025
      %v5037 = vadd.f32 %v5018, %v5025
      %v5038 = vadd.f32 %v5019, %v5025
      %v5039 = vadd.f32 %v5020, %v5025
      %v5040 = vadd.f32 %v5021, %v5025
      %v5041 = vadd.f32 %v5022, %v5025
      %v5042 = vadd.f32 %v5023, %v5025
      %v5043 = vpack.c.bf16 %v5028, %v5027
      %v5044 = vpack.c.bf16 %v5030, %v5029
      %v5045 = vpack.c.bf16 %v5032, %v5031
      %v5046 = vpack.c.bf16 %v5034, %v5033
      %v5047 = vpack.c.bf16 %v5036, %v5035
      %v5048 = vpack.c.bf16 %v5038, %v5037
      %v5049 = vpack.c.bf16 %v5040, %v5039
      %v5050 = vpack.c.bf16 %v5042, %v5041
      %v5051 = vld [vmem:[%s10] sm:$0xff]
      %v5052 = vld [vmem:[%s10 + $0x8] sm:$0xff]
      %v5053 = vld [vmem:[%s10 + $0x10] sm:$0xff]
      %v5054 = vld [vmem:[%s10 + $0x18] sm:$0xff]
      %v5055 = vld [vmem:[%s10 + $0x20] sm:$0xff]
      %v5056 = vld [vmem:[%s10 + $0x28] sm:$0xff]
      %v5057 = vld [vmem:[%s10 + $0x30] sm:$0xff]
      %v5058 = vld [vmem:[%s10 + $0x38] sm:$0xff]
      %v5059 = vld [vmem:[%s11] sm:$0x3]
      %v5061 = vperm.slane %v5059, 0
      %v5062 = vperm.slane %v5059, 1
      %v5073 = vunpack.c.l.b16 %v5051
      %v5074 = vunpack.c.h.b16 %v5051
      %v5075 = vunpack.c.l.b16 %v5052
      %v5076 = vunpack.c.h.b16 %v5052
      %v5077 = vunpack.c.l.b16 %v5053
      %v5078 = vunpack.c.h.b16 %v5053
      %v5079 = vunpack.c.l.b16 %v5054
      %v5080 = vunpack.c.h.b16 %v5054
      %v5081 = vunpack.c.l.b16 %v5055
      %v5082 = vunpack.c.h.b16 %v5055
      %v5083 = vunpack.c.l.b16 %v5056
      %v5084 = vunpack.c.h.b16 %v5056
      %v5085 = vunpack.c.l.b16 %v5057
      %v5086 = vunpack.c.h.b16 %v5057
      %v5087 = vunpack.c.l.b16 %v5058
      %v5088 = vunpack.c.h.b16 %v5058
      %v5089 = vpack.c.b16 %v5075, %v5073
      %v5090 = vpack.c.b16 %v5076, %v5074
      %v5091 = vpack.c.b16 %v5079, %v5077
      %v5092 = vpack.c.b16 %v5080, %v5078
      %v5093 = vpack.c.b16 %v5083, %v5081
      %v5094 = vpack.c.b16 %v5084, %v5082
      %v5095 = vpack.c.b16 %v5087, %v5085
      %v5096 = vpack.c.b16 %v5088, %v5086
      %v5106 = vsel %vm928, %v5043, 0
      %v5109 = vsel %vm928, %v5044, 0
      %v5112 = vsel %vm928, %v5045, 0
      %v5115 = vsel %vm928, %v5046, 0
      %v5118 = vsel %vm928, %v5047, 0
      %v5121 = vsel %vm928, %v5048, 0
      %v5124 = vsel %vm928, %v5049, 0
      %v5127 = vsel %vm928, %v5050, 0
      %5129 = vmatpush.bf16.msra.mxu0 0
      %5130 = vmatpush.bf16.msra.mxu0 0
      %5131 = vmatpush.bf16.msra.mxu0 0
      %5132 = vmatpush.bf16.msra.mxu0 0
      %5133 = vmatpush.bf16.msra.mxu0 %v5095
      %5134 = vmatpush.bf16.msra.mxu0 %v5093
      %5135 = vmatpush.bf16.msra.mxu0 %v5091
      %5136 = vmatpush.bf16.msra.mxu0 %v5089
      %5137 = vmatmul.bf16.gmra.mxu0 %v5106
      %v5138 = vpop.f32.mrf.mxu0
      %v5139 = vadd.f32 %v5061, %v5138
      %v5140 = vpop.f32.mrf.mxu0
      %v5141 = vadd.f32 %v5061, %v5140
      %5142 = vmatmul.bf16.gmra.mxu0 %v5109
      %v5143 = vpop.f32.mrf.mxu0
      %v5144 = vadd.f32 %v5061, %v5143
      %v5145 = vpop.f32.mrf.mxu0
      %v5146 = vadd.f32 %v5061, %v5145
      %5147 = vmatmul.bf16.gmra.mxu0 %v5112
      %v5148 = vpop.f32.mrf.mxu0
      %v5149 = vadd.f32 %v5061, %v5148
      %v5150 = vpop.f32.mrf.mxu0
      %v5151 = vadd.f32 %v5061, %v5150
      %5152 = vmatmul.bf16.gmra.mxu0 %v5115
      %v5153 = vpop.f32.mrf.mxu0
      %v5154 = vadd.f32 %v5061, %v5153
      %v5155 = vpop.f32.mrf.mxu0
      %v5156 = vadd.f32 %v5061, %v5155
      %5157 = vmatmul.bf16.gmra.mxu0 %v5118
      %v5158 = vpop.f32.mrf.mxu0
      %v5159 = vadd.f32 %v5061, %v5158
      %v5160 = vpop.f32.mrf.mxu0
      %v5161 = vadd.f32 %v5061, %v5160
      %5162 = vmatmul.bf16.gmra.mxu0 %v5121
      %v5163 = vpop.f32.mrf.mxu0
      %v5164 = vadd.f32 %v5061, %v5163
      %v5165 = vpop.f32.mrf.mxu0
      %v5166 = vadd.f32 %v5061, %v5165
      %5167 = vmatmul.bf16.gmra.mxu0 %v5124
      %v5168 = vpop.f32.mrf.mxu0
      %v5169 = vadd.f32 %v5061, %v5168
      %v5170 = vpop.f32.mrf.mxu0
      %v5171 = vadd.f32 %v5061, %v5170
      %5172 = vmatmul.bf16.gmra.mxu0 %v5127
      %v5173 = vpop.f32.mrf.mxu0
      %v5174 = vadd.f32 %v5061, %v5173
      %v5175 = vpop.f32.mrf.mxu0
      %v5176 = vadd.f32 %v5061, %v5175
      %5177 = vdwg.mxu0
      %5178 = vmatpush.bf16.msra.mxu0 0
      %5179 = vmatpush.bf16.msra.mxu0 0
      %5180 = vmatpush.bf16.msra.mxu0 0
      %5181 = vmatpush.bf16.msra.mxu0 0
      %5182 = vmatpush.bf16.msra.mxu0 %v5096
      %5183 = vmatpush.bf16.msra.mxu0 %v5094
      %5184 = vmatpush.bf16.msra.mxu0 %v5092
      %5185 = vmatpush.bf16.msra.mxu0 %v5090
      %5186 = vmatmul.bf16.gmra.mxu0 %v5106
      %v5187 = vpop.f32.mrf.mxu0
      %v5188 = vadd.f32 %v5062, %v5187
      %v5189 = vpop.f32.mrf.mxu0
      %v5190 = vadd.f32 %v5062, %v5189
      %5191 = vmatmul.bf16.gmra.mxu0 %v5109
      %v5192 = vpop.f32.mrf.mxu0
      %v5193 = vadd.f32 %v5062, %v5192
      %v5194 = vpop.f32.mrf.mxu0
      %v5195 = vadd.f32 %v5062, %v5194
      %5196 = vmatmul.bf16.gmra.mxu0 %v5112
      %v5197 = vpop.f32.mrf.mxu0
      %v5198 = vadd.f32 %v5062, %v5197
      %v5199 = vpop.f32.mrf.mxu0
      %v5200 = vadd.f32 %v5062, %v5199
      %5201 = vmatmul.bf16.gmra.mxu0 %v5115
      %v5202 = vpop.f32.mrf.mxu0
      %v5203 = vadd.f32 %v5062, %v5202
      %v5204 = vpop.f32.mrf.mxu0
      %v5205 = vadd.f32 %v5062, %v5204
      %5206 = vmatmul.bf16.gmra.mxu0 %v5118
      %v5207 = vpop.f32.mrf.mxu0
      %v5208 = vadd.f32 %v5062, %v5207
      %v5209 = vpop.f32.mrf.mxu0
      %v5210 = vadd.f32 %v5062, %v5209
      %5211 = vmatmul.bf16.gmra.mxu0 %v5121
      %v5212 = vpop.f32.mrf.mxu0
      %v5213 = vadd.f32 %v5062, %v5212
      %v5214 = vpop.f32.mrf.mxu0
      %v5215 = vadd.f32 %v5062, %v5214
      %5216 = vmatmul.bf16.gmra.mxu0 %v5124
      %v5217 = vpop.f32.mrf.mxu0
      %v5218 = vadd.f32 %v5062, %v5217
      %v5219 = vpop.f32.mrf.mxu0
      %v5220 = vadd.f32 %v5062, %v5219
      %5221 = vmatmul.bf16.gmra.mxu0 %v5127
      %v5222 = vpop.f32.mrf.mxu0
      %v5223 = vadd.f32 %v5062, %v5222
      %v5224 = vpop.f32.mrf.mxu0
      %v5225 = vadd.f32 %v5062, %v5224
      %5226 = vdwg.mxu0
      %v5227 = vmax.f32 %v5139, 0.0
      %v5228 = vmax.f32 %v5188, 0.0
      %v5229 = vmax.f32 %v5141, 0.0
      %v5230 = vmax.f32 %v5190, 0.0
      %v5231 = vmax.f32 %v5144, 0.0
      %v5232 = vmax.f32 %v5193, 0.0
      %v5233 = vmax.f32 %v5146, 0.0
      %v5234 = vmax.f32 %v5195, 0.0
      %v5235 = vmax.f32 %v5149, 0.0
      %v5236 = vmax.f32 %v5198, 0.0
      %v5237 = vmax.f32 %v5151, 0.0
      %v5238 = vmax.f32 %v5200, 0.0
      %v5239 = vmax.f32 %v5154, 0.0
      %v5240 = vmax.f32 %v5203, 0.0
      %v5241 = vmax.f32 %v5156, 0.0
      %v5242 = vmax.f32 %v5205, 0.0
      %v5243 = vmax.f32 %v5159, 0.0
      %v5244 = vmax.f32 %v5208, 0.0
      %v5245 = vmax.f32 %v5161, 0.0
      %v5246 = vmax.f32 %v5210, 0.0
      %v5247 = vmax.f32 %v5164, 0.0
      %v5248 = vmax.f32 %v5213, 0.0
      %v5249 = vmax.f32 %v5166, 0.0
      %v5250 = vmax.f32 %v5215, 0.0
      %v5251 = vmax.f32 %v5169, 0.0
      %v5252 = vmax.f32 %v5218, 0.0
      %v5253 = vmax.f32 %v5171, 0.0
      %v5254 = vmax.f32 %v5220, 0.0
      %v5255 = vmax.f32 %v5174, 0.0
      %v5256 = vmax.f32 %v5223, 0.0
      %v5257 = vmax.f32 %v5176, 0.0
      %v5258 = vmax.f32 %v5225, 0.0
      %v5259 = vpack.c.bf16 %v5229, %v5227
      %v5260 = vpack.c.bf16 %v5230, %v5228
      %v5261 = vpack.c.bf16 %v5233, %v5231
      %v5262 = vpack.c.bf16 %v5234, %v5232
      %v5263 = vpack.c.bf16 %v5237, %v5235
      %v5264 = vpack.c.bf16 %v5238, %v5236
      %v5265 = vpack.c.bf16 %v5241, %v5239
      %v5266 = vpack.c.bf16 %v5242, %v5240
      %v5267 = vpack.c.bf16 %v5245, %v5243
      %v5268 = vpack.c.bf16 %v5246, %v5244
      %v5269 = vpack.c.bf16 %v5249, %v5247
      %v5270 = vpack.c.bf16 %v5250, %v5248
      %v5271 = vpack.c.bf16 %v5253, %v5251
      %v5272 = vpack.c.bf16 %v5254, %v5252
      %v5273 = vpack.c.bf16 %v5257, %v5255
      %v5274 = vpack.c.bf16 %v5258, %v5256
      %v5275 = vld [vmem:[%s12] sm:$0xf]
      %v5276 = vld [vmem:[%s12 + $0x4] sm:$0xf]
      %v5277 = vld [vmem:[%s12 + $0x8] sm:$0xf]
      %v5278 = vld [vmem:[%s12 + $0xc] sm:$0xf]
      %v5279 = vld [vmem:[%s12 + $0x10] sm:$0xf]
      %v5280 = vld [vmem:[%s12 + $0x14] sm:$0xf]
      %v5281 = vld [vmem:[%s12 + $0x18] sm:$0xf]
      %v5282 = vld [vmem:[%s12 + $0x1c] sm:$0xf]
      %v5283 = vld [vmem:[%s12 + $0x20] sm:$0xf]
      %v5284 = vld [vmem:[%s12 + $0x24] sm:$0xf]
      %v5285 = vld [vmem:[%s12 + $0x28] sm:$0xf]
      %v5286 = vld [vmem:[%s12 + $0x2c] sm:$0xf]
      %v5287 = vld [vmem:[%s12 + $0x30] sm:$0xf]
      %v5288 = vld [vmem:[%s12 + $0x34] sm:$0xf]
      %v5289 = vld [vmem:[%s12 + $0x38] sm:$0xf]
      %v5290 = vld [vmem:[%s12 + $0x3c] sm:$0xf]
      %v5291 = vld [vmem:[%s12 + $0x40] sm:$0xf]
      %v5292 = vld [vmem:[%s12 + $0x44] sm:$0xf]
      %v5293 = vld [vmem:[%s12 + $0x48] sm:$0xf]
      %v5294 = vld [vmem:[%s12 + $0x4c] sm:$0xf]
      %v5295 = vld [vmem:[%s12 + $0x50] sm:$0xf]
      %v5296 = vld [vmem:[%s12 + $0x54] sm:$0xf]
      %v5297 = vld [vmem:[%s12 + $0x58] sm:$0xf]
      %v5298 = vld [vmem:[%s12 + $0x5c] sm:$0xf]
      %v5299 = vld [vmem:[%s12 + $0x60] sm:$0xf]
      %v5300 = vld [vmem:[%s12 + $0x64] sm:$0xf]
      %v5301 = vld [vmem:[%s12 + $0x68] sm:$0xf]
      %v5302 = vld [vmem:[%s12 + $0x6c] sm:$0xf]
      %v5303 = vld [vmem:[%s12 + $0x70] sm:$0xf]
      %v5304 = vld [vmem:[%s12 + $0x74] sm:$0xf]
      %v5305 = vld [vmem:[%s12 + $0x78] sm:$0xf]
      %v5306 = vld [vmem:[%s12 + $0x7c] sm:$0xf]
      %v5307 = vld [vmem:[%s13] sm:$0x1]
      %v5309 = vperm.slane %v5307, 0
      %v5343 = vunpack.c.l.b16 %v5275
      %v5344 = vunpack.c.l.b16 %v5276
      %v5345 = vunpack.c.l.b16 %v5277
      %v5346 = vunpack.c.l.b16 %v5278
      %v5347 = vunpack.c.l.b16 %v5279
      %v5348 = vunpack.c.l.b16 %v5280
      %v5349 = vunpack.c.l.b16 %v5281
      %v5350 = vunpack.c.l.b16 %v5282
      %v5351 = vunpack.c.l.b16 %v5283
      %v5352 = vunpack.c.l.b16 %v5284
      %v5353 = vunpack.c.l.b16 %v5285
      %v5354 = vunpack.c.l.b16 %v5286
      %v5355 = vunpack.c.l.b16 %v5287
      %v5356 = vunpack.c.l.b16 %v5288
      %v5357 = vunpack.c.l.b16 %v5289
      %v5358 = vunpack.c.l.b16 %v5290
      %v5359 = vunpack.c.l.b16 %v5291
      %v5360 = vunpack.c.l.b16 %v5292
      %v5361 = vunpack.c.l.b16 %v5293
      %v5362 = vunpack.c.l.b16 %v5294
      %v5363 = vunpack.c.l.b16 %v5295
      %v5364 = vunpack.c.l.b16 %v5296
      %v5365 = vunpack.c.l.b16 %v5297
      %v5366 = vunpack.c.l.b16 %v5298
      %v5367 = vunpack.c.l.b16 %v5299
      %v5368 = vunpack.c.l.b16 %v5300
      %v5369 = vunpack.c.l.b16 %v5301
      %v5370 = vunpack.c.l.b16 %v5302
      %v5371 = vunpack.c.l.b16 %v5303
      %v5372 = vunpack.c.l.b16 %v5304
      %v5373 = vunpack.c.l.b16 %v5305
      %v5374 = vunpack.c.l.b16 %v5306
      %v5375 = vpack.c.b16 %v5344, %v5343
      %v5376 = vpack.c.b16 %v5346, %v5345
      %v5377 = vpack.c.b16 %v5348, %v5347
      %v5378 = vpack.c.b16 %v5350, %v5349
      %v5379 = vpack.c.b16 %v5352, %v5351
      %v5380 = vpack.c.b16 %v5354, %v5353
      %v5381 = vpack.c.b16 %v5356, %v5355
      %v5382 = vpack.c.b16 %v5358, %v5357
      %v5383 = vpack.c.b16 %v5360, %v5359
      %v5384 = vpack.c.b16 %v5362, %v5361
      %v5385 = vpack.c.b16 %v5364, %v5363
      %v5386 = vpack.c.b16 %v5366, %v5365
      %v5387 = vpack.c.b16 %v5368, %v5367
      %v5388 = vpack.c.b16 %v5370, %v5369
      %v5389 = vpack.c.b16 %v5372, %v5371
      %v5390 = vpack.c.b16 %v5374, %v5373
      %5407 = vmatpush.bf16.msra.mxu0 %v5382
      %5408 = vmatpush.bf16.msra.mxu0 %v5381
      %5409 = vmatpush.bf16.msra.mxu0 %v5380
      %5410 = vmatpush.bf16.msra.mxu0 %v5379
      %5411 = vmatpush.bf16.msra.mxu0 %v5378
      %5412 = vmatpush.bf16.msra.mxu0 %v5377
      %5413 = vmatpush.bf16.msra.mxu0 %v5376
      %5414 = vmatpush.bf16.msra.mxu0 %v5375
      %5415 = vmatmul.bf16.gmra.mxu0 %v5259
      %v5416 = vpop.f32.mrf.mxu0
      %v5417 = vadd.f32 %v5309, %v5416
      %v5418 = vpop.f32.mrf.mxu0
      %v5419 = vadd.f32 %v5309, %v5418
      %5420 = vmatmul.bf16.gmra.mxu0 %v5261
      %v5421 = vpop.f32.mrf.mxu0
      %v5422 = vadd.f32 %v5309, %v5421
      %v5423 = vpop.f32.mrf.mxu0
      %v5424 = vadd.f32 %v5309, %v5423
      %5425 = vmatmul.bf16.gmra.mxu0 %v5263
      %v5426 = vpop.f32.mrf.mxu0
      %v5427 = vadd.f32 %v5309, %v5426
      %v5428 = vpop.f32.mrf.mxu0
      %v5429 = vadd.f32 %v5309, %v5428
      %5430 = vmatmul.bf16.gmra.mxu0 %v5265
      %v5431 = vpop.f32.mrf.mxu0
      %v5432 = vadd.f32 %v5309, %v5431
      %v5433 = vpop.f32.mrf.mxu0
      %v5434 = vadd.f32 %v5309, %v5433
      %5435 = vmatmul.bf16.gmra.mxu0 %v5267
      %v5436 = vpop.f32.mrf.mxu0
      %v5437 = vadd.f32 %v5309, %v5436
      %v5438 = vpop.f32.mrf.mxu0
      %v5439 = vadd.f32 %v5309, %v5438
      %5440 = vmatmul.bf16.gmra.mxu0 %v5269
      %v5441 = vpop.f32.mrf.mxu0
      %v5442 = vadd.f32 %v5309, %v5441
      %v5443 = vpop.f32.mrf.mxu0
      %v5444 = vadd.f32 %v5309, %v5443
      %5445 = vmatmul.bf16.gmra.mxu0 %v5271
      %v5446 = vpop.f32.mrf.mxu0
      %v5447 = vadd.f32 %v5309, %v5446
      %v5448 = vpop.f32.mrf.mxu0
      %v5449 = vadd.f32 %v5309, %v5448
      %5450 = vmatmul.bf16.gmra.mxu0 %v5273
      %v5451 = vpop.f32.mrf.mxu0
      %v5452 = vadd.f32 %v5309, %v5451
      %v5453 = vpop.f32.mrf.mxu0
      %v5454 = vadd.f32 %v5309, %v5453
      %5455 = vdwg.mxu0
      %5456 = vmatpush.bf16.msra.mxu0 %v5390
      %5457 = vmatpush.bf16.msra.mxu0 %v5389
      %5458 = vmatpush.bf16.msra.mxu0 %v5388
      %5459 = vmatpush.bf16.msra.mxu0 %v5387
      %5460 = vmatpush.bf16.msra.mxu0 %v5386
      %5461 = vmatpush.bf16.msra.mxu0 %v5385
      %5462 = vmatpush.bf16.msra.mxu0 %v5384
      %5463 = vmatpush.bf16.msra.mxu0 %v5383
      %5464 = vmatmul.bf16.gmra.mxu0 %v5260
      %v5465 = vpop.f32.mrf.mxu0
      %v5466 = vadd.f32 %v5417, %v5465
      %v5467 = vpop.f32.mrf.mxu0
      %v5468 = vadd.f32 %v5419, %v5467
      %5469 = vmatmul.bf16.gmra.mxu0 %v5262
      %v5470 = vpop.f32.mrf.mxu0
      %v5471 = vadd.f32 %v5422, %v5470
      %v5472 = vpop.f32.mrf.mxu0
      %v5473 = vadd.f32 %v5424, %v5472
      %5474 = vmatmul.bf16.gmra.mxu0 %v5264
      %v5475 = vpop.f32.mrf.mxu0
      %v5476 = vadd.f32 %v5427, %v5475
      %v5477 = vpop.f32.mrf.mxu0
      %v5478 = vadd.f32 %v5429, %v5477
      %5479 = vmatmul.bf16.gmra.mxu0 %v5266
      %v5480 = vpop.f32.mrf.mxu0
      %v5481 = vadd.f32 %v5432, %v5480
      %v5482 = vpop.f32.mrf.mxu0
      %v5483 = vadd.f32 %v5434, %v5482
      %5484 = vmatmul.bf16.gmra.mxu0 %v5268
      %v5485 = vpop.f32.mrf.mxu0
      %v5486 = vadd.f32 %v5437, %v5485
      %v5487 = vpop.f32.mrf.mxu0
      %v5488 = vadd.f32 %v5439, %v5487
      %5489 = vmatmul.bf16.gmra.mxu0 %v5270
      %v5490 = vpop.f32.mrf.mxu0
      %v5491 = vadd.f32 %v5442, %v5490
      %v5492 = vpop.f32.mrf.mxu0
      %v5493 = vadd.f32 %v5444, %v5492
      %5494 = vmatmul.bf16.gmra.mxu0 %v5272
      %v5495 = vpop.f32.mrf.mxu0
      %v5496 = vadd.f32 %v5447, %v5495
      %v5497 = vpop.f32.mrf.mxu0
      %v5498 = vadd.f32 %v5449, %v5497
      %5499 = vmatmul.bf16.gmra.mxu0 %v5274
      %v5500 = vpop.f32.mrf.mxu0
      %v5501 = vadd.f32 %v5452, %v5500
      %v5502 = vpop.f32.mrf.mxu0
      %v5503 = vadd.f32 %v5454, %v5502
      %5504 = vdwg.mxu0
      %v5505 = vadd.f32 %v5027, %v5466
      %v5506 = vadd.f32 %v5028, %v5468
      %v5507 = vadd.f32 %v5029, %v5471
      %v5508 = vadd.f32 %v5030, %v5473
      %v5509 = vadd.f32 %v5031, %v5476
      %v5510 = vadd.f32 %v5032, %v5478
      %v5511 = vadd.f32 %v5033, %v5481
      %v5512 = vadd.f32 %v5034, %v5483
      %v5513 = vadd.f32 %v5035, %v5486
      %v5514 = vadd.f32 %v5036, %v5488
      %v5515 = vadd.f32 %v5037, %v5491
      %v5516 = vadd.f32 %v5038, %v5493
      %v5517 = vadd.f32 %v5039, %v5496
      %v5518 = vadd.f32 %v5040, %v5498
      %v5519 = vadd.f32 %v5041, %v5501
      %v5520 = vadd.f32 %v5042, %v5503
      %v5521 = vld [vmem:[%s16] sm:$0x1]
      %v5522 = vld [vmem:[%s17] sm:$0x1]
      %v5523 = vsel %vm928, %v5505, 0.0
      %5524 = vadd.xlane.f32.xlu0 %v5523
      %v5525 = vpop.xlane.xlu0 %5524
      %v5526 = vsel %vm928, %v5506, 0.0
      %5527 = vadd.xlane.f32.xlu0 %v5526
      %v5528 = vpop.xlane.xlu0 %5527
      %v5529 = vsel %vm928, %v5507, 0.0
      %5530 = vadd.xlane.f32.xlu0 %v5529
      %v5531 = vpop.xlane.xlu0 %5530
      %v5532 = vsel %vm928, %v5508, 0.0
      %5533 = vadd.xlane.f32.xlu0 %v5532
      %v5534 = vpop.xlane.xlu0 %5533
      %v5535 = vsel %vm928, %v5509, 0.0
      %5536 = vadd.xlane.f32.xlu0 %v5535
      %v5537 = vpop.xlane.xlu0 %5536
      %v5538 = vsel %vm928, %v5510, 0.0
      %5539 = vadd.xlane.f32.xlu0 %v5538
      %v5540 = vpop.xlane.xlu0 %5539
      %v5541 = vsel %vm928, %v5511, 0.0
      %5542 = vadd.xlane.f32.xlu0 %v5541
      %v5543 = vpop.xlane.xlu0 %5542
      %v5544 = vsel %vm928, %v5512, 0.0
      %5545 = vadd.xlane.f32.xlu0 %v5544
      %v5546 = vpop.xlane.xlu0 %5545
      %v5547 = vsel %vm928, %v5513, 0.0
      %5548 = vadd.xlane.f32.xlu0 %v5547
      %v5549 = vpop.xlane.xlu0 %5548
      %v5550 = vsel %vm928, %v5514, 0.0
      %5551 = vadd.xlane.f32.xlu0 %v5550
      %v5552 = vpop.xlane.xlu0 %5551
      %v5553 = vsel %vm928, %v5515, 0.0
      %5554 = vadd.xlane.f32.xlu0 %v5553
      %v5555 = vpop.xlane.xlu0 %5554
      %v5556 = vsel %vm928, %v5516, 0.0
      %5557 = vadd.xlane.f32.xlu0 %v5556
      %v5558 = vpop.xlane.xlu0 %5557
      %v5559 = vsel %vm928, %v5517, 0.0
      %5560 = vadd.xlane.f32.xlu0 %v5559
      %v5561 = vpop.xlane.xlu0 %5560
      %v5562 = vsel %vm928, %v5518, 0.0
      %5563 = vadd.xlane.f32.xlu0 %v5562
      %v5564 = vpop.xlane.xlu0 %5563
      %v5565 = vsel %vm928, %v5519, 0.0
      %5566 = vadd.xlane.f32.xlu0 %v5565
      %v5567 = vpop.xlane.xlu0 %5566
      %v5568 = vsel %vm928, %v5520, 0.0
      %5569 = vadd.xlane.f32.xlu0 %v5568
      %v5570 = vpop.xlane.xlu0 %5569
      %v5571 = vmul.f32 %v5525, %v4700
      %v5572 = vmul.f32 %v5528, %v4700
      %v5573 = vmul.f32 %v5531, %v4700
      %v5574 = vmul.f32 %v5534, %v4700
      %v5575 = vmul.f32 %v5537, %v4700
      %v5576 = vmul.f32 %v5540, %v4700
      %v5577 = vmul.f32 %v5543, %v4700
      %v5578 = vmul.f32 %v5546, %v4700
      %v5579 = vmul.f32 %v5549, %v4700
      %v5580 = vmul.f32 %v5552, %v4700
      %v5581 = vmul.f32 %v5555, %v4700
      %v5582 = vmul.f32 %v5558, %v4700
      %v5583 = vmul.f32 %v5561, %v4700
      %v5584 = vmul.f32 %v5564, %v4700
      %v5585 = vmul.f32 %v5567, %v4700
      %v5586 = vmul.f32 %v5570, %v4700
      %v5587 = vsub.f32 %v5505, %v5571
      %v5588 = vsub.f32 %v5506, %v5572
      %v5589 = vsub.f32 %v5507, %v5573
      %v5590 = vsub.f32 %v5508, %v5574
      %v5591 = vsub.f32 %v5509, %v5575
      %v5592 = vsub.f32 %v5510, %v5576
      %v5593 = vsub.f32 %v5511, %v5577
      %v5594 = vsub.f32 %v5512, %v5578
      %v5595 = vsub.f32 %v5513, %v5579
      %v5596 = vsub.f32 %v5514, %v5580
      %v5597 = vsub.f32 %v5515, %v5581
      %v5598 = vsub.f32 %v5516, %v5582
      %v5599 = vsub.f32 %v5517, %v5583
      %v5600 = vsub.f32 %v5518, %v5584
      %v5601 = vsub.f32 %v5519, %v5585
      %v5602 = vsub.f32 %v5520, %v5586
      %v5603 = vmul.f32 %v5587, %v5587
      %v5604 = vmul.f32 %v5588, %v5588
      %v5605 = vmul.f32 %v5589, %v5589
      %v5606 = vmul.f32 %v5590, %v5590
      %v5607 = vmul.f32 %v5591, %v5591
      %v5608 = vmul.f32 %v5592, %v5592
      %v5609 = vmul.f32 %v5593, %v5593
      %v5610 = vmul.f32 %v5594, %v5594
      %v5611 = vmul.f32 %v5595, %v5595
      %v5612 = vmul.f32 %v5596, %v5596
      %v5613 = vmul.f32 %v5597, %v5597
      %v5614 = vmul.f32 %v5598, %v5598
      %v5615 = vmul.f32 %v5599, %v5599
      %v5616 = vmul.f32 %v5600, %v5600
      %v5617 = vmul.f32 %v5601, %v5601
      %v5618 = vmul.f32 %v5602, %v5602
      %v5619 = vsel %vm928, %v5603, 0.0
      %5620 = vadd.xlane.f32.xlu0 %v5619
      %v5621 = vpop.xlane.xlu0 %5620
      %v5622 = vsel %vm928, %v5604, 0.0
      %5623 = vadd.xlane.f32.xlu0 %v5622
      %v5624 = vpop.xlane.xlu0 %5623
      %v5625 = vsel %vm928, %v5605, 0.0
      %5626 = vadd.xlane.f32.xlu0 %v5625
      %v5627 = vpop.xlane.xlu0 %5626
      %v5628 = vsel %vm928, %v5606, 0.0
      %5629 = vadd.xlane.f32.xlu0 %v5628
      %v5630 = vpop.xlane.xlu0 %5629
      %v5631 = vsel %vm928, %v5607, 0.0
      %5632 = vadd.xlane.f32.xlu0 %v5631
      %v5633 = vpop.xlane.xlu0 %5632
      %v5634 = vsel %vm928, %v5608, 0.0
      %5635 = vadd.xlane.f32.xlu0 %v5634
      %v5636 = vpop.xlane.xlu0 %5635
      %v5637 = vsel %vm928, %v5609, 0.0
      %5638 = vadd.xlane.f32.xlu0 %v5637
      %v5639 = vpop.xlane.xlu0 %5638
      %v5640 = vsel %vm928, %v5610, 0.0
      %5641 = vadd.xlane.f32.xlu0 %v5640
      %v5642 = vpop.xlane.xlu0 %5641
      %v5643 = vsel %vm928, %v5611, 0.0
      %5644 = vadd.xlane.f32.xlu0 %v5643
      %v5645 = vpop.xlane.xlu0 %5644
      %v5646 = vsel %vm928, %v5612, 0.0
      %5647 = vadd.xlane.f32.xlu0 %v5646
      %v5648 = vpop.xlane.xlu0 %5647
      %v5649 = vsel %vm928, %v5613, 0.0
      %5650 = vadd.xlane.f32.xlu0 %v5649
      %v5651 = vpop.xlane.xlu0 %5650
      %v5652 = vsel %vm928, %v5614, 0.0
      %5653 = vadd.xlane.f32.xlu0 %v5652
      %v5654 = vpop.xlane.xlu0 %5653
      %v5655 = vsel %vm928, %v5615, 0.0
      %5656 = vadd.xlane.f32.xlu0 %v5655
      %v5657 = vpop.xlane.xlu0 %5656
      %v5658 = vsel %vm928, %v5616, 0.0
      %5659 = vadd.xlane.f32.xlu0 %v5658
      %v5660 = vpop.xlane.xlu0 %5659
      %v5661 = vsel %vm928, %v5617, 0.0
      %5662 = vadd.xlane.f32.xlu0 %v5661
      %v5663 = vpop.xlane.xlu0 %5662
      %v5664 = vsel %vm928, %v5618, 0.0
      %5665 = vadd.xlane.f32.xlu0 %v5664
      %v5666 = vpop.xlane.xlu0 %5665
      %v5667 = vmul.f32 %v5621, %v4700
      %v5668 = vmul.f32 %v5624, %v4700
      %v5669 = vmul.f32 %v5627, %v4700
      %v5670 = vmul.f32 %v5630, %v4700
      %v5671 = vmul.f32 %v5633, %v4700
      %v5672 = vmul.f32 %v5636, %v4700
      %v5673 = vmul.f32 %v5639, %v4700
      %v5674 = vmul.f32 %v5642, %v4700
      %v5675 = vmul.f32 %v5645, %v4700
      %v5676 = vmul.f32 %v5648, %v4700
      %v5677 = vmul.f32 %v5651, %v4700
      %v5678 = vmul.f32 %v5654, %v4700
      %v5679 = vmul.f32 %v5657, %v4700
      %v5680 = vmul.f32 %v5660, %v4700
      %v5681 = vmul.f32 %v5663, %v4700
      %v5682 = vmul.f32 %v5666, %v4700
      %v5683 = vadd.f32 %v5667, 1e-05
      %v5684 = vadd.f32 %v5668, 1e-05
      %v5685 = vadd.f32 %v5669, 1e-05
      %v5686 = vadd.f32 %v5670, 1e-05
      %v5687 = vadd.f32 %v5671, 1e-05
      %v5688 = vadd.f32 %v5672, 1e-05
      %v5689 = vadd.f32 %v5673, 1e-05
      %v5690 = vadd.f32 %v5674, 1e-05
      %v5691 = vadd.f32 %v5675, 1e-05
      %v5692 = vadd.f32 %v5676, 1e-05
      %v5693 = vadd.f32 %v5677, 1e-05
      %v5694 = vadd.f32 %v5678, 1e-05
      %v5695 = vadd.f32 %v5679, 1e-05
      %v5696 = vadd.f32 %v5680, 1e-05
      %v5697 = vadd.f32 %v5681, 1e-05
      %v5698 = vadd.f32 %v5682, 1e-05
      %v5699 = vrsqrt.pop %v5683
      %v5700 = vmul.f32 %v5699, %v5683
      %v5701 = vmul.f32 %v5700, %v5699
      %v5702 = vmul.f32 0.5, %v5701
      %v5703 = vsub.f32 1.5, %v5702
      %v5704 = vmul.f32 %v5699, %v5703
      %vm5705 = vweird.f32 %v5683
      %vm5706 = vweird.f32 %v5699
      %vm5707 = vmor %vm5705, %vm5706
      %v5708 = vsel %vm5707, %v5699, %v5704
      %v5709 = vrsqrt.pop %v5684
      %v5710 = vmul.f32 %v5709, %v5684
      %v5711 = vmul.f32 %v5710, %v5709
      %v5712 = vmul.f32 0.5, %v5711
      %v5713 = vsub.f32 1.5, %v5712
      %v5714 = vmul.f32 %v5709, %v5713
      %vm5715 = vweird.f32 %v5684
      %vm5716 = vweird.f32 %v5709
      %vm5717 = vmor %vm5715, %vm5716
      %v5718 = vsel %vm5717, %v5709, %v5714
      %v5719 = vrsqrt.pop %v5685
      %v5720 = vmul.f32 %v5719, %v5685
      %v5721 = vmul.f32 %v5720, %v5719
      %v5722 = vmul.f32 0.5, %v5721
      %v5723 = vsub.f32 1.5, %v5722
      %v5724 = vmul.f32 %v5719, %v5723
      %vm5725 = vweird.f32 %v5685
      %vm5726 = vweird.f32 %v5719
      %vm5727 = vmor %vm5725, %vm5726
      %v5728 = vsel %vm5727, %v5719, %v5724
      %v5729 = vrsqrt.pop %v5686
      %v5730 = vmul.f32 %v5729, %v5686
      %v5731 = vmul.f32 %v5730, %v5729
      %v5732 = vmul.f32 0.5, %v5731
      %v5733 = vsub.f32 1.5, %v5732
      %v5734 = vmul.f32 %v5729, %v5733
      %vm5735 = vweird.f32 %v5686
      %vm5736 = vweird.f32 %v5729
      %vm5737 = vmor %vm5735, %vm5736
      %v5738 = vsel %vm5737, %v5729, %v5734
      %v5739 = vrsqrt.pop %v5687
      %v5740 = vmul.f32 %v5739, %v5687
      %v5741 = vmul.f32 %v5740, %v5739
      %v5742 = vmul.f32 0.5, %v5741
      %v5743 = vsub.f32 1.5, %v5742
      %v5744 = vmul.f32 %v5739, %v5743
      %vm5745 = vweird.f32 %v5687
      %vm5746 = vweird.f32 %v5739
      %vm5747 = vmor %vm5745, %vm5746
      %v5748 = vsel %vm5747, %v5739, %v5744
      %v5749 = vrsqrt.pop %v5688
      %v5750 = vmul.f32 %v5749, %v5688
      %v5751 = vmul.f32 %v5750, %v5749
      %v5752 = vmul.f32 0.5, %v5751
      %v5753 = vsub.f32 1.5, %v5752
      %v5754 = vmul.f32 %v5749, %v5753
      %vm5755 = vweird.f32 %v5688
      %vm5756 = vweird.f32 %v5749
      %vm5757 = vmor %vm5755, %vm5756
      %v5758 = vsel %vm5757, %v5749, %v5754
      %v5759 = vrsqrt.pop %v5689
      %v5760 = vmul.f32 %v5759, %v5689
      %v5761 = vmul.f32 %v5760, %v5759
      %v5762 = vmul.f32 0.5, %v5761
      %v5763 = vsub.f32 1.5, %v5762
      %v5764 = vmul.f32 %v5759, %v5763
      %vm5765 = vweird.f32 %v5689
      %vm5766 = vweird.f32 %v5759
      %vm5767 = vmor %vm5765, %vm5766
      %v5768 = vsel %vm5767, %v5759, %v5764
      %v5769 = vrsqrt.pop %v5690
      %v5770 = vmul.f32 %v5769, %v5690
      %v5771 = vmul.f32 %v5770, %v5769
      %v5772 = vmul.f32 0.5, %v5771
      %v5773 = vsub.f32 1.5, %v5772
      %v5774 = vmul.f32 %v5769, %v5773
      %vm5775 = vweird.f32 %v5690
      %vm5776 = vweird.f32 %v5769
      %vm5777 = vmor %vm5775, %vm5776
      %v5778 = vsel %vm5777, %v5769, %v5774
      %v5779 = vrsqrt.pop %v5691
      %v5780 = vmul.f32 %v5779, %v5691
      %v5781 = vmul.f32 %v5780, %v5779
      %v5782 = vmul.f32 0.5, %v5781
      %v5783 = vsub.f32 1.5, %v5782
      %v5784 = vmul.f32 %v5779, %v5783
      %vm5785 = vweird.f32 %v5691
      %vm5786 = vweird.f32 %v5779
      %vm5787 = vmor %vm5785, %vm5786
      %v5788 = vsel %vm5787, %v5779, %v5784
      %v5789 = vrsqrt.pop %v5692
      %v5790 = vmul.f32 %v5789, %v5692
      %v5791 = vmul.f32 %v5790, %v5789
      %v5792 = vmul.f32 0.5, %v5791
      %v5793 = vsub.f32 1.5, %v5792
      %v5794 = vmul.f32 %v5789, %v5793
      %vm5795 = vweird.f32 %v5692
      %vm5796 = vweird.f32 %v5789
      %vm5797 = vmor %vm5795, %vm5796
      %v5798 = vsel %vm5797, %v5789, %v5794
      %v5799 = vrsqrt.pop %v5693
      %v5800 = vmul.f32 %v5799, %v5693
      %v5801 = vmul.f32 %v5800, %v5799
      %v5802 = vmul.f32 0.5, %v5801
      %v5803 = vsub.f32 1.5, %v5802
      %v5804 = vmul.f32 %v5799, %v5803
      %vm5805 = vweird.f32 %v5693
      %vm5806 = vweird.f32 %v5799
      %vm5807 = vmor %vm5805, %vm5806
      %v5808 = vsel %vm5807, %v5799, %v5804
      %v5809 = vrsqrt.pop %v5694
      %v5810 = vmul.f32 %v5809, %v5694
      %v5811 = vmul.f32 %v5810, %v5809
      %v5812 = vmul.f32 0.5, %v5811
      %v5813 = vsub.f32 1.5, %v5812
      %v5814 = vmul.f32 %v5809, %v5813
      %vm5815 = vweird.f32 %v5694
      %vm5816 = vweird.f32 %v5809
      %vm5817 = vmor %vm5815, %vm5816
      %v5818 = vsel %vm5817, %v5809, %v5814
      %v5819 = vrsqrt.pop %v5695
      %v5820 = vmul.f32 %v5819, %v5695
      %v5821 = vmul.f32 %v5820, %v5819
      %v5822 = vmul.f32 0.5, %v5821
      %v5823 = vsub.f32 1.5, %v5822
      %v5824 = vmul.f32 %v5819, %v5823
      %vm5825 = vweird.f32 %v5695
      %vm5826 = vweird.f32 %v5819
      %vm5827 = vmor %vm5825, %vm5826
      %v5828 = vsel %vm5827, %v5819, %v5824
      %v5829 = vrsqrt.pop %v5696
      %v5830 = vmul.f32 %v5829, %v5696
      %v5831 = vmul.f32 %v5830, %v5829
      %v5832 = vmul.f32 0.5, %v5831
      %v5833 = vsub.f32 1.5, %v5832
      %v5834 = vmul.f32 %v5829, %v5833
      %vm5835 = vweird.f32 %v5696
      %vm5836 = vweird.f32 %v5829
      %vm5837 = vmor %vm5835, %vm5836
      %v5838 = vsel %vm5837, %v5829, %v5834
      %v5839 = vrsqrt.pop %v5697
      %v5840 = vmul.f32 %v5839, %v5697
      %v5841 = vmul.f32 %v5840, %v5839
      %v5842 = vmul.f32 0.5, %v5841
      %v5843 = vsub.f32 1.5, %v5842
      %v5844 = vmul.f32 %v5839, %v5843
      %vm5845 = vweird.f32 %v5697
      %vm5846 = vweird.f32 %v5839
      %vm5847 = vmor %vm5845, %vm5846
      %v5848 = vsel %vm5847, %v5839, %v5844
      %v5849 = vrsqrt.pop %v5698
      %v5850 = vmul.f32 %v5849, %v5698
      %v5851 = vmul.f32 %v5850, %v5849
      %v5852 = vmul.f32 0.5, %v5851
      %v5853 = vsub.f32 1.5, %v5852
      %v5854 = vmul.f32 %v5849, %v5853
      %vm5855 = vweird.f32 %v5698
      %vm5856 = vweird.f32 %v5849
      %vm5857 = vmor %vm5855, %vm5856
      %v5858 = vsel %vm5857, %v5849, %v5854
      %v5859 = vmul.f32 %v5587, %v5708
      %v5860 = vmul.f32 %v5588, %v5718
      %v5861 = vmul.f32 %v5589, %v5728
      %v5862 = vmul.f32 %v5590, %v5738
      %v5863 = vmul.f32 %v5591, %v5748
      %v5864 = vmul.f32 %v5592, %v5758
      %v5865 = vmul.f32 %v5593, %v5768
      %v5866 = vmul.f32 %v5594, %v5778
      %v5867 = vmul.f32 %v5595, %v5788
      %v5868 = vmul.f32 %v5596, %v5798
      %v5869 = vmul.f32 %v5597, %v5808
      %v5870 = vmul.f32 %v5598, %v5818
      %v5871 = vmul.f32 %v5599, %v5828
      %v5872 = vmul.f32 %v5600, %v5838
      %v5873 = vmul.f32 %v5601, %v5848
      %v5874 = vmul.f32 %v5602, %v5858
      %v5876 = vperm.slane %v5521, 0
      %v5878 = vmul.f32 %v5859, %v5876
      %v5879 = vmul.f32 %v5860, %v5876
      %v5880 = vmul.f32 %v5861, %v5876
      %v5881 = vmul.f32 %v5862, %v5876
      %v5882 = vmul.f32 %v5863, %v5876
      %v5883 = vmul.f32 %v5864, %v5876
      %v5884 = vmul.f32 %v5865, %v5876
      %v5885 = vmul.f32 %v5866, %v5876
      %v5886 = vmul.f32 %v5867, %v5876
      %v5887 = vmul.f32 %v5868, %v5876
      %v5888 = vmul.f32 %v5869, %v5876
      %v5889 = vmul.f32 %v5870, %v5876
      %v5890 = vmul.f32 %v5871, %v5876
      %v5891 = vmul.f32 %v5872, %v5876
      %v5892 = vmul.f32 %v5873, %v5876
      %v5893 = vmul.f32 %v5874, %v5876
      %v5895 = vperm.slane %v5522, 0
      %v5897 = vadd.f32 %v5878, %v5895
      %v5898 = vadd.f32 %v5879, %v5895
      %v5899 = vadd.f32 %v5880, %v5895
      %v5900 = vadd.f32 %v5881, %v5895
      %v5901 = vadd.f32 %v5882, %v5895
      %v5902 = vadd.f32 %v5883, %v5895
      %v5903 = vadd.f32 %v5884, %v5895
      %v5904 = vadd.f32 %v5885, %v5895
      %v5905 = vadd.f32 %v5886, %v5895
      %v5906 = vadd.f32 %v5887, %v5895
      %v5907 = vadd.f32 %v5888, %v5895
      %v5908 = vadd.f32 %v5889, %v5895
      %v5909 = vadd.f32 %v5890, %v5895
      %v5910 = vadd.f32 %v5891, %v5895
      %v5911 = vadd.f32 %v5892, %v5895
      %v5912 = vadd.f32 %v5893, %v5895
      %v5913 = vpack.c.bf16 %v5898, %v5897
      %v5914 = vpack.c.bf16 %v5900, %v5899
      %v5915 = vpack.c.bf16 %v5902, %v5901
      %v5916 = vpack.c.bf16 %v5904, %v5903
      %v5917 = vpack.c.bf16 %v5906, %v5905
      %v5918 = vpack.c.bf16 %v5908, %v5907
      %v5919 = vpack.c.bf16 %v5910, %v5909
      %v5920 = vpack.c.bf16 %v5912, %v5911
      %s5921 = scalar_lea.vmem %s6, 64
      %v5922 = vld [vmem:[%s5921] sm:$0xff]
      %v5923 = vld [vmem:[%s5921 + $0x8] sm:$0xff]
      %v5924 = vld [vmem:[%s5921 + $0x10] sm:$0xff]
      %v5925 = vld [vmem:[%s5921 + $0x18] sm:$0xff]
      %v5926 = vld [vmem:[%s5921 + $0x20] sm:$0xff]
      %v5927 = vld [vmem:[%s5921 + $0x28] sm:$0xff]
      %v5928 = vld [vmem:[%s5921 + $0x30] sm:$0xff]
      %v5929 = vld [vmem:[%s5921 + $0x38] sm:$0xff]
      %s5930 = scalar_lea.vmem %s7, 2
      %v5931 = vld [vmem:[%s5930] sm:$0x3]
      %v5933 = vperm.slane %v5931, 0
      %v5934 = vperm.slane %v5931, 1
      %v5945 = vunpack.c.l.b16 %v5922
      %v5946 = vunpack.c.h.b16 %v5922
      %v5947 = vunpack.c.l.b16 %v5923
      %v5948 = vunpack.c.h.b16 %v5923
      %v5949 = vunpack.c.l.b16 %v5924
      %v5950 = vunpack.c.h.b16 %v5924
      %v5951 = vunpack.c.l.b16 %v5925
      %v5952 = vunpack.c.h.b16 %v5925
      %v5953 = vunpack.c.l.b16 %v5926
      %v5954 = vunpack.c.h.b16 %v5926
      %v5955 = vunpack.c.l.b16 %v5927
      %v5956 = vunpack.c.h.b16 %v5927
      %v5957 = vunpack.c.l.b16 %v5928
      %v5958 = vunpack.c.h.b16 %v5928
      %v5959 = vunpack.c.l.b16 %v5929
      %v5960 = vunpack.c.h.b16 %v5929
      %v5961 = vpack.c.b16 %v5947, %v5945
      %v5962 = vpack.c.b16 %v5948, %v5946
      %v5963 = vpack.c.b16 %v5951, %v5949
      %v5964 = vpack.c.b16 %v5952, %v5950
      %v5965 = vpack.c.b16 %v5955, %v5953
      %v5966 = vpack.c.b16 %v5956, %v5954
      %v5967 = vpack.c.b16 %v5959, %v5957
      %v5968 = vpack.c.b16 %v5960, %v5958
      %v5978 = vsel %vm928, %v5913, 0
      %v5981 = vsel %vm928, %v5914, 0
      %v5984 = vsel %vm928, %v5915, 0
      %v5987 = vsel %vm928, %v5916, 0
      %v5990 = vsel %vm928, %v5917, 0
      %v5993 = vsel %vm928, %v5918, 0
      %v5996 = vsel %vm928, %v5919, 0
      %v5999 = vsel %vm928, %v5920, 0
      %6001 = vmatpush.bf16.msra.mxu0 0
      %6002 = vmatpush.bf16.msra.mxu0 0
      %6003 = vmatpush.bf16.msra.mxu0 0
      %6004 = vmatpush.bf16.msra.mxu0 0
      %6005 = vmatpush.bf16.msra.mxu0 %v5967
      %6006 = vmatpush.bf16.msra.mxu0 %v5965
      %6007 = vmatpush.bf16.msra.mxu0 %v5963
      %6008 = vmatpush.bf16.msra.mxu0 %v5961
      %6009 = vmatmul.bf16.gmra.mxu0 %v5978
      %v6010 = vpop.f32.mrf.mxu0
      %v6011 = vadd.f32 %v5933, %v6010
      %v6012 = vpop.f32.mrf.mxu0
      %v6013 = vadd.f32 %v5933, %v6012
      %6014 = vmatmul.bf16.gmra.mxu0 %v5981
      %v6015 = vpop.f32.mrf.mxu0
      %v6016 = vadd.f32 %v5933, %v6015
      %v6017 = vpop.f32.mrf.mxu0
      %v6018 = vadd.f32 %v5933, %v6017
      %6019 = vmatmul.bf16.gmra.mxu0 %v5984
      %v6020 = vpop.f32.mrf.mxu0
      %v6021 = vadd.f32 %v5933, %v6020
      %v6022 = vpop.f32.mrf.mxu0
      %v6023 = vadd.f32 %v5933, %v6022
      %6024 = vmatmul.bf16.gmra.mxu0 %v5987
      %v6025 = vpop.f32.mrf.mxu0
      %v6026 = vadd.f32 %v5933, %v6025
      %v6027 = vpop.f32.mrf.mxu0
      %v6028 = vadd.f32 %v5933, %v6027
      %6029 = vmatmul.bf16.gmra.mxu0 %v5990
      %v6030 = vpop.f32.mrf.mxu0
      %v6031 = vadd.f32 %v5933, %v6030
      %v6032 = vpop.f32.mrf.mxu0
      %v6033 = vadd.f32 %v5933, %v6032
      %6034 = vmatmul.bf16.gmra.mxu0 %v5993
      %v6035 = vpop.f32.mrf.mxu0
      %v6036 = vadd.f32 %v5933, %v6035
      %v6037 = vpop.f32.mrf.mxu0
      %v6038 = vadd.f32 %v5933, %v6037
      %6039 = vmatmul.bf16.gmra.mxu0 %v5996
      %v6040 = vpop.f32.mrf.mxu0
      %v6041 = vadd.f32 %v5933, %v6040
      %v6042 = vpop.f32.mrf.mxu0
      %v6043 = vadd.f32 %v5933, %v6042
      %6044 = vmatmul.bf16.gmra.mxu0 %v5999
      %v6045 = vpop.f32.mrf.mxu0
      %v6046 = vadd.f32 %v5933, %v6045
      %v6047 = vpop.f32.mrf.mxu0
      %v6048 = vadd.f32 %v5933, %v6047
      %6049 = vdwg.mxu0
      %6050 = vmatpush.bf16.msra.mxu0 0
      %6051 = vmatpush.bf16.msra.mxu0 0
      %6052 = vmatpush.bf16.msra.mxu0 0
      %6053 = vmatpush.bf16.msra.mxu0 0
      %6054 = vmatpush.bf16.msra.mxu0 %v5968
      %6055 = vmatpush.bf16.msra.mxu0 %v5966
      %6056 = vmatpush.bf16.msra.mxu0 %v5964
      %6057 = vmatpush.bf16.msra.mxu0 %v5962
      %6058 = vmatmul.bf16.gmra.mxu0 %v5978
      %v6059 = vpop.f32.mrf.mxu0
      %v6060 = vadd.f32 %v5934, %v6059
      %v6061 = vpop.f32.mrf.mxu0
      %v6062 = vadd.f32 %v5934, %v6061
      %6063 = vmatmul.bf16.gmra.mxu0 %v5981
      %v6064 = vpop.f32.mrf.mxu0
      %v6065 = vadd.f32 %v5934, %v6064
      %v6066 = vpop.f32.mrf.mxu0
      %v6067 = vadd.f32 %v5934, %v6066
      %6068 = vmatmul.bf16.gmra.mxu0 %v5984
      %v6069 = vpop.f32.mrf.mxu0
      %v6070 = vadd.f32 %v5934, %v6069
      %v6071 = vpop.f32.mrf.mxu0
      %v6072 = vadd.f32 %v5934, %v6071
      %6073 = vmatmul.bf16.gmra.mxu0 %v5987
      %v6074 = vpop.f32.mrf.mxu0
      %v6075 = vadd.f32 %v5934, %v6074
      %v6076 = vpop.f32.mrf.mxu0
      %v6077 = vadd.f32 %v5934, %v6076
      %6078 = vmatmul.bf16.gmra.mxu0 %v5990
      %v6079 = vpop.f32.mrf.mxu0
      %v6080 = vadd.f32 %v5934, %v6079
      %v6081 = vpop.f32.mrf.mxu0
      %v6082 = vadd.f32 %v5934, %v6081
      %6083 = vmatmul.bf16.gmra.mxu0 %v5993
      %v6084 = vpop.f32.mrf.mxu0
      %v6085 = vadd.f32 %v5934, %v6084
      %v6086 = vpop.f32.mrf.mxu0
      %v6087 = vadd.f32 %v5934, %v6086
      %6088 = vmatmul.bf16.gmra.mxu0 %v5996
      %v6089 = vpop.f32.mrf.mxu0
      %v6090 = vadd.f32 %v5934, %v6089
      %v6091 = vpop.f32.mrf.mxu0
      %v6092 = vadd.f32 %v5934, %v6091
      %6093 = vmatmul.bf16.gmra.mxu0 %v5999
      %v6094 = vpop.f32.mrf.mxu0
      %v6095 = vadd.f32 %v5934, %v6094
      %v6096 = vpop.f32.mrf.mxu0
      %v6097 = vadd.f32 %v5934, %v6096
      %6098 = vdwg.mxu0
      %s6099 = scalar_lea.vmem %s8, 32
      %v6100 = vld [vmem:[%s6099] sm:$0xf]
      %v6101 = vld [vmem:[%s6099 + $0x4] sm:$0xf]
      %v6102 = vld [vmem:[%s6099 + $0x8] sm:$0xf]
      %v6103 = vld [vmem:[%s6099 + $0xc] sm:$0xf]
      %v6104 = vld [vmem:[%s6099 + $0x10] sm:$0xf]
      %v6105 = vld [vmem:[%s6099 + $0x14] sm:$0xf]
      %v6106 = vld [vmem:[%s6099 + $0x18] sm:$0xf]
      %v6107 = vld [vmem:[%s6099 + $0x1c] sm:$0xf]
      %6110 = vrot.lane.b32.xlu0 %v6011, 64
      %v6111 = vpop.permute.xlu0 %6110
      %6112 = vrot.lane.b32.xlu0 %v6013, 64
      %v6113 = vpop.permute.xlu0 %6112
      %v6114 = vsel %vm1065, %v6011, 0
      %v6116 = vsel %vm1065, %v6013, 0
      %v6118 = vsel %vm1065, %v6111, 0
      %v6120 = vsel %vm1065, %v6113, 0
      %6122 = vmatpush.xpose.msra.mxu0 0.0
      %6123 = vmatpush.xpose.msra.mxu0 0.0
      %6124 = vmatpush.xpose.msra.mxu0 0.0
      %6125 = vmatpush.xpose.msra.mxu0 0.0
      %6126 = vmatpush.xpose.msra.mxu0 0.0
      %6127 = vmatpush.xpose.msra.mxu0 0.0
      %6128 = vmatpush.xpose.msra.mxu0 0.0
      %6129 = vmatpush.xpose.msra.mxu0 0.0
      %6130 = vmatpush.xpose.msra.mxu0 0.0
      %6131 = vmatpush.xpose.msra.mxu0 0.0
      %6132 = vmatpush.xpose.msra.mxu0 0.0
      %6133 = vmatpush.xpose.msra.mxu0 0.0
      %6134 = vmatpush.xpose.msra.mxu0 0.0
      %6135 = vmatpush.xpose.msra.mxu0 0.0
      %6136 = vmatpush.xpose.msra.mxu0 %v6120
      %6137 = vmatpush.xpose.msra.mxu0 %v6118
      %6138 = vmatmul.f32.gmra.mxu0 %v6114
      %v6139 = vpop.f32.mrf.mxu0
      %v6140 = vadd.f32 0.0, %v6139
      %6141 = vmatmul.f32.gmra.mxu0 %v6116
      %v6142 = vpop.f32.mrf.mxu0
      %v6143 = vadd.f32 0.0, %v6142
      %6144 = vdwg.mxu0
      %6147 = vrot.lane.b32.xlu0 %v6016, 64
      %v6148 = vpop.permute.xlu0 %6147
      %6149 = vrot.lane.b32.xlu0 %v6018, 64
      %v6150 = vpop.permute.xlu0 %6149
      %v6151 = vsel %vm1065, %v6016, 0
      %v6153 = vsel %vm1065, %v6018, 0
      %v6155 = vsel %vm1065, %v6148, 0
      %v6157 = vsel %vm1065, %v6150, 0
      %6159 = vmatpush.xpose.msra.mxu0 0.0
      %6160 = vmatpush.xpose.msra.mxu0 0.0
      %6161 = vmatpush.xpose.msra.mxu0 0.0
      %6162 = vmatpush.xpose.msra.mxu0 0.0
      %6163 = vmatpush.xpose.msra.mxu0 0.0
      %6164 = vmatpush.xpose.msra.mxu0 0.0
      %6165 = vmatpush.xpose.msra.mxu0 0.0
      %6166 = vmatpush.xpose.msra.mxu0 0.0
      %6167 = vmatpush.xpose.msra.mxu0 0.0
      %6168 = vmatpush.xpose.msra.mxu0 0.0
      %6169 = vmatpush.xpose.msra.mxu0 0.0
      %6170 = vmatpush.xpose.msra.mxu0 0.0
      %6171 = vmatpush.xpose.msra.mxu0 0.0
      %6172 = vmatpush.xpose.msra.mxu0 0.0
      %6173 = vmatpush.xpose.msra.mxu0 %v6157
      %6174 = vmatpush.xpose.msra.mxu0 %v6155
      %6175 = vmatmul.f32.gmra.mxu0 %v6151
      %v6176 = vpop.f32.mrf.mxu0
      %v6177 = vadd.f32 0.0, %v6176
      %6178 = vmatmul.f32.gmra.mxu0 %v6153
      %v6179 = vpop.f32.mrf.mxu0
      %v6180 = vadd.f32 0.0, %v6179
      %6181 = vdwg.mxu0
      %6184 = vrot.lane.b32.xlu0 %v6021, 64
      %v6185 = vpop.permute.xlu0 %6184
      %6186 = vrot.lane.b32.xlu0 %v6023, 64
      %v6187 = vpop.permute.xlu0 %6186
      %v6188 = vsel %vm1065, %v6021, 0
      %v6190 = vsel %vm1065, %v6023, 0
      %v6192 = vsel %vm1065, %v6185, 0
      %v6194 = vsel %vm1065, %v6187, 0
      %6196 = vmatpush.xpose.msra.mxu0 0.0
      %6197 = vmatpush.xpose.msra.mxu0 0.0
      %6198 = vmatpush.xpose.msra.mxu0 0.0
      %6199 = vmatpush.xpose.msra.mxu0 0.0
      %6200 = vmatpush.xpose.msra.mxu0 0.0
      %6201 = vmatpush.xpose.msra.mxu0 0.0
      %6202 = vmatpush.xpose.msra.mxu0 0.0
      %6203 = vmatpush.xpose.msra.mxu0 0.0
      %6204 = vmatpush.xpose.msra.mxu0 0.0
      %6205 = vmatpush.xpose.msra.mxu0 0.0
      %6206 = vmatpush.xpose.msra.mxu0 0.0
      %6207 = vmatpush.xpose.msra.mxu0 0.0
      %6208 = vmatpush.xpose.msra.mxu0 0.0
      %6209 = vmatpush.xpose.msra.mxu0 0.0
      %6210 = vmatpush.xpose.msra.mxu0 %v6194
      %6211 = vmatpush.xpose.msra.mxu0 %v6192
      %6212 = vmatmul.f32.gmra.mxu0 %v6188
      %v6213 = vpop.f32.mrf.mxu0
      %v6214 = vadd.f32 0.0, %v6213
      %6215 = vmatmul.f32.gmra.mxu0 %v6190
      %v6216 = vpop.f32.mrf.mxu0
      %v6217 = vadd.f32 0.0, %v6216
      %6218 = vdwg.mxu0
      %6221 = vrot.lane.b32.xlu0 %v6026, 64
      %v6222 = vpop.permute.xlu0 %6221
      %6223 = vrot.lane.b32.xlu0 %v6028, 64
      %v6224 = vpop.permute.xlu0 %6223
      %v6225 = vsel %vm1065, %v6026, 0
      %v6227 = vsel %vm1065, %v6028, 0
      %v6229 = vsel %vm1065, %v6222, 0
      %v6231 = vsel %vm1065, %v6224, 0
      %6233 = vmatpush.xpose.msra.mxu0 0.0
      %6234 = vmatpush.xpose.msra.mxu0 0.0
      %6235 = vmatpush.xpose.msra.mxu0 0.0
      %6236 = vmatpush.xpose.msra.mxu0 0.0
      %6237 = vmatpush.xpose.msra.mxu0 0.0
      %6238 = vmatpush.xpose.msra.mxu0 0.0
      %6239 = vmatpush.xpose.msra.mxu0 0.0
      %6240 = vmatpush.xpose.msra.mxu0 0.0
      %6241 = vmatpush.xpose.msra.mxu0 0.0
      %6242 = vmatpush.xpose.msra.mxu0 0.0
      %6243 = vmatpush.xpose.msra.mxu0 0.0
      %6244 = vmatpush.xpose.msra.mxu0 0.0
      %6245 = vmatpush.xpose.msra.mxu0 0.0
      %6246 = vmatpush.xpose.msra.mxu0 0.0
      %6247 = vmatpush.xpose.msra.mxu0 %v6231
      %6248 = vmatpush.xpose.msra.mxu0 %v6229
      %6249 = vmatmul.f32.gmra.mxu0 %v6225
      %v6250 = vpop.f32.mrf.mxu0
      %v6251 = vadd.f32 0.0, %v6250
      %6252 = vmatmul.f32.gmra.mxu0 %v6227
      %v6253 = vpop.f32.mrf.mxu0
      %v6254 = vadd.f32 0.0, %v6253
      %6255 = vdwg.mxu0
      %6258 = vrot.lane.b32.xlu0 %v6031, 64
      %v6259 = vpop.permute.xlu0 %6258
      %6260 = vrot.lane.b32.xlu0 %v6033, 64
      %v6261 = vpop.permute.xlu0 %6260
      %v6262 = vsel %vm1065, %v6031, 0
      %v6264 = vsel %vm1065, %v6033, 0
      %v6266 = vsel %vm1065, %v6259, 0
      %v6268 = vsel %vm1065, %v6261, 0
      %6270 = vmatpush.xpose.msra.mxu0 0.0
      %6271 = vmatpush.xpose.msra.mxu0 0.0
      %6272 = vmatpush.xpose.msra.mxu0 0.0
      %6273 = vmatpush.xpose.msra.mxu0 0.0
      %6274 = vmatpush.xpose.msra.mxu0 0.0
      %6275 = vmatpush.xpose.msra.mxu0 0.0
      %6276 = vmatpush.xpose.msra.mxu0 0.0
      %6277 = vmatpush.xpose.msra.mxu0 0.0
      %6278 = vmatpush.xpose.msra.mxu0 0.0
      %6279 = vmatpush.xpose.msra.mxu0 0.0
      %6280 = vmatpush.xpose.msra.mxu0 0.0
      %6281 = vmatpush.xpose.msra.mxu0 0.0
      %6282 = vmatpush.xpose.msra.mxu0 0.0
      %6283 = vmatpush.xpose.msra.mxu0 0.0
      %6284 = vmatpush.xpose.msra.mxu0 %v6268
      %6285 = vmatpush.xpose.msra.mxu0 %v6266
      %6286 = vmatmul.f32.gmra.mxu0 %v6262
      %v6287 = vpop.f32.mrf.mxu0
      %v6288 = vadd.f32 0.0, %v6287
      %6289 = vmatmul.f32.gmra.mxu0 %v6264
      %v6290 = vpop.f32.mrf.mxu0
      %v6291 = vadd.f32 0.0, %v6290
      %6292 = vdwg.mxu0
      %6295 = vrot.lane.b32.xlu0 %v6036, 64
      %v6296 = vpop.permute.xlu0 %6295
      %6297 = vrot.lane.b32.xlu0 %v6038, 64
      %v6298 = vpop.permute.xlu0 %6297
      %v6299 = vsel %vm1065, %v6036, 0
      %v6301 = vsel %vm1065, %v6038, 0
      %v6303 = vsel %vm1065, %v6296, 0
      %v6305 = vsel %vm1065, %v6298, 0
      %6307 = vmatpush.xpose.msra.mxu0 0.0
      %6308 = vmatpush.xpose.msra.mxu0 0.0
      %6309 = vmatpush.xpose.msra.mxu0 0.0
      %6310 = vmatpush.xpose.msra.mxu0 0.0
      %6311 = vmatpush.xpose.msra.mxu0 0.0
      %6312 = vmatpush.xpose.msra.mxu0 0.0
      %6313 = vmatpush.xpose.msra.mxu0 0.0
      %6314 = vmatpush.xpose.msra.mxu0 0.0
      %6315 = vmatpush.xpose.msra.mxu0 0.0
      %6316 = vmatpush.xpose.msra.mxu0 0.0
      %6317 = vmatpush.xpose.msra.mxu0 0.0
      %6318 = vmatpush.xpose.msra.mxu0 0.0
      %6319 = vmatpush.xpose.msra.mxu0 0.0
      %6320 = vmatpush.xpose.msra.mxu0 0.0
      %6321 = vmatpush.xpose.msra.mxu0 %v6305
      %6322 = vmatpush.xpose.msra.mxu0 %v6303
      %6323 = vmatmul.f32.gmra.mxu0 %v6299
      %v6324 = vpop.f32.mrf.mxu0
      %v6325 = vadd.f32 0.0, %v6324
      %6326 = vmatmul.f32.gmra.mxu0 %v6301
      %v6327 = vpop.f32.mrf.mxu0
      %v6328 = vadd.f32 0.0, %v6327
      %6329 = vdwg.mxu0
      %6332 = vrot.lane.b32.xlu0 %v6041, 64
      %v6333 = vpop.permute.xlu0 %6332
      %6334 = vrot.lane.b32.xlu0 %v6043, 64
      %v6335 = vpop.permute.xlu0 %6334
      %v6336 = vsel %vm1065, %v6041, 0
      %v6338 = vsel %vm1065, %v6043, 0
      %v6340 = vsel %vm1065, %v6333, 0
      %v6342 = vsel %vm1065, %v6335, 0
      %6344 = vmatpush.xpose.msra.mxu0 0.0
      %6345 = vmatpush.xpose.msra.mxu0 0.0
      %6346 = vmatpush.xpose.msra.mxu0 0.0
      %6347 = vmatpush.xpose.msra.mxu0 0.0
      %6348 = vmatpush.xpose.msra.mxu0 0.0
      %6349 = vmatpush.xpose.msra.mxu0 0.0
      %6350 = vmatpush.xpose.msra.mxu0 0.0
      %6351 = vmatpush.xpose.msra.mxu0 0.0
      %6352 = vmatpush.xpose.msra.mxu0 0.0
      %6353 = vmatpush.xpose.msra.mxu0 0.0
      %6354 = vmatpush.xpose.msra.mxu0 0.0
      %6355 = vmatpush.xpose.msra.mxu0 0.0
      %6356 = vmatpush.xpose.msra.mxu0 0.0
      %6357 = vmatpush.xpose.msra.mxu0 0.0
      %6358 = vmatpush.xpose.msra.mxu0 %v6342
      %6359 = vmatpush.xpose.msra.mxu0 %v6340
      %6360 = vmatmul.f32.gmra.mxu0 %v6336
      %v6361 = vpop.f32.mrf.mxu0
      %v6362 = vadd.f32 0.0, %v6361
      %6363 = vmatmul.f32.gmra.mxu0 %v6338
      %v6364 = vpop.f32.mrf.mxu0
      %v6365 = vadd.f32 0.0, %v6364
      %6366 = vdwg.mxu0
      %6369 = vrot.lane.b32.xlu0 %v6046, 64
      %v6370 = vpop.permute.xlu0 %6369
      %6371 = vrot.lane.b32.xlu0 %v6048, 64
      %v6372 = vpop.permute.xlu0 %6371
      %v6373 = vsel %vm1065, %v6046, 0
      %v6375 = vsel %vm1065, %v6048, 0
      %v6377 = vsel %vm1065, %v6370, 0
      %v6379 = vsel %vm1065, %v6372, 0
      %6381 = vmatpush.xpose.msra.mxu0 0.0
      %6382 = vmatpush.xpose.msra.mxu0 0.0
      %6383 = vmatpush.xpose.msra.mxu0 0.0
      %6384 = vmatpush.xpose.msra.mxu0 0.0
      %6385 = vmatpush.xpose.msra.mxu0 0.0
      %6386 = vmatpush.xpose.msra.mxu0 0.0
      %6387 = vmatpush.xpose.msra.mxu0 0.0
      %6388 = vmatpush.xpose.msra.mxu0 0.0
      %6389 = vmatpush.xpose.msra.mxu0 0.0
      %6390 = vmatpush.xpose.msra.mxu0 0.0
      %6391 = vmatpush.xpose.msra.mxu0 0.0
      %6392 = vmatpush.xpose.msra.mxu0 0.0
      %6393 = vmatpush.xpose.msra.mxu0 0.0
      %6394 = vmatpush.xpose.msra.mxu0 0.0
      %6395 = vmatpush.xpose.msra.mxu0 %v6379
      %6396 = vmatpush.xpose.msra.mxu0 %v6377
      %6397 = vmatmul.f32.gmra.mxu0 %v6373
      %v6398 = vpop.f32.mrf.mxu0
      %v6399 = vadd.f32 0.0, %v6398
      %6400 = vmatmul.f32.gmra.mxu0 %v6375
      %v6401 = vpop.f32.mrf.mxu0
      %v6402 = vadd.f32 0.0, %v6401
      %6403 = vdwg.mxu0
      %v6404 = vmul.f32 %v6140, 0.25
      %v6405 = vmul.f32 %v6143, 0.25
      %v6406 = vmul.f32 %v6177, 0.25
      %v6407 = vmul.f32 %v6180, 0.25
      %v6408 = vmul.f32 %v6214, 0.25
      %v6409 = vmul.f32 %v6217, 0.25
      %v6410 = vmul.f32 %v6251, 0.25
      %v6411 = vmul.f32 %v6254, 0.25
      %v6412 = vmul.f32 %v6288, 0.25
      %v6413 = vmul.f32 %v6291, 0.25
      %v6414 = vmul.f32 %v6325, 0.25
      %v6415 = vmul.f32 %v6328, 0.25
      %v6416 = vmul.f32 %v6362, 0.25
      %v6417 = vmul.f32 %v6365, 0.25
      %v6418 = vmul.f32 %v6399, 0.25
      %v6419 = vmul.f32 %v6402, 0.25
      %v6420 = vadd.f32 %v6404, %v1372
      %v6421 = vadd.f32 %v6405, %v1372
      %v6422 = vadd.f32 %v6406, %v1373
      %v6423 = vadd.f32 %v6407, %v1373
      %v6424 = vadd.f32 %v6408, %v1374
      %v6425 = vadd.f32 %v6409, %v1374
      %v6426 = vadd.f32 %v6410, %v1375
      %v6427 = vadd.f32 %v6411, %v1375
      %v6428 = vadd.f32 %v6412, %v1376
      %v6429 = vadd.f32 %v6413, %v1376
      %v6430 = vadd.f32 %v6414, %v1377
      %v6431 = vadd.f32 %v6415, %v1377
      %v6432 = vadd.f32 %v6416, %v1378
      %v6433 = vadd.f32 %v6417, %v1378
      %v6434 = vadd.f32 %v6418, %v1379
      %v6435 = vadd.f32 %v6419, %v1379
      %v6436 = vsel %vm1065, %v6420, -inf
      %6437 = vmax.xlane.f32.xlu0 %v6436
      %v6438 = vpop.xlane.xlu0 %6437
      %v6439 = vsel %vm1065, %v6421, -inf
      %6440 = vmax.xlane.f32.xlu0 %v6439
      %v6441 = vpop.xlane.xlu0 %6440
      %v6442 = vsel %vm1065, %v6422, -inf
      %6443 = vmax.xlane.f32.xlu0 %v6442
      %v6444 = vpop.xlane.xlu0 %6443
      %v6445 = vsel %vm1065, %v6423, -inf
      %6446 = vmax.xlane.f32.xlu0 %v6445
      %v6447 = vpop.xlane.xlu0 %6446
      %v6448 = vsel %vm1065, %v6424, -inf
      %6449 = vmax.xlane.f32.xlu0 %v6448
      %v6450 = vpop.xlane.xlu0 %6449
      %v6451 = vsel %vm1065, %v6425, -inf
      %6452 = vmax.xlane.f32.xlu0 %v6451
      %v6453 = vpop.xlane.xlu0 %6452
      %v6454 = vsel %vm1065, %v6426, -inf
      %6455 = vmax.xlane.f32.xlu0 %v6454
      %v6456 = vpop.xlane.xlu0 %6455
      %v6457 = vsel %vm1065, %v6427, -inf
      %6458 = vmax.xlane.f32.xlu0 %v6457
      %v6459 = vpop.xlane.xlu0 %6458
      %v6460 = vsel %vm1065, %v6428, -inf
      %6461 = vmax.xlane.f32.xlu0 %v6460
      %v6462 = vpop.xlane.xlu0 %6461
      %v6463 = vsel %vm1065, %v6429, -inf
      %6464 = vmax.xlane.f32.xlu0 %v6463
      %v6465 = vpop.xlane.xlu0 %6464
      %v6466 = vsel %vm1065, %v6430, -inf
      %6467 = vmax.xlane.f32.xlu0 %v6466
      %v6468 = vpop.xlane.xlu0 %6467
      %v6469 = vsel %vm1065, %v6431, -inf
      %6470 = vmax.xlane.f32.xlu0 %v6469
      %v6471 = vpop.xlane.xlu0 %6470
      %v6472 = vsel %vm1065, %v6432, -inf
      %6473 = vmax.xlane.f32.xlu0 %v6472
      %v6474 = vpop.xlane.xlu0 %6473
      %v6475 = vsel %vm1065, %v6433, -inf
      %6476 = vmax.xlane.f32.xlu0 %v6475
      %v6477 = vpop.xlane.xlu0 %6476
      %v6478 = vsel %vm1065, %v6434, -inf
      %6479 = vmax.xlane.f32.xlu0 %v6478
      %v6480 = vpop.xlane.xlu0 %6479
      %v6481 = vsel %vm1065, %v6435, -inf
      %6482 = vmax.xlane.f32.xlu0 %v6481
      %v6483 = vpop.xlane.xlu0 %6482
      %v6484 = vsub.f32 %v6420, %v6438
      %v6485 = vsub.f32 %v6421, %v6441
      %v6486 = vsub.f32 %v6422, %v6444
      %v6487 = vsub.f32 %v6423, %v6447
      %v6488 = vsub.f32 %v6424, %v6450
      %v6489 = vsub.f32 %v6425, %v6453
      %v6490 = vsub.f32 %v6426, %v6456
      %v6491 = vsub.f32 %v6427, %v6459
      %v6492 = vsub.f32 %v6428, %v6462
      %v6493 = vsub.f32 %v6429, %v6465
      %v6494 = vsub.f32 %v6430, %v6468
      %v6495 = vsub.f32 %v6431, %v6471
      %v6496 = vsub.f32 %v6432, %v6474
      %v6497 = vsub.f32 %v6433, %v6477
      %v6498 = vsub.f32 %v6434, %v6480
      %v6499 = vsub.f32 %v6435, %v6483
      %v6500 = vmul.f32 %v6484, 1.442695
      %v6501 = vpow.pop %v6500
      %v6502 = vmul.f32 %v6485, 1.442695
      %v6503 = vpow.pop %v6502
      %v6504 = vmul.f32 %v6486, 1.442695
      %v6505 = vpow.pop %v6504
      %v6506 = vmul.f32 %v6487, 1.442695
      %v6507 = vpow.pop %v6506
      %v6508 = vmul.f32 %v6488, 1.442695
      %v6509 = vpow.pop %v6508
      %v6510 = vmul.f32 %v6489, 1.442695
      %v6511 = vpow.pop %v6510
      %v6512 = vmul.f32 %v6490, 1.442695
      %v6513 = vpow.pop %v6512
      %v6514 = vmul.f32 %v6491, 1.442695
      %v6515 = vpow.pop %v6514
      %v6516 = vmul.f32 %v6492, 1.442695
      %v6517 = vpow.pop %v6516
      %v6518 = vmul.f32 %v6493, 1.442695
      %v6519 = vpow.pop %v6518
      %v6520 = vmul.f32 %v6494, 1.442695
      %v6521 = vpow.pop %v6520
      %v6522 = vmul.f32 %v6495, 1.442695
      %v6523 = vpow.pop %v6522
      %v6524 = vmul.f32 %v6496, 1.442695
      %v6525 = vpow.pop %v6524
      %v6526 = vmul.f32 %v6497, 1.442695
      %v6527 = vpow.pop %v6526
      %v6528 = vmul.f32 %v6498, 1.442695
      %v6529 = vpow.pop %v6528
      %v6530 = vmul.f32 %v6499, 1.442695
      %v6531 = vpow.pop %v6530
      %v6532 = vsel %vm1065, %v6501, 0.0
      %6533 = vadd.xlane.f32.xlu0 %v6532
      %v6534 = vpop.xlane.xlu0 %6533
      %v6535 = vsel %vm1065, %v6503, 0.0
      %6536 = vadd.xlane.f32.xlu0 %v6535
      %v6537 = vpop.xlane.xlu0 %6536
      %v6538 = vsel %vm1065, %v6505, 0.0
      %6539 = vadd.xlane.f32.xlu0 %v6538
      %v6540 = vpop.xlane.xlu0 %6539
      %v6541 = vsel %vm1065, %v6507, 0.0
      %6542 = vadd.xlane.f32.xlu0 %v6541
      %v6543 = vpop.xlane.xlu0 %6542
      %v6544 = vsel %vm1065, %v6509, 0.0
      %6545 = vadd.xlane.f32.xlu0 %v6544
      %v6546 = vpop.xlane.xlu0 %6545
      %v6547 = vsel %vm1065, %v6511, 0.0
      %6548 = vadd.xlane.f32.xlu0 %v6547
      %v6549 = vpop.xlane.xlu0 %6548
      %v6550 = vsel %vm1065, %v6513, 0.0
      %6551 = vadd.xlane.f32.xlu0 %v6550
      %v6552 = vpop.xlane.xlu0 %6551
      %v6553 = vsel %vm1065, %v6515, 0.0
      %6554 = vadd.xlane.f32.xlu0 %v6553
      %v6555 = vpop.xlane.xlu0 %6554
      %v6556 = vsel %vm1065, %v6517, 0.0
      %6557 = vadd.xlane.f32.xlu0 %v6556
      %v6558 = vpop.xlane.xlu0 %6557
      %v6559 = vsel %vm1065, %v6519, 0.0
      %6560 = vadd.xlane.f32.xlu0 %v6559
      %v6561 = vpop.xlane.xlu0 %6560
      %v6562 = vsel %vm1065, %v6521, 0.0
      %6563 = vadd.xlane.f32.xlu0 %v6562
      %v6564 = vpop.xlane.xlu0 %6563
      %v6565 = vsel %vm1065, %v6523, 0.0
      %6566 = vadd.xlane.f32.xlu0 %v6565
      %v6567 = vpop.xlane.xlu0 %6566
      %v6568 = vsel %vm1065, %v6525, 0.0
      %6569 = vadd.xlane.f32.xlu0 %v6568
      %v6570 = vpop.xlane.xlu0 %6569
      %v6571 = vsel %vm1065, %v6527, 0.0
      %6572 = vadd.xlane.f32.xlu0 %v6571
      %v6573 = vpop.xlane.xlu0 %6572
      %v6574 = vsel %vm1065, %v6529, 0.0
      %6575 = vadd.xlane.f32.xlu0 %v6574
      %v6576 = vpop.xlane.xlu0 %6575
      %v6577 = vsel %vm1065, %v6531, 0.0
      %6578 = vadd.xlane.f32.xlu0 %v6577
      %v6579 = vpop.xlane.xlu0 %6578
      %v6580 = vrcp.pop %v6534
      %v6581 = vrcp.pop %v6537
      %v6582 = vrcp.pop %v6540
      %v6583 = vrcp.pop %v6543
      %v6584 = vrcp.pop %v6546
      %v6585 = vrcp.pop %v6549
      %v6586 = vrcp.pop %v6552
      %v6587 = vrcp.pop %v6555
      %v6588 = vrcp.pop %v6558
      %v6589 = vrcp.pop %v6561
      %v6590 = vrcp.pop %v6564
      %v6591 = vrcp.pop %v6567
      %v6592 = vrcp.pop %v6570
      %v6593 = vrcp.pop %v6573
      %v6594 = vrcp.pop %v6576
      %v6595 = vrcp.pop %v6579
      %v6596 = vmul.f32 %v6501, %v6580
      %v6597 = vmul.f32 %v6503, %v6581
      %v6598 = vmul.f32 %v6505, %v6582
      %v6599 = vmul.f32 %v6507, %v6583
      %v6600 = vmul.f32 %v6509, %v6584
      %v6601 = vmul.f32 %v6511, %v6585
      %v6602 = vmul.f32 %v6513, %v6586
      %v6603 = vmul.f32 %v6515, %v6587
      %v6604 = vmul.f32 %v6517, %v6588
      %v6605 = vmul.f32 %v6519, %v6589
      %v6606 = vmul.f32 %v6521, %v6590
      %v6607 = vmul.f32 %v6523, %v6591
      %v6608 = vmul.f32 %v6525, %v6592
      %v6609 = vmul.f32 %v6527, %v6593
      %v6610 = vmul.f32 %v6529, %v6594
      %v6611 = vmul.f32 %v6531, %v6595
      %v6613 = vsel %vm1065, %v6596, 0
      %v6616 = vsel %vm1065, %v6597, 0
      %6618 = vmatpush.msra.mxu0 0.0
      %6619 = vmatpush.msra.mxu0 0.0
      %6620 = vmatpush.msra.mxu0 0.0
      %6621 = vmatpush.msra.mxu0 0.0
      %6622 = vmatpush.msra.mxu0 0.0
      %6623 = vmatpush.msra.mxu0 0.0
      %6624 = vmatpush.msra.mxu0 0.0
      %6625 = vmatpush.msra.mxu0 0.0
      %6626 = vmatpush.msra.mxu0 0.0
      %6627 = vmatpush.msra.mxu0 0.0
      %6628 = vmatpush.msra.mxu0 0.0
      %6629 = vmatpush.msra.mxu0 0.0
      %6630 = vmatpush.msra.mxu0 0.0
      %6631 = vmatpush.msra.mxu0 0.0
      %6632 = vmatpush.msra.mxu0 %v6062
      %6633 = vmatpush.msra.mxu0 %v6060
      %6634 = vmatmul.f32.gmra.mxu0 %v6613
      %v6635 = vpop.f32.mrf.mxu0
      %v6636 = vadd.f32 0.0, %v6635
      %6637 = vmatmul.f32.gmra.mxu0 %v6616
      %v6638 = vpop.f32.mrf.mxu0
      %v6639 = vadd.f32 0.0, %v6638
      %6640 = vdwg.mxu0
      %v6642 = vsel %vm1065, %v6598, 0
      %v6645 = vsel %vm1065, %v6599, 0
      %6647 = vmatpush.msra.mxu0 0.0
      %6648 = vmatpush.msra.mxu0 0.0
      %6649 = vmatpush.msra.mxu0 0.0
      %6650 = vmatpush.msra.mxu0 0.0
      %6651 = vmatpush.msra.mxu0 0.0
      %6652 = vmatpush.msra.mxu0 0.0
      %6653 = vmatpush.msra.mxu0 0.0
      %6654 = vmatpush.msra.mxu0 0.0
      %6655 = vmatpush.msra.mxu0 0.0
      %6656 = vmatpush.msra.mxu0 0.0
      %6657 = vmatpush.msra.mxu0 0.0
      %6658 = vmatpush.msra.mxu0 0.0
      %6659 = vmatpush.msra.mxu0 0.0
      %6660 = vmatpush.msra.mxu0 0.0
      %6661 = vmatpush.msra.mxu0 %v6067
      %6662 = vmatpush.msra.mxu0 %v6065
      %6663 = vmatmul.f32.gmra.mxu0 %v6642
      %v6664 = vpop.f32.mrf.mxu0
      %v6665 = vadd.f32 0.0, %v6664
      %6666 = vmatmul.f32.gmra.mxu0 %v6645
      %v6667 = vpop.f32.mrf.mxu0
      %v6668 = vadd.f32 0.0, %v6667
      %6669 = vdwg.mxu0
      %v6671 = vsel %vm1065, %v6600, 0
      %v6674 = vsel %vm1065, %v6601, 0
      %6676 = vmatpush.msra.mxu0 0.0
      %6677 = vmatpush.msra.mxu0 0.0
      %6678 = vmatpush.msra.mxu0 0.0
      %6679 = vmatpush.msra.mxu0 0.0
      %6680 = vmatpush.msra.mxu0 0.0
      %6681 = vmatpush.msra.mxu0 0.0
      %6682 = vmatpush.msra.mxu0 0.0
      %6683 = vmatpush.msra.mxu0 0.0
      %6684 = vmatpush.msra.mxu0 0.0
      %6685 = vmatpush.msra.mxu0 0.0
      %6686 = vmatpush.msra.mxu0 0.0
      %6687 = vmatpush.msra.mxu0 0.0
      %6688 = vmatpush.msra.mxu0 0.0
      %6689 = vmatpush.msra.mxu0 0.0
      %6690 = vmatpush.msra.mxu0 %v6072
      %6691 = vmatpush.msra.mxu0 %v6070
      %6692 = vmatmul.f32.gmra.mxu0 %v6671
      %v6693 = vpop.f32.mrf.mxu0
      %v6694 = vadd.f32 0.0, %v6693
      %6695 = vmatmul.f32.gmra.mxu0 %v6674
      %v6696 = vpop.f32.mrf.mxu0
      %v6697 = vadd.f32 0.0, %v6696
      %6698 = vdwg.mxu0
      %v6700 = vsel %vm1065, %v6602, 0
      %v6703 = vsel %vm1065, %v6603, 0
      %6705 = vmatpush.msra.mxu0 0.0
      %6706 = vmatpush.msra.mxu0 0.0
      %6707 = vmatpush.msra.mxu0 0.0
      %6708 = vmatpush.msra.mxu0 0.0
      %6709 = vmatpush.msra.mxu0 0.0
      %6710 = vmatpush.msra.mxu0 0.0
      %6711 = vmatpush.msra.mxu0 0.0
      %6712 = vmatpush.msra.mxu0 0.0
      %6713 = vmatpush.msra.mxu0 0.0
      %6714 = vmatpush.msra.mxu0 0.0
      %6715 = vmatpush.msra.mxu0 0.0
      %6716 = vmatpush.msra.mxu0 0.0
      %6717 = vmatpush.msra.mxu0 0.0
      %6718 = vmatpush.msra.mxu0 0.0
      %6719 = vmatpush.msra.mxu0 %v6077
      %6720 = vmatpush.msra.mxu0 %v6075
      %6721 = vmatmul.f32.gmra.mxu0 %v6700
      %v6722 = vpop.f32.mrf.mxu0
      %v6723 = vadd.f32 0.0, %v6722
      %6724 = vmatmul.f32.gmra.mxu0 %v6703
      %v6725 = vpop.f32.mrf.mxu0
      %v6726 = vadd.f32 0.0, %v6725
      %6727 = vdwg.mxu0
      %v6729 = vsel %vm1065, %v6604, 0
      %v6732 = vsel %vm1065, %v6605, 0
      %6734 = vmatpush.msra.mxu0 0.0
      %6735 = vmatpush.msra.mxu0 0.0
      %6736 = vmatpush.msra.mxu0 0.0
      %6737 = vmatpush.msra.mxu0 0.0
      %6738 = vmatpush.msra.mxu0 0.0
      %6739 = vmatpush.msra.mxu0 0.0
      %6740 = vmatpush.msra.mxu0 0.0
      %6741 = vmatpush.msra.mxu0 0.0
      %6742 = vmatpush.msra.mxu0 0.0
      %6743 = vmatpush.msra.mxu0 0.0
      %6744 = vmatpush.msra.mxu0 0.0
      %6745 = vmatpush.msra.mxu0 0.0
      %6746 = vmatpush.msra.mxu0 0.0
      %6747 = vmatpush.msra.mxu0 0.0
      %6748 = vmatpush.msra.mxu0 %v6082
      %6749 = vmatpush.msra.mxu0 %v6080
      %6750 = vmatmul.f32.gmra.mxu0 %v6729
      %v6751 = vpop.f32.mrf.mxu0
      %v6752 = vadd.f32 0.0, %v6751
      %6753 = vmatmul.f32.gmra.mxu0 %v6732
      %v6754 = vpop.f32.mrf.mxu0
      %v6755 = vadd.f32 0.0, %v6754
      %6756 = vdwg.mxu0
      %v6758 = vsel %vm1065, %v6606, 0
      %v6761 = vsel %vm1065, %v6607, 0
      %6763 = vmatpush.msra.mxu0 0.0
      %6764 = vmatpush.msra.mxu0 0.0
      %6765 = vmatpush.msra.mxu0 0.0
      %6766 = vmatpush.msra.mxu0 0.0
      %6767 = vmatpush.msra.mxu0 0.0
      %6768 = vmatpush.msra.mxu0 0.0
      %6769 = vmatpush.msra.mxu0 0.0
      %6770 = vmatpush.msra.mxu0 0.0
      %6771 = vmatpush.msra.mxu0 0.0
      %6772 = vmatpush.msra.mxu0 0.0
      %6773 = vmatpush.msra.mxu0 0.0
      %6774 = vmatpush.msra.mxu0 0.0
      %6775 = vmatpush.msra.mxu0 0.0
      %6776 = vmatpush.msra.mxu0 0.0
      %6777 = vmatpush.msra.mxu0 %v6087
      %6778 = vmatpush.msra.mxu0 %v6085
      %6779 = vmatmul.f32.gmra.mxu0 %v6758
      %v6780 = vpop.f32.mrf.mxu0
      %v6781 = vadd.f32 0.0, %v6780
      %6782 = vmatmul.f32.gmra.mxu0 %v6761
      %v6783 = vpop.f32.mrf.mxu0
      %v6784 = vadd.f32 0.0, %v6783
      %6785 = vdwg.mxu0
      %v6787 = vsel %vm1065, %v6608, 0
      %v6790 = vsel %vm1065, %v6609, 0
      %6792 = vmatpush.msra.mxu0 0.0
      %6793 = vmatpush.msra.mxu0 0.0
      %6794 = vmatpush.msra.mxu0 0.0
      %6795 = vmatpush.msra.mxu0 0.0
      %6796 = vmatpush.msra.mxu0 0.0
      %6797 = vmatpush.msra.mxu0 0.0
      %6798 = vmatpush.msra.mxu0 0.0
      %6799 = vmatpush.msra.mxu0 0.0
      %6800 = vmatpush.msra.mxu0 0.0
      %6801 = vmatpush.msra.mxu0 0.0
      %6802 = vmatpush.msra.mxu0 0.0
      %6803 = vmatpush.msra.mxu0 0.0
      %6804 = vmatpush.msra.mxu0 0.0
      %6805 = vmatpush.msra.mxu0 0.0
      %6806 = vmatpush.msra.mxu0 %v6092
      %6807 = vmatpush.msra.mxu0 %v6090
      %6808 = vmatmul.f32.gmra.mxu0 %v6787
      %v6809 = vpop.f32.mrf.mxu0
      %v6810 = vadd.f32 0.0, %v6809
      %6811 = vmatmul.f32.gmra.mxu0 %v6790
      %v6812 = vpop.f32.mrf.mxu0
      %v6813 = vadd.f32 0.0, %v6812
      %6814 = vdwg.mxu0
      %v6816 = vsel %vm1065, %v6610, 0
      %v6819 = vsel %vm1065, %v6611, 0
      %6821 = vmatpush.msra.mxu0 0.0
      %6822 = vmatpush.msra.mxu0 0.0
      %6823 = vmatpush.msra.mxu0 0.0
      %6824 = vmatpush.msra.mxu0 0.0
      %6825 = vmatpush.msra.mxu0 0.0
      %6826 = vmatpush.msra.mxu0 0.0
      %6827 = vmatpush.msra.mxu0 0.0
      %6828 = vmatpush.msra.mxu0 0.0
      %6829 = vmatpush.msra.mxu0 0.0
      %6830 = vmatpush.msra.mxu0 0.0
      %6831 = vmatpush.msra.mxu0 0.0
      %6832 = vmatpush.msra.mxu0 0.0
      %6833 = vmatpush.msra.mxu0 0.0
      %6834 = vmatpush.msra.mxu0 0.0
      %6835 = vmatpush.msra.mxu0 %v6097
      %6836 = vmatpush.msra.mxu0 %v6095
      %6837 = vmatmul.f32.gmra.mxu0 %v6816
      %v6838 = vpop.f32.mrf.mxu0
      %v6839 = vadd.f32 0.0, %v6838
      %6840 = vmatmul.f32.gmra.mxu0 %v6819
      %v6841 = vpop.f32.mrf.mxu0
      %v6842 = vadd.f32 0.0, %v6841
      %6843 = vdwg.mxu0
      %v6844 = vpack.c.bf16 %v6639, %v6636
      %v6845 = vpack.c.bf16 %v6668, %v6665
      %v6846 = vpack.c.bf16 %v6697, %v6694
      %v6847 = vpack.c.bf16 %v6726, %v6723
      %v6848 = vpack.c.bf16 %v6755, %v6752
      %v6849 = vpack.c.bf16 %v6784, %v6781
      %v6850 = vpack.c.bf16 %v6813, %v6810
      %v6851 = vpack.c.bf16 %v6842, %v6839
      %6852 = vrot.lane.b32.xlu0 %v6011, 112
      %v6853 = vpop.permute.xlu0 %6852
      %6854 = vrot.lane.b32.xlu0 %v6013, 112
      %v6855 = vpop.permute.xlu0 %6854
      %6856 = vrot.lane.b32.xlu0 %v6011, 48
      %v6857 = vpop.permute.xlu0 %6856
      %6858 = vrot.lane.b32.xlu0 %v6013, 48
      %v6859 = vpop.permute.xlu0 %6858
      %v6860 = vsel %vm1065, %v6853, 0
      %v6862 = vsel %vm1065, %v6855, 0
      %v6864 = vsel %vm1065, %v6857, 0
      %v6866 = vsel %vm1065, %v6859, 0
      %6868 = vmatpush.xpose.msra.mxu0 0.0
      %6869 = vmatpush.xpose.msra.mxu0 0.0
      %6870 = vmatpush.xpose.msra.mxu0 0.0
      %6871 = vmatpush.xpose.msra.mxu0 0.0
      %6872 = vmatpush.xpose.msra.mxu0 0.0
      %6873 = vmatpush.xpose.msra.mxu0 0.0
      %6874 = vmatpush.xpose.msra.mxu0 0.0
      %6875 = vmatpush.xpose.msra.mxu0 0.0
      %6876 = vmatpush.xpose.msra.mxu0 0.0
      %6877 = vmatpush.xpose.msra.mxu0 0.0
      %6878 = vmatpush.xpose.msra.mxu0 0.0
      %6879 = vmatpush.xpose.msra.mxu0 0.0
      %6880 = vmatpush.xpose.msra.mxu0 0.0
      %6881 = vmatpush.xpose.msra.mxu0 0.0
      %6882 = vmatpush.xpose.msra.mxu0 %v6866
      %6883 = vmatpush.xpose.msra.mxu0 %v6864
      %6884 = vmatmul.f32.gmra.mxu0 %v6860
      %v6885 = vpop.f32.mrf.mxu0
      %v6886 = vadd.f32 0.0, %v6885
      %6887 = vmatmul.f32.gmra.mxu0 %v6862
      %v6888 = vpop.f32.mrf.mxu0
      %v6889 = vadd.f32 0.0, %v6888
      %6890 = vdwg.mxu0
      %6891 = vrot.lane.b32.xlu0 %v6016, 112
      %v6892 = vpop.permute.xlu0 %6891
      %6893 = vrot.lane.b32.xlu0 %v6018, 112
      %v6894 = vpop.permute.xlu0 %6893
      %6895 = vrot.lane.b32.xlu0 %v6016, 48
      %v6896 = vpop.permute.xlu0 %6895
      %6897 = vrot.lane.b32.xlu0 %v6018, 48
      %v6898 = vpop.permute.xlu0 %6897
      %v6899 = vsel %vm1065, %v6892, 0
      %v6901 = vsel %vm1065, %v6894, 0
      %v6903 = vsel %vm1065, %v6896, 0
      %v6905 = vsel %vm1065, %v6898, 0
      %6907 = vmatpush.xpose.msra.mxu0 0.0
      %6908 = vmatpush.xpose.msra.mxu0 0.0
      %6909 = vmatpush.xpose.msra.mxu0 0.0
      %6910 = vmatpush.xpose.msra.mxu0 0.0
      %6911 = vmatpush.xpose.msra.mxu0 0.0
      %6912 = vmatpush.xpose.msra.mxu0 0.0
      %6913 = vmatpush.xpose.msra.mxu0 0.0
      %6914 = vmatpush.xpose.msra.mxu0 0.0
      %6915 = vmatpush.xpose.msra.mxu0 0.0
      %6916 = vmatpush.xpose.msra.mxu0 0.0
      %6917 = vmatpush.xpose.msra.mxu0 0.0
      %6918 = vmatpush.xpose.msra.mxu0 0.0
      %6919 = vmatpush.xpose.msra.mxu0 0.0
      %6920 = vmatpush.xpose.msra.mxu0 0.0
      %6921 = vmatpush.xpose.msra.mxu0 %v6905
      %6922 = vmatpush.xpose.msra.mxu0 %v6903
      %6923 = vmatmul.f32.gmra.mxu0 %v6899
      %v6924 = vpop.f32.mrf.mxu0
      %v6925 = vadd.f32 0.0, %v6924
      %6926 = vmatmul.f32.gmra.mxu0 %v6901
      %v6927 = vpop.f32.mrf.mxu0
      %v6928 = vadd.f32 0.0, %v6927
      %6929 = vdwg.mxu0
      %6930 = vrot.lane.b32.xlu0 %v6021, 112
      %v6931 = vpop.permute.xlu0 %6930
      %6932 = vrot.lane.b32.xlu0 %v6023, 112
      %v6933 = vpop.permute.xlu0 %6932
      %6934 = vrot.lane.b32.xlu0 %v6021, 48
      %v6935 = vpop.permute.xlu0 %6934
      %6936 = vrot.lane.b32.xlu0 %v6023, 48
      %v6937 = vpop.permute.xlu0 %6936
      %v6938 = vsel %vm1065, %v6931, 0
      %v6940 = vsel %vm1065, %v6933, 0
      %v6942 = vsel %vm1065, %v6935, 0
      %v6944 = vsel %vm1065, %v6937, 0
      %6946 = vmatpush.xpose.msra.mxu0 0.0
      %6947 = vmatpush.xpose.msra.mxu0 0.0
      %6948 = vmatpush.xpose.msra.mxu0 0.0
      %6949 = vmatpush.xpose.msra.mxu0 0.0
      %6950 = vmatpush.xpose.msra.mxu0 0.0
      %6951 = vmatpush.xpose.msra.mxu0 0.0
      %6952 = vmatpush.xpose.msra.mxu0 0.0
      %6953 = vmatpush.xpose.msra.mxu0 0.0
      %6954 = vmatpush.xpose.msra.mxu0 0.0
      %6955 = vmatpush.xpose.msra.mxu0 0.0
      %6956 = vmatpush.xpose.msra.mxu0 0.0
      %6957 = vmatpush.xpose.msra.mxu0 0.0
      %6958 = vmatpush.xpose.msra.mxu0 0.0
      %6959 = vmatpush.xpose.msra.mxu0 0.0
      %6960 = vmatpush.xpose.msra.mxu0 %v6944
      %6961 = vmatpush.xpose.msra.mxu0 %v6942
      %6962 = vmatmul.f32.gmra.mxu0 %v6938
      %v6963 = vpop.f32.mrf.mxu0
      %v6964 = vadd.f32 0.0, %v6963
      %6965 = vmatmul.f32.gmra.mxu0 %v6940
      %v6966 = vpop.f32.mrf.mxu0
      %v6967 = vadd.f32 0.0, %v6966
      %6968 = vdwg.mxu0
      %6969 = vrot.lane.b32.xlu0 %v6026, 112
      %v6970 = vpop.permute.xlu0 %6969
      %6971 = vrot.lane.b32.xlu0 %v6028, 112
      %v6972 = vpop.permute.xlu0 %6971
      %6973 = vrot.lane.b32.xlu0 %v6026, 48
      %v6974 = vpop.permute.xlu0 %6973
      %6975 = vrot.lane.b32.xlu0 %v6028, 48
      %v6976 = vpop.permute.xlu0 %6975
      %v6977 = vsel %vm1065, %v6970, 0
      %v6979 = vsel %vm1065, %v6972, 0
      %v6981 = vsel %vm1065, %v6974, 0
      %v6983 = vsel %vm1065, %v6976, 0
      %6985 = vmatpush.xpose.msra.mxu0 0.0
      %6986 = vmatpush.xpose.msra.mxu0 0.0
      %6987 = vmatpush.xpose.msra.mxu0 0.0
      %6988 = vmatpush.xpose.msra.mxu0 0.0
      %6989 = vmatpush.xpose.msra.mxu0 0.0
      %6990 = vmatpush.xpose.msra.mxu0 0.0
      %6991 = vmatpush.xpose.msra.mxu0 0.0
      %6992 = vmatpush.xpose.msra.mxu0 0.0
      %6993 = vmatpush.xpose.msra.mxu0 0.0
      %6994 = vmatpush.xpose.msra.mxu0 0.0
      %6995 = vmatpush.xpose.msra.mxu0 0.0
      %6996 = vmatpush.xpose.msra.mxu0 0.0
      %6997 = vmatpush.xpose.msra.mxu0 0.0
      %6998 = vmatpush.xpose.msra.mxu0 0.0
      %6999 = vmatpush.xpose.msra.mxu0 %v6983
      %7000 = vmatpush.xpose.msra.mxu0 %v6981
      %7001 = vmatmul.f32.gmra.mxu0 %v6977
      %v7002 = vpop.f32.mrf.mxu0
      %v7003 = vadd.f32 0.0, %v7002
      %7004 = vmatmul.f32.gmra.mxu0 %v6979
      %v7005 = vpop.f32.mrf.mxu0
      %v7006 = vadd.f32 0.0, %v7005
      %7007 = vdwg.mxu0
      %7008 = vrot.lane.b32.xlu0 %v6031, 112
      %v7009 = vpop.permute.xlu0 %7008
      %7010 = vrot.lane.b32.xlu0 %v6033, 112
      %v7011 = vpop.permute.xlu0 %7010
      %7012 = vrot.lane.b32.xlu0 %v6031, 48
      %v7013 = vpop.permute.xlu0 %7012
      %7014 = vrot.lane.b32.xlu0 %v6033, 48
      %v7015 = vpop.permute.xlu0 %7014
      %v7016 = vsel %vm1065, %v7009, 0
      %v7018 = vsel %vm1065, %v7011, 0
      %v7020 = vsel %vm1065, %v7013, 0
      %v7022 = vsel %vm1065, %v7015, 0
      %7024 = vmatpush.xpose.msra.mxu0 0.0
      %7025 = vmatpush.xpose.msra.mxu0 0.0
      %7026 = vmatpush.xpose.msra.mxu0 0.0
      %7027 = vmatpush.xpose.msra.mxu0 0.0
      %7028 = vmatpush.xpose.msra.mxu0 0.0
      %7029 = vmatpush.xpose.msra.mxu0 0.0
      %7030 = vmatpush.xpose.msra.mxu0 0.0
      %7031 = vmatpush.xpose.msra.mxu0 0.0
      %7032 = vmatpush.xpose.msra.mxu0 0.0
      %7033 = vmatpush.xpose.msra.mxu0 0.0
      %7034 = vmatpush.xpose.msra.mxu0 0.0
      %7035 = vmatpush.xpose.msra.mxu0 0.0
      %7036 = vmatpush.xpose.msra.mxu0 0.0
      %7037 = vmatpush.xpose.msra.mxu0 0.0
      %7038 = vmatpush.xpose.msra.mxu0 %v7022
      %7039 = vmatpush.xpose.msra.mxu0 %v7020
      %7040 = vmatmul.f32.gmra.mxu0 %v7016
      %v7041 = vpop.f32.mrf.mxu0
      %v7042 = vadd.f32 0.0, %v7041
      %7043 = vmatmul.f32.gmra.mxu0 %v7018
      %v7044 = vpop.f32.mrf.mxu0
      %v7045 = vadd.f32 0.0, %v7044
      %7046 = vdwg.mxu0
      %7047 = vrot.lane.b32.xlu0 %v6036, 112
      %v7048 = vpop.permute.xlu0 %7047
      %7049 = vrot.lane.b32.xlu0 %v6038, 112
      %v7050 = vpop.permute.xlu0 %7049
      %7051 = vrot.lane.b32.xlu0 %v6036, 48
      %v7052 = vpop.permute.xlu0 %7051
      %7053 = vrot.lane.b32.xlu0 %v6038, 48
      %v7054 = vpop.permute.xlu0 %7053
      %v7055 = vsel %vm1065, %v7048, 0
      %v7057 = vsel %vm1065, %v7050, 0
      %v7059 = vsel %vm1065, %v7052, 0
      %v7061 = vsel %vm1065, %v7054, 0
      %7063 = vmatpush.xpose.msra.mxu0 0.0
      %7064 = vmatpush.xpose.msra.mxu0 0.0
      %7065 = vmatpush.xpose.msra.mxu0 0.0
      %7066 = vmatpush.xpose.msra.mxu0 0.0
      %7067 = vmatpush.xpose.msra.mxu0 0.0
      %7068 = vmatpush.xpose.msra.mxu0 0.0
      %7069 = vmatpush.xpose.msra.mxu0 0.0
      %7070 = vmatpush.xpose.msra.mxu0 0.0
      %7071 = vmatpush.xpose.msra.mxu0 0.0
      %7072 = vmatpush.xpose.msra.mxu0 0.0
      %7073 = vmatpush.xpose.msra.mxu0 0.0
      %7074 = vmatpush.xpose.msra.mxu0 0.0
      %7075 = vmatpush.xpose.msra.mxu0 0.0
      %7076 = vmatpush.xpose.msra.mxu0 0.0
      %7077 = vmatpush.xpose.msra.mxu0 %v7061
      %7078 = vmatpush.xpose.msra.mxu0 %v7059
      %7079 = vmatmul.f32.gmra.mxu0 %v7055
      %v7080 = vpop.f32.mrf.mxu0
      %v7081 = vadd.f32 0.0, %v7080
      %7082 = vmatmul.f32.gmra.mxu0 %v7057
      %v7083 = vpop.f32.mrf.mxu0
      %v7084 = vadd.f32 0.0, %v7083
      %7085 = vdwg.mxu0
      %7086 = vrot.lane.b32.xlu0 %v6041, 112
      %v7087 = vpop.permute.xlu0 %7086
      %7088 = vrot.lane.b32.xlu0 %v6043, 112
      %v7089 = vpop.permute.xlu0 %7088
      %7090 = vrot.lane.b32.xlu0 %v6041, 48
      %v7091 = vpop.permute.xlu0 %7090
      %7092 = vrot.lane.b32.xlu0 %v6043, 48
      %v7093 = vpop.permute.xlu0 %7092
      %v7094 = vsel %vm1065, %v7087, 0
      %v7096 = vsel %vm1065, %v7089, 0
      %v7098 = vsel %vm1065, %v7091, 0
      %v7100 = vsel %vm1065, %v7093, 0
      %7102 = vmatpush.xpose.msra.mxu0 0.0
      %7103 = vmatpush.xpose.msra.mxu0 0.0
      %7104 = vmatpush.xpose.msra.mxu0 0.0
      %7105 = vmatpush.xpose.msra.mxu0 0.0
      %7106 = vmatpush.xpose.msra.mxu0 0.0
      %7107 = vmatpush.xpose.msra.mxu0 0.0
      %7108 = vmatpush.xpose.msra.mxu0 0.0
      %7109 = vmatpush.xpose.msra.mxu0 0.0
      %7110 = vmatpush.xpose.msra.mxu0 0.0
      %7111 = vmatpush.xpose.msra.mxu0 0.0
      %7112 = vmatpush.xpose.msra.mxu0 0.0
      %7113 = vmatpush.xpose.msra.mxu0 0.0
      %7114 = vmatpush.xpose.msra.mxu0 0.0
      %7115 = vmatpush.xpose.msra.mxu0 0.0
      %7116 = vmatpush.xpose.msra.mxu0 %v7100
      %7117 = vmatpush.xpose.msra.mxu0 %v7098
      %7118 = vmatmul.f32.gmra.mxu0 %v7094
      %v7119 = vpop.f32.mrf.mxu0
      %v7120 = vadd.f32 0.0, %v7119
      %7121 = vmatmul.f32.gmra.mxu0 %v7096
      %v7122 = vpop.f32.mrf.mxu0
      %v7123 = vadd.f32 0.0, %v7122
      %7124 = vdwg.mxu0
      %7125 = vrot.lane.b32.xlu0 %v6046, 112
      %v7126 = vpop.permute.xlu0 %7125
      %7127 = vrot.lane.b32.xlu0 %v6048, 112
      %v7128 = vpop.permute.xlu0 %7127
      %7129 = vrot.lane.b32.xlu0 %v6046, 48
      %v7130 = vpop.permute.xlu0 %7129
      %7131 = vrot.lane.b32.xlu0 %v6048, 48
      %v7132 = vpop.permute.xlu0 %7131
      %v7133 = vsel %vm1065, %v7126, 0
      %v7135 = vsel %vm1065, %v7128, 0
      %v7137 = vsel %vm1065, %v7130, 0
      %v7139 = vsel %vm1065, %v7132, 0
      %7141 = vmatpush.xpose.msra.mxu0 0.0
      %7142 = vmatpush.xpose.msra.mxu0 0.0
      %7143 = vmatpush.xpose.msra.mxu0 0.0
      %7144 = vmatpush.xpose.msra.mxu0 0.0
      %7145 = vmatpush.xpose.msra.mxu0 0.0
      %7146 = vmatpush.xpose.msra.mxu0 0.0
      %7147 = vmatpush.xpose.msra.mxu0 0.0
      %7148 = vmatpush.xpose.msra.mxu0 0.0
      %7149 = vmatpush.xpose.msra.mxu0 0.0
      %7150 = vmatpush.xpose.msra.mxu0 0.0
      %7151 = vmatpush.xpose.msra.mxu0 0.0
      %7152 = vmatpush.xpose.msra.mxu0 0.0
      %7153 = vmatpush.xpose.msra.mxu0 0.0
      %7154 = vmatpush.xpose.msra.mxu0 0.0
      %7155 = vmatpush.xpose.msra.mxu0 %v7139
      %7156 = vmatpush.xpose.msra.mxu0 %v7137
      %7157 = vmatmul.f32.gmra.mxu0 %v7133
      %v7158 = vpop.f32.mrf.mxu0
      %v7159 = vadd.f32 0.0, %v7158
      %7160 = vmatmul.f32.gmra.mxu0 %v7135
      %v7161 = vpop.f32.mrf.mxu0
      %v7162 = vadd.f32 0.0, %v7161
      %7163 = vdwg.mxu0
      %v7164 = vmul.f32 %v6886, 0.25
      %v7165 = vmul.f32 %v6889, 0.25
      %v7166 = vmul.f32 %v6925, 0.25
      %v7167 = vmul.f32 %v6928, 0.25
      %v7168 = vmul.f32 %v6964, 0.25
      %v7169 = vmul.f32 %v6967, 0.25
      %v7170 = vmul.f32 %v7003, 0.25
      %v7171 = vmul.f32 %v7006, 0.25
      %v7172 = vmul.f32 %v7042, 0.25
      %v7173 = vmul.f32 %v7045, 0.25
      %v7174 = vmul.f32 %v7081, 0.25
      %v7175 = vmul.f32 %v7084, 0.25
      %v7176 = vmul.f32 %v7120, 0.25
      %v7177 = vmul.f32 %v7123, 0.25
      %v7178 = vmul.f32 %v7159, 0.25
      %v7179 = vmul.f32 %v7162, 0.25
      %v7180 = vadd.f32 %v7164, %v1372
      %v7181 = vadd.f32 %v7165, %v1372
      %v7182 = vadd.f32 %v7166, %v1373
      %v7183 = vadd.f32 %v7167, %v1373
      %v7184 = vadd.f32 %v7168, %v1374
      %v7185 = vadd.f32 %v7169, %v1374
      %v7186 = vadd.f32 %v7170, %v1375
      %v7187 = vadd.f32 %v7171, %v1375
      %v7188 = vadd.f32 %v7172, %v1376
      %v7189 = vadd.f32 %v7173, %v1376
      %v7190 = vadd.f32 %v7174, %v1377
      %v7191 = vadd.f32 %v7175, %v1377
      %v7192 = vadd.f32 %v7176, %v1378
      %v7193 = vadd.f32 %v7177, %v1378
      %v7194 = vadd.f32 %v7178, %v1379
      %v7195 = vadd.f32 %v7179, %v1379
      %v7196 = vsel %vm1065, %v7180, -inf
      %7197 = vmax.xlane.f32.xlu0 %v7196
      %v7198 = vpop.xlane.xlu0 %7197
      %v7199 = vsel %vm1065, %v7181, -inf
      %7200 = vmax.xlane.f32.xlu0 %v7199
      %v7201 = vpop.xlane.xlu0 %7200
      %v7202 = vsel %vm1065, %v7182, -inf
      %7203 = vmax.xlane.f32.xlu0 %v7202
      %v7204 = vpop.xlane.xlu0 %7203
      %v7205 = vsel %vm1065, %v7183, -inf
      %7206 = vmax.xlane.f32.xlu0 %v7205
      %v7207 = vpop.xlane.xlu0 %7206
      %v7208 = vsel %vm1065, %v7184, -inf
      %7209 = vmax.xlane.f32.xlu0 %v7208
      %v7210 = vpop.xlane.xlu0 %7209
      %v7211 = vsel %vm1065, %v7185, -inf
      %7212 = vmax.xlane.f32.xlu0 %v7211
      %v7213 = vpop.xlane.xlu0 %7212
      %v7214 = vsel %vm1065, %v7186, -inf
      %7215 = vmax.xlane.f32.xlu0 %v7214
      %v7216 = vpop.xlane.xlu0 %7215
      %v7217 = vsel %vm1065, %v7187, -inf
      %7218 = vmax.xlane.f32.xlu0 %v7217
      %v7219 = vpop.xlane.xlu0 %7218
      %v7220 = vsel %vm1065, %v7188, -inf
      %7221 = vmax.xlane.f32.xlu0 %v7220
      %v7222 = vpop.xlane.xlu0 %7221
      %v7223 = vsel %vm1065, %v7189, -inf
      %7224 = vmax.xlane.f32.xlu0 %v7223
      %v7225 = vpop.xlane.xlu0 %7224
      %v7226 = vsel %vm1065, %v7190, -inf
      %7227 = vmax.xlane.f32.xlu0 %v7226
      %v7228 = vpop.xlane.xlu0 %7227
      %v7229 = vsel %vm1065, %v7191, -inf
      %7230 = vmax.xlane.f32.xlu0 %v7229
      %v7231 = vpop.xlane.xlu0 %7230
      %v7232 = vsel %vm1065, %v7192, -inf
      %7233 = vmax.xlane.f32.xlu0 %v7232
      %v7234 = vpop.xlane.xlu0 %7233
      %v7235 = vsel %vm1065, %v7193, -inf
      %7236 = vmax.xlane.f32.xlu0 %v7235
      %v7237 = vpop.xlane.xlu0 %7236
      %v7238 = vsel %vm1065, %v7194, -inf
      %7239 = vmax.xlane.f32.xlu0 %v7238
      %v7240 = vpop.xlane.xlu0 %7239
      %v7241 = vsel %vm1065, %v7195, -inf
      %7242 = vmax.xlane.f32.xlu0 %v7241
      %v7243 = vpop.xlane.xlu0 %7242
      %v7244 = vsub.f32 %v7180, %v7198
      %v7245 = vsub.f32 %v7181, %v7201
      %v7246 = vsub.f32 %v7182, %v7204
      %v7247 = vsub.f32 %v7183, %v7207
      %v7248 = vsub.f32 %v7184, %v7210
      %v7249 = vsub.f32 %v7185, %v7213
      %v7250 = vsub.f32 %v7186, %v7216
      %v7251 = vsub.f32 %v7187, %v7219
      %v7252 = vsub.f32 %v7188, %v7222
      %v7253 = vsub.f32 %v7189, %v7225
      %v7254 = vsub.f32 %v7190, %v7228
      %v7255 = vsub.f32 %v7191, %v7231
      %v7256 = vsub.f32 %v7192, %v7234
      %v7257 = vsub.f32 %v7193, %v7237
      %v7258 = vsub.f32 %v7194, %v7240
      %v7259 = vsub.f32 %v7195, %v7243
      %v7260 = vmul.f32 %v7244, 1.442695
      %v7261 = vpow.pop %v7260
      %v7262 = vmul.f32 %v7245, 1.442695
      %v7263 = vpow.pop %v7262
      %v7264 = vmul.f32 %v7246, 1.442695
      %v7265 = vpow.pop %v7264
      %v7266 = vmul.f32 %v7247, 1.442695
      %v7267 = vpow.pop %v7266
      %v7268 = vmul.f32 %v7248, 1.442695
      %v7269 = vpow.pop %v7268
      %v7270 = vmul.f32 %v7249, 1.442695
      %v7271 = vpow.pop %v7270
      %v7272 = vmul.f32 %v7250, 1.442695
      %v7273 = vpow.pop %v7272
      %v7274 = vmul.f32 %v7251, 1.442695
      %v7275 = vpow.pop %v7274
      %v7276 = vmul.f32 %v7252, 1.442695
      %v7277 = vpow.pop %v7276
      %v7278 = vmul.f32 %v7253, 1.442695
      %v7279 = vpow.pop %v7278
      %v7280 = vmul.f32 %v7254, 1.442695
      %v7281 = vpow.pop %v7280
      %v7282 = vmul.f32 %v7255, 1.442695
      %v7283 = vpow.pop %v7282
      %v7284 = vmul.f32 %v7256, 1.442695
      %v7285 = vpow.pop %v7284
      %v7286 = vmul.f32 %v7257, 1.442695
      %v7287 = vpow.pop %v7286
      %v7288 = vmul.f32 %v7258, 1.442695
      %v7289 = vpow.pop %v7288
      %v7290 = vmul.f32 %v7259, 1.442695
      %v7291 = vpow.pop %v7290
      %v7292 = vsel %vm1065, %v7261, 0.0
      %7293 = vadd.xlane.f32.xlu0 %v7292
      %v7294 = vpop.xlane.xlu0 %7293
      %v7295 = vsel %vm1065, %v7263, 0.0
      %7296 = vadd.xlane.f32.xlu0 %v7295
      %v7297 = vpop.xlane.xlu0 %7296
      %v7298 = vsel %vm1065, %v7265, 0.0
      %7299 = vadd.xlane.f32.xlu0 %v7298
      %v7300 = vpop.xlane.xlu0 %7299
      %v7301 = vsel %vm1065, %v7267, 0.0
      %7302 = vadd.xlane.f32.xlu0 %v7301
      %v7303 = vpop.xlane.xlu0 %7302
      %v7304 = vsel %vm1065, %v7269, 0.0
      %7305 = vadd.xlane.f32.xlu0 %v7304
      %v7306 = vpop.xlane.xlu0 %7305
      %v7307 = vsel %vm1065, %v7271, 0.0
      %7308 = vadd.xlane.f32.xlu0 %v7307
      %v7309 = vpop.xlane.xlu0 %7308
      %v7310 = vsel %vm1065, %v7273, 0.0
      %7311 = vadd.xlane.f32.xlu0 %v7310
      %v7312 = vpop.xlane.xlu0 %7311
      %v7313 = vsel %vm1065, %v7275, 0.0
      %7314 = vadd.xlane.f32.xlu0 %v7313
      %v7315 = vpop.xlane.xlu0 %7314
      %v7316 = vsel %vm1065, %v7277, 0.0
      %7317 = vadd.xlane.f32.xlu0 %v7316
      %v7318 = vpop.xlane.xlu0 %7317
      %v7319 = vsel %vm1065, %v7279, 0.0
      %7320 = vadd.xlane.f32.xlu0 %v7319
      %v7321 = vpop.xlane.xlu0 %7320
      %v7322 = vsel %vm1065, %v7281, 0.0
      %7323 = vadd.xlane.f32.xlu0 %v7322
      %v7324 = vpop.xlane.xlu0 %7323
      %v7325 = vsel %vm1065, %v7283, 0.0
      %7326 = vadd.xlane.f32.xlu0 %v7325
      %v7327 = vpop.xlane.xlu0 %7326
      %v7328 = vsel %vm1065, %v7285, 0.0
      %7329 = vadd.xlane.f32.xlu0 %v7328
      %v7330 = vpop.xlane.xlu0 %7329
      %v7331 = vsel %vm1065, %v7287, 0.0
      %7332 = vadd.xlane.f32.xlu0 %v7331
      %v7333 = vpop.xlane.xlu0 %7332
      %v7334 = vsel %vm1065, %v7289, 0.0
      %7335 = vadd.xlane.f32.xlu0 %v7334
      %v7336 = vpop.xlane.xlu0 %7335
      %v7337 = vsel %vm1065, %v7291, 0.0
      %7338 = vadd.xlane.f32.xlu0 %v7337
      %v7339 = vpop.xlane.xlu0 %7338
      %v7340 = vrcp.pop %v7294
      %v7341 = vrcp.pop %v7297
      %v7342 = vrcp.pop %v7300
      %v7343 = vrcp.pop %v7303
      %v7344 = vrcp.pop %v7306
      %v7345 = vrcp.pop %v7309
      %v7346 = vrcp.pop %v7312
      %v7347 = vrcp.pop %v7315
      %v7348 = vrcp.pop %v7318
      %v7349 = vrcp.pop %v7321
      %v7350 = vrcp.pop %v7324
      %v7351 = vrcp.pop %v7327
      %v7352 = vrcp.pop %v7330
      %v7353 = vrcp.pop %v7333
      %v7354 = vrcp.pop %v7336
      %v7355 = vrcp.pop %v7339
      %v7356 = vmul.f32 %v7261, %v7340
      %v7357 = vmul.f32 %v7263, %v7341
      %v7358 = vmul.f32 %v7265, %v7342
      %v7359 = vmul.f32 %v7267, %v7343
      %v7360 = vmul.f32 %v7269, %v7344
      %v7361 = vmul.f32 %v7271, %v7345
      %v7362 = vmul.f32 %v7273, %v7346
      %v7363 = vmul.f32 %v7275, %v7347
      %v7364 = vmul.f32 %v7277, %v7348
      %v7365 = vmul.f32 %v7279, %v7349
      %v7366 = vmul.f32 %v7281, %v7350
      %v7367 = vmul.f32 %v7283, %v7351
      %v7368 = vmul.f32 %v7285, %v7352
      %v7369 = vmul.f32 %v7287, %v7353
      %v7370 = vmul.f32 %v7289, %v7354
      %v7371 = vmul.f32 %v7291, %v7355
      %7374 = vrot.lane.b32.xlu0 %v6060, 112
      %v7375 = vpop.permute.xlu0 %7374
      %7376 = vrot.lane.b32.xlu0 %v6062, 112
      %v7377 = vpop.permute.xlu0 %7376
      %v7381 = vsel %vm1065, %v7356, 0
      %v7384 = vsel %vm1065, %v7357, 0
      %7386 = vmatpush.msra.mxu0 0.0
      %7387 = vmatpush.msra.mxu0 0.0
      %7388 = vmatpush.msra.mxu0 0.0
      %7389 = vmatpush.msra.mxu0 0.0
      %7390 = vmatpush.msra.mxu0 0.0
      %7391 = vmatpush.msra.mxu0 0.0
      %7392 = vmatpush.msra.mxu0 0.0
      %7393 = vmatpush.msra.mxu0 0.0
      %7394 = vmatpush.msra.mxu0 0.0
      %7395 = vmatpush.msra.mxu0 0.0
      %7396 = vmatpush.msra.mxu0 0.0
      %7397 = vmatpush.msra.mxu0 0.0
      %7398 = vmatpush.msra.mxu0 0.0
      %7399 = vmatpush.msra.mxu0 0.0
      %7400 = vmatpush.msra.mxu0 %v7377
      %7401 = vmatpush.msra.mxu0 %v7375
      %7402 = vmatmul.f32.gmra.mxu0 %v7381
      %v7403 = vpop.f32.mrf.mxu0
      %v7404 = vadd.f32 0.0, %v7403
      %7405 = vmatmul.f32.gmra.mxu0 %v7384
      %v7406 = vpop.f32.mrf.mxu0
      %v7407 = vadd.f32 0.0, %v7406
      %7408 = vdwg.mxu0
      %7411 = vrot.lane.b32.xlu0 %v6065, 112
      %v7412 = vpop.permute.xlu0 %7411
      %7413 = vrot.lane.b32.xlu0 %v6067, 112
      %v7414 = vpop.permute.xlu0 %7413
      %v7418 = vsel %vm1065, %v7358, 0
      %v7421 = vsel %vm1065, %v7359, 0
      %7423 = vmatpush.msra.mxu0 0.0
      %7424 = vmatpush.msra.mxu0 0.0
      %7425 = vmatpush.msra.mxu0 0.0
      %7426 = vmatpush.msra.mxu0 0.0
      %7427 = vmatpush.msra.mxu0 0.0
      %7428 = vmatpush.msra.mxu0 0.0
      %7429 = vmatpush.msra.mxu0 0.0
      %7430 = vmatpush.msra.mxu0 0.0
      %7431 = vmatpush.msra.mxu0 0.0
      %7432 = vmatpush.msra.mxu0 0.0
      %7433 = vmatpush.msra.mxu0 0.0
      %7434 = vmatpush.msra.mxu0 0.0
      %7435 = vmatpush.msra.mxu0 0.0
      %7436 = vmatpush.msra.mxu0 0.0
      %7437 = vmatpush.msra.mxu0 %v7414
      %7438 = vmatpush.msra.mxu0 %v7412
      %7439 = vmatmul.f32.gmra.mxu0 %v7418
      %v7440 = vpop.f32.mrf.mxu0
      %v7441 = vadd.f32 0.0, %v7440
      %7442 = vmatmul.f32.gmra.mxu0 %v7421
      %v7443 = vpop.f32.mrf.mxu0
      %v7444 = vadd.f32 0.0, %v7443
      %7445 = vdwg.mxu0
      %7448 = vrot.lane.b32.xlu0 %v6070, 112
      %v7449 = vpop.permute.xlu0 %7448
      %7450 = vrot.lane.b32.xlu0 %v6072, 112
      %v7451 = vpop.permute.xlu0 %7450
      %v7455 = vsel %vm1065, %v7360, 0
      %v7458 = vsel %vm1065, %v7361, 0
      %7460 = vmatpush.msra.mxu0 0.0
      %7461 = vmatpush.msra.mxu0 0.0
      %7462 = vmatpush.msra.mxu0 0.0
      %7463 = vmatpush.msra.mxu0 0.0
      %7464 = vmatpush.msra.mxu0 0.0
      %7465 = vmatpush.msra.mxu0 0.0
      %7466 = vmatpush.msra.mxu0 0.0
      %7467 = vmatpush.msra.mxu0 0.0
      %7468 = vmatpush.msra.mxu0 0.0
      %7469 = vmatpush.msra.mxu0 0.0
      %7470 = vmatpush.msra.mxu0 0.0
      %7471 = vmatpush.msra.mxu0 0.0
      %7472 = vmatpush.msra.mxu0 0.0
      %7473 = vmatpush.msra.mxu0 0.0
      %7474 = vmatpush.msra.mxu0 %v7451
      %7475 = vmatpush.msra.mxu0 %v7449
      %7476 = vmatmul.f32.gmra.mxu0 %v7455
      %v7477 = vpop.f32.mrf.mxu0
      %v7478 = vadd.f32 0.0, %v7477
      %7479 = vmatmul.f32.gmra.mxu0 %v7458
      %v7480 = vpop.f32.mrf.mxu0
      %v7481 = vadd.f32 0.0, %v7480
      %7482 = vdwg.mxu0
      %7485 = vrot.lane.b32.xlu0 %v6075, 112
      %v7486 = vpop.permute.xlu0 %7485
      %7487 = vrot.lane.b32.xlu0 %v6077, 112
      %v7488 = vpop.permute.xlu0 %7487
      %v7492 = vsel %vm1065, %v7362, 0
      %v7495 = vsel %vm1065, %v7363, 0
      %7497 = vmatpush.msra.mxu0 0.0
      %7498 = vmatpush.msra.mxu0 0.0
      %7499 = vmatpush.msra.mxu0 0.0
      %7500 = vmatpush.msra.mxu0 0.0
      %7501 = vmatpush.msra.mxu0 0.0
      %7502 = vmatpush.msra.mxu0 0.0
      %7503 = vmatpush.msra.mxu0 0.0
      %7504 = vmatpush.msra.mxu0 0.0
      %7505 = vmatpush.msra.mxu0 0.0
      %7506 = vmatpush.msra.mxu0 0.0
      %7507 = vmatpush.msra.mxu0 0.0
      %7508 = vmatpush.msra.mxu0 0.0
      %7509 = vmatpush.msra.mxu0 0.0
      %7510 = vmatpush.msra.mxu0 0.0
      %7511 = vmatpush.msra.mxu0 %v7488
      %7512 = vmatpush.msra.mxu0 %v7486
      %7513 = vmatmul.f32.gmra.mxu0 %v7492
      %v7514 = vpop.f32.mrf.mxu0
      %v7515 = vadd.f32 0.0, %v7514
      %7516 = vmatmul.f32.gmra.mxu0 %v7495
      %v7517 = vpop.f32.mrf.mxu0
      %v7518 = vadd.f32 0.0, %v7517
      %7519 = vdwg.mxu0
      %7522 = vrot.lane.b32.xlu0 %v6080, 112
      %v7523 = vpop.permute.xlu0 %7522
      %7524 = vrot.lane.b32.xlu0 %v6082, 112
      %v7525 = vpop.permute.xlu0 %7524
      %v7529 = vsel %vm1065, %v7364, 0
      %v7532 = vsel %vm1065, %v7365, 0
      %7534 = vmatpush.msra.mxu0 0.0
      %7535 = vmatpush.msra.mxu0 0.0
      %7536 = vmatpush.msra.mxu0 0.0
      %7537 = vmatpush.msra.mxu0 0.0
      %7538 = vmatpush.msra.mxu0 0.0
      %7539 = vmatpush.msra.mxu0 0.0
      %7540 = vmatpush.msra.mxu0 0.0
      %7541 = vmatpush.msra.mxu0 0.0
      %7542 = vmatpush.msra.mxu0 0.0
      %7543 = vmatpush.msra.mxu0 0.0
      %7544 = vmatpush.msra.mxu0 0.0
      %7545 = vmatpush.msra.mxu0 0.0
      %7546 = vmatpush.msra.mxu0 0.0
      %7547 = vmatpush.msra.mxu0 0.0
      %7548 = vmatpush.msra.mxu0 %v7525
      %7549 = vmatpush.msra.mxu0 %v7523
      %7550 = vmatmul.f32.gmra.mxu0 %v7529
      %v7551 = vpop.f32.mrf.mxu0
      %v7552 = vadd.f32 0.0, %v7551
      %7553 = vmatmul.f32.gmra.mxu0 %v7532
      %v7554 = vpop.f32.mrf.mxu0
      %v7555 = vadd.f32 0.0, %v7554
      %7556 = vdwg.mxu0
      %7559 = vrot.lane.b32.xlu0 %v6085, 112
      %v7560 = vpop.permute.xlu0 %7559
      %7561 = vrot.lane.b32.xlu0 %v6087, 112
      %v7562 = vpop.permute.xlu0 %7561
      %v7566 = vsel %vm1065, %v7366, 0
      %v7569 = vsel %vm1065, %v7367, 0
      %7571 = vmatpush.msra.mxu0 0.0
      %7572 = vmatpush.msra.mxu0 0.0
      %7573 = vmatpush.msra.mxu0 0.0
      %7574 = vmatpush.msra.mxu0 0.0
      %7575 = vmatpush.msra.mxu0 0.0
      %7576 = vmatpush.msra.mxu0 0.0
      %7577 = vmatpush.msra.mxu0 0.0
      %7578 = vmatpush.msra.mxu0 0.0
      %7579 = vmatpush.msra.mxu0 0.0
      %7580 = vmatpush.msra.mxu0 0.0
      %7581 = vmatpush.msra.mxu0 0.0
      %7582 = vmatpush.msra.mxu0 0.0
      %7583 = vmatpush.msra.mxu0 0.0
      %7584 = vmatpush.msra.mxu0 0.0
      %7585 = vmatpush.msra.mxu0 %v7562
      %7586 = vmatpush.msra.mxu0 %v7560
      %7587 = vmatmul.f32.gmra.mxu0 %v7566
      %v7588 = vpop.f32.mrf.mxu0
      %v7589 = vadd.f32 0.0, %v7588
      %7590 = vmatmul.f32.gmra.mxu0 %v7569
      %v7591 = vpop.f32.mrf.mxu0
      %v7592 = vadd.f32 0.0, %v7591
      %7593 = vdwg.mxu0
      %7596 = vrot.lane.b32.xlu0 %v6090, 112
      %v7597 = vpop.permute.xlu0 %7596
      %7598 = vrot.lane.b32.xlu0 %v6092, 112
      %v7599 = vpop.permute.xlu0 %7598
      %v7603 = vsel %vm1065, %v7368, 0
      %v7606 = vsel %vm1065, %v7369, 0
      %7608 = vmatpush.msra.mxu0 0.0
      %7609 = vmatpush.msra.mxu0 0.0
      %7610 = vmatpush.msra.mxu0 0.0
      %7611 = vmatpush.msra.mxu0 0.0
      %7612 = vmatpush.msra.mxu0 0.0
      %7613 = vmatpush.msra.mxu0 0.0
      %7614 = vmatpush.msra.mxu0 0.0
      %7615 = vmatpush.msra.mxu0 0.0
      %7616 = vmatpush.msra.mxu0 0.0
      %7617 = vmatpush.msra.mxu0 0.0
      %7618 = vmatpush.msra.mxu0 0.0
      %7619 = vmatpush.msra.mxu0 0.0
      %7620 = vmatpush.msra.mxu0 0.0
      %7621 = vmatpush.msra.mxu0 0.0
      %7622 = vmatpush.msra.mxu0 %v7599
      %7623 = vmatpush.msra.mxu0 %v7597
      %7624 = vmatmul.f32.gmra.mxu0 %v7603
      %v7625 = vpop.f32.mrf.mxu0
      %v7626 = vadd.f32 0.0, %v7625
      %7627 = vmatmul.f32.gmra.mxu0 %v7606
      %v7628 = vpop.f32.mrf.mxu0
      %v7629 = vadd.f32 0.0, %v7628
      %7630 = vdwg.mxu0
      %7633 = vrot.lane.b32.xlu0 %v6095, 112
      %v7634 = vpop.permute.xlu0 %7633
      %7635 = vrot.lane.b32.xlu0 %v6097, 112
      %v7636 = vpop.permute.xlu0 %7635
      %v7640 = vsel %vm1065, %v7370, 0
      %v7643 = vsel %vm1065, %v7371, 0
      %7645 = vmatpush.msra.mxu0 0.0
      %7646 = vmatpush.msra.mxu0 0.0
      %7647 = vmatpush.msra.mxu0 0.0
      %7648 = vmatpush.msra.mxu0 0.0
      %7649 = vmatpush.msra.mxu0 0.0
      %7650 = vmatpush.msra.mxu0 0.0
      %7651 = vmatpush.msra.mxu0 0.0
      %7652 = vmatpush.msra.mxu0 0.0
      %7653 = vmatpush.msra.mxu0 0.0
      %7654 = vmatpush.msra.mxu0 0.0
      %7655 = vmatpush.msra.mxu0 0.0
      %7656 = vmatpush.msra.mxu0 0.0
      %7657 = vmatpush.msra.mxu0 0.0
      %7658 = vmatpush.msra.mxu0 0.0
      %7659 = vmatpush.msra.mxu0 %v7636
      %7660 = vmatpush.msra.mxu0 %v7634
      %7661 = vmatmul.f32.gmra.mxu0 %v7640
      %v7662 = vpop.f32.mrf.mxu0
      %v7663 = vadd.f32 0.0, %v7662
      %7664 = vmatmul.f32.gmra.mxu0 %v7643
      %v7665 = vpop.f32.mrf.mxu0
      %v7666 = vadd.f32 0.0, %v7665
      %7667 = vdwg.mxu0
      %v7668 = vpack.c.bf16 %v7407, %v7404
      %v7669 = vpack.c.bf16 %v7444, %v7441
      %v7670 = vpack.c.bf16 %v7481, %v7478
      %v7671 = vpack.c.bf16 %v7518, %v7515
      %v7672 = vpack.c.bf16 %v7555, %v7552
      %v7673 = vpack.c.bf16 %v7592, %v7589
      %v7674 = vpack.c.bf16 %v7629, %v7626
      %v7675 = vpack.c.bf16 %v7666, %v7663
      %v7678 = vunpack.c.l.b16 %v6102
      %v7679 = vunpack.c.l.b16 %v6103
      %v7680 = vpack.c.b16 %v7679, %v7678
      %v7683 = vsel %vm1065, %v7668, 0
      %v7686 = vsel %vm1065, %v7669, 0
      %v7689 = vsel %vm1065, %v7670, 0
      %v7692 = vsel %vm1065, %v7671, 0
      %v7695 = vsel %vm1065, %v7672, 0
      %v7698 = vsel %vm1065, %v7673, 0
      %v7701 = vsel %vm1065, %v7674, 0
      %v7704 = vsel %vm1065, %v7675, 0
      %7706 = vmatpush.bf16.msra.mxu0 0
      %7707 = vmatpush.bf16.msra.mxu0 0
      %7708 = vmatpush.bf16.msra.mxu0 0
      %7709 = vmatpush.bf16.msra.mxu0 0
      %7710 = vmatpush.bf16.msra.mxu0 0
      %7711 = vmatpush.bf16.msra.mxu0 0
      %7712 = vmatpush.bf16.msra.mxu0 0
      %7713 = vmatpush.bf16.msra.mxu0 %v7680
      %7714 = vmatmul.bf16.gmra.mxu0 %v7683
      %v7715 = vpop.f32.mrf.mxu0
      %v7716 = vadd.f32 0.0, %v7715
      %v7717 = vpop.f32.mrf.mxu0
      %v7718 = vadd.f32 0.0, %v7717
      %7719 = vmatmul.bf16.gmra.mxu0 %v7686
      %v7720 = vpop.f32.mrf.mxu0
      %v7721 = vadd.f32 0.0, %v7720
      %v7722 = vpop.f32.mrf.mxu0
      %v7723 = vadd.f32 0.0, %v7722
      %7724 = vmatmul.bf16.gmra.mxu0 %v7689
      %v7725 = vpop.f32.mrf.mxu0
      %v7726 = vadd.f32 0.0, %v7725
      %v7727 = vpop.f32.mrf.mxu0
      %v7728 = vadd.f32 0.0, %v7727
      %7729 = vmatmul.bf16.gmra.mxu0 %v7692
      %v7730 = vpop.f32.mrf.mxu0
      %v7731 = vadd.f32 0.0, %v7730
      %v7732 = vpop.f32.mrf.mxu0
      %v7733 = vadd.f32 0.0, %v7732
      %7734 = vmatmul.bf16.gmra.mxu0 %v7695
      %v7735 = vpop.f32.mrf.mxu0
      %v7736 = vadd.f32 0.0, %v7735
      %v7737 = vpop.f32.mrf.mxu0
      %v7738 = vadd.f32 0.0, %v7737
      %7739 = vmatmul.bf16.gmra.mxu0 %v7698
      %v7740 = vpop.f32.mrf.mxu0
      %v7741 = vadd.f32 0.0, %v7740
      %v7742 = vpop.f32.mrf.mxu0
      %v7743 = vadd.f32 0.0, %v7742
      %7744 = vmatmul.bf16.gmra.mxu0 %v7701
      %v7745 = vpop.f32.mrf.mxu0
      %v7746 = vadd.f32 0.0, %v7745
      %v7747 = vpop.f32.mrf.mxu0
      %v7748 = vadd.f32 0.0, %v7747
      %7749 = vmatmul.bf16.gmra.mxu0 %v7704
      %v7750 = vpop.f32.mrf.mxu0
      %v7751 = vadd.f32 0.0, %v7750
      %v7752 = vpop.f32.mrf.mxu0
      %v7753 = vadd.f32 0.0, %v7752
      %7754 = vdwg.mxu0
      %v7757 = vunpack.c.l.b16 %v6100
      %v7758 = vunpack.c.l.b16 %v6101
      %v7759 = vpack.c.b16 %v7758, %v7757
      %v7762 = vsel %vm1065, %v6844, 0
      %v7765 = vsel %vm1065, %v6845, 0
      %v7768 = vsel %vm1065, %v6846, 0
      %v7771 = vsel %vm1065, %v6847, 0
      %v7774 = vsel %vm1065, %v6848, 0
      %v7777 = vsel %vm1065, %v6849, 0
      %v7780 = vsel %vm1065, %v6850, 0
      %v7783 = vsel %vm1065, %v6851, 0
      %7785 = vmatpush.bf16.msra.mxu0 0
      %7786 = vmatpush.bf16.msra.mxu0 0
      %7787 = vmatpush.bf16.msra.mxu0 0
      %7788 = vmatpush.bf16.msra.mxu0 0
      %7789 = vmatpush.bf16.msra.mxu0 0
      %7790 = vmatpush.bf16.msra.mxu0 0
      %7791 = vmatpush.bf16.msra.mxu0 0
      %7792 = vmatpush.bf16.msra.mxu0 %v7759
      %7793 = vmatmul.bf16.gmra.mxu0 %v7762
      %v7794 = vpop.f32.mrf.mxu0
      %v7795 = vadd.f32 %v7716, %v7794
      %v7796 = vpop.f32.mrf.mxu0
      %v7797 = vadd.f32 %v7718, %v7796
      %7798 = vmatmul.bf16.gmra.mxu0 %v7765
      %v7799 = vpop.f32.mrf.mxu0
      %v7800 = vadd.f32 %v7721, %v7799
      %v7801 = vpop.f32.mrf.mxu0
      %v7802 = vadd.f32 %v7723, %v7801
      %7803 = vmatmul.bf16.gmra.mxu0 %v7768
      %v7804 = vpop.f32.mrf.mxu0
      %v7805 = vadd.f32 %v7726, %v7804
      %v7806 = vpop.f32.mrf.mxu0
      %v7807 = vadd.f32 %v7728, %v7806
      %7808 = vmatmul.bf16.gmra.mxu0 %v7771
      %v7809 = vpop.f32.mrf.mxu0
      %v7810 = vadd.f32 %v7731, %v7809
      %v7811 = vpop.f32.mrf.mxu0
      %v7812 = vadd.f32 %v7733, %v7811
      %7813 = vmatmul.bf16.gmra.mxu0 %v7774
      %v7814 = vpop.f32.mrf.mxu0
      %v7815 = vadd.f32 %v7736, %v7814
      %v7816 = vpop.f32.mrf.mxu0
      %v7817 = vadd.f32 %v7738, %v7816
      %7818 = vmatmul.bf16.gmra.mxu0 %v7777
      %v7819 = vpop.f32.mrf.mxu0
      %v7820 = vadd.f32 %v7741, %v7819
      %v7821 = vpop.f32.mrf.mxu0
      %v7822 = vadd.f32 %v7743, %v7821
      %7823 = vmatmul.bf16.gmra.mxu0 %v7780
      %v7824 = vpop.f32.mrf.mxu0
      %v7825 = vadd.f32 %v7746, %v7824
      %v7826 = vpop.f32.mrf.mxu0
      %v7827 = vadd.f32 %v7748, %v7826
      %7828 = vmatmul.bf16.gmra.mxu0 %v7783
      %v7829 = vpop.f32.mrf.mxu0
      %v7830 = vadd.f32 %v7751, %v7829
      %v7831 = vpop.f32.mrf.mxu0
      %v7832 = vadd.f32 %v7753, %v7831
      %7833 = vdwg.mxu0
      %7834 = vrot.lane.b32.xlu0 %v6011, 96
      %v7835 = vpop.permute.xlu0 %7834
      %7836 = vrot.lane.b32.xlu0 %v6013, 96
      %v7837 = vpop.permute.xlu0 %7836
      %7838 = vrot.lane.b32.xlu0 %v6011, 32
      %v7839 = vpop.permute.xlu0 %7838
      %7840 = vrot.lane.b32.xlu0 %v6013, 32
      %v7841 = vpop.permute.xlu0 %7840
      %v7842 = vsel %vm1065, %v7835, 0
      %v7844 = vsel %vm1065, %v7837, 0
      %v7846 = vsel %vm1065, %v7839, 0
      %v7848 = vsel %vm1065, %v7841, 0
      %7850 = vmatpush.xpose.msra.mxu0 0.0
      %7851 = vmatpush.xpose.msra.mxu0 0.0
      %7852 = vmatpush.xpose.msra.mxu0 0.0
      %7853 = vmatpush.xpose.msra.mxu0 0.0
      %7854 = vmatpush.xpose.msra.mxu0 0.0
      %7855 = vmatpush.xpose.msra.mxu0 0.0
      %7856 = vmatpush.xpose.msra.mxu0 0.0
      %7857 = vmatpush.xpose.msra.mxu0 0.0
      %7858 = vmatpush.xpose.msra.mxu0 0.0
      %7859 = vmatpush.xpose.msra.mxu0 0.0
      %7860 = vmatpush.xpose.msra.mxu0 0.0
      %7861 = vmatpush.xpose.msra.mxu0 0.0
      %7862 = vmatpush.xpose.msra.mxu0 0.0
      %7863 = vmatpush.xpose.msra.mxu0 0.0
      %7864 = vmatpush.xpose.msra.mxu0 %v7848
      %7865 = vmatpush.xpose.msra.mxu0 %v7846
      %7866 = vmatmul.f32.gmra.mxu0 %v7842
      %v7867 = vpop.f32.mrf.mxu0
      %v7868 = vadd.f32 0.0, %v7867
      %7869 = vmatmul.f32.gmra.mxu0 %v7844
      %v7870 = vpop.f32.mrf.mxu0
      %v7871 = vadd.f32 0.0, %v7870
      %7872 = vdwg.mxu0
      %7873 = vrot.lane.b32.xlu0 %v6016, 96
      %v7874 = vpop.permute.xlu0 %7873
      %7875 = vrot.lane.b32.xlu0 %v6018, 96
      %v7876 = vpop.permute.xlu0 %7875
      %7877 = vrot.lane.b32.xlu0 %v6016, 32
      %v7878 = vpop.permute.xlu0 %7877
      %7879 = vrot.lane.b32.xlu0 %v6018, 32
      %v7880 = vpop.permute.xlu0 %7879
      %v7881 = vsel %vm1065, %v7874, 0
      %v7883 = vsel %vm1065, %v7876, 0
      %v7885 = vsel %vm1065, %v7878, 0
      %v7887 = vsel %vm1065, %v7880, 0
      %7889 = vmatpush.xpose.msra.mxu0 0.0
      %7890 = vmatpush.xpose.msra.mxu0 0.0
      %7891 = vmatpush.xpose.msra.mxu0 0.0
      %7892 = vmatpush.xpose.msra.mxu0 0.0
      %7893 = vmatpush.xpose.msra.mxu0 0.0
      %7894 = vmatpush.xpose.msra.mxu0 0.0
      %7895 = vmatpush.xpose.msra.mxu0 0.0
      %7896 = vmatpush.xpose.msra.mxu0 0.0
      %7897 = vmatpush.xpose.msra.mxu0 0.0
      %7898 = vmatpush.xpose.msra.mxu0 0.0
      %7899 = vmatpush.xpose.msra.mxu0 0.0
      %7900 = vmatpush.xpose.msra.mxu0 0.0
      %7901 = vmatpush.xpose.msra.mxu0 0.0
      %7902 = vmatpush.xpose.msra.mxu0 0.0
      %7903 = vmatpush.xpose.msra.mxu0 %v7887
      %7904 = vmatpush.xpose.msra.mxu0 %v7885
      %7905 = vmatmul.f32.gmra.mxu0 %v7881
      %v7906 = vpop.f32.mrf.mxu0
      %v7907 = vadd.f32 0.0, %v7906
      %7908 = vmatmul.f32.gmra.mxu0 %v7883
      %v7909 = vpop.f32.mrf.mxu0
      %v7910 = vadd.f32 0.0, %v7909
      %7911 = vdwg.mxu0
      %7912 = vrot.lane.b32.xlu0 %v6021, 96
      %v7913 = vpop.permute.xlu0 %7912
      %7914 = vrot.lane.b32.xlu0 %v6023, 96
      %v7915 = vpop.permute.xlu0 %7914
      %7916 = vrot.lane.b32.xlu0 %v6021, 32
      %v7917 = vpop.permute.xlu0 %7916
      %7918 = vrot.lane.b32.xlu0 %v6023, 32
      %v7919 = vpop.permute.xlu0 %7918
      %v7920 = vsel %vm1065, %v7913, 0
      %v7922 = vsel %vm1065, %v7915, 0
      %v7924 = vsel %vm1065, %v7917, 0
      %v7926 = vsel %vm1065, %v7919, 0
      %7928 = vmatpush.xpose.msra.mxu0 0.0
      %7929 = vmatpush.xpose.msra.mxu0 0.0
      %7930 = vmatpush.xpose.msra.mxu0 0.0
      %7931 = vmatpush.xpose.msra.mxu0 0.0
      %7932 = vmatpush.xpose.msra.mxu0 0.0
      %7933 = vmatpush.xpose.msra.mxu0 0.0
      %7934 = vmatpush.xpose.msra.mxu0 0.0
      %7935 = vmatpush.xpose.msra.mxu0 0.0
      %7936 = vmatpush.xpose.msra.mxu0 0.0
      %7937 = vmatpush.xpose.msra.mxu0 0.0
      %7938 = vmatpush.xpose.msra.mxu0 0.0
      %7939 = vmatpush.xpose.msra.mxu0 0.0
      %7940 = vmatpush.xpose.msra.mxu0 0.0
      %7941 = vmatpush.xpose.msra.mxu0 0.0
      %7942 = vmatpush.xpose.msra.mxu0 %v7926
      %7943 = vmatpush.xpose.msra.mxu0 %v7924
      %7944 = vmatmul.f32.gmra.mxu0 %v7920
      %v7945 = vpop.f32.mrf.mxu0
      %v7946 = vadd.f32 0.0, %v7945
      %7947 = vmatmul.f32.gmra.mxu0 %v7922
      %v7948 = vpop.f32.mrf.mxu0
      %v7949 = vadd.f32 0.0, %v7948
      %7950 = vdwg.mxu0
      %7951 = vrot.lane.b32.xlu0 %v6026, 96
      %v7952 = vpop.permute.xlu0 %7951
      %7953 = vrot.lane.b32.xlu0 %v6028, 96
      %v7954 = vpop.permute.xlu0 %7953
      %7955 = vrot.lane.b32.xlu0 %v6026, 32
      %v7956 = vpop.permute.xlu0 %7955
      %7957 = vrot.lane.b32.xlu0 %v6028, 32
      %v7958 = vpop.permute.xlu0 %7957
      %v7959 = vsel %vm1065, %v7952, 0
      %v7961 = vsel %vm1065, %v7954, 0
      %v7963 = vsel %vm1065, %v7956, 0
      %v7965 = vsel %vm1065, %v7958, 0
      %7967 = vmatpush.xpose.msra.mxu0 0.0
      %7968 = vmatpush.xpose.msra.mxu0 0.0
      %7969 = vmatpush.xpose.msra.mxu0 0.0
      %7970 = vmatpush.xpose.msra.mxu0 0.0
      %7971 = vmatpush.xpose.msra.mxu0 0.0
      %7972 = vmatpush.xpose.msra.mxu0 0.0
      %7973 = vmatpush.xpose.msra.mxu0 0.0
      %7974 = vmatpush.xpose.msra.mxu0 0.0
      %7975 = vmatpush.xpose.msra.mxu0 0.0
      %7976 = vmatpush.xpose.msra.mxu0 0.0
      %7977 = vmatpush.xpose.msra.mxu0 0.0
      %7978 = vmatpush.xpose.msra.mxu0 0.0
      %7979 = vmatpush.xpose.msra.mxu0 0.0
      %7980 = vmatpush.xpose.msra.mxu0 0.0
      %7981 = vmatpush.xpose.msra.mxu0 %v7965
      %7982 = vmatpush.xpose.msra.mxu0 %v7963
      %7983 = vmatmul.f32.gmra.mxu0 %v7959
      %v7984 = vpop.f32.mrf.mxu0
      %v7985 = vadd.f32 0.0, %v7984
      %7986 = vmatmul.f32.gmra.mxu0 %v7961
      %v7987 = vpop.f32.mrf.mxu0
      %v7988 = vadd.f32 0.0, %v7987
      %7989 = vdwg.mxu0
      %7990 = vrot.lane.b32.xlu0 %v6031, 96
      %v7991 = vpop.permute.xlu0 %7990
      %7992 = vrot.lane.b32.xlu0 %v6033, 96
      %v7993 = vpop.permute.xlu0 %7992
      %7994 = vrot.lane.b32.xlu0 %v6031, 32
      %v7995 = vpop.permute.xlu0 %7994
      %7996 = vrot.lane.b32.xlu0 %v6033, 32
      %v7997 = vpop.permute.xlu0 %7996
      %v7998 = vsel %vm1065, %v7991, 0
      %v8000 = vsel %vm1065, %v7993, 0
      %v8002 = vsel %vm1065, %v7995, 0
      %v8004 = vsel %vm1065, %v7997, 0
      %8006 = vmatpush.xpose.msra.mxu0 0.0
      %8007 = vmatpush.xpose.msra.mxu0 0.0
      %8008 = vmatpush.xpose.msra.mxu0 0.0
      %8009 = vmatpush.xpose.msra.mxu0 0.0
      %8010 = vmatpush.xpose.msra.mxu0 0.0
      %8011 = vmatpush.xpose.msra.mxu0 0.0
      %8012 = vmatpush.xpose.msra.mxu0 0.0
      %8013 = vmatpush.xpose.msra.mxu0 0.0
      %8014 = vmatpush.xpose.msra.mxu0 0.0
      %8015 = vmatpush.xpose.msra.mxu0 0.0
      %8016 = vmatpush.xpose.msra.mxu0 0.0
      %8017 = vmatpush.xpose.msra.mxu0 0.0
      %8018 = vmatpush.xpose.msra.mxu0 0.0
      %8019 = vmatpush.xpose.msra.mxu0 0.0
      %8020 = vmatpush.xpose.msra.mxu0 %v8004
      %8021 = vmatpush.xpose.msra.mxu0 %v8002
      %8022 = vmatmul.f32.gmra.mxu0 %v7998
      %v8023 = vpop.f32.mrf.mxu0
      %v8024 = vadd.f32 0.0, %v8023
      %8025 = vmatmul.f32.gmra.mxu0 %v8000
      %v8026 = vpop.f32.mrf.mxu0
      %v8027 = vadd.f32 0.0, %v8026
      %8028 = vdwg.mxu0
      %8029 = vrot.lane.b32.xlu0 %v6036, 96
      %v8030 = vpop.permute.xlu0 %8029
      %8031 = vrot.lane.b32.xlu0 %v6038, 96
      %v8032 = vpop.permute.xlu0 %8031
      %8033 = vrot.lane.b32.xlu0 %v6036, 32
      %v8034 = vpop.permute.xlu0 %8033
      %8035 = vrot.lane.b32.xlu0 %v6038, 32
      %v8036 = vpop.permute.xlu0 %8035
      %v8037 = vsel %vm1065, %v8030, 0
      %v8039 = vsel %vm1065, %v8032, 0
      %v8041 = vsel %vm1065, %v8034, 0
      %v8043 = vsel %vm1065, %v8036, 0
      %8045 = vmatpush.xpose.msra.mxu0 0.0
      %8046 = vmatpush.xpose.msra.mxu0 0.0
      %8047 = vmatpush.xpose.msra.mxu0 0.0
      %8048 = vmatpush.xpose.msra.mxu0 0.0
      %8049 = vmatpush.xpose.msra.mxu0 0.0
      %8050 = vmatpush.xpose.msra.mxu0 0.0
      %8051 = vmatpush.xpose.msra.mxu0 0.0
      %8052 = vmatpush.xpose.msra.mxu0 0.0
      %8053 = vmatpush.xpose.msra.mxu0 0.0
      %8054 = vmatpush.xpose.msra.mxu0 0.0
      %8055 = vmatpush.xpose.msra.mxu0 0.0
      %8056 = vmatpush.xpose.msra.mxu0 0.0
      %8057 = vmatpush.xpose.msra.mxu0 0.0
      %8058 = vmatpush.xpose.msra.mxu0 0.0
      %8059 = vmatpush.xpose.msra.mxu0 %v8043
      %8060 = vmatpush.xpose.msra.mxu0 %v8041
      %8061 = vmatmul.f32.gmra.mxu0 %v8037
      %v8062 = vpop.f32.mrf.mxu0
      %v8063 = vadd.f32 0.0, %v8062
      %8064 = vmatmul.f32.gmra.mxu0 %v8039
      %v8065 = vpop.f32.mrf.mxu0
      %v8066 = vadd.f32 0.0, %v8065
      %8067 = vdwg.mxu0
      %8068 = vrot.lane.b32.xlu0 %v6041, 96
      %v8069 = vpop.permute.xlu0 %8068
      %8070 = vrot.lane.b32.xlu0 %v6043, 96
      %v8071 = vpop.permute.xlu0 %8070
      %8072 = vrot.lane.b32.xlu0 %v6041, 32
      %v8073 = vpop.permute.xlu0 %8072
      %8074 = vrot.lane.b32.xlu0 %v6043, 32
      %v8075 = vpop.permute.xlu0 %8074
      %v8076 = vsel %vm1065, %v8069, 0
      %v8078 = vsel %vm1065, %v8071, 0
      %v8080 = vsel %vm1065, %v8073, 0
      %v8082 = vsel %vm1065, %v8075, 0
      %8084 = vmatpush.xpose.msra.mxu0 0.0
      %8085 = vmatpush.xpose.msra.mxu0 0.0
      %8086 = vmatpush.xpose.msra.mxu0 0.0
      %8087 = vmatpush.xpose.msra.mxu0 0.0
      %8088 = vmatpush.xpose.msra.mxu0 0.0
      %8089 = vmatpush.xpose.msra.mxu0 0.0
      %8090 = vmatpush.xpose.msra.mxu0 0.0
      %8091 = vmatpush.xpose.msra.mxu0 0.0
      %8092 = vmatpush.xpose.msra.mxu0 0.0
      %8093 = vmatpush.xpose.msra.mxu0 0.0
      %8094 = vmatpush.xpose.msra.mxu0 0.0
      %8095 = vmatpush.xpose.msra.mxu0 0.0
      %8096 = vmatpush.xpose.msra.mxu0 0.0
      %8097 = vmatpush.xpose.msra.mxu0 0.0
      %8098 = vmatpush.xpose.msra.mxu0 %v8082
      %8099 = vmatpush.xpose.msra.mxu0 %v8080
      %8100 = vmatmul.f32.gmra.mxu0 %v8076
      %v8101 = vpop.f32.mrf.mxu0
      %v8102 = vadd.f32 0.0, %v8101
      %8103 = vmatmul.f32.gmra.mxu0 %v8078
      %v8104 = vpop.f32.mrf.mxu0
      %v8105 = vadd.f32 0.0, %v8104
      %8106 = vdwg.mxu0
      %8107 = vrot.lane.b32.xlu0 %v6046, 96
      %v8108 = vpop.permute.xlu0 %8107
      %8109 = vrot.lane.b32.xlu0 %v6048, 96
      %v8110 = vpop.permute.xlu0 %8109
      %8111 = vrot.lane.b32.xlu0 %v6046, 32
      %v8112 = vpop.permute.xlu0 %8111
      %8113 = vrot.lane.b32.xlu0 %v6048, 32
      %v8114 = vpop.permute.xlu0 %8113
      %v8115 = vsel %vm1065, %v8108, 0
      %v8117 = vsel %vm1065, %v8110, 0
      %v8119 = vsel %vm1065, %v8112, 0
      %v8121 = vsel %vm1065, %v8114, 0
      %8123 = vmatpush.xpose.msra.mxu0 0.0
      %8124 = vmatpush.xpose.msra.mxu0 0.0
      %8125 = vmatpush.xpose.msra.mxu0 0.0
      %8126 = vmatpush.xpose.msra.mxu0 0.0
      %8127 = vmatpush.xpose.msra.mxu0 0.0
      %8128 = vmatpush.xpose.msra.mxu0 0.0
      %8129 = vmatpush.xpose.msra.mxu0 0.0
      %8130 = vmatpush.xpose.msra.mxu0 0.0
      %8131 = vmatpush.xpose.msra.mxu0 0.0
      %8132 = vmatpush.xpose.msra.mxu0 0.0
      %8133 = vmatpush.xpose.msra.mxu0 0.0
      %8134 = vmatpush.xpose.msra.mxu0 0.0
      %8135 = vmatpush.xpose.msra.mxu0 0.0
      %8136 = vmatpush.xpose.msra.mxu0 0.0
      %8137 = vmatpush.xpose.msra.mxu0 %v8121
      %8138 = vmatpush.xpose.msra.mxu0 %v8119
      %8139 = vmatmul.f32.gmra.mxu0 %v8115
      %v8140 = vpop.f32.mrf.mxu0
      %v8141 = vadd.f32 0.0, %v8140
      %8142 = vmatmul.f32.gmra.mxu0 %v8117
      %v8143 = vpop.f32.mrf.mxu0
      %v8144 = vadd.f32 0.0, %v8143
      %8145 = vdwg.mxu0
      %v8146 = vmul.f32 %v7868, 0.25
      %v8147 = vmul.f32 %v7871, 0.25
      %v8148 = vmul.f32 %v7907, 0.25
      %v8149 = vmul.f32 %v7910, 0.25
      %v8150 = vmul.f32 %v7946, 0.25
      %v8151 = vmul.f32 %v7949, 0.25
      %v8152 = vmul.f32 %v7985, 0.25
      %v8153 = vmul.f32 %v7988, 0.25
      %v8154 = vmul.f32 %v8024, 0.25
      %v8155 = vmul.f32 %v8027, 0.25
      %v8156 = vmul.f32 %v8063, 0.25
      %v8157 = vmul.f32 %v8066, 0.25
      %v8158 = vmul.f32 %v8102, 0.25
      %v8159 = vmul.f32 %v8105, 0.25
      %v8160 = vmul.f32 %v8141, 0.25
      %v8161 = vmul.f32 %v8144, 0.25
      %v8162 = vadd.f32 %v8146, %v1372
      %v8163 = vadd.f32 %v8147, %v1372
      %v8164 = vadd.f32 %v8148, %v1373
      %v8165 = vadd.f32 %v8149, %v1373
      %v8166 = vadd.f32 %v8150, %v1374
      %v8167 = vadd.f32 %v8151, %v1374
      %v8168 = vadd.f32 %v8152, %v1375
      %v8169 = vadd.f32 %v8153, %v1375
      %v8170 = vadd.f32 %v8154, %v1376
      %v8171 = vadd.f32 %v8155, %v1376
      %v8172 = vadd.f32 %v8156, %v1377
      %v8173 = vadd.f32 %v8157, %v1377
      %v8174 = vadd.f32 %v8158, %v1378
      %v8175 = vadd.f32 %v8159, %v1378
      %v8176 = vadd.f32 %v8160, %v1379
      %v8177 = vadd.f32 %v8161, %v1379
      %v8178 = vsel %vm1065, %v8162, -inf
      %8179 = vmax.xlane.f32.xlu0 %v8178
      %v8180 = vpop.xlane.xlu0 %8179
      %v8181 = vsel %vm1065, %v8163, -inf
      %8182 = vmax.xlane.f32.xlu0 %v8181
      %v8183 = vpop.xlane.xlu0 %8182
      %v8184 = vsel %vm1065, %v8164, -inf
      %8185 = vmax.xlane.f32.xlu0 %v8184
      %v8186 = vpop.xlane.xlu0 %8185
      %v8187 = vsel %vm1065, %v8165, -inf
      %8188 = vmax.xlane.f32.xlu0 %v8187
      %v8189 = vpop.xlane.xlu0 %8188
      %v8190 = vsel %vm1065, %v8166, -inf
      %8191 = vmax.xlane.f32.xlu0 %v8190
      %v8192 = vpop.xlane.xlu0 %8191
      %v8193 = vsel %vm1065, %v8167, -inf
      %8194 = vmax.xlane.f32.xlu0 %v8193
      %v8195 = vpop.xlane.xlu0 %8194
      %v8196 = vsel %vm1065, %v8168, -inf
      %8197 = vmax.xlane.f32.xlu0 %v8196
      %v8198 = vpop.xlane.xlu0 %8197
      %v8199 = vsel %vm1065, %v8169, -inf
      %8200 = vmax.xlane.f32.xlu0 %v8199
      %v8201 = vpop.xlane.xlu0 %8200
      %v8202 = vsel %vm1065, %v8170, -inf
      %8203 = vmax.xlane.f32.xlu0 %v8202
      %v8204 = vpop.xlane.xlu0 %8203
      %v8205 = vsel %vm1065, %v8171, -inf
      %8206 = vmax.xlane.f32.xlu0 %v8205
      %v8207 = vpop.xlane.xlu0 %8206
      %v8208 = vsel %vm1065, %v8172, -inf
      %8209 = vmax.xlane.f32.xlu0 %v8208
      %v8210 = vpop.xlane.xlu0 %8209
      %v8211 = vsel %vm1065, %v8173, -inf
      %8212 = vmax.xlane.f32.xlu0 %v8211
      %v8213 = vpop.xlane.xlu0 %8212
      %v8214 = vsel %vm1065, %v8174, -inf
      %8215 = vmax.xlane.f32.xlu0 %v8214
      %v8216 = vpop.xlane.xlu0 %8215
      %v8217 = vsel %vm1065, %v8175, -inf
      %8218 = vmax.xlane.f32.xlu0 %v8217
      %v8219 = vpop.xlane.xlu0 %8218
      %v8220 = vsel %vm1065, %v8176, -inf
      %8221 = vmax.xlane.f32.xlu0 %v8220
      %v8222 = vpop.xlane.xlu0 %8221
      %v8223 = vsel %vm1065, %v8177, -inf
      %8224 = vmax.xlane.f32.xlu0 %v8223
      %v8225 = vpop.xlane.xlu0 %8224
      %v8226 = vsub.f32 %v8162, %v8180
      %v8227 = vsub.f32 %v8163, %v8183
      %v8228 = vsub.f32 %v8164, %v8186
      %v8229 = vsub.f32 %v8165, %v8189
      %v8230 = vsub.f32 %v8166, %v8192
      %v8231 = vsub.f32 %v8167, %v8195
      %v8232 = vsub.f32 %v8168, %v8198
      %v8233 = vsub.f32 %v8169, %v8201
      %v8234 = vsub.f32 %v8170, %v8204
      %v8235 = vsub.f32 %v8171, %v8207
      %v8236 = vsub.f32 %v8172, %v8210
      %v8237 = vsub.f32 %v8173, %v8213
      %v8238 = vsub.f32 %v8174, %v8216
      %v8239 = vsub.f32 %v8175, %v8219
      %v8240 = vsub.f32 %v8176, %v8222
      %v8241 = vsub.f32 %v8177, %v8225
      %v8242 = vmul.f32 %v8226, 1.442695
      %v8243 = vpow.pop %v8242
      %v8244 = vmul.f32 %v8227, 1.442695
      %v8245 = vpow.pop %v8244
      %v8246 = vmul.f32 %v8228, 1.442695
      %v8247 = vpow.pop %v8246
      %v8248 = vmul.f32 %v8229, 1.442695
      %v8249 = vpow.pop %v8248
      %v8250 = vmul.f32 %v8230, 1.442695
      %v8251 = vpow.pop %v8250
      %v8252 = vmul.f32 %v8231, 1.442695
      %v8253 = vpow.pop %v8252
      %v8254 = vmul.f32 %v8232, 1.442695
      %v8255 = vpow.pop %v8254
      %v8256 = vmul.f32 %v8233, 1.442695
      %v8257 = vpow.pop %v8256
      %v8258 = vmul.f32 %v8234, 1.442695
      %v8259 = vpow.pop %v8258
      %v8260 = vmul.f32 %v8235, 1.442695
      %v8261 = vpow.pop %v8260
      %v8262 = vmul.f32 %v8236, 1.442695
      %v8263 = vpow.pop %v8262
      %v8264 = vmul.f32 %v8237, 1.442695
      %v8265 = vpow.pop %v8264
      %v8266 = vmul.f32 %v8238, 1.442695
      %v8267 = vpow.pop %v8266
      %v8268 = vmul.f32 %v8239, 1.442695
      %v8269 = vpow.pop %v8268
      %v8270 = vmul.f32 %v8240, 1.442695
      %v8271 = vpow.pop %v8270
      %v8272 = vmul.f32 %v8241, 1.442695
      %v8273 = vpow.pop %v8272
      %v8274 = vsel %vm1065, %v8243, 0.0
      %8275 = vadd.xlane.f32.xlu0 %v8274
      %v8276 = vpop.xlane.xlu0 %8275
      %v8277 = vsel %vm1065, %v8245, 0.0
      %8278 = vadd.xlane.f32.xlu0 %v8277
      %v8279 = vpop.xlane.xlu0 %8278
      %v8280 = vsel %vm1065, %v8247, 0.0
      %8281 = vadd.xlane.f32.xlu0 %v8280
      %v8282 = vpop.xlane.xlu0 %8281
      %v8283 = vsel %vm1065, %v8249, 0.0
      %8284 = vadd.xlane.f32.xlu0 %v8283
      %v8285 = vpop.xlane.xlu0 %8284
      %v8286 = vsel %vm1065, %v8251, 0.0
      %8287 = vadd.xlane.f32.xlu0 %v8286
      %v8288 = vpop.xlane.xlu0 %8287
      %v8289 = vsel %vm1065, %v8253, 0.0
      %8290 = vadd.xlane.f32.xlu0 %v8289
      %v8291 = vpop.xlane.xlu0 %8290
      %v8292 = vsel %vm1065, %v8255, 0.0
      %8293 = vadd.xlane.f32.xlu0 %v8292
      %v8294 = vpop.xlane.xlu0 %8293
      %v8295 = vsel %vm1065, %v8257, 0.0
      %8296 = vadd.xlane.f32.xlu0 %v8295
      %v8297 = vpop.xlane.xlu0 %8296
      %v8298 = vsel %vm1065, %v8259, 0.0
      %8299 = vadd.xlane.f32.xlu0 %v8298
      %v8300 = vpop.xlane.xlu0 %8299
      %v8301 = vsel %vm1065, %v8261, 0.0
      %8302 = vadd.xlane.f32.xlu0 %v8301
      %v8303 = vpop.xlane.xlu0 %8302
      %v8304 = vsel %vm1065, %v8263, 0.0
      %8305 = vadd.xlane.f32.xlu0 %v8304
      %v8306 = vpop.xlane.xlu0 %8305
      %v8307 = vsel %vm1065, %v8265, 0.0
      %8308 = vadd.xlane.f32.xlu0 %v8307
      %v8309 = vpop.xlane.xlu0 %8308
      %v8310 = vsel %vm1065, %v8267, 0.0
      %8311 = vadd.xlane.f32.xlu0 %v8310
      %v8312 = vpop.xlane.xlu0 %8311
      %v8313 = vsel %vm1065, %v8269, 0.0
      %8314 = vadd.xlane.f32.xlu0 %v8313
      %v8315 = vpop.xlane.xlu0 %8314
      %v8316 = vsel %vm1065, %v8271, 0.0
      %8317 = vadd.xlane.f32.xlu0 %v8316
      %v8318 = vpop.xlane.xlu0 %8317
      %v8319 = vsel %vm1065, %v8273, 0.0
      %8320 = vadd.xlane.f32.xlu0 %v8319
      %v8321 = vpop.xlane.xlu0 %8320
      %v8322 = vrcp.pop %v8276
      %v8323 = vrcp.pop %v8279
      %v8324 = vrcp.pop %v8282
      %v8325 = vrcp.pop %v8285
      %v8326 = vrcp.pop %v8288
      %v8327 = vrcp.pop %v8291
      %v8328 = vrcp.pop %v8294
      %v8329 = vrcp.pop %v8297
      %v8330 = vrcp.pop %v8300
      %v8331 = vrcp.pop %v8303
      %v8332 = vrcp.pop %v8306
      %v8333 = vrcp.pop %v8309
      %v8334 = vrcp.pop %v8312
      %v8335 = vrcp.pop %v8315
      %v8336 = vrcp.pop %v8318
      %v8337 = vrcp.pop %v8321
      %v8338 = vmul.f32 %v8243, %v8322
      %v8339 = vmul.f32 %v8245, %v8323
      %v8340 = vmul.f32 %v8247, %v8324
      %v8341 = vmul.f32 %v8249, %v8325
      %v8342 = vmul.f32 %v8251, %v8326
      %v8343 = vmul.f32 %v8253, %v8327
      %v8344 = vmul.f32 %v8255, %v8328
      %v8345 = vmul.f32 %v8257, %v8329
      %v8346 = vmul.f32 %v8259, %v8330
      %v8347 = vmul.f32 %v8261, %v8331
      %v8348 = vmul.f32 %v8263, %v8332
      %v8349 = vmul.f32 %v8265, %v8333
      %v8350 = vmul.f32 %v8267, %v8334
      %v8351 = vmul.f32 %v8269, %v8335
      %v8352 = vmul.f32 %v8271, %v8336
      %v8353 = vmul.f32 %v8273, %v8337
      %8354 = vrot.lane.b32.xlu0 %v6060, 96
      %v8355 = vpop.permute.xlu0 %8354
      %8356 = vrot.lane.b32.xlu0 %v6062, 96
      %v8357 = vpop.permute.xlu0 %8356
      %v8361 = vsel %vm1065, %v8338, 0
      %v8364 = vsel %vm1065, %v8339, 0
      %8366 = vmatpush.msra.mxu0 0.0
      %8367 = vmatpush.msra.mxu0 0.0
      %8368 = vmatpush.msra.mxu0 0.0
      %8369 = vmatpush.msra.mxu0 0.0
      %8370 = vmatpush.msra.mxu0 0.0
      %8371 = vmatpush.msra.mxu0 0.0
      %8372 = vmatpush.msra.mxu0 0.0
      %8373 = vmatpush.msra.mxu0 0.0
      %8374 = vmatpush.msra.mxu0 0.0
      %8375 = vmatpush.msra.mxu0 0.0
      %8376 = vmatpush.msra.mxu0 0.0
      %8377 = vmatpush.msra.mxu0 0.0
      %8378 = vmatpush.msra.mxu0 0.0
      %8379 = vmatpush.msra.mxu0 0.0
      %8380 = vmatpush.msra.mxu0 %v8357
      %8381 = vmatpush.msra.mxu0 %v8355
      %8382 = vmatmul.f32.gmra.mxu0 %v8361
      %v8383 = vpop.f32.mrf.mxu0
      %v8384 = vadd.f32 0.0, %v8383
      %8385 = vmatmul.f32.gmra.mxu0 %v8364
      %v8386 = vpop.f32.mrf.mxu0
      %v8387 = vadd.f32 0.0, %v8386
      %8388 = vdwg.mxu0
      %8389 = vrot.lane.b32.xlu0 %v6065, 96
      %v8390 = vpop.permute.xlu0 %8389
      %8391 = vrot.lane.b32.xlu0 %v6067, 96
      %v8392 = vpop.permute.xlu0 %8391
      %v8396 = vsel %vm1065, %v8340, 0
      %v8399 = vsel %vm1065, %v8341, 0
      %8401 = vmatpush.msra.mxu0 0.0
      %8402 = vmatpush.msra.mxu0 0.0
      %8403 = vmatpush.msra.mxu0 0.0
      %8404 = vmatpush.msra.mxu0 0.0
      %8405 = vmatpush.msra.mxu0 0.0
      %8406 = vmatpush.msra.mxu0 0.0
      %8407 = vmatpush.msra.mxu0 0.0
      %8408 = vmatpush.msra.mxu0 0.0
      %8409 = vmatpush.msra.mxu0 0.0
      %8410 = vmatpush.msra.mxu0 0.0
      %8411 = vmatpush.msra.mxu0 0.0
      %8412 = vmatpush.msra.mxu0 0.0
      %8413 = vmatpush.msra.mxu0 0.0
      %8414 = vmatpush.msra.mxu0 0.0
      %8415 = vmatpush.msra.mxu0 %v8392
      %8416 = vmatpush.msra.mxu0 %v8390
      %8417 = vmatmul.f32.gmra.mxu0 %v8396
      %v8418 = vpop.f32.mrf.mxu0
      %v8419 = vadd.f32 0.0, %v8418
      %8420 = vmatmul.f32.gmra.mxu0 %v8399
      %v8421 = vpop.f32.mrf.mxu0
      %v8422 = vadd.f32 0.0, %v8421
      %8423 = vdwg.mxu0
      %8424 = vrot.lane.b32.xlu0 %v6070, 96
      %v8425 = vpop.permute.xlu0 %8424
      %8426 = vrot.lane.b32.xlu0 %v6072, 96
      %v8427 = vpop.permute.xlu0 %8426
      %v8431 = vsel %vm1065, %v8342, 0
      %v8434 = vsel %vm1065, %v8343, 0
      %8436 = vmatpush.msra.mxu0 0.0
      %8437 = vmatpush.msra.mxu0 0.0
      %8438 = vmatpush.msra.mxu0 0.0
      %8439 = vmatpush.msra.mxu0 0.0
      %8440 = vmatpush.msra.mxu0 0.0
      %8441 = vmatpush.msra.mxu0 0.0
      %8442 = vmatpush.msra.mxu0 0.0
      %8443 = vmatpush.msra.mxu0 0.0
      %8444 = vmatpush.msra.mxu0 0.0
      %8445 = vmatpush.msra.mxu0 0.0
      %8446 = vmatpush.msra.mxu0 0.0
      %8447 = vmatpush.msra.mxu0 0.0
      %8448 = vmatpush.msra.mxu0 0.0
      %8449 = vmatpush.msra.mxu0 0.0
      %8450 = vmatpush.msra.mxu0 %v8427
      %8451 = vmatpush.msra.mxu0 %v8425
      %8452 = vmatmul.f32.gmra.mxu0 %v8431
      %v8453 = vpop.f32.mrf.mxu0
      %v8454 = vadd.f32 0.0, %v8453
      %8455 = vmatmul.f32.gmra.mxu0 %v8434
      %v8456 = vpop.f32.mrf.mxu0
      %v8457 = vadd.f32 0.0, %v8456
      %8458 = vdwg.mxu0
      %8459 = vrot.lane.b32.xlu0 %v6075, 96
      %v8460 = vpop.permute.xlu0 %8459
      %8461 = vrot.lane.b32.xlu0 %v6077, 96
      %v8462 = vpop.permute.xlu0 %8461
      %v8466 = vsel %vm1065, %v8344, 0
      %v8469 = vsel %vm1065, %v8345, 0
      %8471 = vmatpush.msra.mxu0 0.0
      %8472 = vmatpush.msra.mxu0 0.0
      %8473 = vmatpush.msra.mxu0 0.0
      %8474 = vmatpush.msra.mxu0 0.0
      %8475 = vmatpush.msra.mxu0 0.0
      %8476 = vmatpush.msra.mxu0 0.0
      %8477 = vmatpush.msra.mxu0 0.0
      %8478 = vmatpush.msra.mxu0 0.0
      %8479 = vmatpush.msra.mxu0 0.0
      %8480 = vmatpush.msra.mxu0 0.0
      %8481 = vmatpush.msra.mxu0 0.0
      %8482 = vmatpush.msra.mxu0 0.0
      %8483 = vmatpush.msra.mxu0 0.0
      %8484 = vmatpush.msra.mxu0 0.0
      %8485 = vmatpush.msra.mxu0 %v8462
      %8486 = vmatpush.msra.mxu0 %v8460
      %8487 = vmatmul.f32.gmra.mxu0 %v8466
      %v8488 = vpop.f32.mrf.mxu0
      %v8489 = vadd.f32 0.0, %v8488
      %8490 = vmatmul.f32.gmra.mxu0 %v8469
      %v8491 = vpop.f32.mrf.mxu0
      %v8492 = vadd.f32 0.0, %v8491
      %8493 = vdwg.mxu0
      %8494 = vrot.lane.b32.xlu0 %v6080, 96
      %v8495 = vpop.permute.xlu0 %8494
      %8496 = vrot.lane.b32.xlu0 %v6082, 96
      %v8497 = vpop.permute.xlu0 %8496
      %v8501 = vsel %vm1065, %v8346, 0
      %v8504 = vsel %vm1065, %v8347, 0
      %8506 = vmatpush.msra.mxu0 0.0
      %8507 = vmatpush.msra.mxu0 0.0
      %8508 = vmatpush.msra.mxu0 0.0
      %8509 = vmatpush.msra.mxu0 0.0
      %8510 = vmatpush.msra.mxu0 0.0
      %8511 = vmatpush.msra.mxu0 0.0
      %8512 = vmatpush.msra.mxu0 0.0
      %8513 = vmatpush.msra.mxu0 0.0
      %8514 = vmatpush.msra.mxu0 0.0
      %8515 = vmatpush.msra.mxu0 0.0
      %8516 = vmatpush.msra.mxu0 0.0
      %8517 = vmatpush.msra.mxu0 0.0
      %8518 = vmatpush.msra.mxu0 0.0
      %8519 = vmatpush.msra.mxu0 0.0
      %8520 = vmatpush.msra.mxu0 %v8497
      %8521 = vmatpush.msra.mxu0 %v8495
      %8522 = vmatmul.f32.gmra.mxu0 %v8501
      %v8523 = vpop.f32.mrf.mxu0
      %v8524 = vadd.f32 0.0, %v8523
      %8525 = vmatmul.f32.gmra.mxu0 %v8504
      %v8526 = vpop.f32.mrf.mxu0
      %v8527 = vadd.f32 0.0, %v8526
      %8528 = vdwg.mxu0
      %8529 = vrot.lane.b32.xlu0 %v6085, 96
      %v8530 = vpop.permute.xlu0 %8529
      %8531 = vrot.lane.b32.xlu0 %v6087, 96
      %v8532 = vpop.permute.xlu0 %8531
      %v8536 = vsel %vm1065, %v8348, 0
      %v8539 = vsel %vm1065, %v8349, 0
      %8541 = vmatpush.msra.mxu0 0.0
      %8542 = vmatpush.msra.mxu0 0.0
      %8543 = vmatpush.msra.mxu0 0.0
      %8544 = vmatpush.msra.mxu0 0.0
      %8545 = vmatpush.msra.mxu0 0.0
      %8546 = vmatpush.msra.mxu0 0.0
      %8547 = vmatpush.msra.mxu0 0.0
      %8548 = vmatpush.msra.mxu0 0.0
      %8549 = vmatpush.msra.mxu0 0.0
      %8550 = vmatpush.msra.mxu0 0.0
      %8551 = vmatpush.msra.mxu0 0.0
      %8552 = vmatpush.msra.mxu0 0.0
      %8553 = vmatpush.msra.mxu0 0.0
      %8554 = vmatpush.msra.mxu0 0.0
      %8555 = vmatpush.msra.mxu0 %v8532
      %8556 = vmatpush.msra.mxu0 %v8530
      %8557 = vmatmul.f32.gmra.mxu0 %v8536
      %v8558 = vpop.f32.mrf.mxu0
      %v8559 = vadd.f32 0.0, %v8558
      %8560 = vmatmul.f32.gmra.mxu0 %v8539
      %v8561 = vpop.f32.mrf.mxu0
      %v8562 = vadd.f32 0.0, %v8561
      %8563 = vdwg.mxu0
      %8564 = vrot.lane.b32.xlu0 %v6090, 96
      %v8565 = vpop.permute.xlu0 %8564
      %8566 = vrot.lane.b32.xlu0 %v6092, 96
      %v8567 = vpop.permute.xlu0 %8566
      %v8571 = vsel %vm1065, %v8350, 0
      %v8574 = vsel %vm1065, %v8351, 0
      %8576 = vmatpush.msra.mxu0 0.0
      %8577 = vmatpush.msra.mxu0 0.0
      %8578 = vmatpush.msra.mxu0 0.0
      %8579 = vmatpush.msra.mxu0 0.0
      %8580 = vmatpush.msra.mxu0 0.0
      %8581 = vmatpush.msra.mxu0 0.0
      %8582 = vmatpush.msra.mxu0 0.0
      %8583 = vmatpush.msra.mxu0 0.0
      %8584 = vmatpush.msra.mxu0 0.0
      %8585 = vmatpush.msra.mxu0 0.0
      %8586 = vmatpush.msra.mxu0 0.0
      %8587 = vmatpush.msra.mxu0 0.0
      %8588 = vmatpush.msra.mxu0 0.0
      %8589 = vmatpush.msra.mxu0 0.0
      %8590 = vmatpush.msra.mxu0 %v8567
      %8591 = vmatpush.msra.mxu0 %v8565
      %8592 = vmatmul.f32.gmra.mxu0 %v8571
      %v8593 = vpop.f32.mrf.mxu0
      %v8594 = vadd.f32 0.0, %v8593
      %8595 = vmatmul.f32.gmra.mxu0 %v8574
      %v8596 = vpop.f32.mrf.mxu0
      %v8597 = vadd.f32 0.0, %v8596
      %8598 = vdwg.mxu0
      %8599 = vrot.lane.b32.xlu0 %v6095, 96
      %v8600 = vpop.permute.xlu0 %8599
      %8601 = vrot.lane.b32.xlu0 %v6097, 96
      %v8602 = vpop.permute.xlu0 %8601
      %v8606 = vsel %vm1065, %v8352, 0
      %v8609 = vsel %vm1065, %v8353, 0
      %8611 = vmatpush.msra.mxu0 0.0
      %8612 = vmatpush.msra.mxu0 0.0
      %8613 = vmatpush.msra.mxu0 0.0
      %8614 = vmatpush.msra.mxu0 0.0
      %8615 = vmatpush.msra.mxu0 0.0
      %8616 = vmatpush.msra.mxu0 0.0
      %8617 = vmatpush.msra.mxu0 0.0
      %8618 = vmatpush.msra.mxu0 0.0
      %8619 = vmatpush.msra.mxu0 0.0
      %8620 = vmatpush.msra.mxu0 0.0
      %8621 = vmatpush.msra.mxu0 0.0
      %8622 = vmatpush.msra.mxu0 0.0
      %8623 = vmatpush.msra.mxu0 0.0
      %8624 = vmatpush.msra.mxu0 0.0
      %8625 = vmatpush.msra.mxu0 %v8602
      %8626 = vmatpush.msra.mxu0 %v8600
      %8627 = vmatmul.f32.gmra.mxu0 %v8606
      %v8628 = vpop.f32.mrf.mxu0
      %v8629 = vadd.f32 0.0, %v8628
      %8630 = vmatmul.f32.gmra.mxu0 %v8609
      %v8631 = vpop.f32.mrf.mxu0
      %v8632 = vadd.f32 0.0, %v8631
      %8633 = vdwg.mxu0
      %v8634 = vpack.c.bf16 %v8387, %v8384
      %v8635 = vpack.c.bf16 %v8422, %v8419
      %v8636 = vpack.c.bf16 %v8457, %v8454
      %v8637 = vpack.c.bf16 %v8492, %v8489
      %v8638 = vpack.c.bf16 %v8527, %v8524
      %v8639 = vpack.c.bf16 %v8562, %v8559
      %v8640 = vpack.c.bf16 %v8597, %v8594
      %v8641 = vpack.c.bf16 %v8632, %v8629
      %v8644 = vunpack.c.l.b16 %v6104
      %v8645 = vunpack.c.l.b16 %v6105
      %v8646 = vpack.c.b16 %v8645, %v8644
      %v8649 = vsel %vm1065, %v8634, 0
      %v8652 = vsel %vm1065, %v8635, 0
      %v8655 = vsel %vm1065, %v8636, 0
      %v8658 = vsel %vm1065, %v8637, 0
      %v8661 = vsel %vm1065, %v8638, 0
      %v8664 = vsel %vm1065, %v8639, 0
      %v8667 = vsel %vm1065, %v8640, 0
      %v8670 = vsel %vm1065, %v8641, 0
      %8672 = vmatpush.bf16.msra.mxu0 0
      %8673 = vmatpush.bf16.msra.mxu0 0
      %8674 = vmatpush.bf16.msra.mxu0 0
      %8675 = vmatpush.bf16.msra.mxu0 0
      %8676 = vmatpush.bf16.msra.mxu0 0
      %8677 = vmatpush.bf16.msra.mxu0 0
      %8678 = vmatpush.bf16.msra.mxu0 0
      %8679 = vmatpush.bf16.msra.mxu0 %v8646
      %8680 = vmatmul.bf16.gmra.mxu0 %v8649
      %v8681 = vpop.f32.mrf.mxu0
      %v8682 = vadd.f32 0.0, %v8681
      %v8683 = vpop.f32.mrf.mxu0
      %v8684 = vadd.f32 0.0, %v8683
      %8685 = vmatmul.bf16.gmra.mxu0 %v8652
      %v8686 = vpop.f32.mrf.mxu0
      %v8687 = vadd.f32 0.0, %v8686
      %v8688 = vpop.f32.mrf.mxu0
      %v8689 = vadd.f32 0.0, %v8688
      %8690 = vmatmul.bf16.gmra.mxu0 %v8655
      %v8691 = vpop.f32.mrf.mxu0
      %v8692 = vadd.f32 0.0, %v8691
      %v8693 = vpop.f32.mrf.mxu0
      %v8694 = vadd.f32 0.0, %v8693
      %8695 = vmatmul.bf16.gmra.mxu0 %v8658
      %v8696 = vpop.f32.mrf.mxu0
      %v8697 = vadd.f32 0.0, %v8696
      %v8698 = vpop.f32.mrf.mxu0
      %v8699 = vadd.f32 0.0, %v8698
      %8700 = vmatmul.bf16.gmra.mxu0 %v8661
      %v8701 = vpop.f32.mrf.mxu0
      %v8702 = vadd.f32 0.0, %v8701
      %v8703 = vpop.f32.mrf.mxu0
      %v8704 = vadd.f32 0.0, %v8703
      %8705 = vmatmul.bf16.gmra.mxu0 %v8664
      %v8706 = vpop.f32.mrf.mxu0
      %v8707 = vadd.f32 0.0, %v8706
      %v8708 = vpop.f32.mrf.mxu0
      %v8709 = vadd.f32 0.0, %v8708
      %8710 = vmatmul.bf16.gmra.mxu0 %v8667
      %v8711 = vpop.f32.mrf.mxu0
      %v8712 = vadd.f32 0.0, %v8711
      %v8713 = vpop.f32.mrf.mxu0
      %v8714 = vadd.f32 0.0, %v8713
      %8715 = vmatmul.bf16.gmra.mxu0 %v8670
      %v8716 = vpop.f32.mrf.mxu0
      %v8717 = vadd.f32 0.0, %v8716
      %v8718 = vpop.f32.mrf.mxu0
      %v8719 = vadd.f32 0.0, %v8718
      %8720 = vdwg.mxu0
      %v8721 = vadd.f32 %v7795, %v8682
      %v8722 = vadd.f32 %v7797, %v8684
      %v8723 = vadd.f32 %v7800, %v8687
      %v8724 = vadd.f32 %v7802, %v8689
      %v8725 = vadd.f32 %v7805, %v8692
      %v8726 = vadd.f32 %v7807, %v8694
      %v8727 = vadd.f32 %v7810, %v8697
      %v8728 = vadd.f32 %v7812, %v8699
      %v8729 = vadd.f32 %v7815, %v8702
      %v8730 = vadd.f32 %v7817, %v8704
      %v8731 = vadd.f32 %v7820, %v8707
      %v8732 = vadd.f32 %v7822, %v8709
      %v8733 = vadd.f32 %v7825, %v8712
      %v8734 = vadd.f32 %v7827, %v8714
      %v8735 = vadd.f32 %v7830, %v8717
      %v8736 = vadd.f32 %v7832, %v8719
      %8737 = vrot.lane.b32.xlu0 %v6011, 80
      %v8738 = vpop.permute.xlu0 %8737
      %8739 = vrot.lane.b32.xlu0 %v6013, 80
      %v8740 = vpop.permute.xlu0 %8739
      %8741 = vrot.lane.b32.xlu0 %v6011, 16
      %v8742 = vpop.permute.xlu0 %8741
      %8743 = vrot.lane.b32.xlu0 %v6013, 16
      %v8744 = vpop.permute.xlu0 %8743
      %v8745 = vsel %vm1065, %v8738, 0
      %v8747 = vsel %vm1065, %v8740, 0
      %v8749 = vsel %vm1065, %v8742, 0
      %v8751 = vsel %vm1065, %v8744, 0
      %8753 = vmatpush.xpose.msra.mxu0 0.0
      %8754 = vmatpush.xpose.msra.mxu0 0.0
      %8755 = vmatpush.xpose.msra.mxu0 0.0
      %8756 = vmatpush.xpose.msra.mxu0 0.0
      %8757 = vmatpush.xpose.msra.mxu0 0.0
      %8758 = vmatpush.xpose.msra.mxu0 0.0
      %8759 = vmatpush.xpose.msra.mxu0 0.0
      %8760 = vmatpush.xpose.msra.mxu0 0.0
      %8761 = vmatpush.xpose.msra.mxu0 0.0
      %8762 = vmatpush.xpose.msra.mxu0 0.0
      %8763 = vmatpush.xpose.msra.mxu0 0.0
      %8764 = vmatpush.xpose.msra.mxu0 0.0
      %8765 = vmatpush.xpose.msra.mxu0 0.0
      %8766 = vmatpush.xpose.msra.mxu0 0.0
      %8767 = vmatpush.xpose.msra.mxu0 %v8751
      %8768 = vmatpush.xpose.msra.mxu0 %v8749
      %8769 = vmatmul.f32.gmra.mxu0 %v8745
      %v8770 = vpop.f32.mrf.mxu0
      %v8771 = vadd.f32 0.0, %v8770
      %8772 = vmatmul.f32.gmra.mxu0 %v8747
      %v8773 = vpop.f32.mrf.mxu0
      %v8774 = vadd.f32 0.0, %v8773
      %8775 = vdwg.mxu0
      %8776 = vrot.lane.b32.xlu0 %v6016, 80
      %v8777 = vpop.permute.xlu0 %8776
      %8778 = vrot.lane.b32.xlu0 %v6018, 80
      %v8779 = vpop.permute.xlu0 %8778
      %8780 = vrot.lane.b32.xlu0 %v6016, 16
      %v8781 = vpop.permute.xlu0 %8780
      %8782 = vrot.lane.b32.xlu0 %v6018, 16
      %v8783 = vpop.permute.xlu0 %8782
      %v8784 = vsel %vm1065, %v8777, 0
      %v8786 = vsel %vm1065, %v8779, 0
      %v8788 = vsel %vm1065, %v8781, 0
      %v8790 = vsel %vm1065, %v8783, 0
      %8792 = vmatpush.xpose.msra.mxu0 0.0
      %8793 = vmatpush.xpose.msra.mxu0 0.0
      %8794 = vmatpush.xpose.msra.mxu0 0.0
      %8795 = vmatpush.xpose.msra.mxu0 0.0
      %8796 = vmatpush.xpose.msra.mxu0 0.0
      %8797 = vmatpush.xpose.msra.mxu0 0.0
      %8798 = vmatpush.xpose.msra.mxu0 0.0
      %8799 = vmatpush.xpose.msra.mxu0 0.0
      %8800 = vmatpush.xpose.msra.mxu0 0.0
      %8801 = vmatpush.xpose.msra.mxu0 0.0
      %8802 = vmatpush.xpose.msra.mxu0 0.0
      %8803 = vmatpush.xpose.msra.mxu0 0.0
      %8804 = vmatpush.xpose.msra.mxu0 0.0
      %8805 = vmatpush.xpose.msra.mxu0 0.0
      %8806 = vmatpush.xpose.msra.mxu0 %v8790
      %8807 = vmatpush.xpose.msra.mxu0 %v8788
      %8808 = vmatmul.f32.gmra.mxu0 %v8784
      %v8809 = vpop.f32.mrf.mxu0
      %v8810 = vadd.f32 0.0, %v8809
      %8811 = vmatmul.f32.gmra.mxu0 %v8786
      %v8812 = vpop.f32.mrf.mxu0
      %v8813 = vadd.f32 0.0, %v8812
      %8814 = vdwg.mxu0
      %8815 = vrot.lane.b32.xlu0 %v6021, 80
      %v8816 = vpop.permute.xlu0 %8815
      %8817 = vrot.lane.b32.xlu0 %v6023, 80
      %v8818 = vpop.permute.xlu0 %8817
      %8819 = vrot.lane.b32.xlu0 %v6021, 16
      %v8820 = vpop.permute.xlu0 %8819
      %8821 = vrot.lane.b32.xlu0 %v6023, 16
      %v8822 = vpop.permute.xlu0 %8821
      %v8823 = vsel %vm1065, %v8816, 0
      %v8825 = vsel %vm1065, %v8818, 0
      %v8827 = vsel %vm1065, %v8820, 0
      %v8829 = vsel %vm1065, %v8822, 0
      %8831 = vmatpush.xpose.msra.mxu0 0.0
      %8832 = vmatpush.xpose.msra.mxu0 0.0
      %8833 = vmatpush.xpose.msra.mxu0 0.0
      %8834 = vmatpush.xpose.msra.mxu0 0.0
      %8835 = vmatpush.xpose.msra.mxu0 0.0
      %8836 = vmatpush.xpose.msra.mxu0 0.0
      %8837 = vmatpush.xpose.msra.mxu0 0.0
      %8838 = vmatpush.xpose.msra.mxu0 0.0
      %8839 = vmatpush.xpose.msra.mxu0 0.0
      %8840 = vmatpush.xpose.msra.mxu0 0.0
      %8841 = vmatpush.xpose.msra.mxu0 0.0
      %8842 = vmatpush.xpose.msra.mxu0 0.0
      %8843 = vmatpush.xpose.msra.mxu0 0.0
      %8844 = vmatpush.xpose.msra.mxu0 0.0
      %8845 = vmatpush.xpose.msra.mxu0 %v8829
      %8846 = vmatpush.xpose.msra.mxu0 %v8827
      %8847 = vmatmul.f32.gmra.mxu0 %v8823
      %v8848 = vpop.f32.mrf.mxu0
      %v8849 = vadd.f32 0.0, %v8848
      %8850 = vmatmul.f32.gmra.mxu0 %v8825
      %v8851 = vpop.f32.mrf.mxu0
      %v8852 = vadd.f32 0.0, %v8851
      %8853 = vdwg.mxu0
      %8854 = vrot.lane.b32.xlu0 %v6026, 80
      %v8855 = vpop.permute.xlu0 %8854
      %8856 = vrot.lane.b32.xlu0 %v6028, 80
      %v8857 = vpop.permute.xlu0 %8856
      %8858 = vrot.lane.b32.xlu0 %v6026, 16
      %v8859 = vpop.permute.xlu0 %8858
      %8860 = vrot.lane.b32.xlu0 %v6028, 16
      %v8861 = vpop.permute.xlu0 %8860
      %v8862 = vsel %vm1065, %v8855, 0
      %v8864 = vsel %vm1065, %v8857, 0
      %v8866 = vsel %vm1065, %v8859, 0
      %v8868 = vsel %vm1065, %v8861, 0
      %8870 = vmatpush.xpose.msra.mxu0 0.0
      %8871 = vmatpush.xpose.msra.mxu0 0.0
      %8872 = vmatpush.xpose.msra.mxu0 0.0
      %8873 = vmatpush.xpose.msra.mxu0 0.0
      %8874 = vmatpush.xpose.msra.mxu0 0.0
      %8875 = vmatpush.xpose.msra.mxu0 0.0
      %8876 = vmatpush.xpose.msra.mxu0 0.0
      %8877 = vmatpush.xpose.msra.mxu0 0.0
      %8878 = vmatpush.xpose.msra.mxu0 0.0
      %8879 = vmatpush.xpose.msra.mxu0 0.0
      %8880 = vmatpush.xpose.msra.mxu0 0.0
      %8881 = vmatpush.xpose.msra.mxu0 0.0
      %8882 = vmatpush.xpose.msra.mxu0 0.0
      %8883 = vmatpush.xpose.msra.mxu0 0.0
      %8884 = vmatpush.xpose.msra.mxu0 %v8868
      %8885 = vmatpush.xpose.msra.mxu0 %v8866
      %8886 = vmatmul.f32.gmra.mxu0 %v8862
      %v8887 = vpop.f32.mrf.mxu0
      %v8888 = vadd.f32 0.0, %v8887
      %8889 = vmatmul.f32.gmra.mxu0 %v8864
      %v8890 = vpop.f32.mrf.mxu0
      %v8891 = vadd.f32 0.0, %v8890
      %8892 = vdwg.mxu0
      %8893 = vrot.lane.b32.xlu0 %v6031, 80
      %v8894 = vpop.permute.xlu0 %8893
      %8895 = vrot.lane.b32.xlu0 %v6033, 80
      %v8896 = vpop.permute.xlu0 %8895
      %8897 = vrot.lane.b32.xlu0 %v6031, 16
      %v8898 = vpop.permute.xlu0 %8897
      %8899 = vrot.lane.b32.xlu0 %v6033, 16
      %v8900 = vpop.permute.xlu0 %8899
      %v8901 = vsel %vm1065, %v8894, 0
      %v8903 = vsel %vm1065, %v8896, 0
      %v8905 = vsel %vm1065, %v8898, 0
      %v8907 = vsel %vm1065, %v8900, 0
      %8909 = vmatpush.xpose.msra.mxu0 0.0
      %8910 = vmatpush.xpose.msra.mxu0 0.0
      %8911 = vmatpush.xpose.msra.mxu0 0.0
      %8912 = vmatpush.xpose.msra.mxu0 0.0
      %8913 = vmatpush.xpose.msra.mxu0 0.0
      %8914 = vmatpush.xpose.msra.mxu0 0.0
      %8915 = vmatpush.xpose.msra.mxu0 0.0
      %8916 = vmatpush.xpose.msra.mxu0 0.0
      %8917 = vmatpush.xpose.msra.mxu0 0.0
      %8918 = vmatpush.xpose.msra.mxu0 0.0
      %8919 = vmatpush.xpose.msra.mxu0 0.0
      %8920 = vmatpush.xpose.msra.mxu0 0.0
      %8921 = vmatpush.xpose.msra.mxu0 0.0
      %8922 = vmatpush.xpose.msra.mxu0 0.0
      %8923 = vmatpush.xpose.msra.mxu0 %v8907
      %8924 = vmatpush.xpose.msra.mxu0 %v8905
      %8925 = vmatmul.f32.gmra.mxu0 %v8901
      %v8926 = vpop.f32.mrf.mxu0
      %v8927 = vadd.f32 0.0, %v8926
      %8928 = vmatmul.f32.gmra.mxu0 %v8903
      %v8929 = vpop.f32.mrf.mxu0
      %v8930 = vadd.f32 0.0, %v8929
      %8931 = vdwg.mxu0
      %8932 = vrot.lane.b32.xlu0 %v6036, 80
      %v8933 = vpop.permute.xlu0 %8932
      %8934 = vrot.lane.b32.xlu0 %v6038, 80
      %v8935 = vpop.permute.xlu0 %8934
      %8936 = vrot.lane.b32.xlu0 %v6036, 16
      %v8937 = vpop.permute.xlu0 %8936
      %8938 = vrot.lane.b32.xlu0 %v6038, 16
      %v8939 = vpop.permute.xlu0 %8938
      %v8940 = vsel %vm1065, %v8933, 0
      %v8942 = vsel %vm1065, %v8935, 0
      %v8944 = vsel %vm1065, %v8937, 0
      %v8946 = vsel %vm1065, %v8939, 0
      %8948 = vmatpush.xpose.msra.mxu0 0.0
      %8949 = vmatpush.xpose.msra.mxu0 0.0
      %8950 = vmatpush.xpose.msra.mxu0 0.0
      %8951 = vmatpush.xpose.msra.mxu0 0.0
      %8952 = vmatpush.xpose.msra.mxu0 0.0
      %8953 = vmatpush.xpose.msra.mxu0 0.0
      %8954 = vmatpush.xpose.msra.mxu0 0.0
      %8955 = vmatpush.xpose.msra.mxu0 0.0
      %8956 = vmatpush.xpose.msra.mxu0 0.0
      %8957 = vmatpush.xpose.msra.mxu0 0.0
      %8958 = vmatpush.xpose.msra.mxu0 0.0
      %8959 = vmatpush.xpose.msra.mxu0 0.0
      %8960 = vmatpush.xpose.msra.mxu0 0.0
      %8961 = vmatpush.xpose.msra.mxu0 0.0
      %8962 = vmatpush.xpose.msra.mxu0 %v8946
      %8963 = vmatpush.xpose.msra.mxu0 %v8944
      %8964 = vmatmul.f32.gmra.mxu0 %v8940
      %v8965 = vpop.f32.mrf.mxu0
      %v8966 = vadd.f32 0.0, %v8965
      %8967 = vmatmul.f32.gmra.mxu0 %v8942
      %v8968 = vpop.f32.mrf.mxu0
      %v8969 = vadd.f32 0.0, %v8968
      %8970 = vdwg.mxu0
      %8971 = vrot.lane.b32.xlu0 %v6041, 80
      %v8972 = vpop.permute.xlu0 %8971
      %8973 = vrot.lane.b32.xlu0 %v6043, 80
      %v8974 = vpop.permute.xlu0 %8973
      %8975 = vrot.lane.b32.xlu0 %v6041, 16
      %v8976 = vpop.permute.xlu0 %8975
      %8977 = vrot.lane.b32.xlu0 %v6043, 16
      %v8978 = vpop.permute.xlu0 %8977
      %v8979 = vsel %vm1065, %v8972, 0
      %v8981 = vsel %vm1065, %v8974, 0
      %v8983 = vsel %vm1065, %v8976, 0
      %v8985 = vsel %vm1065, %v8978, 0
      %8987 = vmatpush.xpose.msra.mxu0 0.0
      %8988 = vmatpush.xpose.msra.mxu0 0.0
      %8989 = vmatpush.xpose.msra.mxu0 0.0
      %8990 = vmatpush.xpose.msra.mxu0 0.0
      %8991 = vmatpush.xpose.msra.mxu0 0.0
      %8992 = vmatpush.xpose.msra.mxu0 0.0
      %8993 = vmatpush.xpose.msra.mxu0 0.0
      %8994 = vmatpush.xpose.msra.mxu0 0.0
      %8995 = vmatpush.xpose.msra.mxu0 0.0
      %8996 = vmatpush.xpose.msra.mxu0 0.0
      %8997 = vmatpush.xpose.msra.mxu0 0.0
      %8998 = vmatpush.xpose.msra.mxu0 0.0
      %8999 = vmatpush.xpose.msra.mxu0 0.0
      %9000 = vmatpush.xpose.msra.mxu0 0.0
      %9001 = vmatpush.xpose.msra.mxu0 %v8985
      %9002 = vmatpush.xpose.msra.mxu0 %v8983
      %9003 = vmatmul.f32.gmra.mxu0 %v8979
      %v9004 = vpop.f32.mrf.mxu0
      %v9005 = vadd.f32 0.0, %v9004
      %9006 = vmatmul.f32.gmra.mxu0 %v8981
      %v9007 = vpop.f32.mrf.mxu0
      %v9008 = vadd.f32 0.0, %v9007
      %9009 = vdwg.mxu0
      %9010 = vrot.lane.b32.xlu0 %v6046, 80
      %v9011 = vpop.permute.xlu0 %9010
      %9012 = vrot.lane.b32.xlu0 %v6048, 80
      %v9013 = vpop.permute.xlu0 %9012
      %9014 = vrot.lane.b32.xlu0 %v6046, 16
      %v9015 = vpop.permute.xlu0 %9014
      %9016 = vrot.lane.b32.xlu0 %v6048, 16
      %v9017 = vpop.permute.xlu0 %9016
      %v9018 = vsel %vm1065, %v9011, 0
      %v9020 = vsel %vm1065, %v9013, 0
      %v9022 = vsel %vm1065, %v9015, 0
      %v9024 = vsel %vm1065, %v9017, 0
      %9026 = vmatpush.xpose.msra.mxu0 0.0
      %9027 = vmatpush.xpose.msra.mxu0 0.0
      %9028 = vmatpush.xpose.msra.mxu0 0.0
      %9029 = vmatpush.xpose.msra.mxu0 0.0
      %9030 = vmatpush.xpose.msra.mxu0 0.0
      %9031 = vmatpush.xpose.msra.mxu0 0.0
      %9032 = vmatpush.xpose.msra.mxu0 0.0
      %9033 = vmatpush.xpose.msra.mxu0 0.0
      %9034 = vmatpush.xpose.msra.mxu0 0.0
      %9035 = vmatpush.xpose.msra.mxu0 0.0
      %9036 = vmatpush.xpose.msra.mxu0 0.0
      %9037 = vmatpush.xpose.msra.mxu0 0.0
      %9038 = vmatpush.xpose.msra.mxu0 0.0
      %9039 = vmatpush.xpose.msra.mxu0 0.0
      %9040 = vmatpush.xpose.msra.mxu0 %v9024
      %9041 = vmatpush.xpose.msra.mxu0 %v9022
      %9042 = vmatmul.f32.gmra.mxu0 %v9018
      %v9043 = vpop.f32.mrf.mxu0
      %v9044 = vadd.f32 0.0, %v9043
      %9045 = vmatmul.f32.gmra.mxu0 %v9020
      %v9046 = vpop.f32.mrf.mxu0
      %v9047 = vadd.f32 0.0, %v9046
      %9048 = vdwg.mxu0
      %v9049 = vmul.f32 %v8771, 0.25
      %v9050 = vmul.f32 %v8774, 0.25
      %v9051 = vmul.f32 %v8810, 0.25
      %v9052 = vmul.f32 %v8813, 0.25
      %v9053 = vmul.f32 %v8849, 0.25
      %v9054 = vmul.f32 %v8852, 0.25
      %v9055 = vmul.f32 %v8888, 0.25
      %v9056 = vmul.f32 %v8891, 0.25
      %v9057 = vmul.f32 %v8927, 0.25
      %v9058 = vmul.f32 %v8930, 0.25
      %v9059 = vmul.f32 %v8966, 0.25
      %v9060 = vmul.f32 %v8969, 0.25
      %v9061 = vmul.f32 %v9005, 0.25
      %v9062 = vmul.f32 %v9008, 0.25
      %v9063 = vmul.f32 %v9044, 0.25
      %v9064 = vmul.f32 %v9047, 0.25
      %v9065 = vadd.f32 %v9049, %v1372
      %v9066 = vadd.f32 %v9050, %v1372
      %v9067 = vadd.f32 %v9051, %v1373
      %v9068 = vadd.f32 %v9052, %v1373
      %v9069 = vadd.f32 %v9053, %v1374
      %v9070 = vadd.f32 %v9054, %v1374
      %v9071 = vadd.f32 %v9055, %v1375
      %v9072 = vadd.f32 %v9056, %v1375
      %v9073 = vadd.f32 %v9057, %v1376
      %v9074 = vadd.f32 %v9058, %v1376
      %v9075 = vadd.f32 %v9059, %v1377
      %v9076 = vadd.f32 %v9060, %v1377
      %v9077 = vadd.f32 %v9061, %v1378
      %v9078 = vadd.f32 %v9062, %v1378
      %v9079 = vadd.f32 %v9063, %v1379
      %v9080 = vadd.f32 %v9064, %v1379
      %v9081 = vsel %vm1065, %v9065, -inf
      %9082 = vmax.xlane.f32.xlu0 %v9081
      %v9083 = vpop.xlane.xlu0 %9082
      %v9084 = vsel %vm1065, %v9066, -inf
      %9085 = vmax.xlane.f32.xlu0 %v9084
      %v9086 = vpop.xlane.xlu0 %9085
      %v9087 = vsel %vm1065, %v9067, -inf
      %9088 = vmax.xlane.f32.xlu0 %v9087
      %v9089 = vpop.xlane.xlu0 %9088
      %v9090 = vsel %vm1065, %v9068, -inf
      %9091 = vmax.xlane.f32.xlu0 %v9090
      %v9092 = vpop.xlane.xlu0 %9091
      %v9093 = vsel %vm1065, %v9069, -inf
      %9094 = vmax.xlane.f32.xlu0 %v9093
      %v9095 = vpop.xlane.xlu0 %9094
      %v9096 = vsel %vm1065, %v9070, -inf
      %9097 = vmax.xlane.f32.xlu0 %v9096
      %v9098 = vpop.xlane.xlu0 %9097
      %v9099 = vsel %vm1065, %v9071, -inf
      %9100 = vmax.xlane.f32.xlu0 %v9099
      %v9101 = vpop.xlane.xlu0 %9100
      %v9102 = vsel %vm1065, %v9072, -inf
      %9103 = vmax.xlane.f32.xlu0 %v9102
      %v9104 = vpop.xlane.xlu0 %9103
      %v9105 = vsel %vm1065, %v9073, -inf
      %9106 = vmax.xlane.f32.xlu0 %v9105
      %v9107 = vpop.xlane.xlu0 %9106
      %v9108 = vsel %vm1065, %v9074, -inf
      %9109 = vmax.xlane.f32.xlu0 %v9108
      %v9110 = vpop.xlane.xlu0 %9109
      %v9111 = vsel %vm1065, %v9075, -inf
      %9112 = vmax.xlane.f32.xlu0 %v9111
      %v9113 = vpop.xlane.xlu0 %9112
      %v9114 = vsel %vm1065, %v9076, -inf
      %9115 = vmax.xlane.f32.xlu0 %v9114
      %v9116 = vpop.xlane.xlu0 %9115
      %v9117 = vsel %vm1065, %v9077, -inf
      %9118 = vmax.xlane.f32.xlu0 %v9117
      %v9119 = vpop.xlane.xlu0 %9118
      %v9120 = vsel %vm1065, %v9078, -inf
      %9121 = vmax.xlane.f32.xlu0 %v9120
      %v9122 = vpop.xlane.xlu0 %9121
      %v9123 = vsel %vm1065, %v9079, -inf
      %9124 = vmax.xlane.f32.xlu0 %v9123
      %v9125 = vpop.xlane.xlu0 %9124
      %v9126 = vsel %vm1065, %v9080, -inf
      %9127 = vmax.xlane.f32.xlu0 %v9126
      %v9128 = vpop.xlane.xlu0 %9127
      %v9129 = vsub.f32 %v9065, %v9083
      %v9130 = vsub.f32 %v9066, %v9086
      %v9131 = vsub.f32 %v9067, %v9089
      %v9132 = vsub.f32 %v9068, %v9092
      %v9133 = vsub.f32 %v9069, %v9095
      %v9134 = vsub.f32 %v9070, %v9098
      %v9135 = vsub.f32 %v9071, %v9101
      %v9136 = vsub.f32 %v9072, %v9104
      %v9137 = vsub.f32 %v9073, %v9107
      %v9138 = vsub.f32 %v9074, %v9110
      %v9139 = vsub.f32 %v9075, %v9113
      %v9140 = vsub.f32 %v9076, %v9116
      %v9141 = vsub.f32 %v9077, %v9119
      %v9142 = vsub.f32 %v9078, %v9122
      %v9143 = vsub.f32 %v9079, %v9125
      %v9144 = vsub.f32 %v9080, %v9128
      %v9145 = vmul.f32 %v9129, 1.442695
      %v9146 = vpow.pop %v9145
      %v9147 = vmul.f32 %v9130, 1.442695
      %v9148 = vpow.pop %v9147
      %v9149 = vmul.f32 %v9131, 1.442695
      %v9150 = vpow.pop %v9149
      %v9151 = vmul.f32 %v9132, 1.442695
      %v9152 = vpow.pop %v9151
      %v9153 = vmul.f32 %v9133, 1.442695
      %v9154 = vpow.pop %v9153
      %v9155 = vmul.f32 %v9134, 1.442695
      %v9156 = vpow.pop %v9155
      %v9157 = vmul.f32 %v9135, 1.442695
      %v9158 = vpow.pop %v9157
      %v9159 = vmul.f32 %v9136, 1.442695
      %v9160 = vpow.pop %v9159
      %v9161 = vmul.f32 %v9137, 1.442695
      %v9162 = vpow.pop %v9161
      %v9163 = vmul.f32 %v9138, 1.442695
      %v9164 = vpow.pop %v9163
      %v9165 = vmul.f32 %v9139, 1.442695
      %v9166 = vpow.pop %v9165
      %v9167 = vmul.f32 %v9140, 1.442695
      %v9168 = vpow.pop %v9167
      %v9169 = vmul.f32 %v9141, 1.442695
      %v9170 = vpow.pop %v9169
      %v9171 = vmul.f32 %v9142, 1.442695
      %v9172 = vpow.pop %v9171
      %v9173 = vmul.f32 %v9143, 1.442695
      %v9174 = vpow.pop %v9173
      %v9175 = vmul.f32 %v9144, 1.442695
      %v9176 = vpow.pop %v9175
      %v9177 = vsel %vm1065, %v9146, 0.0
      %9178 = vadd.xlane.f32.xlu0 %v9177
      %v9179 = vpop.xlane.xlu0 %9178
      %v9180 = vsel %vm1065, %v9148, 0.0
      %9181 = vadd.xlane.f32.xlu0 %v9180
      %v9182 = vpop.xlane.xlu0 %9181
      %v9183 = vsel %vm1065, %v9150, 0.0
      %9184 = vadd.xlane.f32.xlu0 %v9183
      %v9185 = vpop.xlane.xlu0 %9184
      %v9186 = vsel %vm1065, %v9152, 0.0
      %9187 = vadd.xlane.f32.xlu0 %v9186
      %v9188 = vpop.xlane.xlu0 %9187
      %v9189 = vsel %vm1065, %v9154, 0.0
      %9190 = vadd.xlane.f32.xlu0 %v9189
      %v9191 = vpop.xlane.xlu0 %9190
      %v9192 = vsel %vm1065, %v9156, 0.0
      %9193 = vadd.xlane.f32.xlu0 %v9192
      %v9194 = vpop.xlane.xlu0 %9193
      %v9195 = vsel %vm1065, %v9158, 0.0
      %9196 = vadd.xlane.f32.xlu0 %v9195
      %v9197 = vpop.xlane.xlu0 %9196
      %v9198 = vsel %vm1065, %v9160, 0.0
      %9199 = vadd.xlane.f32.xlu0 %v9198
      %v9200 = vpop.xlane.xlu0 %9199
      %v9201 = vsel %vm1065, %v9162, 0.0
      %9202 = vadd.xlane.f32.xlu0 %v9201
      %v9203 = vpop.xlane.xlu0 %9202
      %v9204 = vsel %vm1065, %v9164, 0.0
      %9205 = vadd.xlane.f32.xlu0 %v9204
      %v9206 = vpop.xlane.xlu0 %9205
      %v9207 = vsel %vm1065, %v9166, 0.0
      %9208 = vadd.xlane.f32.xlu0 %v9207
      %v9209 = vpop.xlane.xlu0 %9208
      %v9210 = vsel %vm1065, %v9168, 0.0
      %9211 = vadd.xlane.f32.xlu0 %v9210
      %v9212 = vpop.xlane.xlu0 %9211
      %v9213 = vsel %vm1065, %v9170, 0.0
      %9214 = vadd.xlane.f32.xlu0 %v9213
      %v9215 = vpop.xlane.xlu0 %9214
      %v9216 = vsel %vm1065, %v9172, 0.0
      %9217 = vadd.xlane.f32.xlu0 %v9216
      %v9218 = vpop.xlane.xlu0 %9217
      %v9219 = vsel %vm1065, %v9174, 0.0
      %9220 = vadd.xlane.f32.xlu0 %v9219
      %v9221 = vpop.xlane.xlu0 %9220
      %v9222 = vsel %vm1065, %v9176, 0.0
      %9223 = vadd.xlane.f32.xlu0 %v9222
      %v9224 = vpop.xlane.xlu0 %9223
      %v9225 = vrcp.pop %v9179
      %v9226 = vrcp.pop %v9182
      %v9227 = vrcp.pop %v9185
      %v9228 = vrcp.pop %v9188
      %v9229 = vrcp.pop %v9191
      %v9230 = vrcp.pop %v9194
      %v9231 = vrcp.pop %v9197
      %v9232 = vrcp.pop %v9200
      %v9233 = vrcp.pop %v9203
      %v9234 = vrcp.pop %v9206
      %v9235 = vrcp.pop %v9209
      %v9236 = vrcp.pop %v9212
      %v9237 = vrcp.pop %v9215
      %v9238 = vrcp.pop %v9218
      %v9239 = vrcp.pop %v9221
      %v9240 = vrcp.pop %v9224
      %v9241 = vmul.f32 %v9146, %v9225
      %v9242 = vmul.f32 %v9148, %v9226
      %v9243 = vmul.f32 %v9150, %v9227
      %v9244 = vmul.f32 %v9152, %v9228
      %v9245 = vmul.f32 %v9154, %v9229
      %v9246 = vmul.f32 %v9156, %v9230
      %v9247 = vmul.f32 %v9158, %v9231
      %v9248 = vmul.f32 %v9160, %v9232
      %v9249 = vmul.f32 %v9162, %v9233
      %v9250 = vmul.f32 %v9164, %v9234
      %v9251 = vmul.f32 %v9166, %v9235
      %v9252 = vmul.f32 %v9168, %v9236
      %v9253 = vmul.f32 %v9170, %v9237
      %v9254 = vmul.f32 %v9172, %v9238
      %v9255 = vmul.f32 %v9174, %v9239
      %v9256 = vmul.f32 %v9176, %v9240
      %9257 = vrot.lane.b32.xlu0 %v6060, 80
      %v9258 = vpop.permute.xlu0 %9257
      %9259 = vrot.lane.b32.xlu0 %v6062, 80
      %v9260 = vpop.permute.xlu0 %9259
      %v9264 = vsel %vm1065, %v9241, 0
      %v9267 = vsel %vm1065, %v9242, 0
      %9269 = vmatpush.msra.mxu0 0.0
      %9270 = vmatpush.msra.mxu0 0.0
      %9271 = vmatpush.msra.mxu0 0.0
      %9272 = vmatpush.msra.mxu0 0.0
      %9273 = vmatpush.msra.mxu0 0.0
      %9274 = vmatpush.msra.mxu0 0.0
      %9275 = vmatpush.msra.mxu0 0.0
      %9276 = vmatpush.msra.mxu0 0.0
      %9277 = vmatpush.msra.mxu0 0.0
      %9278 = vmatpush.msra.mxu0 0.0
      %9279 = vmatpush.msra.mxu0 0.0
      %9280 = vmatpush.msra.mxu0 0.0
      %9281 = vmatpush.msra.mxu0 0.0
      %9282 = vmatpush.msra.mxu0 0.0
      %9283 = vmatpush.msra.mxu0 %v9260
      %9284 = vmatpush.msra.mxu0 %v9258
      %9285 = vmatmul.f32.gmra.mxu0 %v9264
      %v9286 = vpop.f32.mrf.mxu0
      %v9287 = vadd.f32 0.0, %v9286
      %9288 = vmatmul.f32.gmra.mxu0 %v9267
      %v9289 = vpop.f32.mrf.mxu0
      %v9290 = vadd.f32 0.0, %v9289
      %9291 = vdwg.mxu0
      %9292 = vrot.lane.b32.xlu0 %v6065, 80
      %v9293 = vpop.permute.xlu0 %9292
      %9294 = vrot.lane.b32.xlu0 %v6067, 80
      %v9295 = vpop.permute.xlu0 %9294
      %v9299 = vsel %vm1065, %v9243, 0
      %v9302 = vsel %vm1065, %v9244, 0
      %9304 = vmatpush.msra.mxu0 0.0
      %9305 = vmatpush.msra.mxu0 0.0
      %9306 = vmatpush.msra.mxu0 0.0
      %9307 = vmatpush.msra.mxu0 0.0
      %9308 = vmatpush.msra.mxu0 0.0
      %9309 = vmatpush.msra.mxu0 0.0
      %9310 = vmatpush.msra.mxu0 0.0
      %9311 = vmatpush.msra.mxu0 0.0
      %9312 = vmatpush.msra.mxu0 0.0
      %9313 = vmatpush.msra.mxu0 0.0
      %9314 = vmatpush.msra.mxu0 0.0
      %9315 = vmatpush.msra.mxu0 0.0
      %9316 = vmatpush.msra.mxu0 0.0
      %9317 = vmatpush.msra.mxu0 0.0
      %9318 = vmatpush.msra.mxu0 %v9295
      %9319 = vmatpush.msra.mxu0 %v9293
      %9320 = vmatmul.f32.gmra.mxu0 %v9299
      %v9321 = vpop.f32.mrf.mxu0
      %v9322 = vadd.f32 0.0, %v9321
      %9323 = vmatmul.f32.gmra.mxu0 %v9302
      %v9324 = vpop.f32.mrf.mxu0
      %v9325 = vadd.f32 0.0, %v9324
      %9326 = vdwg.mxu0
      %9327 = vrot.lane.b32.xlu0 %v6070, 80
      %v9328 = vpop.permute.xlu0 %9327
      %9329 = vrot.lane.b32.xlu0 %v6072, 80
      %v9330 = vpop.permute.xlu0 %9329
      %v9334 = vsel %vm1065, %v9245, 0
      %v9337 = vsel %vm1065, %v9246, 0
      %9339 = vmatpush.msra.mxu0 0.0
      %9340 = vmatpush.msra.mxu0 0.0
      %9341 = vmatpush.msra.mxu0 0.0
      %9342 = vmatpush.msra.mxu0 0.0
      %9343 = vmatpush.msra.mxu0 0.0
      %9344 = vmatpush.msra.mxu0 0.0
      %9345 = vmatpush.msra.mxu0 0.0
      %9346 = vmatpush.msra.mxu0 0.0
      %9347 = vmatpush.msra.mxu0 0.0
      %9348 = vmatpush.msra.mxu0 0.0
      %9349 = vmatpush.msra.mxu0 0.0
      %9350 = vmatpush.msra.mxu0 0.0
      %9351 = vmatpush.msra.mxu0 0.0
      %9352 = vmatpush.msra.mxu0 0.0
      %9353 = vmatpush.msra.mxu0 %v9330
      %9354 = vmatpush.msra.mxu0 %v9328
      %9355 = vmatmul.f32.gmra.mxu0 %v9334
      %v9356 = vpop.f32.mrf.mxu0
      %v9357 = vadd.f32 0.0, %v9356
      %9358 = vmatmul.f32.gmra.mxu0 %v9337
      %v9359 = vpop.f32.mrf.mxu0
      %v9360 = vadd.f32 0.0, %v9359
      %9361 = vdwg.mxu0
      %9362 = vrot.lane.b32.xlu0 %v6075, 80
      %v9363 = vpop.permute.xlu0 %9362
      %9364 = vrot.lane.b32.xlu0 %v6077, 80
      %v9365 = vpop.permute.xlu0 %9364
      %v9369 = vsel %vm1065, %v9247, 0
      %v9372 = vsel %vm1065, %v9248, 0
      %9374 = vmatpush.msra.mxu0 0.0
      %9375 = vmatpush.msra.mxu0 0.0
      %9376 = vmatpush.msra.mxu0 0.0
      %9377 = vmatpush.msra.mxu0 0.0
      %9378 = vmatpush.msra.mxu0 0.0
      %9379 = vmatpush.msra.mxu0 0.0
      %9380 = vmatpush.msra.mxu0 0.0
      %9381 = vmatpush.msra.mxu0 0.0
      %9382 = vmatpush.msra.mxu0 0.0
      %9383 = vmatpush.msra.mxu0 0.0
      %9384 = vmatpush.msra.mxu0 0.0
      %9385 = vmatpush.msra.mxu0 0.0
      %9386 = vmatpush.msra.mxu0 0.0
      %9387 = vmatpush.msra.mxu0 0.0
      %9388 = vmatpush.msra.mxu0 %v9365
      %9389 = vmatpush.msra.mxu0 %v9363
      %9390 = vmatmul.f32.gmra.mxu0 %v9369
      %v9391 = vpop.f32.mrf.mxu0
      %v9392 = vadd.f32 0.0, %v9391
      %9393 = vmatmul.f32.gmra.mxu0 %v9372
      %v9394 = vpop.f32.mrf.mxu0
      %v9395 = vadd.f32 0.0, %v9394
      %9396 = vdwg.mxu0
      %9397 = vrot.lane.b32.xlu0 %v6080, 80
      %v9398 = vpop.permute.xlu0 %9397
      %9399 = vrot.lane.b32.xlu0 %v6082, 80
      %v9400 = vpop.permute.xlu0 %9399
      %v9404 = vsel %vm1065, %v9249, 0
      %v9407 = vsel %vm1065, %v9250, 0
      %9409 = vmatpush.msra.mxu0 0.0
      %9410 = vmatpush.msra.mxu0 0.0
      %9411 = vmatpush.msra.mxu0 0.0
      %9412 = vmatpush.msra.mxu0 0.0
      %9413 = vmatpush.msra.mxu0 0.0
      %9414 = vmatpush.msra.mxu0 0.0
      %9415 = vmatpush.msra.mxu0 0.0
      %9416 = vmatpush.msra.mxu0 0.0
      %9417 = vmatpush.msra.mxu0 0.0
      %9418 = vmatpush.msra.mxu0 0.0
      %9419 = vmatpush.msra.mxu0 0.0
      %9420 = vmatpush.msra.mxu0 0.0
      %9421 = vmatpush.msra.mxu0 0.0
      %9422 = vmatpush.msra.mxu0 0.0
      %9423 = vmatpush.msra.mxu0 %v9400
      %9424 = vmatpush.msra.mxu0 %v9398
      %9425 = vmatmul.f32.gmra.mxu0 %v9404
      %v9426 = vpop.f32.mrf.mxu0
      %v9427 = vadd.f32 0.0, %v9426
      %9428 = vmatmul.f32.gmra.mxu0 %v9407
      %v9429 = vpop.f32.mrf.mxu0
      %v9430 = vadd.f32 0.0, %v9429
      %9431 = vdwg.mxu0
      %9432 = vrot.lane.b32.xlu0 %v6085, 80
      %v9433 = vpop.permute.xlu0 %9432
      %9434 = vrot.lane.b32.xlu0 %v6087, 80
      %v9435 = vpop.permute.xlu0 %9434
      %v9439 = vsel %vm1065, %v9251, 0
      %v9442 = vsel %vm1065, %v9252, 0
      %9444 = vmatpush.msra.mxu0 0.0
      %9445 = vmatpush.msra.mxu0 0.0
      %9446 = vmatpush.msra.mxu0 0.0
      %9447 = vmatpush.msra.mxu0 0.0
      %9448 = vmatpush.msra.mxu0 0.0
      %9449 = vmatpush.msra.mxu0 0.0
      %9450 = vmatpush.msra.mxu0 0.0
      %9451 = vmatpush.msra.mxu0 0.0
      %9452 = vmatpush.msra.mxu0 0.0
      %9453 = vmatpush.msra.mxu0 0.0
      %9454 = vmatpush.msra.mxu0 0.0
      %9455 = vmatpush.msra.mxu0 0.0
      %9456 = vmatpush.msra.mxu0 0.0
      %9457 = vmatpush.msra.mxu0 0.0
      %9458 = vmatpush.msra.mxu0 %v9435
      %9459 = vmatpush.msra.mxu0 %v9433
      %9460 = vmatmul.f32.gmra.mxu0 %v9439
      %v9461 = vpop.f32.mrf.mxu0
      %v9462 = vadd.f32 0.0, %v9461
      %9463 = vmatmul.f32.gmra.mxu0 %v9442
      %v9464 = vpop.f32.mrf.mxu0
      %v9465 = vadd.f32 0.0, %v9464
      %9466 = vdwg.mxu0
      %9467 = vrot.lane.b32.xlu0 %v6090, 80
      %v9468 = vpop.permute.xlu0 %9467
      %9469 = vrot.lane.b32.xlu0 %v6092, 80
      %v9470 = vpop.permute.xlu0 %9469
      %v9474 = vsel %vm1065, %v9253, 0
      %v9477 = vsel %vm1065, %v9254, 0
      %9479 = vmatpush.msra.mxu0 0.0
      %9480 = vmatpush.msra.mxu0 0.0
      %9481 = vmatpush.msra.mxu0 0.0
      %9482 = vmatpush.msra.mxu0 0.0
      %9483 = vmatpush.msra.mxu0 0.0
      %9484 = vmatpush.msra.mxu0 0.0
      %9485 = vmatpush.msra.mxu0 0.0
      %9486 = vmatpush.msra.mxu0 0.0
      %9487 = vmatpush.msra.mxu0 0.0
      %9488 = vmatpush.msra.mxu0 0.0
      %9489 = vmatpush.msra.mxu0 0.0
      %9490 = vmatpush.msra.mxu0 0.0
      %9491 = vmatpush.msra.mxu0 0.0
      %9492 = vmatpush.msra.mxu0 0.0
      %9493 = vmatpush.msra.mxu0 %v9470
      %9494 = vmatpush.msra.mxu0 %v9468
      %9495 = vmatmul.f32.gmra.mxu0 %v9474
      %v9496 = vpop.f32.mrf.mxu0
      %v9497 = vadd.f32 0.0, %v9496
      %9498 = vmatmul.f32.gmra.mxu0 %v9477
      %v9499 = vpop.f32.mrf.mxu0
      %v9500 = vadd.f32 0.0, %v9499
      %9501 = vdwg.mxu0
      %9502 = vrot.lane.b32.xlu0 %v6095, 80
      %v9503 = vpop.permute.xlu0 %9502
      %9504 = vrot.lane.b32.xlu0 %v6097, 80
      %v9505 = vpop.permute.xlu0 %9504
      %v9509 = vsel %vm1065, %v9255, 0
      %v9512 = vsel %vm1065, %v9256, 0
      %9514 = vmatpush.msra.mxu0 0.0
      %9515 = vmatpush.msra.mxu0 0.0
      %9516 = vmatpush.msra.mxu0 0.0
      %9517 = vmatpush.msra.mxu0 0.0
      %9518 = vmatpush.msra.mxu0 0.0
      %9519 = vmatpush.msra.mxu0 0.0
      %9520 = vmatpush.msra.mxu0 0.0
      %9521 = vmatpush.msra.mxu0 0.0
      %9522 = vmatpush.msra.mxu0 0.0
      %9523 = vmatpush.msra.mxu0 0.0
      %9524 = vmatpush.msra.mxu0 0.0
      %9525 = vmatpush.msra.mxu0 0.0
      %9526 = vmatpush.msra.mxu0 0.0
      %9527 = vmatpush.msra.mxu0 0.0
      %9528 = vmatpush.msra.mxu0 %v9505
      %9529 = vmatpush.msra.mxu0 %v9503
      %9530 = vmatmul.f32.gmra.mxu0 %v9509
      %v9531 = vpop.f32.mrf.mxu0
      %v9532 = vadd.f32 0.0, %v9531
      %9533 = vmatmul.f32.gmra.mxu0 %v9512
      %v9534 = vpop.f32.mrf.mxu0
      %v9535 = vadd.f32 0.0, %v9534
      %9536 = vdwg.mxu0
      %v9537 = vpack.c.bf16 %v9290, %v9287
      %v9538 = vpack.c.bf16 %v9325, %v9322
      %v9539 = vpack.c.bf16 %v9360, %v9357
      %v9540 = vpack.c.bf16 %v9395, %v9392
      %v9541 = vpack.c.bf16 %v9430, %v9427
      %v9542 = vpack.c.bf16 %v9465, %v9462
      %v9543 = vpack.c.bf16 %v9500, %v9497
      %v9544 = vpack.c.bf16 %v9535, %v9532
      %v9547 = vunpack.c.l.b16 %v6106
      %v9548 = vunpack.c.l.b16 %v6107
      %v9549 = vpack.c.b16 %v9548, %v9547
      %v9552 = vsel %vm1065, %v9537, 0
      %v9555 = vsel %vm1065, %v9538, 0
      %v9558 = vsel %vm1065, %v9539, 0
      %v9561 = vsel %vm1065, %v9540, 0
      %v9564 = vsel %vm1065, %v9541, 0
      %v9567 = vsel %vm1065, %v9542, 0
      %v9570 = vsel %vm1065, %v9543, 0
      %v9573 = vsel %vm1065, %v9544, 0
      %9575 = vmatpush.bf16.msra.mxu0 0
      %9576 = vmatpush.bf16.msra.mxu0 0
      %9577 = vmatpush.bf16.msra.mxu0 0
      %9578 = vmatpush.bf16.msra.mxu0 0
      %9579 = vmatpush.bf16.msra.mxu0 0
      %9580 = vmatpush.bf16.msra.mxu0 0
      %9581 = vmatpush.bf16.msra.mxu0 0
      %9582 = vmatpush.bf16.msra.mxu0 %v9549
      %9583 = vmatmul.bf16.gmra.mxu0 %v9552
      %v9584 = vpop.f32.mrf.mxu0
      %v9585 = vadd.f32 0.0, %v9584
      %v9586 = vpop.f32.mrf.mxu0
      %v9587 = vadd.f32 0.0, %v9586
      %9588 = vmatmul.bf16.gmra.mxu0 %v9555
      %v9589 = vpop.f32.mrf.mxu0
      %v9590 = vadd.f32 0.0, %v9589
      %v9591 = vpop.f32.mrf.mxu0
      %v9592 = vadd.f32 0.0, %v9591
      %9593 = vmatmul.bf16.gmra.mxu0 %v9558
      %v9594 = vpop.f32.mrf.mxu0
      %v9595 = vadd.f32 0.0, %v9594
      %v9596 = vpop.f32.mrf.mxu0
      %v9597 = vadd.f32 0.0, %v9596
      %9598 = vmatmul.bf16.gmra.mxu0 %v9561
      %v9599 = vpop.f32.mrf.mxu0
      %v9600 = vadd.f32 0.0, %v9599
      %v9601 = vpop.f32.mrf.mxu0
      %v9602 = vadd.f32 0.0, %v9601
      %9603 = vmatmul.bf16.gmra.mxu0 %v9564
      %v9604 = vpop.f32.mrf.mxu0
      %v9605 = vadd.f32 0.0, %v9604
      %v9606 = vpop.f32.mrf.mxu0
      %v9607 = vadd.f32 0.0, %v9606
      %9608 = vmatmul.bf16.gmra.mxu0 %v9567
      %v9609 = vpop.f32.mrf.mxu0
      %v9610 = vadd.f32 0.0, %v9609
      %v9611 = vpop.f32.mrf.mxu0
      %v9612 = vadd.f32 0.0, %v9611
      %9613 = vmatmul.bf16.gmra.mxu0 %v9570
      %v9614 = vpop.f32.mrf.mxu0
      %v9615 = vadd.f32 0.0, %v9614
      %v9616 = vpop.f32.mrf.mxu0
      %v9617 = vadd.f32 0.0, %v9616
      %9618 = vmatmul.bf16.gmra.mxu0 %v9573
      %v9619 = vpop.f32.mrf.mxu0
      %v9620 = vadd.f32 0.0, %v9619
      %v9621 = vpop.f32.mrf.mxu0
      %v9622 = vadd.f32 0.0, %v9621
      %9623 = vdwg.mxu0
      %v9624 = vadd.f32 %v8721, %v9585
      %v9625 = vadd.f32 %v8722, %v9587
      %v9626 = vadd.f32 %v8723, %v9590
      %v9627 = vadd.f32 %v8724, %v9592
      %v9628 = vadd.f32 %v8725, %v9595
      %v9629 = vadd.f32 %v8726, %v9597
      %v9630 = vadd.f32 %v8727, %v9600
      %v9631 = vadd.f32 %v8728, %v9602
      %v9632 = vadd.f32 %v8729, %v9605
      %v9633 = vadd.f32 %v8730, %v9607
      %v9634 = vadd.f32 %v8731, %v9610
      %v9635 = vadd.f32 %v8732, %v9612
      %v9636 = vadd.f32 %v8733, %v9615
      %v9637 = vadd.f32 %v8734, %v9617
      %v9638 = vadd.f32 %v8735, %v9620
      %v9639 = vadd.f32 %v8736, %v9622
      %v9640 = vadd.f32 %v5897, %v9624
      %v9641 = vadd.f32 %v5898, %v9625
      %v9642 = vadd.f32 %v5899, %v9626
      %v9643 = vadd.f32 %v5900, %v9627
      %v9644 = vadd.f32 %v5901, %v9628
      %v9645 = vadd.f32 %v5902, %v9629
      %v9646 = vadd.f32 %v5903, %v9630
      %v9647 = vadd.f32 %v5904, %v9631
      %v9648 = vadd.f32 %v5905, %v9632
      %v9649 = vadd.f32 %v5906, %v9633
      %v9650 = vadd.f32 %v5907, %v9634
      %v9651 = vadd.f32 %v5908, %v9635
      %v9652 = vadd.f32 %v5909, %v9636
      %v9653 = vadd.f32 %v5910, %v9637
      %v9654 = vadd.f32 %v5911, %v9638
      %v9655 = vadd.f32 %v5912, %v9639
      %s9656 = scalar_lea.vmem %s9, 1
      %v9657 = vld [vmem:[%s9656] sm:$0x1]
      %v9659 = vperm.slane %v9657, 0
      %v9661 = vadd.f32 %v9640, %v9659
      %v9662 = vadd.f32 %v9641, %v9659
      %v9663 = vadd.f32 %v9642, %v9659
      %v9664 = vadd.f32 %v9643, %v9659
      %v9665 = vadd.f32 %v9644, %v9659
      %v9666 = vadd.f32 %v9645, %v9659
      %v9667 = vadd.f32 %v9646, %v9659
      %v9668 = vadd.f32 %v9647, %v9659
      %v9669 = vadd.f32 %v9648, %v9659
      %v9670 = vadd.f32 %v9649, %v9659
      %v9671 = vadd.f32 %v9650, %v9659
      %v9672 = vadd.f32 %v9651, %v9659
      %v9673 = vadd.f32 %v9652, %v9659
      %v9674 = vadd.f32 %v9653, %v9659
      %v9675 = vadd.f32 %v9654, %v9659
      %v9676 = vadd.f32 %v9655, %v9659
      %s9677 = scalar_lea.vmem %s14, 1
      %v9678 = vld [vmem:[%s9677] sm:$0x1]
      %s9679 = scalar_lea.vmem %s15, 1
      %v9680 = vld [vmem:[%s9679] sm:$0x1]
      %v9681 = vsel %vm928, %v9661, 0.0
      %9682 = vadd.xlane.f32.xlu0 %v9681
      %v9683 = vpop.xlane.xlu0 %9682
      %v9684 = vsel %vm928, %v9662, 0.0
      %9685 = vadd.xlane.f32.xlu0 %v9684
      %v9686 = vpop.xlane.xlu0 %9685
      %v9687 = vsel %vm928, %v9663, 0.0
      %9688 = vadd.xlane.f32.xlu0 %v9687
      %v9689 = vpop.xlane.xlu0 %9688
      %v9690 = vsel %vm928, %v9664, 0.0
      %9691 = vadd.xlane.f32.xlu0 %v9690
      %v9692 = vpop.xlane.xlu0 %9691
      %v9693 = vsel %vm928, %v9665, 0.0
      %9694 = vadd.xlane.f32.xlu0 %v9693
      %v9695 = vpop.xlane.xlu0 %9694
      %v9696 = vsel %vm928, %v9666, 0.0
      %9697 = vadd.xlane.f32.xlu0 %v9696
      %v9698 = vpop.xlane.xlu0 %9697
      %v9699 = vsel %vm928, %v9667, 0.0
      %9700 = vadd.xlane.f32.xlu0 %v9699
      %v9701 = vpop.xlane.xlu0 %9700
      %v9702 = vsel %vm928, %v9668, 0.0
      %9703 = vadd.xlane.f32.xlu0 %v9702
      %v9704 = vpop.xlane.xlu0 %9703
      %v9705 = vsel %vm928, %v9669, 0.0
      %9706 = vadd.xlane.f32.xlu0 %v9705
      %v9707 = vpop.xlane.xlu0 %9706
      %v9708 = vsel %vm928, %v9670, 0.0
      %9709 = vadd.xlane.f32.xlu0 %v9708
      %v9710 = vpop.xlane.xlu0 %9709
      %v9711 = vsel %vm928, %v9671, 0.0
      %9712 = vadd.xlane.f32.xlu0 %v9711
      %v9713 = vpop.xlane.xlu0 %9712
      %v9714 = vsel %vm928, %v9672, 0.0
      %9715 = vadd.xlane.f32.xlu0 %v9714
      %v9716 = vpop.xlane.xlu0 %9715
      %v9717 = vsel %vm928, %v9673, 0.0
      %9718 = vadd.xlane.f32.xlu0 %v9717
      %v9719 = vpop.xlane.xlu0 %9718
      %v9720 = vsel %vm928, %v9674, 0.0
      %9721 = vadd.xlane.f32.xlu0 %v9720
      %v9722 = vpop.xlane.xlu0 %9721
      %v9723 = vsel %vm928, %v9675, 0.0
      %9724 = vadd.xlane.f32.xlu0 %v9723
      %v9725 = vpop.xlane.xlu0 %9724
      %v9726 = vsel %vm928, %v9676, 0.0
      %9727 = vadd.xlane.f32.xlu0 %v9726
      %v9728 = vpop.xlane.xlu0 %9727
      %v9729 = vmul.f32 %v9683, %v4700
      %v9730 = vmul.f32 %v9686, %v4700
      %v9731 = vmul.f32 %v9689, %v4700
      %v9732 = vmul.f32 %v9692, %v4700
      %v9733 = vmul.f32 %v9695, %v4700
      %v9734 = vmul.f32 %v9698, %v4700
      %v9735 = vmul.f32 %v9701, %v4700
      %v9736 = vmul.f32 %v9704, %v4700
      %v9737 = vmul.f32 %v9707, %v4700
      %v9738 = vmul.f32 %v9710, %v4700
      %v9739 = vmul.f32 %v9713, %v4700
      %v9740 = vmul.f32 %v9716, %v4700
      %v9741 = vmul.f32 %v9719, %v4700
      %v9742 = vmul.f32 %v9722, %v4700
      %v9743 = vmul.f32 %v9725, %v4700
      %v9744 = vmul.f32 %v9728, %v4700
      %v9745 = vsub.f32 %v9661, %v9729
      %v9746 = vsub.f32 %v9662, %v9730
      %v9747 = vsub.f32 %v9663, %v9731
      %v9748 = vsub.f32 %v9664, %v9732
      %v9749 = vsub.f32 %v9665, %v9733
      %v9750 = vsub.f32 %v9666, %v9734
      %v9751 = vsub.f32 %v9667, %v9735
      %v9752 = vsub.f32 %v9668, %v9736
      %v9753 = vsub.f32 %v9669, %v9737
      %v9754 = vsub.f32 %v9670, %v9738
      %v9755 = vsub.f32 %v9671, %v9739
      %v9756 = vsub.f32 %v9672, %v9740
      %v9757 = vsub.f32 %v9673, %v9741
      %v9758 = vsub.f32 %v9674, %v9742
      %v9759 = vsub.f32 %v9675, %v9743
      %v9760 = vsub.f32 %v9676, %v9744
      %v9761 = vmul.f32 %v9745, %v9745
      %v9762 = vmul.f32 %v9746, %v9746
      %v9763 = vmul.f32 %v9747, %v9747
      %v9764 = vmul.f32 %v9748, %v9748
      %v9765 = vmul.f32 %v9749, %v9749
      %v9766 = vmul.f32 %v9750, %v9750
      %v9767 = vmul.f32 %v9751, %v9751
      %v9768 = vmul.f32 %v9752, %v9752
      %v9769 = vmul.f32 %v9753, %v9753
      %v9770 = vmul.f32 %v9754, %v9754
      %v9771 = vmul.f32 %v9755, %v9755
      %v9772 = vmul.f32 %v9756, %v9756
      %v9773 = vmul.f32 %v9757, %v9757
      %v9774 = vmul.f32 %v9758, %v9758
      %v9775 = vmul.f32 %v9759, %v9759
      %v9776 = vmul.f32 %v9760, %v9760
      %v9777 = vsel %vm928, %v9761, 0.0
      %9778 = vadd.xlane.f32.xlu0 %v9777
      %v9779 = vpop.xlane.xlu0 %9778
      %v9780 = vsel %vm928, %v9762, 0.0
      %9781 = vadd.xlane.f32.xlu0 %v9780
      %v9782 = vpop.xlane.xlu0 %9781
      %v9783 = vsel %vm928, %v9763, 0.0
      %9784 = vadd.xlane.f32.xlu0 %v9783
      %v9785 = vpop.xlane.xlu0 %9784
      %v9786 = vsel %vm928, %v9764, 0.0
      %9787 = vadd.xlane.f32.xlu0 %v9786
      %v9788 = vpop.xlane.xlu0 %9787
      %v9789 = vsel %vm928, %v9765, 0.0
      %9790 = vadd.xlane.f32.xlu0 %v9789
      %v9791 = vpop.xlane.xlu0 %9790
      %v9792 = vsel %vm928, %v9766, 0.0
      %9793 = vadd.xlane.f32.xlu0 %v9792
      %v9794 = vpop.xlane.xlu0 %9793
      %v9795 = vsel %vm928, %v9767, 0.0
      %9796 = vadd.xlane.f32.xlu0 %v9795
      %v9797 = vpop.xlane.xlu0 %9796
      %v9798 = vsel %vm928, %v9768, 0.0
      %9799 = vadd.xlane.f32.xlu0 %v9798
      %v9800 = vpop.xlane.xlu0 %9799
      %v9801 = vsel %vm928, %v9769, 0.0
      %9802 = vadd.xlane.f32.xlu0 %v9801
      %v9803 = vpop.xlane.xlu0 %9802
      %v9804 = vsel %vm928, %v9770, 0.0
      %9805 = vadd.xlane.f32.xlu0 %v9804
      %v9806 = vpop.xlane.xlu0 %9805
      %v9807 = vsel %vm928, %v9771, 0.0
      %9808 = vadd.xlane.f32.xlu0 %v9807
      %v9809 = vpop.xlane.xlu0 %9808
      %v9810 = vsel %vm928, %v9772, 0.0
      %9811 = vadd.xlane.f32.xlu0 %v9810
      %v9812 = vpop.xlane.xlu0 %9811
      %v9813 = vsel %vm928, %v9773, 0.0
      %9814 = vadd.xlane.f32.xlu0 %v9813
      %v9815 = vpop.xlane.xlu0 %9814
      %v9816 = vsel %vm928, %v9774, 0.0
      %9817 = vadd.xlane.f32.xlu0 %v9816
      %v9818 = vpop.xlane.xlu0 %9817
      %v9819 = vsel %vm928, %v9775, 0.0
      %9820 = vadd.xlane.f32.xlu0 %v9819
      %v9821 = vpop.xlane.xlu0 %9820
      %v9822 = vsel %vm928, %v9776, 0.0
      %9823 = vadd.xlane.f32.xlu0 %v9822
      %v9824 = vpop.xlane.xlu0 %9823
      %v9825 = vmul.f32 %v9779, %v4700
      %v9826 = vmul.f32 %v9782, %v4700
      %v9827 = vmul.f32 %v9785, %v4700
      %v9828 = vmul.f32 %v9788, %v4700
      %v9829 = vmul.f32 %v9791, %v4700
      %v9830 = vmul.f32 %v9794, %v4700
      %v9831 = vmul.f32 %v9797, %v4700
      %v9832 = vmul.f32 %v9800, %v4700
      %v9833 = vmul.f32 %v9803, %v4700
      %v9834 = vmul.f32 %v9806, %v4700
      %v9835 = vmul.f32 %v9809, %v4700
      %v9836 = vmul.f32 %v9812, %v4700
      %v9837 = vmul.f32 %v9815, %v4700
      %v9838 = vmul.f32 %v9818, %v4700
      %v9839 = vmul.f32 %v9821, %v4700
      %v9840 = vmul.f32 %v9824, %v4700
      %v9841 = vadd.f32 %v9825, 1e-05
      %v9842 = vadd.f32 %v9826, 1e-05
      %v9843 = vadd.f32 %v9827, 1e-05
      %v9844 = vadd.f32 %v9828, 1e-05
      %v9845 = vadd.f32 %v9829, 1e-05
      %v9846 = vadd.f32 %v9830, 1e-05
      %v9847 = vadd.f32 %v9831, 1e-05
      %v9848 = vadd.f32 %v9832, 1e-05
      %v9849 = vadd.f32 %v9833, 1e-05
      %v9850 = vadd.f32 %v9834, 1e-05
      %v9851 = vadd.f32 %v9835, 1e-05
      %v9852 = vadd.f32 %v9836, 1e-05
      %v9853 = vadd.f32 %v9837, 1e-05
      %v9854 = vadd.f32 %v9838, 1e-05
      %v9855 = vadd.f32 %v9839, 1e-05
      %v9856 = vadd.f32 %v9840, 1e-05
      %v9857 = vrsqrt.pop %v9841
      %v9858 = vmul.f32 %v9857, %v9841
      %v9859 = vmul.f32 %v9858, %v9857
      %v9860 = vmul.f32 0.5, %v9859
      %v9861 = vsub.f32 1.5, %v9860
      %v9862 = vmul.f32 %v9857, %v9861
      %vm9863 = vweird.f32 %v9841
      %vm9864 = vweird.f32 %v9857
      %vm9865 = vmor %vm9863, %vm9864
      %v9866 = vsel %vm9865, %v9857, %v9862
      %v9867 = vrsqrt.pop %v9842
      %v9868 = vmul.f32 %v9867, %v9842
      %v9869 = vmul.f32 %v9868, %v9867
      %v9870 = vmul.f32 0.5, %v9869
      %v9871 = vsub.f32 1.5, %v9870
      %v9872 = vmul.f32 %v9867, %v9871
      %vm9873 = vweird.f32 %v9842
      %vm9874 = vweird.f32 %v9867
      %vm9875 = vmor %vm9873, %vm9874
      %v9876 = vsel %vm9875, %v9867, %v9872
      %v9877 = vrsqrt.pop %v9843
      %v9878 = vmul.f32 %v9877, %v9843
      %v9879 = vmul.f32 %v9878, %v9877
      %v9880 = vmul.f32 0.5, %v9879
      %v9881 = vsub.f32 1.5, %v9880
      %v9882 = vmul.f32 %v9877, %v9881
      %vm9883 = vweird.f32 %v9843
      %vm9884 = vweird.f32 %v9877
      %vm9885 = vmor %vm9883, %vm9884
      %v9886 = vsel %vm9885, %v9877, %v9882
      %v9887 = vrsqrt.pop %v9844
      %v9888 = vmul.f32 %v9887, %v9844
      %v9889 = vmul.f32 %v9888, %v9887
      %v9890 = vmul.f32 0.5, %v9889
      %v9891 = vsub.f32 1.5, %v9890
      %v9892 = vmul.f32 %v9887, %v9891
      %vm9893 = vweird.f32 %v9844
      %vm9894 = vweird.f32 %v9887
      %vm9895 = vmor %vm9893, %vm9894
      %v9896 = vsel %vm9895, %v9887, %v9892
      %v9897 = vrsqrt.pop %v9845
      %v9898 = vmul.f32 %v9897, %v9845
      %v9899 = vmul.f32 %v9898, %v9897
      %v9900 = vmul.f32 0.5, %v9899
      %v9901 = vsub.f32 1.5, %v9900
      %v9902 = vmul.f32 %v9897, %v9901
      %vm9903 = vweird.f32 %v9845
      %vm9904 = vweird.f32 %v9897
      %vm9905 = vmor %vm9903, %vm9904
      %v9906 = vsel %vm9905, %v9897, %v9902
      %v9907 = vrsqrt.pop %v9846
      %v9908 = vmul.f32 %v9907, %v9846
      %v9909 = vmul.f32 %v9908, %v9907
      %v9910 = vmul.f32 0.5, %v9909
      %v9911 = vsub.f32 1.5, %v9910
      %v9912 = vmul.f32 %v9907, %v9911
      %vm9913 = vweird.f32 %v9846
      %vm9914 = vweird.f32 %v9907
      %vm9915 = vmor %vm9913, %vm9914
      %v9916 = vsel %vm9915, %v9907, %v9912
      %v9917 = vrsqrt.pop %v9847
      %v9918 = vmul.f32 %v9917, %v9847
      %v9919 = vmul.f32 %v9918, %v9917
      %v9920 = vmul.f32 0.5, %v9919
      %v9921 = vsub.f32 1.5, %v9920
      %v9922 = vmul.f32 %v9917, %v9921
      %vm9923 = vweird.f32 %v9847
      %vm9924 = vweird.f32 %v9917
      %vm9925 = vmor %vm9923, %vm9924
      %v9926 = vsel %vm9925, %v9917, %v9922
      %v9927 = vrsqrt.pop %v9848
      %v9928 = vmul.f32 %v9927, %v9848
      %v9929 = vmul.f32 %v9928, %v9927
      %v9930 = vmul.f32 0.5, %v9929
      %v9931 = vsub.f32 1.5, %v9930
      %v9932 = vmul.f32 %v9927, %v9931
      %vm9933 = vweird.f32 %v9848
      %vm9934 = vweird.f32 %v9927
      %vm9935 = vmor %vm9933, %vm9934
      %v9936 = vsel %vm9935, %v9927, %v9932
      %v9937 = vrsqrt.pop %v9849
      %v9938 = vmul.f32 %v9937, %v9849
      %v9939 = vmul.f32 %v9938, %v9937
      %v9940 = vmul.f32 0.5, %v9939
      %v9941 = vsub.f32 1.5, %v9940
      %v9942 = vmul.f32 %v9937, %v9941
      %vm9943 = vweird.f32 %v9849
      %vm9944 = vweird.f32 %v9937
      %vm9945 = vmor %vm9943, %vm9944
      %v9946 = vsel %vm9945, %v9937, %v9942
      %v9947 = vrsqrt.pop %v9850
      %v9948 = vmul.f32 %v9947, %v9850
      %v9949 = vmul.f32 %v9948, %v9947
      %v9950 = vmul.f32 0.5, %v9949
      %v9951 = vsub.f32 1.5, %v9950
      %v9952 = vmul.f32 %v9947, %v9951
      %vm9953 = vweird.f32 %v9850
      %vm9954 = vweird.f32 %v9947
      %vm9955 = vmor %vm9953, %vm9954
      %v9956 = vsel %vm9955, %v9947, %v9952
      %v9957 = vrsqrt.pop %v9851
      %v9958 = vmul.f32 %v9957, %v9851
      %v9959 = vmul.f32 %v9958, %v9957
      %v9960 = vmul.f32 0.5, %v9959
      %v9961 = vsub.f32 1.5, %v9960
      %v9962 = vmul.f32 %v9957, %v9961
      %vm9963 = vweird.f32 %v9851
      %vm9964 = vweird.f32 %v9957
      %vm9965 = vmor %vm9963, %vm9964
      %v9966 = vsel %vm9965, %v9957, %v9962
      %v9967 = vrsqrt.pop %v9852
      %v9968 = vmul.f32 %v9967, %v9852
      %v9969 = vmul.f32 %v9968, %v9967
      %v9970 = vmul.f32 0.5, %v9969
      %v9971 = vsub.f32 1.5, %v9970
      %v9972 = vmul.f32 %v9967, %v9971
      %vm9973 = vweird.f32 %v9852
      %vm9974 = vweird.f32 %v9967
      %vm9975 = vmor %vm9973, %vm9974
      %v9976 = vsel %vm9975, %v9967, %v9972
      %v9977 = vrsqrt.pop %v9853
      %v9978 = vmul.f32 %v9977, %v9853
      %v9979 = vmul.f32 %v9978, %v9977
      %v9980 = vmul.f32 0.5, %v9979
      %v9981 = vsub.f32 1.5, %v9980
      %v9982 = vmul.f32 %v9977, %v9981
      %vm9983 = vweird.f32 %v9853
      %vm9984 = vweird.f32 %v9977
      %vm9985 = vmor %vm9983, %vm9984
      %v9986 = vsel %vm9985, %v9977, %v9982
      %v9987 = vrsqrt.pop %v9854
      %v9988 = vmul.f32 %v9987, %v9854
      %v9989 = vmul.f32 %v9988, %v9987
      %v9990 = vmul.f32 0.5, %v9989
      %v9991 = vsub.f32 1.5, %v9990
      %v9992 = vmul.f32 %v9987, %v9991
      %vm9993 = vweird.f32 %v9854
      %vm9994 = vweird.f32 %v9987
      %vm9995 = vmor %vm9993, %vm9994
      %v9996 = vsel %vm9995, %v9987, %v9992
      %v9997 = vrsqrt.pop %v9855
      %v9998 = vmul.f32 %v9997, %v9855
      %v9999 = vmul.f32 %v9998, %v9997
      %v10000 = vmul.f32 0.5, %v9999
      %v10001 = vsub.f32 1.5, %v10000
      %v10002 = vmul.f32 %v9997, %v10001
      %vm10003 = vweird.f32 %v9855
      %vm10004 = vweird.f32 %v9997
      %vm10005 = vmor %vm10003, %vm10004
      %v10006 = vsel %vm10005, %v9997, %v10002
      %v10007 = vrsqrt.pop %v9856
      %v10008 = vmul.f32 %v10007, %v9856
      %v10009 = vmul.f32 %v10008, %v10007
      %v10010 = vmul.f32 0.5, %v10009
      %v10011 = vsub.f32 1.5, %v10010
      %v10012 = vmul.f32 %v10007, %v10011
      %vm10013 = vweird.f32 %v9856
      %vm10014 = vweird.f32 %v10007
      %vm10015 = vmor %vm10013, %vm10014
      %v10016 = vsel %vm10015, %v10007, %v10012
      %v10017 = vmul.f32 %v9745, %v9866
      %v10018 = vmul.f32 %v9746, %v9876
      %v10019 = vmul.f32 %v9747, %v9886
      %v10020 = vmul.f32 %v9748, %v9896
      %v10021 = vmul.f32 %v9749, %v9906
      %v10022 = vmul.f32 %v9750, %v9916
      %v10023 = vmul.f32 %v9751, %v9926
      %v10024 = vmul.f32 %v9752, %v9936
      %v10025 = vmul.f32 %v9753, %v9946
      %v10026 = vmul.f32 %v9754, %v9956
      %v10027 = vmul.f32 %v9755, %v9966
      %v10028 = vmul.f32 %v9756, %v9976
      %v10029 = vmul.f32 %v9757, %v9986
      %v10030 = vmul.f32 %v9758, %v9996
      %v10031 = vmul.f32 %v9759, %v10006
      %v10032 = vmul.f32 %v9760, %v10016
      %v10034 = vperm.slane %v9678, 0
      %v10036 = vmul.f32 %v10017, %v10034
      %v10037 = vmul.f32 %v10018, %v10034
      %v10038 = vmul.f32 %v10019, %v10034
      %v10039 = vmul.f32 %v10020, %v10034
      %v10040 = vmul.f32 %v10021, %v10034
      %v10041 = vmul.f32 %v10022, %v10034
      %v10042 = vmul.f32 %v10023, %v10034
      %v10043 = vmul.f32 %v10024, %v10034
      %v10044 = vmul.f32 %v10025, %v10034
      %v10045 = vmul.f32 %v10026, %v10034
      %v10046 = vmul.f32 %v10027, %v10034
      %v10047 = vmul.f32 %v10028, %v10034
      %v10048 = vmul.f32 %v10029, %v10034
      %v10049 = vmul.f32 %v10030, %v10034
      %v10050 = vmul.f32 %v10031, %v10034
      %v10051 = vmul.f32 %v10032, %v10034
      %v10053 = vperm.slane %v9680, 0
      %v10055 = vadd.f32 %v10036, %v10053
      %v10056 = vadd.f32 %v10037, %v10053
      %v10057 = vadd.f32 %v10038, %v10053
      %v10058 = vadd.f32 %v10039, %v10053
      %v10059 = vadd.f32 %v10040, %v10053
      %v10060 = vadd.f32 %v10041, %v10053
      %v10061 = vadd.f32 %v10042, %v10053
      %v10062 = vadd.f32 %v10043, %v10053
      %v10063 = vadd.f32 %v10044, %v10053
      %v10064 = vadd.f32 %v10045, %v10053
      %v10065 = vadd.f32 %v10046, %v10053
      %v10066 = vadd.f32 %v10047, %v10053
      %v10067 = vadd.f32 %v10048, %v10053
      %v10068 = vadd.f32 %v10049, %v10053
      %v10069 = vadd.f32 %v10050, %v10053
      %v10070 = vadd.f32 %v10051, %v10053
      %v10071 = vpack.c.bf16 %v10056, %v10055
      %v10072 = vpack.c.bf16 %v10058, %v10057
      %v10073 = vpack.c.bf16 %v10060, %v10059
      %v10074 = vpack.c.bf16 %v10062, %v10061
      %v10075 = vpack.c.bf16 %v10064, %v10063
      %v10076 = vpack.c.bf16 %v10066, %v10065
      %v10077 = vpack.c.bf16 %v10068, %v10067
      %v10078 = vpack.c.bf16 %v10070, %v10069
      %s10079 = scalar_lea.vmem %s10, 64
      %v10080 = vld [vmem:[%s10079] sm:$0xff]
      %v10081 = vld [vmem:[%s10079 + $0x8] sm:$0xff]
      %v10082 = vld [vmem:[%s10079 + $0x10] sm:$0xff]
      %v10083 = vld [vmem:[%s10079 + $0x18] sm:$0xff]
      %v10084 = vld [vmem:[%s10079 + $0x20] sm:$0xff]
      %v10085 = vld [vmem:[%s10079 + $0x28] sm:$0xff]
      %v10086 = vld [vmem:[%s10079 + $0x30] sm:$0xff]
      %v10087 = vld [vmem:[%s10079 + $0x38] sm:$0xff]
      %s10088 = scalar_lea.vmem %s11, 2
      %v10089 = vld [vmem:[%s10088] sm:$0x3]
      %v10091 = vperm.slane %v10089, 0
      %v10092 = vperm.slane %v10089, 1
      %v10103 = vunpack.c.l.b16 %v10080
      %v10104 = vunpack.c.h.b16 %v10080
      %v10105 = vunpack.c.l.b16 %v10081
      %v10106 = vunpack.c.h.b16 %v10081
      %v10107 = vunpack.c.l.b16 %v10082
      %v10108 = vunpack.c.h.b16 %v10082
      %v10109 = vunpack.c.l.b16 %v10083
      %v10110 = vunpack.c.h.b16 %v10083
      %v10111 = vunpack.c.l.b16 %v10084
      %v10112 = vunpack.c.h.b16 %v10084
      %v10113 = vunpack.c.l.b16 %v10085
      %v10114 = vunpack.c.h.b16 %v10085
      %v10115 = vunpack.c.l.b16 %v10086
      %v10116 = vunpack.c.h.b16 %v10086
      %v10117 = vunpack.c.l.b16 %v10087
      %v10118 = vunpack.c.h.b16 %v10087
      %v10119 = vpack.c.b16 %v10105, %v10103
      %v10120 = vpack.c.b16 %v10106, %v10104
      %v10121 = vpack.c.b16 %v10109, %v10107
      %v10122 = vpack.c.b16 %v10110, %v10108
      %v10123 = vpack.c.b16 %v10113, %v10111
      %v10124 = vpack.c.b16 %v10114, %v10112
      %v10125 = vpack.c.b16 %v10117, %v10115
      %v10126 = vpack.c.b16 %v10118, %v10116
      %v10136 = vsel %vm928, %v10071, 0
      %v10139 = vsel %vm928, %v10072, 0
      %v10142 = vsel %vm928, %v10073, 0
      %v10145 = vsel %vm928, %v10074, 0
      %v10148 = vsel %vm928, %v10075, 0
      %v10151 = vsel %vm928, %v10076, 0
      %v10154 = vsel %vm928, %v10077, 0
      %v10157 = vsel %vm928, %v10078, 0
      %10159 = vmatpush.bf16.msra.mxu0 0
      %10160 = vmatpush.bf16.msra.mxu0 0
      %10161 = vmatpush.bf16.msra.mxu0 0
      %10162 = vmatpush.bf16.msra.mxu0 0
      %10163 = vmatpush.bf16.msra.mxu0 %v10125
      %10164 = vmatpush.bf16.msra.mxu0 %v10123
      %10165 = vmatpush.bf16.msra.mxu0 %v10121
      %10166 = vmatpush.bf16.msra.mxu0 %v10119
      %10167 = vmatmul.bf16.gmra.mxu0 %v10136
      %v10168 = vpop.f32.mrf.mxu0
      %v10169 = vadd.f32 %v10091, %v10168
      %v10170 = vpop.f32.mrf.mxu0
      %v10171 = vadd.f32 %v10091, %v10170
      %10172 = vmatmul.bf16.gmra.mxu0 %v10139
      %v10173 = vpop.f32.mrf.mxu0
      %v10174 = vadd.f32 %v10091, %v10173
      %v10175 = vpop.f32.mrf.mxu0
      %v10176 = vadd.f32 %v10091, %v10175
      %10177 = vmatmul.bf16.gmra.mxu0 %v10142
      %v10178 = vpop.f32.mrf.mxu0
      %v10179 = vadd.f32 %v10091, %v10178
      %v10180 = vpop.f32.mrf.mxu0
      %v10181 = vadd.f32 %v10091, %v10180
      %10182 = vmatmul.bf16.gmra.mxu0 %v10145
      %v10183 = vpop.f32.mrf.mxu0
      %v10184 = vadd.f32 %v10091, %v10183
      %v10185 = vpop.f32.mrf.mxu0
      %v10186 = vadd.f32 %v10091, %v10185
      %10187 = vmatmul.bf16.gmra.mxu0 %v10148
      %v10188 = vpop.f32.mrf.mxu0
      %v10189 = vadd.f32 %v10091, %v10188
      %v10190 = vpop.f32.mrf.mxu0
      %v10191 = vadd.f32 %v10091, %v10190
      %10192 = vmatmul.bf16.gmra.mxu0 %v10151
      %v10193 = vpop.f32.mrf.mxu0
      %v10194 = vadd.f32 %v10091, %v10193
      %v10195 = vpop.f32.mrf.mxu0
      %v10196 = vadd.f32 %v10091, %v10195
      %10197 = vmatmul.bf16.gmra.mxu0 %v10154
      %v10198 = vpop.f32.mrf.mxu0
      %v10199 = vadd.f32 %v10091, %v10198
      %v10200 = vpop.f32.mrf.mxu0
      %v10201 = vadd.f32 %v10091, %v10200
      %10202 = vmatmul.bf16.gmra.mxu0 %v10157
      %v10203 = vpop.f32.mrf.mxu0
      %v10204 = vadd.f32 %v10091, %v10203
      %v10205 = vpop.f32.mrf.mxu0
      %v10206 = vadd.f32 %v10091, %v10205
      %10207 = vdwg.mxu0
      %10208 = vmatpush.bf16.msra.mxu0 0
      %10209 = vmatpush.bf16.msra.mxu0 0
      %10210 = vmatpush.bf16.msra.mxu0 0
      %10211 = vmatpush.bf16.msra.mxu0 0
      %10212 = vmatpush.bf16.msra.mxu0 %v10126
      %10213 = vmatpush.bf16.msra.mxu0 %v10124
      %10214 = vmatpush.bf16.msra.mxu0 %v10122
      %10215 = vmatpush.bf16.msra.mxu0 %v10120
      %10216 = vmatmul.bf16.gmra.mxu0 %v10136
      %v10217 = vpop.f32.mrf.mxu0
      %v10218 = vadd.f32 %v10092, %v10217
      %v10219 = vpop.f32.mrf.mxu0
      %v10220 = vadd.f32 %v10092, %v10219
      %10221 = vmatmul.bf16.gmra.mxu0 %v10139
      %v10222 = vpop.f32.mrf.mxu0
      %v10223 = vadd.f32 %v10092, %v10222
      %v10224 = vpop.f32.mrf.mxu0
      %v10225 = vadd.f32 %v10092, %v10224
      %10226 = vmatmul.bf16.gmra.mxu0 %v10142
      %v10227 = vpop.f32.mrf.mxu0
      %v10228 = vadd.f32 %v10092, %v10227
      %v10229 = vpop.f32.mrf.mxu0
      %v10230 = vadd.f32 %v10092, %v10229
      %10231 = vmatmul.bf16.gmra.mxu0 %v10145
      %v10232 = vpop.f32.mrf.mxu0
      %v10233 = vadd.f32 %v10092, %v10232
      %v10234 = vpop.f32.mrf.mxu0
      %v10235 = vadd.f32 %v10092, %v10234
      %10236 = vmatmul.bf16.gmra.mxu0 %v10148
      %v10237 = vpop.f32.mrf.mxu0
      %v10238 = vadd.f32 %v10092, %v10237
      %v10239 = vpop.f32.mrf.mxu0
      %v10240 = vadd.f32 %v10092, %v10239
      %10241 = vmatmul.bf16.gmra.mxu0 %v10151
      %v10242 = vpop.f32.mrf.mxu0
      %v10243 = vadd.f32 %v10092, %v10242
      %v10244 = vpop.f32.mrf.mxu0
      %v10245 = vadd.f32 %v10092, %v10244
      %10246 = vmatmul.bf16.gmra.mxu0 %v10154
      %v10247 = vpop.f32.mrf.mxu0
      %v10248 = vadd.f32 %v10092, %v10247
      %v10249 = vpop.f32.mrf.mxu0
      %v10250 = vadd.f32 %v10092, %v10249
      %10251 = vmatmul.bf16.gmra.mxu0 %v10157
      %v10252 = vpop.f32.mrf.mxu0
      %v10253 = vadd.f32 %v10092, %v10252
      %v10254 = vpop.f32.mrf.mxu0
      %v10255 = vadd.f32 %v10092, %v10254
      %10256 = vdwg.mxu0
      %v10257 = vmax.f32 %v10169, 0.0
      %v10258 = vmax.f32 %v10218, 0.0
      %v10259 = vmax.f32 %v10171, 0.0
      %v10260 = vmax.f32 %v10220, 0.0
      %v10261 = vmax.f32 %v10174, 0.0
      %v10262 = vmax.f32 %v10223, 0.0
      %v10263 = vmax.f32 %v10176, 0.0
      %v10264 = vmax.f32 %v10225, 0.0
      %v10265 = vmax.f32 %v10179, 0.0
      %v10266 = vmax.f32 %v10228, 0.0
      %v10267 = vmax.f32 %v10181, 0.0
      %v10268 = vmax.f32 %v10230, 0.0
      %v10269 = vmax.f32 %v10184, 0.0
      %v10270 = vmax.f32 %v10233, 0.0
      %v10271 = vmax.f32 %v10186, 0.0
      %v10272 = vmax.f32 %v10235, 0.0
      %v10273 = vmax.f32 %v10189, 0.0
      %v10274 = vmax.f32 %v10238, 0.0
      %v10275 = vmax.f32 %v10191, 0.0
      %v10276 = vmax.f32 %v10240, 0.0
      %v10277 = vmax.f32 %v10194, 0.0
      %v10278 = vmax.f32 %v10243, 0.0
      %v10279 = vmax.f32 %v10196, 0.0
      %v10280 = vmax.f32 %v10245, 0.0
      %v10281 = vmax.f32 %v10199, 0.0
      %v10282 = vmax.f32 %v10248, 0.0
      %v10283 = vmax.f32 %v10201, 0.0
      %v10284 = vmax.f32 %v10250, 0.0
      %v10285 = vmax.f32 %v10204, 0.0
      %v10286 = vmax.f32 %v10253, 0.0
      %v10287 = vmax.f32 %v10206, 0.0
      %v10288 = vmax.f32 %v10255, 0.0
      %v10289 = vpack.c.bf16 %v10259, %v10257
      %v10290 = vpack.c.bf16 %v10260, %v10258
      %v10291 = vpack.c.bf16 %v10263, %v10261
      %v10292 = vpack.c.bf16 %v10264, %v10262
      %v10293 = vpack.c.bf16 %v10267, %v10265
      %v10294 = vpack.c.bf16 %v10268, %v10266
      %v10295 = vpack.c.bf16 %v10271, %v10269
      %v10296 = vpack.c.bf16 %v10272, %v10270
      %v10297 = vpack.c.bf16 %v10275, %v10273
      %v10298 = vpack.c.bf16 %v10276, %v10274
      %v10299 = vpack.c.bf16 %v10279, %v10277
      %v10300 = vpack.c.bf16 %v10280, %v10278
      %v10301 = vpack.c.bf16 %v10283, %v10281
      %v10302 = vpack.c.bf16 %v10284, %v10282
      %v10303 = vpack.c.bf16 %v10287, %v10285
      %v10304 = vpack.c.bf16 %v10288, %v10286
      %s10305 = scalar_lea.vmem %s12, 128
      %v10306 = vld [vmem:[%s10305] sm:$0xf]
      %v10307 = vld [vmem:[%s10305 + $0x4] sm:$0xf]
      %v10308 = vld [vmem:[%s10305 + $0x8] sm:$0xf]
      %v10309 = vld [vmem:[%s10305 + $0xc] sm:$0xf]
      %v10310 = vld [vmem:[%s10305 + $0x10] sm:$0xf]
      %v10311 = vld [vmem:[%s10305 + $0x14] sm:$0xf]
      %v10312 = vld [vmem:[%s10305 + $0x18] sm:$0xf]
      %v10313 = vld [vmem:[%s10305 + $0x1c] sm:$0xf]
      %v10314 = vld [vmem:[%s10305 + $0x20] sm:$0xf]
      %v10315 = vld [vmem:[%s10305 + $0x24] sm:$0xf]
      %v10316 = vld [vmem:[%s10305 + $0x28] sm:$0xf]
      %v10317 = vld [vmem:[%s10305 + $0x2c] sm:$0xf]
      %v10318 = vld [vmem:[%s10305 + $0x30] sm:$0xf]
      %v10319 = vld [vmem:[%s10305 + $0x34] sm:$0xf]
      %v10320 = vld [vmem:[%s10305 + $0x38] sm:$0xf]
      %v10321 = vld [vmem:[%s10305 + $0x3c] sm:$0xf]
      %v10322 = vld [vmem:[%s10305 + $0x40] sm:$0xf]
      %v10323 = vld [vmem:[%s10305 + $0x44] sm:$0xf]
      %v10324 = vld [vmem:[%s10305 + $0x48] sm:$0xf]
      %v10325 = vld [vmem:[%s10305 + $0x4c] sm:$0xf]
      %v10326 = vld [vmem:[%s10305 + $0x50] sm:$0xf]
      %v10327 = vld [vmem:[%s10305 + $0x54] sm:$0xf]
      %v10328 = vld [vmem:[%s10305 + $0x58] sm:$0xf]
      %v10329 = vld [vmem:[%s10305 + $0x5c] sm:$0xf]
      %v10330 = vld [vmem:[%s10305 + $0x60] sm:$0xf]
      %v10331 = vld [vmem:[%s10305 + $0x64] sm:$0xf]
      %v10332 = vld [vmem:[%s10305 + $0x68] sm:$0xf]
      %v10333 = vld [vmem:[%s10305 + $0x6c] sm:$0xf]
      %v10334 = vld [vmem:[%s10305 + $0x70] sm:$0xf]
      %v10335 = vld [vmem:[%s10305 + $0x74] sm:$0xf]
      %v10336 = vld [vmem:[%s10305 + $0x78] sm:$0xf]
      %v10337 = vld [vmem:[%s10305 + $0x7c] sm:$0xf]
      %s10338 = scalar_lea.vmem %s13, 1
      %v10339 = vld [vmem:[%s10338] sm:$0x1]
      %v10341 = vperm.slane %v10339, 0
      %v10375 = vunpack.c.l.b16 %v10306
      %v10376 = vunpack.c.l.b16 %v10307
      %v10377 = vunpack.c.l.b16 %v10308
      %v10378 = vunpack.c.l.b16 %v10309
      %v10379 = vunpack.c.l.b16 %v10310
      %v10380 = vunpack.c.l.b16 %v10311
      %v10381 = vunpack.c.l.b16 %v10312
      %v10382 = vunpack.c.l.b16 %v10313
      %v10383 = vunpack.c.l.b16 %v10314
      %v10384 = vunpack.c.l.b16 %v10315
      %v10385 = vunpack.c.l.b16 %v10316
      %v10386 = vunpack.c.l.b16 %v10317
      %v10387 = vunpack.c.l.b16 %v10318
      %v10388 = vunpack.c.l.b16 %v10319
      %v10389 = vunpack.c.l.b16 %v10320
      %v10390 = vunpack.c.l.b16 %v10321
      %v10391 = vunpack.c.l.b16 %v10322
      %v10392 = vunpack.c.l.b16 %v10323
      %v10393 = vunpack.c.l.b16 %v10324
      %v10394 = vunpack.c.l.b16 %v10325
      %v10395 = vunpack.c.l.b16 %v10326
      %v10396 = vunpack.c.l.b16 %v10327
      %v10397 = vunpack.c.l.b16 %v10328
      %v10398 = vunpack.c.l.b16 %v10329
      %v10399 = vunpack.c.l.b16 %v10330
      %v10400 = vunpack.c.l.b16 %v10331
      %v10401 = vunpack.c.l.b16 %v10332
      %v10402 = vunpack.c.l.b16 %v10333
      %v10403 = vunpack.c.l.b16 %v10334
      %v10404 = vunpack.c.l.b16 %v10335
      %v10405 = vunpack.c.l.b16 %v10336
      %v10406 = vunpack.c.l.b16 %v10337
      %v10407 = vpack.c.b16 %v10376, %v10375
      %v10408 = vpack.c.b16 %v10378, %v10377
      %v10409 = vpack.c.b16 %v10380, %v10379
      %v10410 = vpack.c.b16 %v10382, %v10381
      %v10411 = vpack.c.b16 %v10384, %v10383
      %v10412 = vpack.c.b16 %v10386, %v10385
      %v10413 = vpack.c.b16 %v10388, %v10387
      %v10414 = vpack.c.b16 %v10390, %v10389
      %v10415 = vpack.c.b16 %v10392, %v10391
      %v10416 = vpack.c.b16 %v10394, %v10393
      %v10417 = vpack.c.b16 %v10396, %v10395
      %v10418 = vpack.c.b16 %v10398, %v10397
      %v10419 = vpack.c.b16 %v10400, %v10399
      %v10420 = vpack.c.b16 %v10402, %v10401
      %v10421 = vpack.c.b16 %v10404, %v10403
      %v10422 = vpack.c.b16 %v10406, %v10405
      %10439 = vmatpush.bf16.msra.mxu0 %v10414
      %10440 = vmatpush.bf16.msra.mxu0 %v10413
      %10441 = vmatpush.bf16.msra.mxu0 %v10412
      %10442 = vmatpush.bf16.msra.mxu0 %v10411
      %10443 = vmatpush.bf16.msra.mxu0 %v10410
      %10444 = vmatpush.bf16.msra.mxu0 %v10409
      %10445 = vmatpush.bf16.msra.mxu0 %v10408
      %10446 = vmatpush.bf16.msra.mxu0 %v10407
      %10447 = vmatmul.bf16.gmra.mxu0 %v10289
      %v10448 = vpop.f32.mrf.mxu0
      %v10449 = vadd.f32 %v10341, %v10448
      %v10450 = vpop.f32.mrf.mxu0
      %v10451 = vadd.f32 %v10341, %v10450
      %10452 = vmatmul.bf16.gmra.mxu0 %v10291
      %v10453 = vpop.f32.mrf.mxu0
      %v10454 = vadd.f32 %v10341, %v10453
      %v10455 = vpop.f32.mrf.mxu0
      %v10456 = vadd.f32 %v10341, %v10455
      %10457 = vmatmul.bf16.gmra.mxu0 %v10293
      %v10458 = vpop.f32.mrf.mxu0
      %v10459 = vadd.f32 %v10341, %v10458
      %v10460 = vpop.f32.mrf.mxu0
      %v10461 = vadd.f32 %v10341, %v10460
      %10462 = vmatmul.bf16.gmra.mxu0 %v10295
      %v10463 = vpop.f32.mrf.mxu0
      %v10464 = vadd.f32 %v10341, %v10463
      %v10465 = vpop.f32.mrf.mxu0
      %v10466 = vadd.f32 %v10341, %v10465
      %10467 = vmatmul.bf16.gmra.mxu0 %v10297
      %v10468 = vpop.f32.mrf.mxu0
      %v10469 = vadd.f32 %v10341, %v10468
      %v10470 = vpop.f32.mrf.mxu0
      %v10471 = vadd.f32 %v10341, %v10470
      %10472 = vmatmul.bf16.gmra.mxu0 %v10299
      %v10473 = vpop.f32.mrf.mxu0
      %v10474 = vadd.f32 %v10341, %v10473
      %v10475 = vpop.f32.mrf.mxu0
      %v10476 = vadd.f32 %v10341, %v10475
      %10477 = vmatmul.bf16.gmra.mxu0 %v10301
      %v10478 = vpop.f32.mrf.mxu0
      %v10479 = vadd.f32 %v10341, %v10478
      %v10480 = vpop.f32.mrf.mxu0
      %v10481 = vadd.f32 %v10341, %v10480
      %10482 = vmatmul.bf16.gmra.mxu0 %v10303
      %v10483 = vpop.f32.mrf.mxu0
      %v10484 = vadd.f32 %v10341, %v10483
      %v10485 = vpop.f32.mrf.mxu0
      %v10486 = vadd.f32 %v10341, %v10485
      %10487 = vdwg.mxu0
      %10488 = vmatpush.bf16.msra.mxu0 %v10422
      %10489 = vmatpush.bf16.msra.mxu0 %v10421
      %10490 = vmatpush.bf16.msra.mxu0 %v10420
      %10491 = vmatpush.bf16.msra.mxu0 %v10419
      %10492 = vmatpush.bf16.msra.mxu0 %v10418
      %10493 = vmatpush.bf16.msra.mxu0 %v10417
      %10494 = vmatpush.bf16.msra.mxu0 %v10416
      %10495 = vmatpush.bf16.msra.mxu0 %v10415
      %10496 = vmatmul.bf16.gmra.mxu0 %v10290
      %v10497 = vpop.f32.mrf.mxu0
      %v10498 = vadd.f32 %v10449, %v10497
      %v10499 = vpop.f32.mrf.mxu0
      %v10500 = vadd.f32 %v10451, %v10499
      %10501 = vmatmul.bf16.gmra.mxu0 %v10292
      %v10502 = vpop.f32.mrf.mxu0
      %v10503 = vadd.f32 %v10454, %v10502
      %v10504 = vpop.f32.mrf.mxu0
      %v10505 = vadd.f32 %v10456, %v10504
      %10506 = vmatmul.bf16.gmra.mxu0 %v10294
      %v10507 = vpop.f32.mrf.mxu0
      %v10508 = vadd.f32 %v10459, %v10507
      %v10509 = vpop.f32.mrf.mxu0
      %v10510 = vadd.f32 %v10461, %v10509
      %10511 = vmatmul.bf16.gmra.mxu0 %v10296
      %v10512 = vpop.f32.mrf.mxu0
      %v10513 = vadd.f32 %v10464, %v10512
      %v10514 = vpop.f32.mrf.mxu0
      %v10515 = vadd.f32 %v10466, %v10514
      %10516 = vmatmul.bf16.gmra.mxu0 %v10298
      %v10517 = vpop.f32.mrf.mxu0
      %v10518 = vadd.f32 %v10469, %v10517
      %v10519 = vpop.f32.mrf.mxu0
      %v10520 = vadd.f32 %v10471, %v10519
      %10521 = vmatmul.bf16.gmra.mxu0 %v10300
      %v10522 = vpop.f32.mrf.mxu0
      %v10523 = vadd.f32 %v10474, %v10522
      %v10524 = vpop.f32.mrf.mxu0
      %v10525 = vadd.f32 %v10476, %v10524
      %10526 = vmatmul.bf16.gmra.mxu0 %v10302
      %v10527 = vpop.f32.mrf.mxu0
      %v10528 = vadd.f32 %v10479, %v10527
      %v10529 = vpop.f32.mrf.mxu0
      %v10530 = vadd.f32 %v10481, %v10529
      %10531 = vmatmul.bf16.gmra.mxu0 %v10304
      %v10532 = vpop.f32.mrf.mxu0
      %v10533 = vadd.f32 %v10484, %v10532
      %v10534 = vpop.f32.mrf.mxu0
      %v10535 = vadd.f32 %v10486, %v10534
      %10536 = vdwg.mxu0
      %v10537 = vadd.f32 %v10055, %v10498
      %v10538 = vadd.f32 %v10056, %v10500
      %v10539 = vadd.f32 %v10057, %v10503
      %v10540 = vadd.f32 %v10058, %v10505
      %v10541 = vadd.f32 %v10059, %v10508
      %v10542 = vadd.f32 %v10060, %v10510
      %v10543 = vadd.f32 %v10061, %v10513
      %v10544 = vadd.f32 %v10062, %v10515
      %v10545 = vadd.f32 %v10063, %v10518
      %v10546 = vadd.f32 %v10064, %v10520
      %v10547 = vadd.f32 %v10065, %v10523
      %v10548 = vadd.f32 %v10066, %v10525
      %v10549 = vadd.f32 %v10067, %v10528
      %v10550 = vadd.f32 %v10068, %v10530
      %v10551 = vadd.f32 %v10069, %v10533
      %v10552 = vadd.f32 %v10070, %v10535
      %s10553 = scalar_lea.vmem %s16, 1
      %v10554 = vld [vmem:[%s10553] sm:$0x1]
      %s10555 = scalar_lea.vmem %s17, 1
      %v10556 = vld [vmem:[%s10555] sm:$0x1]
      %v10557 = vsel %vm928, %v10537, 0.0
      %10558 = vadd.xlane.f32.xlu0 %v10557
      %v10559 = vpop.xlane.xlu0 %10558
      %v10560 = vsel %vm928, %v10538, 0.0
      %10561 = vadd.xlane.f32.xlu0 %v10560
      %v10562 = vpop.xlane.xlu0 %10561
      %v10563 = vsel %vm928, %v10539, 0.0
      %10564 = vadd.xlane.f32.xlu0 %v10563
      %v10565 = vpop.xlane.xlu0 %10564
      %v10566 = vsel %vm928, %v10540, 0.0
      %10567 = vadd.xlane.f32.xlu0 %v10566
      %v10568 = vpop.xlane.xlu0 %10567
      %v10569 = vsel %vm928, %v10541, 0.0
      %10570 = vadd.xlane.f32.xlu0 %v10569
      %v10571 = vpop.xlane.xlu0 %10570
      %v10572 = vsel %vm928, %v10542, 0.0
      %10573 = vadd.xlane.f32.xlu0 %v10572
      %v10574 = vpop.xlane.xlu0 %10573
      %v10575 = vsel %vm928, %v10543, 0.0
      %10576 = vadd.xlane.f32.xlu0 %v10575
      %v10577 = vpop.xlane.xlu0 %10576
      %v10578 = vsel %vm928, %v10544, 0.0
      %10579 = vadd.xlane.f32.xlu0 %v10578
      %v10580 = vpop.xlane.xlu0 %10579
      %v10581 = vsel %vm928, %v10545, 0.0
      %10582 = vadd.xlane.f32.xlu0 %v10581
      %v10583 = vpop.xlane.xlu0 %10582
      %v10584 = vsel %vm928, %v10546, 0.0
      %10585 = vadd.xlane.f32.xlu0 %v10584
      %v10586 = vpop.xlane.xlu0 %10585
      %v10587 = vsel %vm928, %v10547, 0.0
      %10588 = vadd.xlane.f32.xlu0 %v10587
      %v10589 = vpop.xlane.xlu0 %10588
      %v10590 = vsel %vm928, %v10548, 0.0
      %10591 = vadd.xlane.f32.xlu0 %v10590
      %v10592 = vpop.xlane.xlu0 %10591
      %v10593 = vsel %vm928, %v10549, 0.0
      %10594 = vadd.xlane.f32.xlu0 %v10593
      %v10595 = vpop.xlane.xlu0 %10594
      %v10596 = vsel %vm928, %v10550, 0.0
      %10597 = vadd.xlane.f32.xlu0 %v10596
      %v10598 = vpop.xlane.xlu0 %10597
      %v10599 = vsel %vm928, %v10551, 0.0
      %10600 = vadd.xlane.f32.xlu0 %v10599
      %v10601 = vpop.xlane.xlu0 %10600
      %v10602 = vsel %vm928, %v10552, 0.0
      %10603 = vadd.xlane.f32.xlu0 %v10602
      %v10604 = vpop.xlane.xlu0 %10603
      %v10605 = vmul.f32 %v10559, %v4700
      %v10606 = vmul.f32 %v10562, %v4700
      %v10607 = vmul.f32 %v10565, %v4700
      %v10608 = vmul.f32 %v10568, %v4700
      %v10609 = vmul.f32 %v10571, %v4700
      %v10610 = vmul.f32 %v10574, %v4700
      %v10611 = vmul.f32 %v10577, %v4700
      %v10612 = vmul.f32 %v10580, %v4700
      %v10613 = vmul.f32 %v10583, %v4700
      %v10614 = vmul.f32 %v10586, %v4700
      %v10615 = vmul.f32 %v10589, %v4700
      %v10616 = vmul.f32 %v10592, %v4700
      %v10617 = vmul.f32 %v10595, %v4700
      %v10618 = vmul.f32 %v10598, %v4700
      %v10619 = vmul.f32 %v10601, %v4700
      %v10620 = vmul.f32 %v10604, %v4700
      %v10621 = vsub.f32 %v10537, %v10605
      %v10622 = vsub.f32 %v10538, %v10606
      %v10623 = vsub.f32 %v10539, %v10607
      %v10624 = vsub.f32 %v10540, %v10608
      %v10625 = vsub.f32 %v10541, %v10609
      %v10626 = vsub.f32 %v10542, %v10610
      %v10627 = vsub.f32 %v10543, %v10611
      %v10628 = vsub.f32 %v10544, %v10612
      %v10629 = vsub.f32 %v10545, %v10613
      %v10630 = vsub.f32 %v10546, %v10614
      %v10631 = vsub.f32 %v10547, %v10615
      %v10632 = vsub.f32 %v10548, %v10616
      %v10633 = vsub.f32 %v10549, %v10617
      %v10634 = vsub.f32 %v10550, %v10618
      %v10635 = vsub.f32 %v10551, %v10619
      %v10636 = vsub.f32 %v10552, %v10620
      %v10637 = vmul.f32 %v10621, %v10621
      %v10638 = vmul.f32 %v10622, %v10622
      %v10639 = vmul.f32 %v10623, %v10623
      %v10640 = vmul.f32 %v10624, %v10624
      %v10641 = vmul.f32 %v10625, %v10625
      %v10642 = vmul.f32 %v10626, %v10626
      %v10643 = vmul.f32 %v10627, %v10627
      %v10644 = vmul.f32 %v10628, %v10628
      %v10645 = vmul.f32 %v10629, %v10629
      %v10646 = vmul.f32 %v10630, %v10630
      %v10647 = vmul.f32 %v10631, %v10631
      %v10648 = vmul.f32 %v10632, %v10632
      %v10649 = vmul.f32 %v10633, %v10633
      %v10650 = vmul.f32 %v10634, %v10634
      %v10651 = vmul.f32 %v10635, %v10635
      %v10652 = vmul.f32 %v10636, %v10636
      %v10653 = vsel %vm928, %v10637, 0.0
      %10654 = vadd.xlane.f32.xlu0 %v10653
      %v10655 = vpop.xlane.xlu0 %10654
      %v10656 = vsel %vm928, %v10638, 0.0
      %10657 = vadd.xlane.f32.xlu0 %v10656
      %v10658 = vpop.xlane.xlu0 %10657
      %v10659 = vsel %vm928, %v10639, 0.0
      %10660 = vadd.xlane.f32.xlu0 %v10659
      %v10661 = vpop.xlane.xlu0 %10660
      %v10662 = vsel %vm928, %v10640, 0.0
      %10663 = vadd.xlane.f32.xlu0 %v10662
      %v10664 = vpop.xlane.xlu0 %10663
      %v10665 = vsel %vm928, %v10641, 0.0
      %10666 = vadd.xlane.f32.xlu0 %v10665
      %v10667 = vpop.xlane.xlu0 %10666
      %v10668 = vsel %vm928, %v10642, 0.0
      %10669 = vadd.xlane.f32.xlu0 %v10668
      %v10670 = vpop.xlane.xlu0 %10669
      %v10671 = vsel %vm928, %v10643, 0.0
      %10672 = vadd.xlane.f32.xlu0 %v10671
      %v10673 = vpop.xlane.xlu0 %10672
      %v10674 = vsel %vm928, %v10644, 0.0
      %10675 = vadd.xlane.f32.xlu0 %v10674
      %v10676 = vpop.xlane.xlu0 %10675
      %v10677 = vsel %vm928, %v10645, 0.0
      %10678 = vadd.xlane.f32.xlu0 %v10677
      %v10679 = vpop.xlane.xlu0 %10678
      %v10680 = vsel %vm928, %v10646, 0.0
      %10681 = vadd.xlane.f32.xlu0 %v10680
      %v10682 = vpop.xlane.xlu0 %10681
      %v10683 = vsel %vm928, %v10647, 0.0
      %10684 = vadd.xlane.f32.xlu0 %v10683
      %v10685 = vpop.xlane.xlu0 %10684
      %v10686 = vsel %vm928, %v10648, 0.0
      %10687 = vadd.xlane.f32.xlu0 %v10686
      %v10688 = vpop.xlane.xlu0 %10687
      %v10689 = vsel %vm928, %v10649, 0.0
      %10690 = vadd.xlane.f32.xlu0 %v10689
      %v10691 = vpop.xlane.xlu0 %10690
      %v10692 = vsel %vm928, %v10650, 0.0
      %10693 = vadd.xlane.f32.xlu0 %v10692
      %v10694 = vpop.xlane.xlu0 %10693
      %v10695 = vsel %vm928, %v10651, 0.0
      %10696 = vadd.xlane.f32.xlu0 %v10695
      %v10697 = vpop.xlane.xlu0 %10696
      %v10698 = vsel %vm928, %v10652, 0.0
      %10699 = vadd.xlane.f32.xlu0 %v10698
      %v10700 = vpop.xlane.xlu0 %10699
      %v10701 = vmul.f32 %v10655, %v4700
      %v10702 = vmul.f32 %v10658, %v4700
      %v10703 = vmul.f32 %v10661, %v4700
      %v10704 = vmul.f32 %v10664, %v4700
      %v10705 = vmul.f32 %v10667, %v4700
      %v10706 = vmul.f32 %v10670, %v4700
      %v10707 = vmul.f32 %v10673, %v4700
      %v10708 = vmul.f32 %v10676, %v4700
      %v10709 = vmul.f32 %v10679, %v4700
      %v10710 = vmul.f32 %v10682, %v4700
      %v10711 = vmul.f32 %v10685, %v4700
      %v10712 = vmul.f32 %v10688, %v4700
      %v10713 = vmul.f32 %v10691, %v4700
      %v10714 = vmul.f32 %v10694, %v4700
      %v10715 = vmul.f32 %v10697, %v4700
      %v10716 = vmul.f32 %v10700, %v4700
      %v10717 = vadd.f32 %v10701, 1e-05
      %v10718 = vadd.f32 %v10702, 1e-05
      %v10719 = vadd.f32 %v10703, 1e-05
      %v10720 = vadd.f32 %v10704, 1e-05
      %v10721 = vadd.f32 %v10705, 1e-05
      %v10722 = vadd.f32 %v10706, 1e-05
      %v10723 = vadd.f32 %v10707, 1e-05
      %v10724 = vadd.f32 %v10708, 1e-05
      %v10725 = vadd.f32 %v10709, 1e-05
      %v10726 = vadd.f32 %v10710, 1e-05
      %v10727 = vadd.f32 %v10711, 1e-05
      %v10728 = vadd.f32 %v10712, 1e-05
      %v10729 = vadd.f32 %v10713, 1e-05
      %v10730 = vadd.f32 %v10714, 1e-05
      %v10731 = vadd.f32 %v10715, 1e-05
      %v10732 = vadd.f32 %v10716, 1e-05
      %v10733 = vrsqrt.pop %v10717
      %v10734 = vmul.f32 %v10733, %v10717
      %v10735 = vmul.f32 %v10734, %v10733
      %v10736 = vmul.f32 0.5, %v10735
      %v10737 = vsub.f32 1.5, %v10736
      %v10738 = vmul.f32 %v10733, %v10737
      %vm10739 = vweird.f32 %v10717
      %vm10740 = vweird.f32 %v10733
      %vm10741 = vmor %vm10739, %vm10740
      %v10742 = vsel %vm10741, %v10733, %v10738
      %v10743 = vrsqrt.pop %v10718
      %v10744 = vmul.f32 %v10743, %v10718
      %v10745 = vmul.f32 %v10744, %v10743
      %v10746 = vmul.f32 0.5, %v10745
      %v10747 = vsub.f32 1.5, %v10746
      %v10748 = vmul.f32 %v10743, %v10747
      %vm10749 = vweird.f32 %v10718
      %vm10750 = vweird.f32 %v10743
      %vm10751 = vmor %vm10749, %vm10750
      %v10752 = vsel %vm10751, %v10743, %v10748
      %v10753 = vrsqrt.pop %v10719
      %v10754 = vmul.f32 %v10753, %v10719
      %v10755 = vmul.f32 %v10754, %v10753
      %v10756 = vmul.f32 0.5, %v10755
      %v10757 = vsub.f32 1.5, %v10756
      %v10758 = vmul.f32 %v10753, %v10757
      %vm10759 = vweird.f32 %v10719
      %vm10760 = vweird.f32 %v10753
      %vm10761 = vmor %vm10759, %vm10760
      %v10762 = vsel %vm10761, %v10753, %v10758
      %v10763 = vrsqrt.pop %v10720
      %v10764 = vmul.f32 %v10763, %v10720
      %v10765 = vmul.f32 %v10764, %v10763
      %v10766 = vmul.f32 0.5, %v10765
      %v10767 = vsub.f32 1.5, %v10766
      %v10768 = vmul.f32 %v10763, %v10767
      %vm10769 = vweird.f32 %v10720
      %vm10770 = vweird.f32 %v10763
      %vm10771 = vmor %vm10769, %vm10770
      %v10772 = vsel %vm10771, %v10763, %v10768
      %v10773 = vrsqrt.pop %v10721
      %v10774 = vmul.f32 %v10773, %v10721
      %v10775 = vmul.f32 %v10774, %v10773
      %v10776 = vmul.f32 0.5, %v10775
      %v10777 = vsub.f32 1.5, %v10776
      %v10778 = vmul.f32 %v10773, %v10777
      %vm10779 = vweird.f32 %v10721
      %vm10780 = vweird.f32 %v10773
      %vm10781 = vmor %vm10779, %vm10780
      %v10782 = vsel %vm10781, %v10773, %v10778
      %v10783 = vrsqrt.pop %v10722
      %v10784 = vmul.f32 %v10783, %v10722
      %v10785 = vmul.f32 %v10784, %v10783
      %v10786 = vmul.f32 0.5, %v10785
      %v10787 = vsub.f32 1.5, %v10786
      %v10788 = vmul.f32 %v10783, %v10787
      %vm10789 = vweird.f32 %v10722
      %vm10790 = vweird.f32 %v10783
      %vm10791 = vmor %vm10789, %vm10790
      %v10792 = vsel %vm10791, %v10783, %v10788
      %v10793 = vrsqrt.pop %v10723
      %v10794 = vmul.f32 %v10793, %v10723
      %v10795 = vmul.f32 %v10794, %v10793
      %v10796 = vmul.f32 0.5, %v10795
      %v10797 = vsub.f32 1.5, %v10796
      %v10798 = vmul.f32 %v10793, %v10797
      %vm10799 = vweird.f32 %v10723
      %vm10800 = vweird.f32 %v10793
      %vm10801 = vmor %vm10799, %vm10800
      %v10802 = vsel %vm10801, %v10793, %v10798
      %v10803 = vrsqrt.pop %v10724
      %v10804 = vmul.f32 %v10803, %v10724
      %v10805 = vmul.f32 %v10804, %v10803
      %v10806 = vmul.f32 0.5, %v10805
      %v10807 = vsub.f32 1.5, %v10806
      %v10808 = vmul.f32 %v10803, %v10807
      %vm10809 = vweird.f32 %v10724
      %vm10810 = vweird.f32 %v10803
      %vm10811 = vmor %vm10809, %vm10810
      %v10812 = vsel %vm10811, %v10803, %v10808
      %v10813 = vrsqrt.pop %v10725
      %v10814 = vmul.f32 %v10813, %v10725
      %v10815 = vmul.f32 %v10814, %v10813
      %v10816 = vmul.f32 0.5, %v10815
      %v10817 = vsub.f32 1.5, %v10816
      %v10818 = vmul.f32 %v10813, %v10817
      %vm10819 = vweird.f32 %v10725
      %vm10820 = vweird.f32 %v10813
      %vm10821 = vmor %vm10819, %vm10820
      %v10822 = vsel %vm10821, %v10813, %v10818
      %v10823 = vrsqrt.pop %v10726
      %v10824 = vmul.f32 %v10823, %v10726
      %v10825 = vmul.f32 %v10824, %v10823
      %v10826 = vmul.f32 0.5, %v10825
      %v10827 = vsub.f32 1.5, %v10826
      %v10828 = vmul.f32 %v10823, %v10827
      %vm10829 = vweird.f32 %v10726
      %vm10830 = vweird.f32 %v10823
      %vm10831 = vmor %vm10829, %vm10830
      %v10832 = vsel %vm10831, %v10823, %v10828
      %v10833 = vrsqrt.pop %v10727
      %v10834 = vmul.f32 %v10833, %v10727
      %v10835 = vmul.f32 %v10834, %v10833
      %v10836 = vmul.f32 0.5, %v10835
      %v10837 = vsub.f32 1.5, %v10836
      %v10838 = vmul.f32 %v10833, %v10837
      %vm10839 = vweird.f32 %v10727
      %vm10840 = vweird.f32 %v10833
      %vm10841 = vmor %vm10839, %vm10840
      %v10842 = vsel %vm10841, %v10833, %v10838
      %v10843 = vrsqrt.pop %v10728
      %v10844 = vmul.f32 %v10843, %v10728
      %v10845 = vmul.f32 %v10844, %v10843
      %v10846 = vmul.f32 0.5, %v10845
      %v10847 = vsub.f32 1.5, %v10846
      %v10848 = vmul.f32 %v10843, %v10847
      %vm10849 = vweird.f32 %v10728
      %vm10850 = vweird.f32 %v10843
      %vm10851 = vmor %vm10849, %vm10850
      %v10852 = vsel %vm10851, %v10843, %v10848
      %v10853 = vrsqrt.pop %v10729
      %v10854 = vmul.f32 %v10853, %v10729
      %v10855 = vmul.f32 %v10854, %v10853
      %v10856 = vmul.f32 0.5, %v10855
      %v10857 = vsub.f32 1.5, %v10856
      %v10858 = vmul.f32 %v10853, %v10857
      %vm10859 = vweird.f32 %v10729
      %vm10860 = vweird.f32 %v10853
      %vm10861 = vmor %vm10859, %vm10860
      %v10862 = vsel %vm10861, %v10853, %v10858
      %v10863 = vrsqrt.pop %v10730
      %v10864 = vmul.f32 %v10863, %v10730
      %v10865 = vmul.f32 %v10864, %v10863
      %v10866 = vmul.f32 0.5, %v10865
      %v10867 = vsub.f32 1.5, %v10866
      %v10868 = vmul.f32 %v10863, %v10867
      %vm10869 = vweird.f32 %v10730
      %vm10870 = vweird.f32 %v10863
      %vm10871 = vmor %vm10869, %vm10870
      %v10872 = vsel %vm10871, %v10863, %v10868
      %v10873 = vrsqrt.pop %v10731
      %v10874 = vmul.f32 %v10873, %v10731
      %v10875 = vmul.f32 %v10874, %v10873
      %v10876 = vmul.f32 0.5, %v10875
      %v10877 = vsub.f32 1.5, %v10876
      %v10878 = vmul.f32 %v10873, %v10877
      %vm10879 = vweird.f32 %v10731
      %vm10880 = vweird.f32 %v10873
      %vm10881 = vmor %vm10879, %vm10880
      %v10882 = vsel %vm10881, %v10873, %v10878
      %v10883 = vrsqrt.pop %v10732
      %v10884 = vmul.f32 %v10883, %v10732
      %v10885 = vmul.f32 %v10884, %v10883
      %v10886 = vmul.f32 0.5, %v10885
      %v10887 = vsub.f32 1.5, %v10886
      %v10888 = vmul.f32 %v10883, %v10887
      %vm10889 = vweird.f32 %v10732
      %vm10890 = vweird.f32 %v10883
      %vm10891 = vmor %vm10889, %vm10890
      %v10892 = vsel %vm10891, %v10883, %v10888
      %v10893 = vmul.f32 %v10621, %v10742
      %v10894 = vmul.f32 %v10622, %v10752
      %v10895 = vmul.f32 %v10623, %v10762
      %v10896 = vmul.f32 %v10624, %v10772
      %v10897 = vmul.f32 %v10625, %v10782
      %v10898 = vmul.f32 %v10626, %v10792
      %v10899 = vmul.f32 %v10627, %v10802
      %v10900 = vmul.f32 %v10628, %v10812
      %v10901 = vmul.f32 %v10629, %v10822
      %v10902 = vmul.f32 %v10630, %v10832
      %v10903 = vmul.f32 %v10631, %v10842
      %v10904 = vmul.f32 %v10632, %v10852
      %v10905 = vmul.f32 %v10633, %v10862
      %v10906 = vmul.f32 %v10634, %v10872
      %v10907 = vmul.f32 %v10635, %v10882
      %v10908 = vmul.f32 %v10636, %v10892
      %v10910 = vperm.slane %v10554, 0
      %v10912 = vmul.f32 %v10893, %v10910
      %v10913 = vmul.f32 %v10894, %v10910
      %v10914 = vmul.f32 %v10895, %v10910
      %v10915 = vmul.f32 %v10896, %v10910
      %v10916 = vmul.f32 %v10897, %v10910
      %v10917 = vmul.f32 %v10898, %v10910
      %v10918 = vmul.f32 %v10899, %v10910
      %v10919 = vmul.f32 %v10900, %v10910
      %v10920 = vmul.f32 %v10901, %v10910
      %v10921 = vmul.f32 %v10902, %v10910
      %v10922 = vmul.f32 %v10903, %v10910
      %v10923 = vmul.f32 %v10904, %v10910
      %v10924 = vmul.f32 %v10905, %v10910
      %v10925 = vmul.f32 %v10906, %v10910
      %v10926 = vmul.f32 %v10907, %v10910
      %v10927 = vmul.f32 %v10908, %v10910
      %v10929 = vperm.slane %v10556, 0
      %v10931 = vadd.f32 %v10912, %v10929
      %v10932 = vadd.f32 %v10913, %v10929
      %v10933 = vadd.f32 %v10914, %v10929
      %v10934 = vadd.f32 %v10915, %v10929
      %v10935 = vadd.f32 %v10916, %v10929
      %v10936 = vadd.f32 %v10917, %v10929
      %v10937 = vadd.f32 %v10918, %v10929
      %v10938 = vadd.f32 %v10919, %v10929
      %v10939 = vadd.f32 %v10920, %v10929
      %v10940 = vadd.f32 %v10921, %v10929
      %v10941 = vadd.f32 %v10922, %v10929
      %v10942 = vadd.f32 %v10923, %v10929
      %v10943 = vadd.f32 %v10924, %v10929
      %v10944 = vadd.f32 %v10925, %v10929
      %v10945 = vadd.f32 %v10926, %v10929
      %v10946 = vadd.f32 %v10927, %v10929
      %v10947 = vld [vmem:[%s676] sm:$0xff]
      %v10948 = vperm.slane %v10947, 0
      %v10949 = vlaneseq
      %v10950 = vshrl.u32 %v10949, 7
      %10952 = vset.pattern.permute.xlu0 %v10950
      %10953 = vperm.xlu0 %10952, %v10948
      %v10954 = vpop.permute.xlu0 %10953
      %v10955 = vlaneseq
      %v10956 = vshrl.u32 %v10955, 7
      %v10957 = vadd.s32 %v10956, 8
      %10958 = vset.pattern.permute.xlu0 %v10957
      %10959 = vperm.xlu0 %10958, %v10948
      %v10960 = vpop.permute.xlu0 %10959
      %v10961 = vperm.slane %v10947, 1
      %v10962 = vlaneseq
      %v10963 = vshrl.u32 %v10962, 7
      %10965 = vset.pattern.permute.xlu0 %v10963
      %10966 = vperm.xlu0 %10965, %v10961
      %v10967 = vpop.permute.xlu0 %10966
      %v10968 = vlaneseq
      %v10969 = vshrl.u32 %v10968, 7
      %v10970 = vadd.s32 %v10969, 8
      %10971 = vset.pattern.permute.xlu0 %v10970
      %10972 = vperm.xlu0 %10971, %v10961
      %v10973 = vpop.permute.xlu0 %10972
      %v10974 = vperm.slane %v10947, 2
      %v10975 = vlaneseq
      %v10976 = vshrl.u32 %v10975, 7
      %10978 = vset.pattern.permute.xlu0 %v10976
      %10979 = vperm.xlu0 %10978, %v10974
      %v10980 = vpop.permute.xlu0 %10979
      %v10981 = vlaneseq
      %v10982 = vshrl.u32 %v10981, 7
      %v10983 = vadd.s32 %v10982, 8
      %10984 = vset.pattern.permute.xlu0 %v10983
      %10985 = vperm.xlu0 %10984, %v10974
      %v10986 = vpop.permute.xlu0 %10985
      %v10987 = vperm.slane %v10947, 3
      %v10988 = vlaneseq
      %v10989 = vshrl.u32 %v10988, 7
      %10991 = vset.pattern.permute.xlu0 %v10989
      %10992 = vperm.xlu0 %10991, %v10987
      %v10993 = vpop.permute.xlu0 %10992
      %v10994 = vlaneseq
      %v10995 = vshrl.u32 %v10994, 7
      %v10996 = vadd.s32 %v10995, 8
      %10997 = vset.pattern.permute.xlu0 %v10996
      %10998 = vperm.xlu0 %10997, %v10987
      %v10999 = vpop.permute.xlu0 %10998
      %v11000 = vperm.slane %v10947, 4
      %v11001 = vlaneseq
      %v11002 = vshrl.u32 %v11001, 7
      %11004 = vset.pattern.permute.xlu0 %v11002
      %11005 = vperm.xlu0 %11004, %v11000
      %v11006 = vpop.permute.xlu0 %11005
      %v11007 = vlaneseq
      %v11008 = vshrl.u32 %v11007, 7
      %v11009 = vadd.s32 %v11008, 8
      %11010 = vset.pattern.permute.xlu0 %v11009
      %11011 = vperm.xlu0 %11010, %v11000
      %v11012 = vpop.permute.xlu0 %11011
      %v11013 = vperm.slane %v10947, 5
      %v11014 = vlaneseq
      %v11015 = vshrl.u32 %v11014, 7
      %11017 = vset.pattern.permute.xlu0 %v11015
      %11018 = vperm.xlu0 %11017, %v11013
      %v11019 = vpop.permute.xlu0 %11018
      %v11020 = vlaneseq
      %v11021 = vshrl.u32 %v11020, 7
      %v11022 = vadd.s32 %v11021, 8
      %11023 = vset.pattern.permute.xlu0 %v11022
      %11024 = vperm.xlu0 %11023, %v11013
      %v11025 = vpop.permute.xlu0 %11024
      %v11026 = vperm.slane %v10947, 6
      %v11027 = vlaneseq
      %v11028 = vshrl.u32 %v11027, 7
      %11030 = vset.pattern.permute.xlu0 %v11028
      %11031 = vperm.xlu0 %11030, %v11026
      %v11032 = vpop.permute.xlu0 %11031
      %v11033 = vlaneseq
      %v11034 = vshrl.u32 %v11033, 7
      %v11035 = vadd.s32 %v11034, 8
      %11036 = vset.pattern.permute.xlu0 %v11035
      %11037 = vperm.xlu0 %11036, %v11026
      %v11038 = vpop.permute.xlu0 %11037
      %v11039 = vperm.slane %v10947, 7
      %v11040 = vlaneseq
      %v11041 = vshrl.u32 %v11040, 7
      %11043 = vset.pattern.permute.xlu0 %v11041
      %11044 = vperm.xlu0 %11043, %v11039
      %v11045 = vpop.permute.xlu0 %11044
      %v11046 = vlaneseq
      %v11047 = vshrl.u32 %v11046, 7
      %v11048 = vadd.s32 %v11047, 8
      %11049 = vset.pattern.permute.xlu0 %v11048
      %11050 = vperm.xlu0 %11049, %v11039
      %v11051 = vpop.permute.xlu0 %11050
      %v11052 = vmul.f32 %v10931, %v10954
      %v11053 = vmul.f32 %v10932, %v10960
      %v11054 = vmul.f32 %v10933, %v10967
      %v11055 = vmul.f32 %v10934, %v10973
      %v11056 = vmul.f32 %v10935, %v10980
      %v11057 = vmul.f32 %v10936, %v10986
      %v11058 = vmul.f32 %v10937, %v10993
      %v11059 = vmul.f32 %v10938, %v10999
      %v11060 = vmul.f32 %v10939, %v11006
      %v11061 = vmul.f32 %v10940, %v11012
      %v11062 = vmul.f32 %v10941, %v11019
      %v11063 = vmul.f32 %v10942, %v11025
      %v11064 = vmul.f32 %v10943, %v11032
      %v11065 = vmul.f32 %v10944, %v11038
      %v11066 = vmul.f32 %v10945, %v11045
      %v11067 = vmul.f32 %v10946, %v11051
      %v11068 = vsel %vm928, %v11052, 0.0
      %v11069 = vsel %vm928, %v11053, 0.0
      %v11070 = vadd.f32 %v11068, %v11069
      %v11071 = vrot.slane %v11070, 4
      %v11072 = vadd.f32 %v11070, %v11071
      %v11073 = vrot.slane %v11072, 2
      %v11074 = vadd.f32 %v11072, %v11073
      %v11075 = vrot.slane %v11074, 1
      %v11076 = vadd.f32 %v11074, %v11075
      %v11077 = vsel %vm928, %v11054, 0.0
      %v11078 = vsel %vm928, %v11055, 0.0
      %v11079 = vadd.f32 %v11077, %v11078
      %v11080 = vrot.slane %v11079, 4
      %v11081 = vadd.f32 %v11079, %v11080
      %v11082 = vrot.slane %v11081, 2
      %v11083 = vadd.f32 %v11081, %v11082
      %v11084 = vrot.slane %v11083, 1
      %v11085 = vadd.f32 %v11083, %v11084
      %v11086 = vsel %vm928, %v11056, 0.0
      %v11087 = vsel %vm928, %v11057, 0.0
      %v11088 = vadd.f32 %v11086, %v11087
      %v11089 = vrot.slane %v11088, 4
      %v11090 = vadd.f32 %v11088, %v11089
      %v11091 = vrot.slane %v11090, 2
      %v11092 = vadd.f32 %v11090, %v11091
      %v11093 = vrot.slane %v11092, 1
      %v11094 = vadd.f32 %v11092, %v11093
      %v11095 = vsel %vm928, %v11058, 0.0
      %v11096 = vsel %vm928, %v11059, 0.0
      %v11097 = vadd.f32 %v11095, %v11096
      %v11098 = vrot.slane %v11097, 4
      %v11099 = vadd.f32 %v11097, %v11098
      %v11100 = vrot.slane %v11099, 2
      %v11101 = vadd.f32 %v11099, %v11100
      %v11102 = vrot.slane %v11101, 1
      %v11103 = vadd.f32 %v11101, %v11102
      %v11104 = vsel %vm928, %v11060, 0.0
      %v11105 = vsel %vm928, %v11061, 0.0
      %v11106 = vadd.f32 %v11104, %v11105
      %v11107 = vrot.slane %v11106, 4
      %v11108 = vadd.f32 %v11106, %v11107
      %v11109 = vrot.slane %v11108, 2
      %v11110 = vadd.f32 %v11108, %v11109
      %v11111 = vrot.slane %v11110, 1
      %v11112 = vadd.f32 %v11110, %v11111
      %v11113 = vsel %vm928, %v11062, 0.0
      %v11114 = vsel %vm928, %v11063, 0.0
      %v11115 = vadd.f32 %v11113, %v11114
      %v11116 = vrot.slane %v11115, 4
      %v11117 = vadd.f32 %v11115, %v11116
      %v11118 = vrot.slane %v11117, 2
      %v11119 = vadd.f32 %v11117, %v11118
      %v11120 = vrot.slane %v11119, 1
      %v11121 = vadd.f32 %v11119, %v11120
      %v11122 = vsel %vm928, %v11064, 0.0
      %v11123 = vsel %vm928, %v11065, 0.0
      %v11124 = vadd.f32 %v11122, %v11123
      %v11125 = vrot.slane %v11124, 4
      %v11126 = vadd.f32 %v11124, %v11125
      %v11127 = vrot.slane %v11126, 2
      %v11128 = vadd.f32 %v11126, %v11127
      %v11129 = vrot.slane %v11128, 1
      %v11130 = vadd.f32 %v11128, %v11129
      %v11131 = vsel %vm928, %v11066, 0.0
      %v11132 = vsel %vm928, %v11067, 0.0
      %v11133 = vadd.f32 %v11131, %v11132
      %v11134 = vrot.slane %v11133, 4
      %v11135 = vadd.f32 %v11133, %v11134
      %v11136 = vrot.slane %v11135, 2
      %v11137 = vadd.f32 %v11135, %v11136
      %v11138 = vrot.slane %v11137, 1
      %v11139 = vadd.f32 %v11137, %v11138
      %v11140 = vpack.c.bf16 %v11076, %v11076
      %v11141 = vpack.c.bf16 %v11085, %v11085
      %v11142 = vpack.c.bf16 %v11094, %v11094
      %v11143 = vpack.c.bf16 %v11103, %v11103
      %v11144 = vpack.c.bf16 %v11112, %v11112
      %v11145 = vpack.c.bf16 %v11121, %v11121
      %v11146 = vpack.c.bf16 %v11130, %v11130
      %v11147 = vpack.c.bf16 %v11139, %v11139
      %v11148 = vld [vmem:[%s18] sm:$0xff]
      %v11149 = vld [vmem:[%s18 + $0x8] sm:$0xff]
      %v11150 = vld [vmem:[%s18 + $0x10] sm:$0xff]
      %v11151 = vld [vmem:[%s18 + $0x18] sm:$0xff]
      %v11152 = vld [vmem:[%s18 + $0x20] sm:$0xff]
      %v11153 = vld [vmem:[%s18 + $0x28] sm:$0xff]
      %v11154 = vld [vmem:[%s18 + $0x30] sm:$0xff]
      %v11155 = vld [vmem:[%s18 + $0x38] sm:$0xff]
      %v11156 = vld [vmem:[%s18 + $0x40] sm:$0xff]
      %v11157 = vld [vmem:[%s18 + $0x48] sm:$0xff]
      %v11158 = vld [vmem:[%s18 + $0x50] sm:$0xff]
      %v11159 = vld [vmem:[%s18 + $0x58] sm:$0xff]
      %v11160 = vld [vmem:[%s18 + $0x60] sm:$0xff]
      %v11161 = vld [vmem:[%s18 + $0x68] sm:$0xff]
      %v11162 = vld [vmem:[%s18 + $0x70] sm:$0xff]
      %v11163 = vld [vmem:[%s18 + $0x78] sm:$0xff]
      %v11164 = vld [vmem:[%s19] sm:$0xf]
      %v11166 = vperm.slane %v11164, 0
      %v11167 = vperm.slane %v11164, 1
      %v11168 = vperm.slane %v11164, 2
      %v11169 = vperm.slane %v11164, 3
      %v11182 = vunpack.c.l.b16 %v11140
      %v11183 = vunpack.c.l.b16 %v11141
      %v11184 = vunpack.c.l.b16 %v11142
      %v11185 = vunpack.c.l.b16 %v11143
      %v11186 = vunpack.c.l.b16 %v11144
      %v11187 = vunpack.c.l.b16 %v11145
      %v11188 = vunpack.c.l.b16 %v11146
      %v11189 = vunpack.c.l.b16 %v11147
      %vm11190 = vcmask 1041409
      %v11191 = vsel %vm11190, %v11183, %v11182
      %vm11192 = vcmask 1042434
      %v11193 = vsel %vm11192, %v11184, %v11191
      %vm11194 = vcmask 1043459
      %v11195 = vsel %vm11194, %v11185, %v11193
      %vm11196 = vcmask 1044484
      %v11197 = vsel %vm11196, %v11186, %v11195
      %vm11198 = vcmask 1045509
      %v11199 = vsel %vm11198, %v11187, %v11197
      %vm11200 = vcmask 1046534
      %v11201 = vsel %vm11200, %v11188, %v11199
      %vm11202 = vcmask 1047559
      %v11203 = vsel %vm11202, %v11189, %v11201
      %v11204 = vpack.c.b16 %v11203, %v11203
      %v11221 = vunpack.c.l.b16 %v11148
      %v11222 = vunpack.c.h.b16 %v11148
      %v11223 = vunpack.c.l.b16 %v11149
      %v11224 = vunpack.c.h.b16 %v11149
      %v11225 = vunpack.c.l.b16 %v11150
      %v11226 = vunpack.c.h.b16 %v11150
      %v11227 = vunpack.c.l.b16 %v11151
      %v11228 = vunpack.c.h.b16 %v11151
      %v11229 = vunpack.c.l.b16 %v11152
      %v11230 = vunpack.c.h.b16 %v11152
      %v11231 = vunpack.c.l.b16 %v11153
      %v11232 = vunpack.c.h.b16 %v11153
      %v11233 = vunpack.c.l.b16 %v11154
      %v11234 = vunpack.c.h.b16 %v11154
      %v11235 = vunpack.c.l.b16 %v11155
      %v11236 = vunpack.c.h.b16 %v11155
      %v11237 = vunpack.c.l.b16 %v11156
      %v11238 = vunpack.c.h.b16 %v11156
      %v11239 = vunpack.c.l.b16 %v11157
      %v11240 = vunpack.c.h.b16 %v11157
      %v11241 = vunpack.c.l.b16 %v11158
      %v11242 = vunpack.c.h.b16 %v11158
      %v11243 = vunpack.c.l.b16 %v11159
      %v11244 = vunpack.c.h.b16 %v11159
      %v11245 = vunpack.c.l.b16 %v11160
      %v11246 = vunpack.c.h.b16 %v11160
      %v11247 = vunpack.c.l.b16 %v11161
      %v11248 = vunpack.c.h.b16 %v11161
      %v11249 = vunpack.c.l.b16 %v11162
      %v11250 = vunpack.c.h.b16 %v11162
      %v11251 = vunpack.c.l.b16 %v11163
      %v11252 = vunpack.c.h.b16 %v11163
      %v11253 = vpack.c.b16 %v11225, %v11221
      %v11254 = vpack.c.b16 %v11226, %v11222
      %v11255 = vpack.c.b16 %v11227, %v11223
      %v11256 = vpack.c.b16 %v11228, %v11224
      %v11257 = vpack.c.b16 %v11233, %v11229
      %v11258 = vpack.c.b16 %v11234, %v11230
      %v11259 = vpack.c.b16 %v11235, %v11231
      %v11260 = vpack.c.b16 %v11236, %v11232
      %v11261 = vpack.c.b16 %v11241, %v11237
      %v11262 = vpack.c.b16 %v11242, %v11238
      %v11263 = vpack.c.b16 %v11243, %v11239
      %v11264 = vpack.c.b16 %v11244, %v11240
      %v11265 = vpack.c.b16 %v11249, %v11245
      %v11266 = vpack.c.b16 %v11250, %v11246
      %v11267 = vpack.c.b16 %v11251, %v11247
      %v11268 = vpack.c.b16 %v11252, %v11248
      %v11286 = vsel %vm928, %v11204, 0
      %11288 = vmatpush.bf16.msra.mxu0 0
      %11289 = vmatpush.bf16.msra.mxu0 0
      %11290 = vmatpush.bf16.msra.mxu0 0
      %11291 = vmatpush.bf16.msra.mxu0 0
      %11292 = vmatpush.bf16.msra.mxu0 %v11265
      %11293 = vmatpush.bf16.msra.mxu0 %v11261
      %11294 = vmatpush.bf16.msra.mxu0 %v11257
      %11295 = vmatpush.bf16.msra.mxu0 %v11253
      %11296 = vmatmul.bf16.gmra.mxu0 %v11286
      %v11297 = vpop.f32.mrf.mxu0
      %v11298 = vadd.f32 %v11166, %v11297
      %v11299 = vpop.f32.mrf.mxu0
      %11300 = vdwg.mxu0
      %11301 = vmatpush.bf16.msra.mxu0 0
      %11302 = vmatpush.bf16.msra.mxu0 0
      %11303 = vmatpush.bf16.msra.mxu0 0
      %11304 = vmatpush.bf16.msra.mxu0 0
      %11305 = vmatpush.bf16.msra.mxu0 %v11266
      %11306 = vmatpush.bf16.msra.mxu0 %v11262
      %11307 = vmatpush.bf16.msra.mxu0 %v11258
      %11308 = vmatpush.bf16.msra.mxu0 %v11254
      %11309 = vmatmul.bf16.gmra.mxu0 %v11286
      %v11310 = vpop.f32.mrf.mxu0
      %v11311 = vadd.f32 %v11167, %v11310
      %v11312 = vpop.f32.mrf.mxu0
      %11313 = vdwg.mxu0
      %11314 = vmatpush.bf16.msra.mxu0 0
      %11315 = vmatpush.bf16.msra.mxu0 0
      %11316 = vmatpush.bf16.msra.mxu0 0
      %11317 = vmatpush.bf16.msra.mxu0 0
      %11318 = vmatpush.bf16.msra.mxu0 %v11267
      %11319 = vmatpush.bf16.msra.mxu0 %v11263
      %11320 = vmatpush.bf16.msra.mxu0 %v11259
      %11321 = vmatpush.bf16.msra.mxu0 %v11255
      %11322 = vmatmul.bf16.gmra.mxu0 %v11286
      %v11323 = vpop.f32.mrf.mxu0
      %v11324 = vadd.f32 %v11168, %v11323
      %v11325 = vpop.f32.mrf.mxu0
      %11326 = vdwg.mxu0
      %11327 = vmatpush.bf16.msra.mxu0 0
      %11328 = vmatpush.bf16.msra.mxu0 0
      %11329 = vmatpush.bf16.msra.mxu0 0
      %11330 = vmatpush.bf16.msra.mxu0 0
      %11331 = vmatpush.bf16.msra.mxu0 %v11268
      %11332 = vmatpush.bf16.msra.mxu0 %v11264
      %11333 = vmatpush.bf16.msra.mxu0 %v11260
      %11334 = vmatpush.bf16.msra.mxu0 %v11256
      %11335 = vmatmul.bf16.gmra.mxu0 %v11286
      %v11336 = vpop.f32.mrf.mxu0
      %v11337 = vadd.f32 %v11169, %v11336
      %v11338 = vpop.f32.mrf.mxu0
      %11339 = vdwg.mxu0
      %v11340 = vand.u32 2147483647, %v11298
      %v11341 = vand.u32 2147483647, %v11311
      %v11342 = vand.u32 2147483647, %v11324
      %v11343 = vld [vmem:[%s662] sm:$0xff]
      %11345 = vset.pattern.permute.xlu0 0
      %11346 = vperm.xlu0 %11345, %v11343
      %v11347 = vpop.permute.xlu0 %11346
      %v11349 = vmul.f32 %v11347, %v11340
      %v11350 = vadd.f32 %v11324, %v11349
      %11351 = vset.pattern.permute.xlu0 1
      %11352 = vperm.xlu0 %11351, %v11343
      %v11353 = vpop.permute.xlu0 %11352
      %v11355 = vmul.f32 %v11353, %v11340
      %11357 = vrot.lane.b32.xlu0 %v11355, 64
      %v11358 = vpop.permute.xlu0 %11357
      %v11360 = vadd.f32 %v11350, %v11358
      %11361 = vset.pattern.permute.xlu0 2
      %11362 = vperm.xlu0 %11361, %v11343
      %v11363 = vpop.permute.xlu0 %11362
      %v11365 = vmul.f32 %v11363, %v11341
      %v11366 = vadd.f32 %v11360, %v11365
      %11367 = vset.pattern.permute.xlu0 3
      %11368 = vperm.xlu0 %11367, %v11343
      %v11369 = vpop.permute.xlu0 %11368
      %v11371 = vmul.f32 %v11369, %v11341
      %11373 = vrot.lane.b32.xlu0 %v11371, 64
      %v11374 = vpop.permute.xlu0 %11373
      %v11376 = vadd.f32 %v11366, %v11374
      %vm11377 = vcmp.gt.f32.partialorder %v11376, 0.0
      %v11378 = vmin.f32 %v11376, 0.0
      %v11379 = vmul.f32 %v11378, 1.442695
      %v11380 = vpow.pop %v11379
      %v11381 = vsub.f32 %v11380, 1.0
      %v11382 = vsel %vm11377, %v11376, %v11381
      %11384 = vrot.lane.b32.xlu0 %v11342, 64
      %v11385 = vpop.permute.xlu0 %11384
      %v11387 = vmul.f32 %v11382, %v11385
      %v11388 = vsel %vm928, %v11387, 0.0
      %11389 = vadd.xlane.f32.xlu0 %v11388
      %v11390 = vpop.xlane.xlu0 %11389
      %v11391 = vadd.f32 %v11390, %v11337
      %vm11392 = vcmask 7168
      %11393 = vst.msk [vmem:[%s680] sm:$0xff] %vm11392, %v11391
      %p11394 = scmp.lt.s32.totalorder %s31, 2
      %s11395 = scalar_select %p11394, %s31, 2
      %s11396 = smul.addr %s11395, 8
      %s11397 = scalar_lea.vmem %s20, %s11396
      // Predicated region
      $region101: #{tpu_custom_call.1} parent=99 // pred_check
        %p11398 = pneg %p489
      $region102: #{tpu_custom_call.1} parent=99 // pred_check_branch
        %11400 = sbr.rel (%p11398) target = $region104
      $region103: #{tpu_custom_call.1} parent=99 // pred_region
        _
      $region104: #{tpu_custom_call.1} parent=99 // pred_fallthru
        _
    $region100: #{tpu_custom_call.1} parent=5 // pred_fallthru
      _
    %p11401 = scmp.le.s32.totalorder 2, %s26
    // Predicated region
    $region105: #{tpu_custom_call.1} parent=5 // pred_check
      %p11402 = pneg %p11401
    $region106: #{tpu_custom_call.1} parent=5 // pred_check_branch
      %11404 = sbr.rel (%p11402) target = $region108
    $region107: #{tpu_custom_call.1} parent=5 // pred_region
      %s11405 = ssub.s32 %s26, 2
      // Predicated region
      $region109: #{tpu_custom_call.1} parent=107 // pred_check
        %p11406 = pneg %p495
      $region110: #{tpu_custom_call.1} parent=107 // pred_check_branch
        %11408 = sbr.rel (%p11406) target = $region112
      $region111: #{tpu_custom_call.1} parent=107 // pred_region
        %p11409 = scmp.lt.s32.totalorder %s32, 2
        %s11410 = scalar_select %p11409, %s32, 2
        %s11411 = smul.addr %s11410, 8
        %s11412 = scalar_lea.vmem %s20, %s11411
      $region112: #{tpu_custom_call.1} parent=107 // pred_fallthru
        _
    $region108: #{tpu_custom_call.1} parent=5 // pred_fallthru
      _
  $region6: #{tpu_custom_call.1} parent=0 // loop_footer
    %s30 = sadd.s32 1, %s26
  $region7: #{tpu_custom_call.1} parent=0 // loop_footer_branch
    %25 = sbr.rel target = $region3
  $region8: #{tpu_custom_call.1} parent=0 // loop_exit
    _

</llo_original>
